<compile_context>
chip_gen: v5e
topology: v5e:2x2
jax: 0.10.0
libtpu: 0.0.40
codegen_flags: <defaults>
</compile_context>

<pallas_src>
import functools

import jax
import jax.numpy as jnp
from jax.experimental import pallas as pl
from jax.experimental.pallas import tpu as pltpu

_BN_EPS = 1e-5


# ----------------------------------------------------------------------------
# In-kernel helpers.  Per-image activation layout: rows = H, lanes = W*C
# (channel fastest).
# ----------------------------------------------------------------------------
def _shift_rows_down(x):
    """y[r] = x[r - 1]; a zero row enters at the top image border."""
    return jnp.concatenate([jnp.zeros_like(x[:1]), x[:-1]], axis=0)


def _shift_rows_up(x):
    """y[r] = x[r + 1]; a zero row enters at the bottom image border."""
    return jnp.concatenate([x[1:], jnp.zeros_like(x[:1])], axis=0)


def _conv3x3(x, b_ref, s_ref):
    """3x3 conv (pad=1) + folded BN scale/shift + ReLU -> f32 (H, W*Cout).

    x: bf16 (H, W*Cin).  b_ref: bf16 (3, W*Cin, W*Cout) block-banded weights,
    one per H tap (W taps and BN scale folded in).  s_ref: f32 (1, W*Cout).
    The H shifts are cheap row copies, not matmuls; the three independent tap
    matmuls accumulate into one f32 register tile before the VPU epilogue.
    """
    acc = jnp.dot(x, b_ref[1], preferred_element_type=jnp.float32)
    if x.shape[0] > 1:  # H == 1: the +/-1 H taps only see zero padding
        acc += jnp.dot(_shift_rows_down(x), b_ref[0],
                       preferred_element_type=jnp.float32)
        acc += jnp.dot(_shift_rows_up(x), b_ref[2],
                       preferred_element_type=jnp.float32)
    return jnp.maximum(acc + s_ref[...], 0.0)


def _unet_kernel(num_levels, *refs):
    """Whole UNet forward for one image (one grid step), fully VMEM resident.

    refs = (x_ref, *weight_refs, out_ref, *pool_scratch_refs).
    """
    n_weights = 5 * num_levels + 4 + 7 * num_levels + 2
    x_ref = refs[0]
    wit = iter(refs[1:1 + n_weights])
    out_ref = refs[1 + n_weights]
    sit = iter(refs[2 + n_weights:])

    x = x_ref[...]                                    # bf16 (H0, W0*Cin)
    skips = []

    # ---- encoder: DoubleConv + fused 2x2 maxpool per level -----------------
    for _ in range(num_levels):
        b1, s1, b2, s2, csel = (next(wit), next(wit), next(wit), next(wit),
                                next(wit))
        y1 = _conv3x3(x, b1, s1).astype(jnp.bfloat16)
        y2 = _conv3x3(y1, b2, s2)                     # f32 (H, W*C)
        skips.append(y2.astype(jnp.bfloat16))
        pbuf = next(sit)                              # f32 (H, W*C) scratch
        pbuf[...] = y2
        h = y2.shape[0]
        # Row-pair max via strided VMEM loads (no selection matmuls).
        rmax = jnp.maximum(pbuf[pl.ds(0, h // 2, 2), :],
                           pbuf[pl.ds(1, h // 2, 2), :]).astype(jnp.bfloat16)
        # W-pair max: two exact 0/1 column selections (tiny) + VPU max.
        x = jnp.maximum(
            jnp.dot(rmax, csel[0], preferred_element_type=jnp.float32),
            jnp.dot(rmax, csel[1], preferred_element_type=jnp.float32),
        ).astype(jnp.bfloat16)

    # ---- bottleneck ---------------------------------------------------------
    b1, s1, b2, s2 = next(wit), next(wit), next(wit), next(wit)
    x = _conv3x3(x, b1, s1).astype(jnp.bfloat16)
    x = _conv3x3(x, b2, s2).astype(jnp.bfloat16)

    # ---- decoder: ConvTranspose(2,2) + DoubleConv over concat (split-K) ----
    for _ in range(num_levels):
        rup, upb, b1u, b1s, s1, b2, s2 = (next(wit), next(wit), next(wit),
                                          next(wit), next(wit), next(wit),
                                          next(wit))
        skip = skips.pop()                            # bf16 (2Hs, 2Ws*f)
        # ConvTranspose2d(k=2, s=2): one matmul per output-row parity.
        t0 = jnp.dot(x, rup[0], preferred_element_type=jnp.float32) + upb[...]
        t1 = jnp.dot(x, rup[1], preferred_element_type=jnp.float32) + upb[...]
        t0 = t0.astype(jnp.bfloat16)
        t1 = t1.astype(jnp.bfloat16)
        hs = t0.shape[0]
        if hs == 1:
            up = jnp.concatenate([t0, t1], axis=0)
        else:
            # Exact 0/1 interleave matrices built in-kernel from iota (no
            # operand DMA; <2% of the level's conv FLOPs).
            r2 = jax.lax.broadcasted_iota(jnp.int32, (2 * hs, hs), 0)
            c2 = jax.lax.broadcasted_iota(jnp.int32, (2 * hs, hs), 1)
            e0 = (r2 == 2 * c2).astype(jnp.bfloat16)
            e1 = (r2 == 2 * c2 + 1).astype(jnp.bfloat16)
            up = (jnp.dot(e0, t0, preferred_element_type=jnp.float32)
                  + jnp.dot(e1, t1, preferred_element_type=jnp.float32)
                  ).astype(jnp.bfloat16)
        # conv1 over channel-concat([up, skip]) without materializing it:
        # split-K accumulation of the two weight halves.
        acc = jnp.dot(up, b1u[1], preferred_element_type=jnp.float32)
        acc += jnp.dot(skip, b1s[1], preferred_element_type=jnp.float32)
        acc += jnp.dot(_shift_rows_down(up), b1u[0],
                       preferred_element_type=jnp.float32)
        acc += jnp.dot(_shift_rows_up(up), b1u[2],
                       preferred_element_type=jnp.float32)
        acc += jnp.dot(_shift_rows_down(skip), b1s[0],
                       preferred_element_type=jnp.float32)
        acc += jnp.dot(_shift_rows_up(skip), b1s[2],
                       preferred_element_type=jnp.float32)
        y1 = jnp.maximum(acc + s1[...], 0.0).astype(jnp.bfloat16)
        x = _conv3x3(y1, b2, s2).astype(jnp.bfloat16)

    # ---- fused 1x1 out-conv epilogue (lane-dense padded store) --------------
    wout, bout = next(wit), next(wit)
    out_ref[...] = (jnp.dot(x, wout[...], preferred_element_type=jnp.float32)
                    + bout[...])


# ----------------------------------------------------------------------------
# Operand builders (run eagerly ONCE; cached outside the jitted forward).
# ----------------------------------------------------------------------------
def _fold_bn(bn, conv_bias, cout):
    scale = bn["gamma"] * jax.lax.rsqrt(bn["var"] + _BN_EPS)
    bias = conv_bias if conv_bias is not None else jnp.zeros((cout,),
                                                             jnp.float32)
    return scale, bn["beta"] + scale * (bias - bn["mean"])


def _banded3(w, scale, wdim):
    """Torch conv weight (Cout, Cin, 3, 3) -> bf16 (3, W*Cin, W*Cout) banded
    per-H-tap matrices (W taps, W zero padding, BN scale folded in)."""
    cout, cin = w.shape[0], w.shape[1]
    wm = jnp.transpose(w, (2, 3, 1, 0)) * scale           # (3, 3, Cin, Cout)
    taps = []
    for u in range(3):
        blk = jnp.zeros((wdim, cin, wdim, cout), jnp.float32)
        for v in range(3):
            off = v - 1
            lo, hi = max(0, -off), wdim - max(0, off)
            if lo < hi:
                j = jnp.arange(lo, hi)                     # output w index
                blk = blk.at[j + off, :, j, :].add(wm[u, v][None])
        taps.append(blk.reshape(wdim * cin, wdim * cout))
    return jnp.stack(taps).astype(jnp.bfloat16)


def _tile_shift(shift, wdim):
    return jnp.tile(shift, wdim).reshape(1, -1).astype(jnp.float32)


def _pool_col_selectors(wdim, c):
    """(2, W*C, (W//2)*C) exact 0/1 selectors picking even / odd W blocks."""
    j = jnp.arange(wdim // 2)
    e = jnp.zeros((2, wdim, wdim // 2), jnp.float32)
    e = e.at[0, 2 * j, j].set(1.0).at[1, 2 * j + 1, j].set(1.0)
    eye_c = jnp.eye(c, dtype=jnp.float32)
    return jnp.stack([jnp.kron(e[0], eye_c),
                      jnp.kron(e[1], eye_c)]).astype(jnp.bfloat16)


def _upsample_mats(wt, bias, wdim):
    """ConvTranspose2d(k=2,s=2) weight (Cin, Cout, 2, 2) -> per-output-row
    parity expansion matrices (2, W*Cin, 2W*Cout) + tiled bias."""
    cin, cout = wt.shape[0], wt.shape[1]
    j = jnp.arange(wdim)
    taps = []
    for u in range(2):
        blk = jnp.zeros((wdim, cin, 2 * wdim, cout), jnp.float32)
        for v in range(2):
            blk = blk.at[j, :, 2 * j + v, :].add(wt[:, :, u, v][None])
        taps.append(blk.reshape(wdim * cin, 2 * wdim * cout))
    rup = jnp.stack(taps).astype(jnp.bfloat16)
    upb = jnp.tile(bias, 2 * wdim).reshape(1, -1).astype(jnp.float32)
    return rup, upb


def _outconv_mats(w, b, wdim, pad_to):
    cout, cin = w.shape[0], w.shape[1]
    wp = jnp.zeros((cin, pad_to), jnp.float32).at[:, :cout].set(w[:, :, 0, 0].T)
    bp = jnp.zeros((pad_to,), jnp.float32).at[:cout].set(b)
    wmat = jnp.kron(jnp.eye(wdim, dtype=jnp.float32), wp)
    return wmat.astype(jnp.bfloat16), jnp.tile(bp, wdim).reshape(1, -1)


def _prepare_operands(params, h0, w0, out_channels):
    """Builds the flat operand tuple consumed by the fused kernel (once)."""
    ops, scratch = [], []
    h, w = h0, w0
    for p in params["encoder"]:
        f = p["w1"].shape[0]
        sc1, sh1 = _fold_bn(p["bn1"], None, f)
        sc2, sh2 = _fold_bn(p["bn2"], p["b2"], f)
        ops += [_banded3(p["w1"], sc1, w), _tile_shift(sh1, w),
                _banded3(p["w2"], sc2, w), _tile_shift(sh2, w),
                _pool_col_selectors(w, f)]
        scratch.append(pltpu.VMEM((h, w * f), jnp.float32))
        h, w = h // 2, w // 2
    p = params["bottleneck"]
    fb = p["w1"].shape[0]
    sc1, sh1 = _fold_bn(p["bn1"], None, fb)
    sc2, sh2 = _fold_bn(p["bn2"], p["b2"], fb)
    ops += [_banded3(p["w1"], sc1, w), _tile_shift(sh1, w),
            _banded3(p["w2"], sc2, w), _tile_shift(sh2, w)]
    for dp in params["decoder"]:
        f = dp["up_w"].shape[1]
        rup, upb = _upsample_mats(dp["up_w"], dp["up_b"], w)
        dc = dp["dc"]
        sc1, sh1 = _fold_bn(dc["bn1"], None, f)
        sc2, sh2 = _fold_bn(dc["bn2"], dc["b2"], f)
        ops += [rup, upb,
                _banded3(dc["w1"][:, :f], sc1, 2 * w),   # upsampled half
                _banded3(dc["w1"][:, f:], sc1, 2 * w),   # skip half
                _tile_shift(sh1, 2 * w),
                _banded3(dc["w2"], sc2, 2 * w),
                _tile_shift(sh2, 2 * w)]
        h, w = 2 * h, 2 * w
    pad_c = ((out_channels + 7) // 8) * 8   # lane-dense final store
    wout, bout = _outconv_mats(params["out_w"], params["out_b"], w, pad_c)
    ops += [wout, bout]
    return tuple(ops), tuple(scratch), pad_c


# ----------------------------------------------------------------------------
# Forward builder: one fused pallas_call, grid over batch (parallel for the
# two v7x TensorCores; no effect on v5e/v6e).
# ----------------------------------------------------------------------------
def build_unet_forward(params, batch, in_channels, out_channels, h0, w0):
    num_levels = len(params["encoder"])
    ops, scratch_shapes, pad_c = _prepare_operands(params, h0, w0,
                                                   out_channels)
    kernel = functools.partial(_unet_kernel, num_levels)

    in_specs = [pl.BlockSpec((h0, w0 * in_channels), lambda n: (n, 0))]
    for op in ops:
        in_specs.append(pl.BlockSpec(op.shape,
                                     lambda n, _nd=op.ndim: (0,) * _nd))
    out_spec = pl.BlockSpec((h0, w0 * pad_c), lambda n: (n, 0))

    call = pl.pallas_call(
        kernel,
        grid=(batch,),
        in_specs=in_specs,
        out_specs=out_spec,
        out_shape=jax.ShapeDtypeStruct((batch * h0, w0 * pad_c), jnp.float32),
        scratch_shapes=list(scratch_shapes),
        compiler_params=pltpu.CompilerParams(
            dimension_semantics=("parallel",)),
    )

    def forward(x_nchw, ops_):
        x = jnp.transpose(x_nchw, (0, 2, 3, 1))
        x = x.reshape(batch * h0, w0 * in_channels).astype(jnp.bfloat16)
        y = call(x, *ops_)
        y = y.reshape(batch, h0, w0, pad_c)[..., :out_channels]
        return jnp.transpose(y, (0, 3, 1, 2))

    # TODO(synk): F.resize fallback for mismatched skip shapes is not
    # implemented; spatial dims are powers of two so shapes always match.
    return jax.jit(forward), ops


# ----------------------------------------------------------------------------
# Parameter init (deterministic, synthetic)
# ----------------------------------------------------------------------------
def _key_stream(key):
    while True:
        key, sub = jax.random.split(key)
        yield sub


def _init_bn(ks, c):
    return dict(
        gamma=1.0 + 0.05 * jax.random.normal(next(ks), (c,), jnp.float32),
        beta=0.05 * jax.random.normal(next(ks), (c,), jnp.float32),
        mean=0.05 * jax.random.normal(next(ks), (c,), jnp.float32),
        var=jax.random.uniform(next(ks), (c,), jnp.float32, 0.5, 1.5),
    )


def _init_double_conv(ks, cin, cout):
    return dict(
        w1=0.1 * jax.random.normal(next(ks), (cout, cin, 3, 3), jnp.float32),
        bn1=_init_bn(ks, cout),
        w2=0.1 * jax.random.normal(next(ks), (cout, cout, 3, 3), jnp.float32),
        b2=0.05 * jax.random.normal(next(ks), (cout,), jnp.float32),
        bn2=_init_bn(ks, cout),
    )


def init_unet_params(key, in_channels, out_channels, features):
    ks = _key_stream(key)
    params = {"encoder": [], "decoder": []}
    cin = in_channels
    for f in features:
        params["encoder"].append(_init_double_conv(ks, cin, f))
        cin = f
    params["bottleneck"] = _init_double_conv(ks, features[-1], features[-1] * 2)
    for f in reversed(features):
        params["decoder"].append(dict(
            up_w=0.1 * jax.random.normal(next(ks), (f * 2, f, 2, 2),
                                         jnp.float32),
            up_b=0.05 * jax.random.normal(next(ks), (f,), jnp.float32),
            dc=_init_double_conv(ks, f * 2, f),
        ))
    params["out_w"] = 0.1 * jax.random.normal(
        next(ks), (out_channels, features[0], 1, 1), jnp.float32)
    params["out_b"] = 0.05 * jax.random.normal(next(ks), (out_channels,),
                                               jnp.float32)
    return params


# ----------------------------------------------------------------------------
# Main
# ----------------------------------------------------------------------------
if __name__ == "__main__":
    key = jax.random.PRNGKey(0)
    k_x, k_p = jax.random.split(key)

    IN_CHANNELS = 4
    OUT_CHANNELS = 15
    FEATURES = (8, 16, 32, 64)  # small widths, same 4-level UNet topology
    BATCH, SPATIAL = 2, 16

    x = jax.random.normal(k_x, (BATCH, IN_CHANNELS, SPATIAL, SPATIAL),
                          jnp.float32)
    params = init_unet_params(k_p, IN_CHANNELS, OUT_CHANNELS, FEATURES)

    fwd, ops = build_unet_forward(params, BATCH, IN_CHANNELS, OUT_CHANNELS,
                                  SPATIAL, SPATIAL)
    out = jax.block_until_ready(fwd(x, ops))
    assert out.shape == (BATCH, OUT_CHANNELS, SPATIAL, SPATIAL), out.shape
    assert bool(jnp.all(jnp.isfinite(out)))
    print("KERNEL_OK")
</pallas_src>

<mosaic_0001>
module attributes {stable_mosaic.version = 11 : i64} {
  func.func @_unet_kernel(%arg0: i32, %arg1: memref<16x64xbf16, #tpu.memory_space<vmem>>, %arg2: memref<3x64x128xbf16, #tpu.memory_space<vmem>>, %arg3: memref<1x128xf32, #tpu.memory_space<vmem>>, %arg4: memref<3x128x128xbf16, #tpu.memory_space<vmem>>, %arg5: memref<1x128xf32, #tpu.memory_space<vmem>>, %arg6: memref<2x128x64xbf16, #tpu.memory_space<vmem>>, %arg7: memref<3x64x128xbf16, #tpu.memory_space<vmem>>, %arg8: memref<1x128xf32, #tpu.memory_space<vmem>>, %arg9: memref<3x128x128xbf16, #tpu.memory_space<vmem>>, %arg10: memref<1x128xf32, #tpu.memory_space<vmem>>, %arg11: memref<2x128x64xbf16, #tpu.memory_space<vmem>>, %arg12: memref<3x64x128xbf16, #tpu.memory_space<vmem>>, %arg13: memref<1x128xf32, #tpu.memory_space<vmem>>, %arg14: memref<3x128x128xbf16, #tpu.memory_space<vmem>>, %arg15: memref<1x128xf32, #tpu.memory_space<vmem>>, %arg16: memref<2x128x64xbf16, #tpu.memory_space<vmem>>, %arg17: memref<3x64x128xbf16, #tpu.memory_space<vmem>>, %arg18: memref<1x128xf32, #tpu.memory_space<vmem>>, %arg19: memref<3x128x128xbf16, #tpu.memory_space<vmem>>, %arg20: memref<1x128xf32, #tpu.memory_space<vmem>>, %arg21: memref<2x128x64xbf16, #tpu.memory_space<vmem>>, %arg22: memref<3x64x128xbf16, #tpu.memory_space<vmem>>, %arg23: memref<1x128xf32, #tpu.memory_space<vmem>>, %arg24: memref<3x128x128xbf16, #tpu.memory_space<vmem>>, %arg25: memref<1x128xf32, #tpu.memory_space<vmem>>, %arg26: memref<2x128x128xbf16, #tpu.memory_space<vmem>>, %arg27: memref<1x128xf32, #tpu.memory_space<vmem>>, %arg28: memref<3x128x128xbf16, #tpu.memory_space<vmem>>, %arg29: memref<3x128x128xbf16, #tpu.memory_space<vmem>>, %arg30: memref<1x128xf32, #tpu.memory_space<vmem>>, %arg31: memref<3x128x128xbf16, #tpu.memory_space<vmem>>, %arg32: memref<1x128xf32, #tpu.memory_space<vmem>>, %arg33: memref<2x128x128xbf16, #tpu.memory_space<vmem>>, %arg34: memref<1x128xf32, #tpu.memory_space<vmem>>, %arg35: memref<3x128x128xbf16, #tpu.memory_space<vmem>>, %arg36: memref<3x128x128xbf16, #tpu.memory_space<vmem>>, %arg37: memref<1x128xf32, #tpu.memory_space<vmem>>, %arg38: memref<3x128x128xbf16, #tpu.memory_space<vmem>>, %arg39: memref<1x128xf32, #tpu.memory_space<vmem>>, %arg40: memref<2x128x128xbf16, #tpu.memory_space<vmem>>, %arg41: memref<1x128xf32, #tpu.memory_space<vmem>>, %arg42: memref<3x128x128xbf16, #tpu.memory_space<vmem>>, %arg43: memref<3x128x128xbf16, #tpu.memory_space<vmem>>, %arg44: memref<1x128xf32, #tpu.memory_space<vmem>>, %arg45: memref<3x128x128xbf16, #tpu.memory_space<vmem>>, %arg46: memref<1x128xf32, #tpu.memory_space<vmem>>, %arg47: memref<2x128x128xbf16, #tpu.memory_space<vmem>>, %arg48: memref<1x128xf32, #tpu.memory_space<vmem>>, %arg49: memref<3x128x128xbf16, #tpu.memory_space<vmem>>, %arg50: memref<3x128x128xbf16, #tpu.memory_space<vmem>>, %arg51: memref<1x128xf32, #tpu.memory_space<vmem>>, %arg52: memref<3x128x128xbf16, #tpu.memory_space<vmem>>, %arg53: memref<1x128xf32, #tpu.memory_space<vmem>>, %arg54: memref<128x256xbf16, #tpu.memory_space<vmem>>, %arg55: memref<1x256xf32, #tpu.memory_space<vmem>>, %arg56: memref<16x256xf32, #tpu.memory_space<vmem>>, %arg57: memref<16x128xf32, #tpu.memory_space<vmem>>, %arg58: memref<8x128xf32, #tpu.memory_space<vmem>>, %arg59: memref<4x128xf32, #tpu.memory_space<vmem>>, %arg60: memref<2x128xf32, #tpu.memory_space<vmem>>) attributes {dimension_semantics = [#tpu.dimension_semantics<parallel>], iteration_bounds = array<i64: 2>, scalar_prefetch = 0 : i64, scratch_operands = 4 : i64, tpu.core_type = #tpu.core_type<tc>, window_params = [{transform_indices = @transform_0, window_bounds = array<i64: 16, 64>}, {pipeline_mode = #tpu.pipeline_mode<synchronous>, transform_indices = @transform_1, window_bounds = array<i64: 3, 64, 128>}, {pipeline_mode = #tpu.pipeline_mode<synchronous>, transform_indices = @transform_2, window_bounds = array<i64: 1, 128>}, {pipeline_mode = #tpu.pipeline_mode<synchronous>, transform_indices = @transform_3, window_bounds = array<i64: 3, 128, 128>}, {pipeline_mode = #tpu.pipeline_mode<synchronous>, transform_indices = @transform_4, window_bounds = array<i64: 1, 128>}, {pipeline_mode = #tpu.pipeline_mode<synchronous>, transform_indices = @transform_5, window_bounds = array<i64: 2, 128, 64>}, {pipeline_mode = #tpu.pipeline_mode<synchronous>, transform_indices = @transform_6, window_bounds = array<i64: 3, 64, 128>}, {pipeline_mode = #tpu.pipeline_mode<synchronous>, transform_indices = @transform_7, window_bounds = array<i64: 1, 128>}, {pipeline_mode = #tpu.pipeline_mode<synchronous>, transform_indices = @transform_8, window_bounds = array<i64: 3, 128, 128>}, {pipeline_mode = #tpu.pipeline_mode<synchronous>, transform_indices = @transform_9, window_bounds = array<i64: 1, 128>}, {pipeline_mode = #tpu.pipeline_mode<synchronous>, transform_indices = @transform_10, window_bounds = array<i64: 2, 128, 64>}, {pipeline_mode = #tpu.pipeline_mode<synchronous>, transform_indices = @transform_11, window_bounds = array<i64: 3, 64, 128>}, {pipeline_mode = #tpu.pipeline_mode<synchronous>, transform_indices = @transform_12, window_bounds = array<i64: 1, 128>}, {pipeline_mode = #tpu.pipeline_mode<synchronous>, transform_indices = @transform_13, window_bounds = array<i64: 3, 128, 128>}, {pipeline_mode = #tpu.pipeline_mode<synchronous>, transform_indices = @transform_14, window_bounds = array<i64: 1, 128>}, {pipeline_mode = #tpu.pipeline_mode<synchronous>, transform_indices = @transform_15, window_bounds = array<i64: 2, 128, 64>}, {pipeline_mode = #tpu.pipeline_mode<synchronous>, transform_indices = @transform_16, window_bounds = array<i64: 3, 64, 128>}, {pipeline_mode = #tpu.pipeline_mode<synchronous>, transform_indices = @transform_17, window_bounds = array<i64: 1, 128>}, {pipeline_mode = #tpu.pipeline_mode<synchronous>, transform_indices = @transform_18, window_bounds = array<i64: 3, 128, 128>}, {pipeline_mode = #tpu.pipeline_mode<synchronous>, transform_indices = @transform_19, window_bounds = array<i64: 1, 128>}, {pipeline_mode = #tpu.pipeline_mode<synchronous>, transform_indices = @transform_20, window_bounds = array<i64: 2, 128, 64>}, {pipeline_mode = #tpu.pipeline_mode<synchronous>, transform_indices = @transform_21, window_bounds = array<i64: 3, 64, 128>}, {pipeline_mode = #tpu.pipeline_mode<synchronous>, transform_indices = @transform_22, window_bounds = array<i64: 1, 128>}, {pipeline_mode = #tpu.pipeline_mode<synchronous>, transform_indices = @transform_23, window_bounds = array<i64: 3, 128, 128>}, {pipeline_mode = #tpu.pipeline_mode<synchronous>, transform_indices = @transform_24, window_bounds = array<i64: 1, 128>}, {pipeline_mode = #tpu.pipeline_mode<synchronous>, transform_indices = @transform_25, window_bounds = array<i64: 2, 128, 128>}, {pipeline_mode = #tpu.pipeline_mode<synchronous>, transform_indices = @transform_26, window_bounds = array<i64: 1, 128>}, {pipeline_mode = #tpu.pipeline_mode<synchronous>, transform_indices = @transform_27, window_bounds = array<i64: 3, 128, 128>}, {pipeline_mode = #tpu.pipeline_mode<synchronous>, transform_indices = @transform_28, window_bounds = array<i64: 3, 128, 128>}, {pipeline_mode = #tpu.pipeline_mode<synchronous>, transform_indices = @transform_29, window_bounds = array<i64: 1, 128>}, {pipeline_mode = #tpu.pipeline_mode<synchronous>, transform_indices = @transform_30, window_bounds = array<i64: 3, 128, 128>}, {pipeline_mode = #tpu.pipeline_mode<synchronous>, transform_indices = @transform_31, window_bounds = array<i64: 1, 128>}, {pipeline_mode = #tpu.pipeline_mode<synchronous>, transform_indices = @transform_32, window_bounds = array<i64: 2, 128, 128>}, {pipeline_mode = #tpu.pipeline_mode<synchronous>, transform_indices = @transform_33, window_bounds = array<i64: 1, 128>}, {pipeline_mode = #tpu.pipeline_mode<synchronous>, transform_indices = @transform_34, window_bounds = array<i64: 3, 128, 128>}, {pipeline_mode = #tpu.pipeline_mode<synchronous>, transform_indices = @transform_35, window_bounds = array<i64: 3, 128, 128>}, {pipeline_mode = #tpu.pipeline_mode<synchronous>, transform_indices = @transform_36, window_bounds = array<i64: 1, 128>}, {pipeline_mode = #tpu.pipeline_mode<synchronous>, transform_indices = @transform_37, window_bounds = array<i64: 3, 128, 128>}, {pipeline_mode = #tpu.pipeline_mode<synchronous>, transform_indices = @transform_38, window_bounds = array<i64: 1, 128>}, {pipeline_mode = #tpu.pipeline_mode<synchronous>, transform_indices = @transform_39, window_bounds = array<i64: 2, 128, 128>}, {pipeline_mode = #tpu.pipeline_mode<synchronous>, transform_indices = @transform_40, window_bounds = array<i64: 1, 128>}, {pipeline_mode = #tpu.pipeline_mode<synchronous>, transform_indices = @transform_41, window_bounds = array<i64: 3, 128, 128>}, {pipeline_mode = #tpu.pipeline_mode<synchronous>, transform_indices = @transform_42, window_bounds = array<i64: 3, 128, 128>}, {pipeline_mode = #tpu.pipeline_mode<synchronous>, transform_indices = @transform_43, window_bounds = array<i64: 1, 128>}, {pipeline_mode = #tpu.pipeline_mode<synchronous>, transform_indices = @transform_44, window_bounds = array<i64: 3, 128, 128>}, {pipeline_mode = #tpu.pipeline_mode<synchronous>, transform_indices = @transform_45, window_bounds = array<i64: 1, 128>}, {pipeline_mode = #tpu.pipeline_mode<synchronous>, transform_indices = @transform_46, window_bounds = array<i64: 2, 128, 128>}, {pipeline_mode = #tpu.pipeline_mode<synchronous>, transform_indices = @transform_47, window_bounds = array<i64: 1, 128>}, {pipeline_mode = #tpu.pipeline_mode<synchronous>, transform_indices = @transform_48, window_bounds = array<i64: 3, 128, 128>}, {pipeline_mode = #tpu.pipeline_mode<synchronous>, transform_indices = @transform_49, window_bounds = array<i64: 3, 128, 128>}, {pipeline_mode = #tpu.pipeline_mode<synchronous>, transform_indices = @transform_50, window_bounds = array<i64: 1, 128>}, {pipeline_mode = #tpu.pipeline_mode<synchronous>, transform_indices = @transform_51, window_bounds = array<i64: 3, 128, 128>}, {pipeline_mode = #tpu.pipeline_mode<synchronous>, transform_indices = @transform_52, window_bounds = array<i64: 1, 128>}, {pipeline_mode = #tpu.pipeline_mode<synchronous>, transform_indices = @transform_53, window_bounds = array<i64: 128, 256>}, {pipeline_mode = #tpu.pipeline_mode<synchronous>, transform_indices = @transform_54, window_bounds = array<i64: 1, 256>}, {transform_indices = @transform_55, window_bounds = array<i64: 16, 256>}]} {
    %c0 = arith.constant 0 : index
    %c0_0 = arith.constant 0 : index
    %0 = vector.load %arg1[%c0, %c0_0] : memref<16x64xbf16, #tpu.memory_space<vmem>>, vector<16x64xbf16>
    %c1 = arith.constant 1 : index
    %c0_1 = arith.constant 0 : index
    %c0_2 = arith.constant 0 : index
    %1 = vector.load %arg2[%c1, %c0_1, %c0_2] : memref<3x64x128xbf16, #tpu.memory_space<vmem>>, vector<1x64x128xbf16>
    %2 = vector.shape_cast %1 : vector<1x64x128xbf16> to vector<64x128xbf16>
    %cst = arith.constant dense<0.000000e+00> : vector<16x128xf32>
    %3 = tpu.matmul %0, %2, %cst {dimension_numbers = #tpu.dot_dimension_numbers<[1], [0], [0], [1], [0, 0, 1, 1], [], []>} : vector<16x64xbf16>, vector<64x128xbf16>, vector<16x128xf32> -> vector<16x128xf32>
    %cst_3 = arith.constant 0.000000e+00 : bf16
    %4 = vector.broadcast %cst_3 : bf16 to vector<1x64xbf16>
    %5 = vector.extract_strided_slice %0 {offsets = [0, 0], sizes = [15, 64], strides = [1, 1]} : vector<16x64xbf16> to vector<15x64xbf16>
    %6 = tpu.concatenate %4, %5 in 0 : vector<1x64xbf16>, vector<15x64xbf16> -> vector<16x64xbf16>
    %c0_4 = arith.constant 0 : index
    %c0_5 = arith.constant 0 : index
    %c0_6 = arith.constant 0 : index
    %7 = vector.load %arg2[%c0_4, %c0_5, %c0_6] : memref<3x64x128xbf16, #tpu.memory_space<vmem>>, vector<1x64x128xbf16>
    %8 = vector.shape_cast %7 : vector<1x64x128xbf16> to vector<64x128xbf16>
    %cst_7 = arith.constant dense<0.000000e+00> : vector<16x128xf32>
    %9 = tpu.matmul %6, %8, %cst_7 {dimension_numbers = #tpu.dot_dimension_numbers<[1], [0], [0], [1], [0, 0, 1, 1], [], []>} : vector<16x64xbf16>, vector<64x128xbf16>, vector<16x128xf32> -> vector<16x128xf32>
    %10 = arith.addf %3, %9 : vector<16x128xf32>
    %11 = vector.extract_strided_slice %0 {offsets = [1, 0], sizes = [15, 64], strides = [1, 1]} : vector<16x64xbf16> to vector<15x64xbf16>
    %cst_8 = arith.constant 0.000000e+00 : bf16
    %12 = vector.broadcast %cst_8 : bf16 to vector<1x64xbf16>
    %13 = tpu.concatenate %11, %12 in 0 : vector<15x64xbf16>, vector<1x64xbf16> -> vector<16x64xbf16>
    %c2 = arith.constant 2 : index
    %c0_9 = arith.constant 0 : index
    %c0_10 = arith.constant 0 : index
    %14 = vector.load %arg2[%c2, %c0_9, %c0_10] : memref<3x64x128xbf16, #tpu.memory_space<vmem>>, vector<1x64x128xbf16>
    %15 = vector.shape_cast %14 : vector<1x64x128xbf16> to vector<64x128xbf16>
    %cst_11 = arith.constant dense<0.000000e+00> : vector<16x128xf32>
    %16 = tpu.matmul %13, %15, %cst_11 {dimension_numbers = #tpu.dot_dimension_numbers<[1], [0], [0], [1], [0, 0, 1, 1], [], []>} : vector<16x64xbf16>, vector<64x128xbf16>, vector<16x128xf32> -> vector<16x128xf32>
    %17 = arith.addf %10, %16 : vector<16x128xf32>
    %c0_12 = arith.constant 0 : index
    %c0_13 = arith.constant 0 : index
    %18 = vector.load %arg3[%c0_12, %c0_13] : memref<1x128xf32, #tpu.memory_space<vmem>>, vector<1x128xf32>
    %19 = vector.broadcast %18 : vector<1x128xf32> to vector<16x128xf32>
    %20 = arith.addf %17, %19 : vector<16x128xf32>
    %cst_14 = arith.constant 0.000000e+00 : f32
    %21 = vector.broadcast %cst_14 : f32 to vector<16x128xf32>
    %22 = arith.maximumf %20, %21 : vector<16x128xf32>
    %23 = arith.truncf %22 : vector<16x128xf32> to vector<16x128xbf16>
    %c1_15 = arith.constant 1 : index
    %c0_16 = arith.constant 0 : index
    %c0_17 = arith.constant 0 : index
    %24 = vector.load %arg4[%c1_15, %c0_16, %c0_17] : memref<3x128x128xbf16, #tpu.memory_space<vmem>>, vector<1x128x128xbf16>
    %25 = vector.shape_cast %24 : vector<1x128x128xbf16> to vector<128x128xbf16>
    %cst_18 = arith.constant dense<0.000000e+00> : vector<16x128xf32>
    %26 = tpu.matmul %23, %25, %cst_18 {dimension_numbers = #tpu.dot_dimension_numbers<[1], [0], [0], [1], [0, 0, 1, 1], [], []>} : vector<16x128xbf16>, vector<128x128xbf16>, vector<16x128xf32> -> vector<16x128xf32>
    %cst_19 = arith.constant 0.000000e+00 : bf16
    %27 = vector.broadcast %cst_19 : bf16 to vector<1x128xbf16>
    %28 = vector.extract_strided_slice %23 {offsets = [0, 0], sizes = [15, 128], strides = [1, 1]} : vector<16x128xbf16> to vector<15x128xbf16>
    %29 = tpu.concatenate %27, %28 in 0 : vector<1x128xbf16>, vector<15x128xbf16> -> vector<16x128xbf16>
    %c0_20 = arith.constant 0 : index
    %c0_21 = arith.constant 0 : index
    %c0_22 = arith.constant 0 : index
    %30 = vector.load %arg4[%c0_20, %c0_21, %c0_22] : memref<3x128x128xbf16, #tpu.memory_space<vmem>>, vector<1x128x128xbf16>
    %31 = vector.shape_cast %30 : vector<1x128x128xbf16> to vector<128x128xbf16>
    %cst_23 = arith.constant dense<0.000000e+00> : vector<16x128xf32>
    %32 = tpu.matmul %29, %31, %cst_23 {dimension_numbers = #tpu.dot_dimension_numbers<[1], [0], [0], [1], [0, 0, 1, 1], [], []>} : vector<16x128xbf16>, vector<128x128xbf16>, vector<16x128xf32> -> vector<16x128xf32>
    %33 = arith.addf %26, %32 : vector<16x128xf32>
    %34 = vector.extract_strided_slice %23 {offsets = [1, 0], sizes = [15, 128], strides = [1, 1]} : vector<16x128xbf16> to vector<15x128xbf16>
    %cst_24 = arith.constant 0.000000e+00 : bf16
    %35 = vector.broadcast %cst_24 : bf16 to vector<1x128xbf16>
    %36 = tpu.concatenate %34, %35 in 0 : vector<15x128xbf16>, vector<1x128xbf16> -> vector<16x128xbf16>
    %c2_25 = arith.constant 2 : index
    %c0_26 = arith.constant 0 : index
    %c0_27 = arith.constant 0 : index
    %37 = vector.load %arg4[%c2_25, %c0_26, %c0_27] : memref<3x128x128xbf16, #tpu.memory_space<vmem>>, vector<1x128x128xbf16>
    %38 = vector.shape_cast %37 : vector<1x128x128xbf16> to vector<128x128xbf16>
    %cst_28 = arith.constant dense<0.000000e+00> : vector<16x128xf32>
    %39 = tpu.matmul %36, %38, %cst_28 {dimension_numbers = #tpu.dot_dimension_numbers<[1], [0], [0], [1], [0, 0, 1, 1], [], []>} : vector<16x128xbf16>, vector<128x128xbf16>, vector<16x128xf32> -> vector<16x128xf32>
    %40 = arith.addf %33, %39 : vector<16x128xf32>
    %c0_29 = arith.constant 0 : index
    %c0_30 = arith.constant 0 : index
    %41 = vector.load %arg5[%c0_29, %c0_30] : memref<1x128xf32, #tpu.memory_space<vmem>>, vector<1x128xf32>
    %42 = vector.broadcast %41 : vector<1x128xf32> to vector<16x128xf32>
    %43 = arith.addf %40, %42 : vector<16x128xf32>
    %cst_31 = arith.constant 0.000000e+00 : f32
    %44 = vector.broadcast %cst_31 : f32 to vector<16x128xf32>
    %45 = arith.maximumf %43, %44 : vector<16x128xf32>
    %46 = arith.truncf %45 : vector<16x128xf32> to vector<16x128xbf16>
    %c0_32 = arith.constant 0 : index
    %c0_33 = arith.constant 0 : index
    %47 = vector.load %arg57[%c0_32, %c0_33] : memref<16x128xf32, #tpu.memory_space<vmem>>, vector<16x128xf32>
    tpu.vector_store %arg57[%c0_32, %c0_33], %45 {strides = array<i32>} : memref<16x128xf32, #tpu.memory_space<vmem>>, vector<16x128xf32>,
    %c0_34 = arith.constant 0 : index
    %c0_35 = arith.constant 0 : index
    %48 = tpu.strided_load %arg57[%c0_34, %c0_35] {strides = array<i32: 2, 1>} : memref<16x128xf32, #tpu.memory_space<vmem>>, vector<8x128xf32>
    %c1_36 = arith.constant 1 : index
    %c0_37 = arith.constant 0 : index
    %49 = tpu.strided_load %arg57[%c1_36, %c0_37] {strides = array<i32: 2, 1>} : memref<16x128xf32, #tpu.memory_space<vmem>>, vector<8x128xf32>
    %50 = arith.maximumf %48, %49 : vector<8x128xf32>
    %51 = arith.truncf %50 : vector<8x128xf32> to vector<8x128xbf16>
    %c0_38 = arith.constant 0 : index
    %c0_39 = arith.constant 0 : index
    %c0_40 = arith.constant 0 : index
    %52 = vector.load %arg6[%c0_38, %c0_39, %c0_40] : memref<2x128x64xbf16, #tpu.memory_space<vmem>>, vector<1x128x64xbf16>
    %53 = vector.shape_cast %52 : vector<1x128x64xbf16> to vector<128x64xbf16>
    %cst_41 = arith.constant dense<0.000000e+00> : vector<8x64xf32>
    %54 = tpu.matmul %51, %53, %cst_41 {dimension_numbers = #tpu.dot_dimension_numbers<[1], [0], [0], [1], [0, 0, 1, 1], [], []>} : vector<8x128xbf16>, vector<128x64xbf16>, vector<8x64xf32> -> vector<8x64xf32>
    %c1_42 = arith.constant 1 : index
    %c0_43 = arith.constant 0 : index
    %c0_44 = arith.constant 0 : index
    %55 = vector.load %arg6[%c1_42, %c0_43, %c0_44] : memref<2x128x64xbf16, #tpu.memory_space<vmem>>, vector<1x128x64xbf16>
    %56 = vector.shape_cast %55 : vector<1x128x64xbf16> to vector<128x64xbf16>
    %cst_45 = arith.constant dense<0.000000e+00> : vector<8x64xf32>
    %57 = tpu.matmul %51, %56, %cst_45 {dimension_numbers = #tpu.dot_dimension_numbers<[1], [0], [0], [1], [0, 0, 1, 1], [], []>} : vector<8x128xbf16>, vector<128x64xbf16>, vector<8x64xf32> -> vector<8x64xf32>
    %58 = arith.maximumf %54, %57 : vector<8x64xf32>
    %59 = arith.truncf %58 : vector<8x64xf32> to vector<8x64xbf16>
    %c1_46 = arith.constant 1 : index
    %c0_47 = arith.constant 0 : index
    %c0_48 = arith.constant 0 : index
    %60 = vector.load %arg7[%c1_46, %c0_47, %c0_48] : memref<3x64x128xbf16, #tpu.memory_space<vmem>>, vector<1x64x128xbf16>
    %61 = vector.shape_cast %60 : vector<1x64x128xbf16> to vector<64x128xbf16>
    %cst_49 = arith.constant dense<0.000000e+00> : vector<8x128xf32>
    %62 = tpu.matmul %59, %61, %cst_49 {dimension_numbers = #tpu.dot_dimension_numbers<[1], [0], [0], [1], [0, 0, 1, 1], [], []>} : vector<8x64xbf16>, vector<64x128xbf16>, vector<8x128xf32> -> vector<8x128xf32>
    %cst_50 = arith.constant 0.000000e+00 : bf16
    %63 = vector.broadcast %cst_50 : bf16 to vector<1x64xbf16>
    %64 = vector.extract_strided_slice %59 {offsets = [0, 0], sizes = [7, 64], strides = [1, 1]} : vector<8x64xbf16> to vector<7x64xbf16>
    %65 = tpu.concatenate %63, %64 in 0 : vector<1x64xbf16>, vector<7x64xbf16> -> vector<8x64xbf16>
    %c0_51 = arith.constant 0 : index
    %c0_52 = arith.constant 0 : index
    %c0_53 = arith.constant 0 : index
    %66 = vector.load %arg7[%c0_51, %c0_52, %c0_53] : memref<3x64x128xbf16, #tpu.memory_space<vmem>>, vector<1x64x128xbf16>
    %67 = vector.shape_cast %66 : vector<1x64x128xbf16> to vector<64x128xbf16>
    %cst_54 = arith.constant dense<0.000000e+00> : vector<8x128xf32>
    %68 = tpu.matmul %65, %67, %cst_54 {dimension_numbers = #tpu.dot_dimension_numbers<[1], [0], [0], [1], [0, 0, 1, 1], [], []>} : vector<8x64xbf16>, vector<64x128xbf16>, vector<8x128xf32> -> vector<8x128xf32>
    %69 = arith.addf %62, %68 : vector<8x128xf32>
    %70 = vector.extract_strided_slice %59 {offsets = [1, 0], sizes = [7, 64], strides = [1, 1]} : vector<8x64xbf16> to vector<7x64xbf16>
    %cst_55 = arith.constant 0.000000e+00 : bf16
    %71 = vector.broadcast %cst_55 : bf16 to vector<1x64xbf16>
    %72 = tpu.concatenate %70, %71 in 0 : vector<7x64xbf16>, vector<1x64xbf16> -> vector<8x64xbf16>
    %c2_56 = arith.constant 2 : index
    %c0_57 = arith.constant 0 : index
    %c0_58 = arith.constant 0 : index
    %73 = vector.load %arg7[%c2_56, %c0_57, %c0_58] : memref<3x64x128xbf16, #tpu.memory_space<vmem>>, vector<1x64x128xbf16>
    %74 = vector.shape_cast %73 : vector<1x64x128xbf16> to vector<64x128xbf16>
    %cst_59 = arith.constant dense<0.000000e+00> : vector<8x128xf32>
    %75 = tpu.matmul %72, %74, %cst_59 {dimension_numbers = #tpu.dot_dimension_numbers<[1], [0], [0], [1], [0, 0, 1, 1], [], []>} : vector<8x64xbf16>, vector<64x128xbf16>, vector<8x128xf32> -> vector<8x128xf32>
    %76 = arith.addf %69, %75 : vector<8x128xf32>
    %c0_60 = arith.constant 0 : index
    %c0_61 = arith.constant 0 : index
    %77 = vector.load %arg8[%c0_60, %c0_61] : memref<1x128xf32, #tpu.memory_space<vmem>>, vector<1x128xf32>
    %78 = vector.broadcast %77 : vector<1x128xf32> to vector<8x128xf32>
    %79 = arith.addf %76, %78 : vector<8x128xf32>
    %cst_62 = arith.constant 0.000000e+00 : f32
    %80 = vector.broadcast %cst_62 : f32 to vector<8x128xf32>
    %81 = arith.maximumf %79, %80 : vector<8x128xf32>
    %82 = arith.truncf %81 : vector<8x128xf32> to vector<8x128xbf16>
    %c1_63 = arith.constant 1 : index
    %c0_64 = arith.constant 0 : index
    %c0_65 = arith.constant 0 : index
    %83 = vector.load %arg9[%c1_63, %c0_64, %c0_65] : memref<3x128x128xbf16, #tpu.memory_space<vmem>>, vector<1x128x128xbf16>
    %84 = vector.shape_cast %83 : vector<1x128x128xbf16> to vector<128x128xbf16>
    %cst_66 = arith.constant dense<0.000000e+00> : vector<8x128xf32>
    %85 = tpu.matmul %82, %84, %cst_66 {dimension_numbers = #tpu.dot_dimension_numbers<[1], [0], [0], [1], [0, 0, 1, 1], [], []>} : vector<8x128xbf16>, vector<128x128xbf16>, vector<8x128xf32> -> vector<8x128xf32>
    %cst_67 = arith.constant 0.000000e+00 : bf16
    %86 = vector.broadcast %cst_67 : bf16 to vector<1x128xbf16>
    %87 = vector.extract_strided_slice %82 {offsets = [0, 0], sizes = [7, 128], strides = [1, 1]} : vector<8x128xbf16> to vector<7x128xbf16>
    %88 = tpu.concatenate %86, %87 in 0 : vector<1x128xbf16>, vector<7x128xbf16> -> vector<8x128xbf16>
    %c0_68 = arith.constant 0 : index
    %c0_69 = arith.constant 0 : index
    %c0_70 = arith.constant 0 : index
    %89 = vector.load %arg9[%c0_68, %c0_69, %c0_70] : memref<3x128x128xbf16, #tpu.memory_space<vmem>>, vector<1x128x128xbf16>
    %90 = vector.shape_cast %89 : vector<1x128x128xbf16> to vector<128x128xbf16>
    %cst_71 = arith.constant dense<0.000000e+00> : vector<8x128xf32>
    %91 = tpu.matmul %88, %90, %cst_71 {dimension_numbers = #tpu.dot_dimension_numbers<[1], [0], [0], [1], [0, 0, 1, 1], [], []>} : vector<8x128xbf16>, vector<128x128xbf16>, vector<8x128xf32> -> vector<8x128xf32>
    %92 = arith.addf %85, %91 : vector<8x128xf32>
    %93 = vector.extract_strided_slice %82 {offsets = [1, 0], sizes = [7, 128], strides = [1, 1]} : vector<8x128xbf16> to vector<7x128xbf16>
    %cst_72 = arith.constant 0.000000e+00 : bf16
    %94 = vector.broadcast %cst_72 : bf16 to vector<1x128xbf16>
    %95 = tpu.concatenate %93, %94 in 0 : vector<7x128xbf16>, vector<1x128xbf16> -> vector<8x128xbf16>
    %c2_73 = arith.constant 2 : index
    %c0_74 = arith.constant 0 : index
    %c0_75 = arith.constant 0 : index
    %96 = vector.load %arg9[%c2_73, %c0_74, %c0_75] : memref<3x128x128xbf16, #tpu.memory_space<vmem>>, vector<1x128x128xbf16>
    %97 = vector.shape_cast %96 : vector<1x128x128xbf16> to vector<128x128xbf16>
    %cst_76 = arith.constant dense<0.000000e+00> : vector<8x128xf32>
    %98 = tpu.matmul %95, %97, %cst_76 {dimension_numbers = #tpu.dot_dimension_numbers<[1], [0], [0], [1], [0, 0, 1, 1], [], []>} : vector<8x128xbf16>, vector<128x128xbf16>, vector<8x128xf32> -> vector<8x128xf32>
    %99 = arith.addf %92, %98 : vector<8x128xf32>
    %c0_77 = arith.constant 0 : index
    %c0_78 = arith.constant 0 : index
    %100 = vector.load %arg10[%c0_77, %c0_78] : memref<1x128xf32, #tpu.memory_space<vmem>>, vector<1x128xf32>
    %101 = vector.broadcast %100 : vector<1x128xf32> to vector<8x128xf32>
    %102 = arith.addf %99, %101 : vector<8x128xf32>
    %cst_79 = arith.constant 0.000000e+00 : f32
    %103 = vector.broadcast %cst_79 : f32 to vector<8x128xf32>
    %104 = arith.maximumf %102, %103 : vector<8x128xf32>
    %105 = arith.truncf %104 : vector<8x128xf32> to vector<8x128xbf16>
    %c0_80 = arith.constant 0 : index
    %c0_81 = arith.constant 0 : index
    %106 = vector.load %arg58[%c0_80, %c0_81] : memref<8x128xf32, #tpu.memory_space<vmem>>, vector<8x128xf32>
    tpu.vector_store %arg58[%c0_80, %c0_81], %104 {strides = array<i32>} : memref<8x128xf32, #tpu.memory_space<vmem>>, vector<8x128xf32>,
    %c0_82 = arith.constant 0 : index
    %c0_83 = arith.constant 0 : index
    %107 = tpu.strided_load %arg58[%c0_82, %c0_83] {strides = array<i32: 2, 1>} : memref<8x128xf32, #tpu.memory_space<vmem>>, vector<4x128xf32>
    %c1_84 = arith.constant 1 : index
    %c0_85 = arith.constant 0 : index
    %108 = tpu.strided_load %arg58[%c1_84, %c0_85] {strides = array<i32: 2, 1>} : memref<8x128xf32, #tpu.memory_space<vmem>>, vector<4x128xf32>
    %109 = arith.maximumf %107, %108 : vector<4x128xf32>
    %110 = arith.truncf %109 : vector<4x128xf32> to vector<4x128xbf16>
    %c0_86 = arith.constant 0 : index
    %c0_87 = arith.constant 0 : index
    %c0_88 = arith.constant 0 : index
    %111 = vector.load %arg11[%c0_86, %c0_87, %c0_88] : memref<2x128x64xbf16, #tpu.memory_space<vmem>>, vector<1x128x64xbf16>
    %112 = vector.shape_cast %111 : vector<1x128x64xbf16> to vector<128x64xbf16>
    %cst_89 = arith.constant dense<0.000000e+00> : vector<4x64xf32>
    %113 = tpu.matmul %110, %112, %cst_89 {dimension_numbers = #tpu.dot_dimension_numbers<[1], [0], [0], [1], [0, 0, 1, 1], [], []>} : vector<4x128xbf16>, vector<128x64xbf16>, vector<4x64xf32> -> vector<4x64xf32>
    %c1_90 = arith.constant 1 : index
    %c0_91 = arith.constant 0 : index
    %c0_92 = arith.constant 0 : index
    %114 = vector.load %arg11[%c1_90, %c0_91, %c0_92] : memref<2x128x64xbf16, #tpu.memory_space<vmem>>, vector<1x128x64xbf16>
    %115 = vector.shape_cast %114 : vector<1x128x64xbf16> to vector<128x64xbf16>
    %cst_93 = arith.constant dense<0.000000e+00> : vector<4x64xf32>
    %116 = tpu.matmul %110, %115, %cst_93 {dimension_numbers = #tpu.dot_dimension_numbers<[1], [0], [0], [1], [0, 0, 1, 1], [], []>} : vector<4x128xbf16>, vector<128x64xbf16>, vector<4x64xf32> -> vector<4x64xf32>
    %117 = arith.maximumf %113, %116 : vector<4x64xf32>
    %118 = arith.truncf %117 : vector<4x64xf32> to vector<4x64xbf16>
    %c1_94 = arith.constant 1 : index
    %c0_95 = arith.constant 0 : index
    %c0_96 = arith.constant 0 : index
    %119 = vector.load %arg12[%c1_94, %c0_95, %c0_96] : memref<3x64x128xbf16, #tpu.memory_space<vmem>>, vector<1x64x128xbf16>
    %120 = vector.shape_cast %119 : vector<1x64x128xbf16> to vector<64x128xbf16>
    %cst_97 = arith.constant dense<0.000000e+00> : vector<4x128xf32>
    %121 = tpu.matmul %118, %120, %cst_97 {dimension_numbers = #tpu.dot_dimension_numbers<[1], [0], [0], [1], [0, 0, 1, 1], [], []>} : vector<4x64xbf16>, vector<64x128xbf16>, vector<4x128xf32> -> vector<4x128xf32>
    %cst_98 = arith.constant 0.000000e+00 : bf16
    %122 = vector.broadcast %cst_98 : bf16 to vector<1x64xbf16>
    %123 = vector.extract_strided_slice %118 {offsets = [0, 0], sizes = [3, 64], strides = [1, 1]} : vector<4x64xbf16> to vector<3x64xbf16>
    %124 = tpu.concatenate %122, %123 in 0 : vector<1x64xbf16>, vector<3x64xbf16> -> vector<4x64xbf16>
    %c0_99 = arith.constant 0 : index
    %c0_100 = arith.constant 0 : index
    %c0_101 = arith.constant 0 : index
    %125 = vector.load %arg12[%c0_99, %c0_100, %c0_101] : memref<3x64x128xbf16, #tpu.memory_space<vmem>>, vector<1x64x128xbf16>
    %126 = vector.shape_cast %125 : vector<1x64x128xbf16> to vector<64x128xbf16>
    %cst_102 = arith.constant dense<0.000000e+00> : vector<4x128xf32>
    %127 = tpu.matmul %124, %126, %cst_102 {dimension_numbers = #tpu.dot_dimension_numbers<[1], [0], [0], [1], [0, 0, 1, 1], [], []>} : vector<4x64xbf16>, vector<64x128xbf16>, vector<4x128xf32> -> vector<4x128xf32>
    %128 = arith.addf %121, %127 : vector<4x128xf32>
    %129 = vector.extract_strided_slice %118 {offsets = [1, 0], sizes = [3, 64], strides = [1, 1]} : vector<4x64xbf16> to vector<3x64xbf16>
    %cst_103 = arith.constant 0.000000e+00 : bf16
    %130 = vector.broadcast %cst_103 : bf16 to vector<1x64xbf16>
    %131 = tpu.concatenate %129, %130 in 0 : vector<3x64xbf16>, vector<1x64xbf16> -> vector<4x64xbf16>
    %c2_104 = arith.constant 2 : index
    %c0_105 = arith.constant 0 : index
    %c0_106 = arith.constant 0 : index
    %132 = vector.load %arg12[%c2_104, %c0_105, %c0_106] : memref<3x64x128xbf16, #tpu.memory_space<vmem>>, vector<1x64x128xbf16>
    %133 = vector.shape_cast %132 : vector<1x64x128xbf16> to vector<64x128xbf16>
    %cst_107 = arith.constant dense<0.000000e+00> : vector<4x128xf32>
    %134 = tpu.matmul %131, %133, %cst_107 {dimension_numbers = #tpu.dot_dimension_numbers<[1], [0], [0], [1], [0, 0, 1, 1], [], []>} : vector<4x64xbf16>, vector<64x128xbf16>, vector<4x128xf32> -> vector<4x128xf32>
    %135 = arith.addf %128, %134 : vector<4x128xf32>
    %c0_108 = arith.constant 0 : index
    %c0_109 = arith.constant 0 : index
    %136 = vector.load %arg13[%c0_108, %c0_109] : memref<1x128xf32, #tpu.memory_space<vmem>>, vector<1x128xf32>
    %137 = vector.broadcast %136 : vector<1x128xf32> to vector<4x128xf32>
    %138 = arith.addf %135, %137 : vector<4x128xf32>
    %cst_110 = arith.constant 0.000000e+00 : f32
    %139 = vector.broadcast %cst_110 : f32 to vector<4x128xf32>
    %140 = arith.maximumf %138, %139 : vector<4x128xf32>
    %141 = arith.truncf %140 : vector<4x128xf32> to vector<4x128xbf16>
    %c1_111 = arith.constant 1 : index
    %c0_112 = arith.constant 0 : index
    %c0_113 = arith.constant 0 : index
    %142 = vector.load %arg14[%c1_111, %c0_112, %c0_113] : memref<3x128x128xbf16, #tpu.memory_space<vmem>>, vector<1x128x128xbf16>
    %143 = vector.shape_cast %142 : vector<1x128x128xbf16> to vector<128x128xbf16>
    %cst_114 = arith.constant dense<0.000000e+00> : vector<4x128xf32>
    %144 = tpu.matmul %141, %143, %cst_114 {dimension_numbers = #tpu.dot_dimension_numbers<[1], [0], [0], [1], [0, 0, 1, 1], [], []>} : vector<4x128xbf16>, vector<128x128xbf16>, vector<4x128xf32> -> vector<4x128xf32>
    %cst_115 = arith.constant 0.000000e+00 : bf16
    %145 = vector.broadcast %cst_115 : bf16 to vector<1x128xbf16>
    %146 = vector.extract_strided_slice %141 {offsets = [0, 0], sizes = [3, 128], strides = [1, 1]} : vector<4x128xbf16> to vector<3x128xbf16>
    %147 = tpu.concatenate %145, %146 in 0 : vector<1x128xbf16>, vector<3x128xbf16> -> vector<4x128xbf16>
    %c0_116 = arith.constant 0 : index
    %c0_117 = arith.constant 0 : index
    %c0_118 = arith.constant 0 : index
    %148 = vector.load %arg14[%c0_116, %c0_117, %c0_118] : memref<3x128x128xbf16, #tpu.memory_space<vmem>>, vector<1x128x128xbf16>
    %149 = vector.shape_cast %148 : vector<1x128x128xbf16> to vector<128x128xbf16>
    %cst_119 = arith.constant dense<0.000000e+00> : vector<4x128xf32>
    %150 = tpu.matmul %147, %149, %cst_119 {dimension_numbers = #tpu.dot_dimension_numbers<[1], [0], [0], [1], [0, 0, 1, 1], [], []>} : vector<4x128xbf16>, vector<128x128xbf16>, vector<4x128xf32> -> vector<4x128xf32>
    %151 = arith.addf %144, %150 : vector<4x128xf32>
    %152 = vector.extract_strided_slice %141 {offsets = [1, 0], sizes = [3, 128], strides = [1, 1]} : vector<4x128xbf16> to vector<3x128xbf16>
    %cst_120 = arith.constant 0.000000e+00 : bf16
    %153 = vector.broadcast %cst_120 : bf16 to vector<1x128xbf16>
    %154 = tpu.concatenate %152, %153 in 0 : vector<3x128xbf16>, vector<1x128xbf16> -> vector<4x128xbf16>
    %c2_121 = arith.constant 2 : index
    %c0_122 = arith.constant 0 : index
    %c0_123 = arith.constant 0 : index
    %155 = vector.load %arg14[%c2_121, %c0_122, %c0_123] : memref<3x128x128xbf16, #tpu.memory_space<vmem>>, vector<1x128x128xbf16>
    %156 = vector.shape_cast %155 : vector<1x128x128xbf16> to vector<128x128xbf16>
    %cst_124 = arith.constant dense<0.000000e+00> : vector<4x128xf32>
    %157 = tpu.matmul %154, %156, %cst_124 {dimension_numbers = #tpu.dot_dimension_numbers<[1], [0], [0], [1], [0, 0, 1, 1], [], []>} : vector<4x128xbf16>, vector<128x128xbf16>, vector<4x128xf32> -> vector<4x128xf32>
    %158 = arith.addf %151, %157 : vector<4x128xf32>
    %c0_125 = arith.constant 0 : index
    %c0_126 = arith.constant 0 : index
    %159 = vector.load %arg15[%c0_125, %c0_126] : memref<1x128xf32, #tpu.memory_space<vmem>>, vector<1x128xf32>
    %160 = vector.broadcast %159 : vector<1x128xf32> to vector<4x128xf32>
    %161 = arith.addf %158, %160 : vector<4x128xf32>
    %cst_127 = arith.constant 0.000000e+00 : f32
    %162 = vector.broadcast %cst_127 : f32 to vector<4x128xf32>
    %163 = arith.maximumf %161, %162 : vector<4x128xf32>
    %164 = arith.truncf %163 : vector<4x128xf32> to vector<4x128xbf16>
    %c0_128 = arith.constant 0 : index
    %c0_129 = arith.constant 0 : index
    %165 = vector.load %arg59[%c0_128, %c0_129] : memref<4x128xf32, #tpu.memory_space<vmem>>, vector<4x128xf32>
    tpu.vector_store %arg59[%c0_128, %c0_129], %163 {strides = array<i32>} : memref<4x128xf32, #tpu.memory_space<vmem>>, vector<4x128xf32>,
    %c0_130 = arith.constant 0 : index
    %c0_131 = arith.constant 0 : index
    %166 = tpu.strided_load %arg59[%c0_130, %c0_131] {strides = array<i32: 2, 1>} : memref<4x128xf32, #tpu.memory_space<vmem>>, vector<2x128xf32>
    %c1_132 = arith.constant 1 : index
    %c0_133 = arith.constant 0 : index
    %167 = tpu.strided_load %arg59[%c1_132, %c0_133] {strides = array<i32: 2, 1>} : memref<4x128xf32, #tpu.memory_space<vmem>>, vector<2x128xf32>
    %168 = arith.maximumf %166, %167 : vector<2x128xf32>
    %169 = arith.truncf %168 : vector<2x128xf32> to vector<2x128xbf16>
    %c0_134 = arith.constant 0 : index
    %c0_135 = arith.constant 0 : index
    %c0_136 = arith.constant 0 : index
    %170 = vector.load %arg16[%c0_134, %c0_135, %c0_136] : memref<2x128x64xbf16, #tpu.memory_space<vmem>>, vector<1x128x64xbf16>
    %171 = vector.shape_cast %170 : vector<1x128x64xbf16> to vector<128x64xbf16>
    %cst_137 = arith.constant dense<0.000000e+00> : vector<2x64xf32>
    %172 = tpu.matmul %169, %171, %cst_137 {dimension_numbers = #tpu.dot_dimension_numbers<[1], [0], [0], [1], [0, 0, 1, 1], [], []>} : vector<2x128xbf16>, vector<128x64xbf16>, vector<2x64xf32> -> vector<2x64xf32>
    %c1_138 = arith.constant 1 : index
    %c0_139 = arith.constant 0 : index
    %c0_140 = arith.constant 0 : index
    %173 = vector.load %arg16[%c1_138, %c0_139, %c0_140] : memref<2x128x64xbf16, #tpu.memory_space<vmem>>, vector<1x128x64xbf16>
    %174 = vector.shape_cast %173 : vector<1x128x64xbf16> to vector<128x64xbf16>
    %cst_141 = arith.constant dense<0.000000e+00> : vector<2x64xf32>
    %175 = tpu.matmul %169, %174, %cst_141 {dimension_numbers = #tpu.dot_dimension_numbers<[1], [0], [0], [1], [0, 0, 1, 1], [], []>} : vector<2x128xbf16>, vector<128x64xbf16>, vector<2x64xf32> -> vector<2x64xf32>
    %176 = arith.maximumf %172, %175 : vector<2x64xf32>
    %177 = arith.truncf %176 : vector<2x64xf32> to vector<2x64xbf16>
    %c1_142 = arith.constant 1 : index
    %c0_143 = arith.constant 0 : index
    %c0_144 = arith.constant 0 : index
    %178 = vector.load %arg17[%c1_142, %c0_143, %c0_144] : memref<3x64x128xbf16, #tpu.memory_space<vmem>>, vector<1x64x128xbf16>
    %179 = vector.shape_cast %178 : vector<1x64x128xbf16> to vector<64x128xbf16>
    %cst_145 = arith.constant dense<0.000000e+00> : vector<2x128xf32>
    %180 = tpu.matmul %177, %179, %cst_145 {dimension_numbers = #tpu.dot_dimension_numbers<[1], [0], [0], [1], [0, 0, 1, 1], [], []>} : vector<2x64xbf16>, vector<64x128xbf16>, vector<2x128xf32> -> vector<2x128xf32>
    %cst_146 = arith.constant 0.000000e+00 : bf16
    %181 = vector.broadcast %cst_146 : bf16 to vector<1x64xbf16>
    %182 = vector.extract_strided_slice %177 {offsets = [0, 0], sizes = [1, 64], strides = [1, 1]} : vector<2x64xbf16> to vector<1x64xbf16>
    %183 = tpu.concatenate %181, %182 in 0 : vector<1x64xbf16>, vector<1x64xbf16> -> vector<2x64xbf16>
    %c0_147 = arith.constant 0 : index
    %c0_148 = arith.constant 0 : index
    %c0_149 = arith.constant 0 : index
    %184 = vector.load %arg17[%c0_147, %c0_148, %c0_149] : memref<3x64x128xbf16, #tpu.memory_space<vmem>>, vector<1x64x128xbf16>
    %185 = vector.shape_cast %184 : vector<1x64x128xbf16> to vector<64x128xbf16>
    %cst_150 = arith.constant dense<0.000000e+00> : vector<2x128xf32>
    %186 = tpu.matmul %183, %185, %cst_150 {dimension_numbers = #tpu.dot_dimension_numbers<[1], [0], [0], [1], [0, 0, 1, 1], [], []>} : vector<2x64xbf16>, vector<64x128xbf16>, vector<2x128xf32> -> vector<2x128xf32>
    %187 = arith.addf %180, %186 : vector<2x128xf32>
    %188 = vector.extract_strided_slice %177 {offsets = [1, 0], sizes = [1, 64], strides = [1, 1]} : vector<2x64xbf16> to vector<1x64xbf16>
    %cst_151 = arith.constant 0.000000e+00 : bf16
    %189 = vector.broadcast %cst_151 : bf16 to vector<1x64xbf16>
    %190 = tpu.concatenate %188, %189 in 0 : vector<1x64xbf16>, vector<1x64xbf16> -> vector<2x64xbf16>
    %c2_152 = arith.constant 2 : index
    %c0_153 = arith.constant 0 : index
    %c0_154 = arith.constant 0 : index
    %191 = vector.load %arg17[%c2_152, %c0_153, %c0_154] : memref<3x64x128xbf16, #tpu.memory_space<vmem>>, vector<1x64x128xbf16>
    %192 = vector.shape_cast %191 : vector<1x64x128xbf16> to vector<64x128xbf16>
    %cst_155 = arith.constant dense<0.000000e+00> : vector<2x128xf32>
    %193 = tpu.matmul %190, %192, %cst_155 {dimension_numbers = #tpu.dot_dimension_numbers<[1], [0], [0], [1], [0, 0, 1, 1], [], []>} : vector<2x64xbf16>, vector<64x128xbf16>, vector<2x128xf32> -> vector<2x128xf32>
    %194 = arith.addf %187, %193 : vector<2x128xf32>
    %c0_156 = arith.constant 0 : index
    %c0_157 = arith.constant 0 : index
    %195 = vector.load %arg18[%c0_156, %c0_157] : memref<1x128xf32, #tpu.memory_space<vmem>>, vector<1x128xf32>
    %196 = vector.broadcast %195 : vector<1x128xf32> to vector<2x128xf32>
    %197 = arith.addf %194, %196 : vector<2x128xf32>
    %cst_158 = arith.constant 0.000000e+00 : f32
    %198 = vector.broadcast %cst_158 : f32 to vector<2x128xf32>
    %199 = arith.maximumf %197, %198 : vector<2x128xf32>
    %200 = arith.truncf %199 : vector<2x128xf32> to vector<2x128xbf16>
    %c1_159 = arith.constant 1 : index
    %c0_160 = arith.constant 0 : index
    %c0_161 = arith.constant 0 : index
    %201 = vector.load %arg19[%c1_159, %c0_160, %c0_161] : memref<3x128x128xbf16, #tpu.memory_space<vmem>>, vector<1x128x128xbf16>
    %202 = vector.shape_cast %201 : vector<1x128x128xbf16> to vector<128x128xbf16>
    %cst_162 = arith.constant dense<0.000000e+00> : vector<2x128xf32>
    %203 = tpu.matmul %200, %202, %cst_162 {dimension_numbers = #tpu.dot_dimension_numbers<[1], [0], [0], [1], [0, 0, 1, 1], [], []>} : vector<2x128xbf16>, vector<128x128xbf16>, vector<2x128xf32> -> vector<2x128xf32>
    %cst_163 = arith.constant 0.000000e+00 : bf16
    %204 = vector.broadcast %cst_163 : bf16 to vector<1x128xbf16>
    %205 = vector.extract_strided_slice %200 {offsets = [0, 0], sizes = [1, 128], strides = [1, 1]} : vector<2x128xbf16> to vector<1x128xbf16>
    %206 = tpu.concatenate %204, %205 in 0 : vector<1x128xbf16>, vector<1x128xbf16> -> vector<2x128xbf16>
    %c0_164 = arith.constant 0 : index
    %c0_165 = arith.constant 0 : index
    %c0_166 = arith.constant 0 : index
    %207 = vector.load %arg19[%c0_164, %c0_165, %c0_166] : memref<3x128x128xbf16, #tpu.memory_space<vmem>>, vector<1x128x128xbf16>
    %208 = vector.shape_cast %207 : vector<1x128x128xbf16> to vector<128x128xbf16>
    %cst_167 = arith.constant dense<0.000000e+00> : vector<2x128xf32>
    %209 = tpu.matmul %206, %208, %cst_167 {dimension_numbers = #tpu.dot_dimension_numbers<[1], [0], [0], [1], [0, 0, 1, 1], [], []>} : vector<2x128xbf16>, vector<128x128xbf16>, vector<2x128xf32> -> vector<2x128xf32>
    %210 = arith.addf %203, %209 : vector<2x128xf32>
    %211 = vector.extract_strided_slice %200 {offsets = [1, 0], sizes = [1, 128], strides = [1, 1]} : vector<2x128xbf16> to vector<1x128xbf16>
    %cst_168 = arith.constant 0.000000e+00 : bf16
    %212 = vector.broadcast %cst_168 : bf16 to vector<1x128xbf16>
    %213 = tpu.concatenate %211, %212 in 0 : vector<1x128xbf16>, vector<1x128xbf16> -> vector<2x128xbf16>
    %c2_169 = arith.constant 2 : index
    %c0_170 = arith.constant 0 : index
    %c0_171 = arith.constant 0 : index
    %214 = vector.load %arg19[%c2_169, %c0_170, %c0_171] : memref<3x128x128xbf16, #tpu.memory_space<vmem>>, vector<1x128x128xbf16>
    %215 = vector.shape_cast %214 : vector<1x128x128xbf16> to vector<128x128xbf16>
    %cst_172 = arith.constant dense<0.000000e+00> : vector<2x128xf32>
    %216 = tpu.matmul %213, %215, %cst_172 {dimension_numbers = #tpu.dot_dimension_numbers<[1], [0], [0], [1], [0, 0, 1, 1], [], []>} : vector<2x128xbf16>, vector<128x128xbf16>, vector<2x128xf32> -> vector<2x128xf32>
    %217 = arith.addf %210, %216 : vector<2x128xf32>
    %c0_173 = arith.constant 0 : index
    %c0_174 = arith.constant 0 : index
    %218 = vector.load %arg20[%c0_173, %c0_174] : memref<1x128xf32, #tpu.memory_space<vmem>>, vector<1x128xf32>
    %219 = vector.broadcast %218 : vector<1x128xf32> to vector<2x128xf32>
    %220 = arith.addf %217, %219 : vector<2x128xf32>
    %cst_175 = arith.constant 0.000000e+00 : f32
    %221 = vector.broadcast %cst_175 : f32 to vector<2x128xf32>
    %222 = arith.maximumf %220, %221 : vector<2x128xf32>
    %223 = arith.truncf %222 : vector<2x128xf32> to vector<2x128xbf16>
    %c0_176 = arith.constant 0 : index
    %c0_177 = arith.constant 0 : index
    %224 = vector.load %arg60[%c0_176, %c0_177] : memref<2x128xf32, #tpu.memory_space<vmem>>, vector<2x128xf32>
    tpu.vector_store %arg60[%c0_176, %c0_177], %222 {strides = array<i32>} : memref<2x128xf32, #tpu.memory_space<vmem>>, vector<2x128xf32>,
    %c0_178 = arith.constant 0 : index
    %c0_179 = arith.constant 0 : index
    %225 = tpu.strided_load %arg60[%c0_178, %c0_179] {strides = array<i32: 2, 1>} : memref<2x128xf32, #tpu.memory_space<vmem>>, vector<1x128xf32>
    %c1_180 = arith.constant 1 : index
    %c0_181 = arith.constant 0 : index
    %226 = tpu.strided_load %arg60[%c1_180, %c0_181] {strides = array<i32: 2, 1>} : memref<2x128xf32, #tpu.memory_space<vmem>>, vector<1x128xf32>
    %227 = arith.maximumf %225, %226 : vector<1x128xf32>
    %228 = arith.truncf %227 : vector<1x128xf32> to vector<1x128xbf16>
    %c0_182 = arith.constant 0 : index
    %c0_183 = arith.constant 0 : index
    %c0_184 = arith.constant 0 : index
    %229 = vector.load %arg21[%c0_182, %c0_183, %c0_184] : memref<2x128x64xbf16, #tpu.memory_space<vmem>>, vector<1x128x64xbf16>
    %230 = vector.shape_cast %229 : vector<1x128x64xbf16> to vector<128x64xbf16>
    %cst_185 = arith.constant dense<0.000000e+00> : vector<1x64xf32>
    %231 = tpu.matmul %228, %230, %cst_185 {dimension_numbers = #tpu.dot_dimension_numbers<[1], [0], [0], [1], [0, 0, 1, 1], [], []>} : vector<1x128xbf16>, vector<128x64xbf16>, vector<1x64xf32> -> vector<1x64xf32>
    %c1_186 = arith.constant 1 : index
    %c0_187 = arith.constant 0 : index
    %c0_188 = arith.constant 0 : index
    %232 = vector.load %arg21[%c1_186, %c0_187, %c0_188] : memref<2x128x64xbf16, #tpu.memory_space<vmem>>, vector<1x128x64xbf16>
    %233 = vector.shape_cast %232 : vector<1x128x64xbf16> to vector<128x64xbf16>
    %cst_189 = arith.constant dense<0.000000e+00> : vector<1x64xf32>
    %234 = tpu.matmul %228, %233, %cst_189 {dimension_numbers = #tpu.dot_dimension_numbers<[1], [0], [0], [1], [0, 0, 1, 1], [], []>} : vector<1x128xbf16>, vector<128x64xbf16>, vector<1x64xf32> -> vector<1x64xf32>
    %235 = arith.maximumf %231, %234 : vector<1x64xf32>
    %236 = arith.truncf %235 : vector<1x64xf32> to vector<1x64xbf16>
    %c1_190 = arith.constant 1 : index
    %c0_191 = arith.constant 0 : index
    %c0_192 = arith.constant 0 : index
    %237 = vector.load %arg22[%c1_190, %c0_191, %c0_192] : memref<3x64x128xbf16, #tpu.memory_space<vmem>>, vector<1x64x128xbf16>
    %238 = vector.shape_cast %237 : vector<1x64x128xbf16> to vector<64x128xbf16>
    %cst_193 = arith.constant dense<0.000000e+00> : vector<1x128xf32>
    %239 = tpu.matmul %236, %238, %cst_193 {dimension_numbers = #tpu.dot_dimension_numbers<[1], [0], [0], [1], [0, 0, 1, 1], [], []>} : vector<1x64xbf16>, vector<64x128xbf16>, vector<1x128xf32> -> vector<1x128xf32>
    %c0_194 = arith.constant 0 : index
    %c0_195 = arith.constant 0 : index
    %240 = vector.load %arg23[%c0_194, %c0_195] : memref<1x128xf32, #tpu.memory_space<vmem>>, vector<1x128xf32>
    %241 = arith.addf %239, %240 : vector<1x128xf32>
    %cst_196 = arith.constant 0.000000e+00 : f32
    %242 = vector.broadcast %cst_196 : f32 to vector<1x128xf32>
    %243 = arith.maximumf %241, %242 : vector<1x128xf32>
    %244 = arith.truncf %243 : vector<1x128xf32> to vector<1x128xbf16>
    %c1_197 = arith.constant 1 : index
    %c0_198 = arith.constant 0 : index
    %c0_199 = arith.constant 0 : index
    %245 = vector.load %arg24[%c1_197, %c0_198, %c0_199] : memref<3x128x128xbf16, #tpu.memory_space<vmem>>, vector<1x128x128xbf16>
    %246 = vector.shape_cast %245 : vector<1x128x128xbf16> to vector<128x128xbf16>
    %cst_200 = arith.constant dense<0.000000e+00> : vector<1x128xf32>
    %247 = tpu.matmul %244, %246, %cst_200 {dimension_numbers = #tpu.dot_dimension_numbers<[1], [0], [0], [1], [0, 0, 1, 1], [], []>} : vector<1x128xbf16>, vector<128x128xbf16>, vector<1x128xf32> -> vector<1x128xf32>
    %c0_201 = arith.constant 0 : index
    %c0_202 = arith.constant 0 : index
    %248 = vector.load %arg25[%c0_201, %c0_202] : memref<1x128xf32, #tpu.memory_space<vmem>>, vector<1x128xf32>
    %249 = arith.addf %247, %248 : vector<1x128xf32>
    %cst_203 = arith.constant 0.000000e+00 : f32
    %250 = vector.broadcast %cst_203 : f32 to vector<1x128xf32>
    %251 = arith.maximumf %249, %250 : vector<1x128xf32>
    %252 = arith.truncf %251 : vector<1x128xf32> to vector<1x128xbf16>
    %c0_204 = arith.constant 0 : index
    %c0_205 = arith.constant 0 : index
    %c0_206 = arith.constant 0 : index
    %253 = vector.load %arg26[%c0_204, %c0_205, %c0_206] : memref<2x128x128xbf16, #tpu.memory_space<vmem>>, vector<1x128x128xbf16>
    %254 = vector.shape_cast %253 : vector<1x128x128xbf16> to vector<128x128xbf16>
    %cst_207 = arith.constant dense<0.000000e+00> : vector<1x128xf32>
    %255 = tpu.matmul %252, %254, %cst_207 {dimension_numbers = #tpu.dot_dimension_numbers<[1], [0], [0], [1], [0, 0, 1, 1], [], []>} : vector<1x128xbf16>, vector<128x128xbf16>, vector<1x128xf32> -> vector<1x128xf32>
    %c0_208 = arith.constant 0 : index
    %c0_209 = arith.constant 0 : index
    %256 = vector.load %arg27[%c0_208, %c0_209] : memref<1x128xf32, #tpu.memory_space<vmem>>, vector<1x128xf32>
    %257 = arith.addf %255, %256 : vector<1x128xf32>
    %c1_210 = arith.constant 1 : index
    %c0_211 = arith.constant 0 : index
    %c0_212 = arith.constant 0 : index
    %258 = vector.load %arg26[%c1_210, %c0_211, %c0_212] : memref<2x128x128xbf16, #tpu.memory_space<vmem>>, vector<1x128x128xbf16>
    %259 = vector.shape_cast %258 : vector<1x128x128xbf16> to vector<128x128xbf16>
    %cst_213 = arith.constant dense<0.000000e+00> : vector<1x128xf32>
    %260 = tpu.matmul %252, %259, %cst_213 {dimension_numbers = #tpu.dot_dimension_numbers<[1], [0], [0], [1], [0, 0, 1, 1], [], []>} : vector<1x128xbf16>, vector<128x128xbf16>, vector<1x128xf32> -> vector<1x128xf32>
    %c0_214 = arith.constant 0 : index
    %c0_215 = arith.constant 0 : index
    %261 = vector.load %arg27[%c0_214, %c0_215] : memref<1x128xf32, #tpu.memory_space<vmem>>, vector<1x128xf32>
    %262 = arith.addf %260, %261 : vector<1x128xf32>
    %263 = arith.truncf %257 : vector<1x128xf32> to vector<1x128xbf16>
    %264 = arith.truncf %262 : vector<1x128xf32> to vector<1x128xbf16>
    %265 = tpu.concatenate %263, %264 in 0 : vector<1x128xbf16>, vector<1x128xbf16> -> vector<2x128xbf16>
    %c1_216 = arith.constant 1 : index
    %c0_217 = arith.constant 0 : index
    %c0_218 = arith.constant 0 : index
    %266 = vector.load %arg28[%c1_216, %c0_217, %c0_218] : memref<3x128x128xbf16, #tpu.memory_space<vmem>>, vector<1x128x128xbf16>
    %267 = vector.shape_cast %266 : vector<1x128x128xbf16> to vector<128x128xbf16>
    %cst_219 = arith.constant dense<0.000000e+00> : vector<2x128xf32>
    %268 = tpu.matmul %265, %267, %cst_219 {dimension_numbers = #tpu.dot_dimension_numbers<[1], [0], [0], [1], [0, 0, 1, 1], [], []>} : vector<2x128xbf16>, vector<128x128xbf16>, vector<2x128xf32> -> vector<2x128xf32>
    %c1_220 = arith.constant 1 : index
    %c0_221 = arith.constant 0 : index
    %c0_222 = arith.constant 0 : index
    %269 = vector.load %arg29[%c1_220, %c0_221, %c0_222] : memref<3x128x128xbf16, #tpu.memory_space<vmem>>, vector<1x128x128xbf16>
    %270 = vector.shape_cast %269 : vector<1x128x128xbf16> to vector<128x128xbf16>
    %cst_223 = arith.constant dense<0.000000e+00> : vector<2x128xf32>
    %271 = tpu.matmul %223, %270, %cst_223 {dimension_numbers = #tpu.dot_dimension_numbers<[1], [0], [0], [1], [0, 0, 1, 1], [], []>} : vector<2x128xbf16>, vector<128x128xbf16>, vector<2x128xf32> -> vector<2x128xf32>
    %272 = arith.addf %268, %271 : vector<2x128xf32>
    %cst_224 = arith.constant 0.000000e+00 : bf16
    %273 = vector.broadcast %cst_224 : bf16 to vector<1x128xbf16>
    %274 = vector.extract_strided_slice %265 {offsets = [0, 0], sizes = [1, 128], strides = [1, 1]} : vector<2x128xbf16> to vector<1x128xbf16>
    %275 = tpu.concatenate %273, %274 in 0 : vector<1x128xbf16>, vector<1x128xbf16> -> vector<2x128xbf16>
    %c0_225 = arith.constant 0 : index
    %c0_226 = arith.constant 0 : index
    %c0_227 = arith.constant 0 : index
    %276 = vector.load %arg28[%c0_225, %c0_226, %c0_227] : memref<3x128x128xbf16, #tpu.memory_space<vmem>>, vector<1x128x128xbf16>
    %277 = vector.shape_cast %276 : vector<1x128x128xbf16> to vector<128x128xbf16>
    %cst_228 = arith.constant dense<0.000000e+00> : vector<2x128xf32>
    %278 = tpu.matmul %275, %277, %cst_228 {dimension_numbers = #tpu.dot_dimension_numbers<[1], [0], [0], [1], [0, 0, 1, 1], [], []>} : vector<2x128xbf16>, vector<128x128xbf16>, vector<2x128xf32> -> vector<2x128xf32>
    %279 = arith.addf %272, %278 : vector<2x128xf32>
    %280 = vector.extract_strided_slice %265 {offsets = [1, 0], sizes = [1, 128], strides = [1, 1]} : vector<2x128xbf16> to vector<1x128xbf16>
    %cst_229 = arith.constant 0.000000e+00 : bf16
    %281 = vector.broadcast %cst_229 : bf16 to vector<1x128xbf16>
    %282 = tpu.concatenate %280, %281 in 0 : vector<1x128xbf16>, vector<1x128xbf16> -> vector<2x128xbf16>
    %c2_230 = arith.constant 2 : index
    %c0_231 = arith.constant 0 : index
    %c0_232 = arith.constant 0 : index
    %283 = vector.load %arg28[%c2_230, %c0_231, %c0_232] : memref<3x128x128xbf16, #tpu.memory_space<vmem>>, vector<1x128x128xbf16>
    %284 = vector.shape_cast %283 : vector<1x128x128xbf16> to vector<128x128xbf16>
    %cst_233 = arith.constant dense<0.000000e+00> : vector<2x128xf32>
    %285 = tpu.matmul %282, %284, %cst_233 {dimension_numbers = #tpu.dot_dimension_numbers<[1], [0], [0], [1], [0, 0, 1, 1], [], []>} : vector<2x128xbf16>, vector<128x128xbf16>, vector<2x128xf32> -> vector<2x128xf32>
    %286 = arith.addf %279, %285 : vector<2x128xf32>
    %cst_234 = arith.constant 0.000000e+00 : bf16
    %287 = vector.broadcast %cst_234 : bf16 to vector<1x128xbf16>
    %288 = vector.extract_strided_slice %223 {offsets = [0, 0], sizes = [1, 128], strides = [1, 1]} : vector<2x128xbf16> to vector<1x128xbf16>
    %289 = tpu.concatenate %287, %288 in 0 : vector<1x128xbf16>, vector<1x128xbf16> -> vector<2x128xbf16>
    %c0_235 = arith.constant 0 : index
    %c0_236 = arith.constant 0 : index
    %c0_237 = arith.constant 0 : index
    %290 = vector.load %arg29[%c0_235, %c0_236, %c0_237] : memref<3x128x128xbf16, #tpu.memory_space<vmem>>, vector<1x128x128xbf16>
    %291 = vector.shape_cast %290 : vector<1x128x128xbf16> to vector<128x128xbf16>
    %cst_238 = arith.constant dense<0.000000e+00> : vector<2x128xf32>
    %292 = tpu.matmul %289, %291, %cst_238 {dimension_numbers = #tpu.dot_dimension_numbers<[1], [0], [0], [1], [0, 0, 1, 1], [], []>} : vector<2x128xbf16>, vector<128x128xbf16>, vector<2x128xf32> -> vector<2x128xf32>
    %293 = arith.addf %286, %292 : vector<2x128xf32>
    %294 = vector.extract_strided_slice %223 {offsets = [1, 0], sizes = [1, 128], strides = [1, 1]} : vector<2x128xbf16> to vector<1x128xbf16>
    %cst_239 = arith.constant 0.000000e+00 : bf16
    %295 = vector.broadcast %cst_239 : bf16 to vector<1x128xbf16>
    %296 = tpu.concatenate %294, %295 in 0 : vector<1x128xbf16>, vector<1x128xbf16> -> vector<2x128xbf16>
    %c2_240 = arith.constant 2 : index
    %c0_241 = arith.constant 0 : index
    %c0_242 = arith.constant 0 : index
    %297 = vector.load %arg29[%c2_240, %c0_241, %c0_242] : memref<3x128x128xbf16, #tpu.memory_space<vmem>>, vector<1x128x128xbf16>
    %298 = vector.shape_cast %297 : vector<1x128x128xbf16> to vector<128x128xbf16>
    %cst_243 = arith.constant dense<0.000000e+00> : vector<2x128xf32>
    %299 = tpu.matmul %296, %298, %cst_243 {dimension_numbers = #tpu.dot_dimension_numbers<[1], [0], [0], [1], [0, 0, 1, 1], [], []>} : vector<2x128xbf16>, vector<128x128xbf16>, vector<2x128xf32> -> vector<2x128xf32>
    %300 = arith.addf %293, %299 : vector<2x128xf32>
    %c0_244 = arith.constant 0 : index
    %c0_245 = arith.constant 0 : index
    %301 = vector.load %arg30[%c0_244, %c0_245] : memref<1x128xf32, #tpu.memory_space<vmem>>, vector<1x128xf32>
    %302 = vector.broadcast %301 : vector<1x128xf32> to vector<2x128xf32>
    %303 = arith.addf %300, %302 : vector<2x128xf32>
    %cst_246 = arith.constant 0.000000e+00 : f32
    %304 = vector.broadcast %cst_246 : f32 to vector<2x128xf32>
    %305 = arith.maximumf %303, %304 : vector<2x128xf32>
    %306 = arith.truncf %305 : vector<2x128xf32> to vector<2x128xbf16>
    %c1_247 = arith.constant 1 : index
    %c0_248 = arith.constant 0 : index
    %c0_249 = arith.constant 0 : index
    %307 = vector.load %arg31[%c1_247, %c0_248, %c0_249] : memref<3x128x128xbf16, #tpu.memory_space<vmem>>, vector<1x128x128xbf16>
    %308 = vector.shape_cast %307 : vector<1x128x128xbf16> to vector<128x128xbf16>
    %cst_250 = arith.constant dense<0.000000e+00> : vector<2x128xf32>
    %309 = tpu.matmul %306, %308, %cst_250 {dimension_numbers = #tpu.dot_dimension_numbers<[1], [0], [0], [1], [0, 0, 1, 1], [], []>} : vector<2x128xbf16>, vector<128x128xbf16>, vector<2x128xf32> -> vector<2x128xf32>
    %cst_251 = arith.constant 0.000000e+00 : bf16
    %310 = vector.broadcast %cst_251 : bf16 to vector<1x128xbf16>
    %311 = vector.extract_strided_slice %306 {offsets = [0, 0], sizes = [1, 128], strides = [1, 1]} : vector<2x128xbf16> to vector<1x128xbf16>
    %312 = tpu.concatenate %310, %311 in 0 : vector<1x128xbf16>, vector<1x128xbf16> -> vector<2x128xbf16>
    %c0_252 = arith.constant 0 : index
    %c0_253 = arith.constant 0 : index
    %c0_254 = arith.constant 0 : index
    %313 = vector.load %arg31[%c0_252, %c0_253, %c0_254] : memref<3x128x128xbf16, #tpu.memory_space<vmem>>, vector<1x128x128xbf16>
    %314 = vector.shape_cast %313 : vector<1x128x128xbf16> to vector<128x128xbf16>
    %cst_255 = arith.constant dense<0.000000e+00> : vector<2x128xf32>
    %315 = tpu.matmul %312, %314, %cst_255 {dimension_numbers = #tpu.dot_dimension_numbers<[1], [0], [0], [1], [0, 0, 1, 1], [], []>} : vector<2x128xbf16>, vector<128x128xbf16>, vector<2x128xf32> -> vector<2x128xf32>
    %316 = arith.addf %309, %315 : vector<2x128xf32>
    %317 = vector.extract_strided_slice %306 {offsets = [1, 0], sizes = [1, 128], strides = [1, 1]} : vector<2x128xbf16> to vector<1x128xbf16>
    %cst_256 = arith.constant 0.000000e+00 : bf16
    %318 = vector.broadcast %cst_256 : bf16 to vector<1x128xbf16>
    %319 = tpu.concatenate %317, %318 in 0 : vector<1x128xbf16>, vector<1x128xbf16> -> vector<2x128xbf16>
    %c2_257 = arith.constant 2 : index
    %c0_258 = arith.constant 0 : index
    %c0_259 = arith.constant 0 : index
    %320 = vector.load %arg31[%c2_257, %c0_258, %c0_259] : memref<3x128x128xbf16, #tpu.memory_space<vmem>>, vector<1x128x128xbf16>
    %321 = vector.shape_cast %320 : vector<1x128x128xbf16> to vector<128x128xbf16>
    %cst_260 = arith.constant dense<0.000000e+00> : vector<2x128xf32>
    %322 = tpu.matmul %319, %321, %cst_260 {dimension_numbers = #tpu.dot_dimension_numbers<[1], [0], [0], [1], [0, 0, 1, 1], [], []>} : vector<2x128xbf16>, vector<128x128xbf16>, vector<2x128xf32> -> vector<2x128xf32>
    %323 = arith.addf %316, %322 : vector<2x128xf32>
    %c0_261 = arith.constant 0 : index
    %c0_262 = arith.constant 0 : index
    %324 = vector.load %arg32[%c0_261, %c0_262] : memref<1x128xf32, #tpu.memory_space<vmem>>, vector<1x128xf32>
    %325 = vector.broadcast %324 : vector<1x128xf32> to vector<2x128xf32>
    %326 = arith.addf %323, %325 : vector<2x128xf32>
    %cst_263 = arith.constant 0.000000e+00 : f32
    %327 = vector.broadcast %cst_263 : f32 to vector<2x128xf32>
    %328 = arith.maximumf %326, %327 : vector<2x128xf32>
    %329 = arith.truncf %328 : vector<2x128xf32> to vector<2x128xbf16>
    %c0_264 = arith.constant 0 : index
    %c0_265 = arith.constant 0 : index
    %c0_266 = arith.constant 0 : index
    %330 = vector.load %arg33[%c0_264, %c0_265, %c0_266] : memref<2x128x128xbf16, #tpu.memory_space<vmem>>, vector<1x128x128xbf16>
    %331 = vector.shape_cast %330 : vector<1x128x128xbf16> to vector<128x128xbf16>
    %cst_267 = arith.constant dense<0.000000e+00> : vector<2x128xf32>
    %332 = tpu.matmul %329, %331, %cst_267 {dimension_numbers = #tpu.dot_dimension_numbers<[1], [0], [0], [1], [0, 0, 1, 1], [], []>} : vector<2x128xbf16>, vector<128x128xbf16>, vector<2x128xf32> -> vector<2x128xf32>
    %c0_268 = arith.constant 0 : index
    %c0_269 = arith.constant 0 : index
    %333 = vector.load %arg34[%c0_268, %c0_269] : memref<1x128xf32, #tpu.memory_space<vmem>>, vector<1x128xf32>
    %334 = vector.broadcast %333 : vector<1x128xf32> to vector<2x128xf32>
    %335 = arith.addf %332, %334 : vector<2x128xf32>
    %c1_270 = arith.constant 1 : index
    %c0_271 = arith.constant 0 : index
    %c0_272 = arith.constant 0 : index
    %336 = vector.load %arg33[%c1_270, %c0_271, %c0_272] : memref<2x128x128xbf16, #tpu.memory_space<vmem>>, vector<1x128x128xbf16>
    %337 = vector.shape_cast %336 : vector<1x128x128xbf16> to vector<128x128xbf16>
    %cst_273 = arith.constant dense<0.000000e+00> : vector<2x128xf32>
    %338 = tpu.matmul %329, %337, %cst_273 {dimension_numbers = #tpu.dot_dimension_numbers<[1], [0], [0], [1], [0, 0, 1, 1], [], []>} : vector<2x128xbf16>, vector<128x128xbf16>, vector<2x128xf32> -> vector<2x128xf32>
    %c0_274 = arith.constant 0 : index
    %c0_275 = arith.constant 0 : index
    %339 = vector.load %arg34[%c0_274, %c0_275] : memref<1x128xf32, #tpu.memory_space<vmem>>, vector<1x128xf32>
    %340 = vector.broadcast %339 : vector<1x128xf32> to vector<2x128xf32>
    %341 = arith.addf %338, %340 : vector<2x128xf32>
    %342 = arith.truncf %335 : vector<2x128xf32> to vector<2x128xbf16>
    %343 = arith.truncf %341 : vector<2x128xf32> to vector<2x128xbf16>
    %344 = tpu.iota {dimensions = array<i32: 0>} : vector<4x2xi32>
    %345 = tpu.iota {dimensions = array<i32: 1>} : vector<4x2xi32>
    %c2_i32 = arith.constant 2 : i32
    %346 = vector.broadcast %c2_i32 : i32 to vector<4x2xi32>
    %347 = arith.muli %346, %345 : vector<4x2xi32>
    %348 = arith.cmpi eq, %344, %347 : vector<4x2xi32>
    %349 = arith.extui %348 : vector<4x2xi1> to vector<4x2xi32>
    %350 = arith.sitofp %349 : vector<4x2xi32> to vector<4x2xf32>
    %351 = arith.truncf %350 : vector<4x2xf32> to vector<4x2xbf16>
    %c2_i32_276 = arith.constant 2 : i32
    %352 = vector.broadcast %c2_i32_276 : i32 to vector<4x2xi32>
    %353 = arith.muli %352, %345 : vector<4x2xi32>
    %c1_i32 = arith.constant 1 : i32
    %354 = vector.broadcast %c1_i32 : i32 to vector<4x2xi32>
    %355 = arith.addi %353, %354 : vector<4x2xi32>
    %356 = arith.cmpi eq, %344, %355 : vector<4x2xi32>
    %357 = arith.extui %356 : vector<4x2xi1> to vector<4x2xi32>
    %358 = arith.sitofp %357 : vector<4x2xi32> to vector<4x2xf32>
    %359 = arith.truncf %358 : vector<4x2xf32> to vector<4x2xbf16>
    %cst_277 = arith.constant dense<0.000000e+00> : vector<4x128xf32>
    %360 = tpu.matmul %351, %342, %cst_277 {dimension_numbers = #tpu.dot_dimension_numbers<[1], [0], [0], [1], [0, 0, 1, 1], [], []>} : vector<4x2xbf16>, vector<2x128xbf16>, vector<4x128xf32> -> vector<4x128xf32>
    %cst_278 = arith.constant dense<0.000000e+00> : vector<4x128xf32>
    %361 = tpu.matmul %359, %343, %cst_278 {dimension_numbers = #tpu.dot_dimension_numbers<[1], [0], [0], [1], [0, 0, 1, 1], [], []>} : vector<4x2xbf16>, vector<2x128xbf16>, vector<4x128xf32> -> vector<4x128xf32>
    %362 = arith.addf %360, %361 : vector<4x128xf32>
    %363 = arith.truncf %362 : vector<4x128xf32> to vector<4x128xbf16>
    %c1_279 = arith.constant 1 : index
    %c0_280 = arith.constant 0 : index
    %c0_281 = arith.constant 0 : index
    %364 = vector.load %arg35[%c1_279, %c0_280, %c0_281] : memref<3x128x128xbf16, #tpu.memory_space<vmem>>, vector<1x128x128xbf16>
    %365 = vector.shape_cast %364 : vector<1x128x128xbf16> to vector<128x128xbf16>
    %cst_282 = arith.constant dense<0.000000e+00> : vector<4x128xf32>
    %366 = tpu.matmul %363, %365, %cst_282 {dimension_numbers = #tpu.dot_dimension_numbers<[1], [0], [0], [1], [0, 0, 1, 1], [], []>} : vector<4x128xbf16>, vector<128x128xbf16>, vector<4x128xf32> -> vector<4x128xf32>
    %c1_283 = arith.constant 1 : index
    %c0_284 = arith.constant 0 : index
    %c0_285 = arith.constant 0 : index
    %367 = vector.load %arg36[%c1_283, %c0_284, %c0_285] : memref<3x128x128xbf16, #tpu.memory_space<vmem>>, vector<1x128x128xbf16>
    %368 = vector.shape_cast %367 : vector<1x128x128xbf16> to vector<128x128xbf16>
    %cst_286 = arith.constant dense<0.000000e+00> : vector<4x128xf32>
    %369 = tpu.matmul %164, %368, %cst_286 {dimension_numbers = #tpu.dot_dimension_numbers<[1], [0], [0], [1], [0, 0, 1, 1], [], []>} : vector<4x128xbf16>, vector<128x128xbf16>, vector<4x128xf32> -> vector<4x128xf32>
    %370 = arith.addf %366, %369 : vector<4x128xf32>
    %cst_287 = arith.constant 0.000000e+00 : bf16
    %371 = vector.broadcast %cst_287 : bf16 to vector<1x128xbf16>
    %372 = vector.extract_strided_slice %363 {offsets = [0, 0], sizes = [3, 128], strides = [1, 1]} : vector<4x128xbf16> to vector<3x128xbf16>
    %373 = tpu.concatenate %371, %372 in 0 : vector<1x128xbf16>, vector<3x128xbf16> -> vector<4x128xbf16>
    %c0_288 = arith.constant 0 : index
    %c0_289 = arith.constant 0 : index
    %c0_290 = arith.constant 0 : index
    %374 = vector.load %arg35[%c0_288, %c0_289, %c0_290] : memref<3x128x128xbf16, #tpu.memory_space<vmem>>, vector<1x128x128xbf16>
    %375 = vector.shape_cast %374 : vector<1x128x128xbf16> to vector<128x128xbf16>
    %cst_291 = arith.constant dense<0.000000e+00> : vector<4x128xf32>
    %376 = tpu.matmul %373, %375, %cst_291 {dimension_numbers = #tpu.dot_dimension_numbers<[1], [0], [0], [1], [0, 0, 1, 1], [], []>} : vector<4x128xbf16>, vector<128x128xbf16>, vector<4x128xf32> -> vector<4x128xf32>
    %377 = arith.addf %370, %376 : vector<4x128xf32>
    %378 = vector.extract_strided_slice %363 {offsets = [1, 0], sizes = [3, 128], strides = [1, 1]} : vector<4x128xbf16> to vector<3x128xbf16>
    %cst_292 = arith.constant 0.000000e+00 : bf16
    %379 = vector.broadcast %cst_292 : bf16 to vector<1x128xbf16>
    %380 = tpu.concatenate %378, %379 in 0 : vector<3x128xbf16>, vector<1x128xbf16> -> vector<4x128xbf16>
    %c2_293 = arith.constant 2 : index
    %c0_294 = arith.constant 0 : index
    %c0_295 = arith.constant 0 : index
    %381 = vector.load %arg35[%c2_293, %c0_294, %c0_295] : memref<3x128x128xbf16, #tpu.memory_space<vmem>>, vector<1x128x128xbf16>
    %382 = vector.shape_cast %381 : vector<1x128x128xbf16> to vector<128x128xbf16>
    %cst_296 = arith.constant dense<0.000000e+00> : vector<4x128xf32>
    %383 = tpu.matmul %380, %382, %cst_296 {dimension_numbers = #tpu.dot_dimension_numbers<[1], [0], [0], [1], [0, 0, 1, 1], [], []>} : vector<4x128xbf16>, vector<128x128xbf16>, vector<4x128xf32> -> vector<4x128xf32>
    %384 = arith.addf %377, %383 : vector<4x128xf32>
    %cst_297 = arith.constant 0.000000e+00 : bf16
    %385 = vector.broadcast %cst_297 : bf16 to vector<1x128xbf16>
    %386 = vector.extract_strided_slice %164 {offsets = [0, 0], sizes = [3, 128], strides = [1, 1]} : vector<4x128xbf16> to vector<3x128xbf16>
    %387 = tpu.concatenate %385, %386 in 0 : vector<1x128xbf16>, vector<3x128xbf16> -> vector<4x128xbf16>
    %c0_298 = arith.constant 0 : index
    %c0_299 = arith.constant 0 : index
    %c0_300 = arith.constant 0 : index
    %388 = vector.load %arg36[%c0_298, %c0_299, %c0_300] : memref<3x128x128xbf16, #tpu.memory_space<vmem>>, vector<1x128x128xbf16>
    %389 = vector.shape_cast %388 : vector<1x128x128xbf16> to vector<128x128xbf16>
    %cst_301 = arith.constant dense<0.000000e+00> : vector<4x128xf32>
    %390 = tpu.matmul %387, %389, %cst_301 {dimension_numbers = #tpu.dot_dimension_numbers<[1], [0], [0], [1], [0, 0, 1, 1], [], []>} : vector<4x128xbf16>, vector<128x128xbf16>, vector<4x128xf32> -> vector<4x128xf32>
    %391 = arith.addf %384, %390 : vector<4x128xf32>
    %392 = vector.extract_strided_slice %164 {offsets = [1, 0], sizes = [3, 128], strides = [1, 1]} : vector<4x128xbf16> to vector<3x128xbf16>
    %cst_302 = arith.constant 0.000000e+00 : bf16
    %393 = vector.broadcast %cst_302 : bf16 to vector<1x128xbf16>
    %394 = tpu.concatenate %392, %393 in 0 : vector<3x128xbf16>, vector<1x128xbf16> -> vector<4x128xbf16>
    %c2_303 = arith.constant 2 : index
    %c0_304 = arith.constant 0 : index
    %c0_305 = arith.constant 0 : index
    %395 = vector.load %arg36[%c2_303, %c0_304, %c0_305] : memref<3x128x128xbf16, #tpu.memory_space<vmem>>, vector<1x128x128xbf16>
    %396 = vector.shape_cast %395 : vector<1x128x128xbf16> to vector<128x128xbf16>
    %cst_306 = arith.constant dense<0.000000e+00> : vector<4x128xf32>
    %397 = tpu.matmul %394, %396, %cst_306 {dimension_numbers = #tpu.dot_dimension_numbers<[1], [0], [0], [1], [0, 0, 1, 1], [], []>} : vector<4x128xbf16>, vector<128x128xbf16>, vector<4x128xf32> -> vector<4x128xf32>
    %398 = arith.addf %391, %397 : vector<4x128xf32>
    %c0_307 = arith.constant 0 : index
    %c0_308 = arith.constant 0 : index
    %399 = vector.load %arg37[%c0_307, %c0_308] : memref<1x128xf32, #tpu.memory_space<vmem>>, vector<1x128xf32>
    %400 = vector.broadcast %399 : vector<1x128xf32> to vector<4x128xf32>
    %401 = arith.addf %398, %400 : vector<4x128xf32>
    %cst_309 = arith.constant 0.000000e+00 : f32
    %402 = vector.broadcast %cst_309 : f32 to vector<4x128xf32>
    %403 = arith.maximumf %401, %402 : vector<4x128xf32>
    %404 = arith.truncf %403 : vector<4x128xf32> to vector<4x128xbf16>
    %c1_310 = arith.constant 1 : index
    %c0_311 = arith.constant 0 : index
    %c0_312 = arith.constant 0 : index
    %405 = vector.load %arg38[%c1_310, %c0_311, %c0_312] : memref<3x128x128xbf16, #tpu.memory_space<vmem>>, vector<1x128x128xbf16>
    %406 = vector.shape_cast %405 : vector<1x128x128xbf16> to vector<128x128xbf16>
    %cst_313 = arith.constant dense<0.000000e+00> : vector<4x128xf32>
    %407 = tpu.matmul %404, %406, %cst_313 {dimension_numbers = #tpu.dot_dimension_numbers<[1], [0], [0], [1], [0, 0, 1, 1], [], []>} : vector<4x128xbf16>, vector<128x128xbf16>, vector<4x128xf32> -> vector<4x128xf32>
    %cst_314 = arith.constant 0.000000e+00 : bf16
    %408 = vector.broadcast %cst_314 : bf16 to vector<1x128xbf16>
    %409 = vector.extract_strided_slice %404 {offsets = [0, 0], sizes = [3, 128], strides = [1, 1]} : vector<4x128xbf16> to vector<3x128xbf16>
    %410 = tpu.concatenate %408, %409 in 0 : vector<1x128xbf16>, vector<3x128xbf16> -> vector<4x128xbf16>
    %c0_315 = arith.constant 0 : index
    %c0_316 = arith.constant 0 : index
    %c0_317 = arith.constant 0 : index
    %411 = vector.load %arg38[%c0_315, %c0_316, %c0_317] : memref<3x128x128xbf16, #tpu.memory_space<vmem>>, vector<1x128x128xbf16>
    %412 = vector.shape_cast %411 : vector<1x128x128xbf16> to vector<128x128xbf16>
    %cst_318 = arith.constant dense<0.000000e+00> : vector<4x128xf32>
    %413 = tpu.matmul %410, %412, %cst_318 {dimension_numbers = #tpu.dot_dimension_numbers<[1], [0], [0], [1], [0, 0, 1, 1], [], []>} : vector<4x128xbf16>, vector<128x128xbf16>, vector<4x128xf32> -> vector<4x128xf32>
    %414 = arith.addf %407, %413 : vector<4x128xf32>
    %415 = vector.extract_strided_slice %404 {offsets = [1, 0], sizes = [3, 128], strides = [1, 1]} : vector<4x128xbf16> to vector<3x128xbf16>
    %cst_319 = arith.constant 0.000000e+00 : bf16
    %416 = vector.broadcast %cst_319 : bf16 to vector<1x128xbf16>
    %417 = tpu.concatenate %415, %416 in 0 : vector<3x128xbf16>, vector<1x128xbf16> -> vector<4x128xbf16>
    %c2_320 = arith.constant 2 : index
    %c0_321 = arith.constant 0 : index
    %c0_322 = arith.constant 0 : index
    %418 = vector.load %arg38[%c2_320, %c0_321, %c0_322] : memref<3x128x128xbf16, #tpu.memory_space<vmem>>, vector<1x128x128xbf16>
    %419 = vector.shape_cast %418 : vector<1x128x128xbf16> to vector<128x128xbf16>
    %cst_323 = arith.constant dense<0.000000e+00> : vector<4x128xf32>
    %420 = tpu.matmul %417, %419, %cst_323 {dimension_numbers = #tpu.dot_dimension_numbers<[1], [0], [0], [1], [0, 0, 1, 1], [], []>} : vector<4x128xbf16>, vector<128x128xbf16>, vector<4x128xf32> -> vector<4x128xf32>
    %421 = arith.addf %414, %420 : vector<4x128xf32>
    %c0_324 = arith.constant 0 : index
    %c0_325 = arith.constant 0 : index
    %422 = vector.load %arg39[%c0_324, %c0_325] : memref<1x128xf32, #tpu.memory_space<vmem>>, vector<1x128xf32>
    %423 = vector.broadcast %422 : vector<1x128xf32> to vector<4x128xf32>
    %424 = arith.addf %421, %423 : vector<4x128xf32>
    %cst_326 = arith.constant 0.000000e+00 : f32
    %425 = vector.broadcast %cst_326 : f32 to vector<4x128xf32>
    %426 = arith.maximumf %424, %425 : vector<4x128xf32>
    %427 = arith.truncf %426 : vector<4x128xf32> to vector<4x128xbf16>
    %c0_327 = arith.constant 0 : index
    %c0_328 = arith.constant 0 : index
    %c0_329 = arith.constant 0 : index
    %428 = vector.load %arg40[%c0_327, %c0_328, %c0_329] : memref<2x128x128xbf16, #tpu.memory_space<vmem>>, vector<1x128x128xbf16>
    %429 = vector.shape_cast %428 : vector<1x128x128xbf16> to vector<128x128xbf16>
    %cst_330 = arith.constant dense<0.000000e+00> : vector<4x128xf32>
    %430 = tpu.matmul %427, %429, %cst_330 {dimension_numbers = #tpu.dot_dimension_numbers<[1], [0], [0], [1], [0, 0, 1, 1], [], []>} : vector<4x128xbf16>, vector<128x128xbf16>, vector<4x128xf32> -> vector<4x128xf32>
    %c0_331 = arith.constant 0 : index
    %c0_332 = arith.constant 0 : index
    %431 = vector.load %arg41[%c0_331, %c0_332] : memref<1x128xf32, #tpu.memory_space<vmem>>, vector<1x128xf32>
    %432 = vector.broadcast %431 : vector<1x128xf32> to vector<4x128xf32>
    %433 = arith.addf %430, %432 : vector<4x128xf32>
    %c1_333 = arith.constant 1 : index
    %c0_334 = arith.constant 0 : index
    %c0_335 = arith.constant 0 : index
    %434 = vector.load %arg40[%c1_333, %c0_334, %c0_335] : memref<2x128x128xbf16, #tpu.memory_space<vmem>>, vector<1x128x128xbf16>
    %435 = vector.shape_cast %434 : vector<1x128x128xbf16> to vector<128x128xbf16>
    %cst_336 = arith.constant dense<0.000000e+00> : vector<4x128xf32>
    %436 = tpu.matmul %427, %435, %cst_336 {dimension_numbers = #tpu.dot_dimension_numbers<[1], [0], [0], [1], [0, 0, 1, 1], [], []>} : vector<4x128xbf16>, vector<128x128xbf16>, vector<4x128xf32> -> vector<4x128xf32>
    %c0_337 = arith.constant 0 : index
    %c0_338 = arith.constant 0 : index
    %437 = vector.load %arg41[%c0_337, %c0_338] : memref<1x128xf32, #tpu.memory_space<vmem>>, vector<1x128xf32>
    %438 = vector.broadcast %437 : vector<1x128xf32> to vector<4x128xf32>
    %439 = arith.addf %436, %438 : vector<4x128xf32>
    %440 = arith.truncf %433 : vector<4x128xf32> to vector<4x128xbf16>
    %441 = arith.truncf %439 : vector<4x128xf32> to vector<4x128xbf16>
    %442 = tpu.iota {dimensions = array<i32: 0>} : vector<8x4xi32>
    %443 = tpu.iota {dimensions = array<i32: 1>} : vector<8x4xi32>
    %c2_i32_339 = arith.constant 2 : i32
    %444 = vector.broadcast %c2_i32_339 : i32 to vector<8x4xi32>
    %445 = arith.muli %444, %443 : vector<8x4xi32>
    %446 = arith.cmpi eq, %442, %445 : vector<8x4xi32>
    %447 = arith.extui %446 : vector<8x4xi1> to vector<8x4xi32>
    %448 = arith.sitofp %447 : vector<8x4xi32> to vector<8x4xf32>
    %449 = arith.truncf %448 : vector<8x4xf32> to vector<8x4xbf16>
    %c2_i32_340 = arith.constant 2 : i32
    %450 = vector.broadcast %c2_i32_340 : i32 to vector<8x4xi32>
    %451 = arith.muli %450, %443 : vector<8x4xi32>
    %c1_i32_341 = arith.constant 1 : i32
    %452 = vector.broadcast %c1_i32_341 : i32 to vector<8x4xi32>
    %453 = arith.addi %451, %452 : vector<8x4xi32>
    %454 = arith.cmpi eq, %442, %453 : vector<8x4xi32>
    %455 = arith.extui %454 : vector<8x4xi1> to vector<8x4xi32>
    %456 = arith.sitofp %455 : vector<8x4xi32> to vector<8x4xf32>
    %457 = arith.truncf %456 : vector<8x4xf32> to vector<8x4xbf16>
    %cst_342 = arith.constant dense<0.000000e+00> : vector<8x128xf32>
    %458 = tpu.matmul %449, %440, %cst_342 {dimension_numbers = #tpu.dot_dimension_numbers<[1], [0], [0], [1], [0, 0, 1, 1], [], []>} : vector<8x4xbf16>, vector<4x128xbf16>, vector<8x128xf32> -> vector<8x128xf32>
    %cst_343 = arith.constant dense<0.000000e+00> : vector<8x128xf32>
    %459 = tpu.matmul %457, %441, %cst_343 {dimension_numbers = #tpu.dot_dimension_numbers<[1], [0], [0], [1], [0, 0, 1, 1], [], []>} : vector<8x4xbf16>, vector<4x128xbf16>, vector<8x128xf32> -> vector<8x128xf32>
    %460 = arith.addf %458, %459 : vector<8x128xf32>
    %461 = arith.truncf %460 : vector<8x128xf32> to vector<8x128xbf16>
    %c1_344 = arith.constant 1 : index
    %c0_345 = arith.constant 0 : index
    %c0_346 = arith.constant 0 : index
    %462 = vector.load %arg42[%c1_344, %c0_345, %c0_346] : memref<3x128x128xbf16, #tpu.memory_space<vmem>>, vector<1x128x128xbf16>
    %463 = vector.shape_cast %462 : vector<1x128x128xbf16> to vector<128x128xbf16>
    %cst_347 = arith.constant dense<0.000000e+00> : vector<8x128xf32>
    %464 = tpu.matmul %461, %463, %cst_347 {dimension_numbers = #tpu.dot_dimension_numbers<[1], [0], [0], [1], [0, 0, 1, 1], [], []>} : vector<8x128xbf16>, vector<128x128xbf16>, vector<8x128xf32> -> vector<8x128xf32>
    %c1_348 = arith.constant 1 : index
    %c0_349 = arith.constant 0 : index
    %c0_350 = arith.constant 0 : index
    %465 = vector.load %arg43[%c1_348, %c0_349, %c0_350] : memref<3x128x128xbf16, #tpu.memory_space<vmem>>, vector<1x128x128xbf16>
    %466 = vector.shape_cast %465 : vector<1x128x128xbf16> to vector<128x128xbf16>
    %cst_351 = arith.constant dense<0.000000e+00> : vector<8x128xf32>
    %467 = tpu.matmul %105, %466, %cst_351 {dimension_numbers = #tpu.dot_dimension_numbers<[1], [0], [0], [1], [0, 0, 1, 1], [], []>} : vector<8x128xbf16>, vector<128x128xbf16>, vector<8x128xf32> -> vector<8x128xf32>
    %468 = arith.addf %464, %467 : vector<8x128xf32>
    %cst_352 = arith.constant 0.000000e+00 : bf16
    %469 = vector.broadcast %cst_352 : bf16 to vector<1x128xbf16>
    %470 = vector.extract_strided_slice %461 {offsets = [0, 0], sizes = [7, 128], strides = [1, 1]} : vector<8x128xbf16> to vector<7x128xbf16>
    %471 = tpu.concatenate %469, %470 in 0 : vector<1x128xbf16>, vector<7x128xbf16> -> vector<8x128xbf16>
    %c0_353 = arith.constant 0 : index
    %c0_354 = arith.constant 0 : index
    %c0_355 = arith.constant 0 : index
    %472 = vector.load %arg42[%c0_353, %c0_354, %c0_355] : memref<3x128x128xbf16, #tpu.memory_space<vmem>>, vector<1x128x128xbf16>
    %473 = vector.shape_cast %472 : vector<1x128x128xbf16> to vector<128x128xbf16>
    %cst_356 = arith.constant dense<0.000000e+00> : vector<8x128xf32>
    %474 = tpu.matmul %471, %473, %cst_356 {dimension_numbers = #tpu.dot_dimension_numbers<[1], [0], [0], [1], [0, 0, 1, 1], [], []>} : vector<8x128xbf16>, vector<128x128xbf16>, vector<8x128xf32> -> vector<8x128xf32>
    %475 = arith.addf %468, %474 : vector<8x128xf32>
    %476 = vector.extract_strided_slice %461 {offsets = [1, 0], sizes = [7, 128], strides = [1, 1]} : vector<8x128xbf16> to vector<7x128xbf16>
    %cst_357 = arith.constant 0.000000e+00 : bf16
    %477 = vector.broadcast %cst_357 : bf16 to vector<1x128xbf16>
    %478 = tpu.concatenate %476, %477 in 0 : vector<7x128xbf16>, vector<1x128xbf16> -> vector<8x128xbf16>
    %c2_358 = arith.constant 2 : index
    %c0_359 = arith.constant 0 : index
    %c0_360 = arith.constant 0 : index
    %479 = vector.load %arg42[%c2_358, %c0_359, %c0_360] : memref<3x128x128xbf16, #tpu.memory_space<vmem>>, vector<1x128x128xbf16>
    %480 = vector.shape_cast %479 : vector<1x128x128xbf16> to vector<128x128xbf16>
    %cst_361 = arith.constant dense<0.000000e+00> : vector<8x128xf32>
    %481 = tpu.matmul %478, %480, %cst_361 {dimension_numbers = #tpu.dot_dimension_numbers<[1], [0], [0], [1], [0, 0, 1, 1], [], []>} : vector<8x128xbf16>, vector<128x128xbf16>, vector<8x128xf32> -> vector<8x128xf32>
    %482 = arith.addf %475, %481 : vector<8x128xf32>
    %cst_362 = arith.constant 0.000000e+00 : bf16
    %483 = vector.broadcast %cst_362 : bf16 to vector<1x128xbf16>
    %484 = vector.extract_strided_slice %105 {offsets = [0, 0], sizes = [7, 128], strides = [1, 1]} : vector<8x128xbf16> to vector<7x128xbf16>
    %485 = tpu.concatenate %483, %484 in 0 : vector<1x128xbf16>, vector<7x128xbf16> -> vector<8x128xbf16>
    %c0_363 = arith.constant 0 : index
    %c0_364 = arith.constant 0 : index
    %c0_365 = arith.constant 0 : index
    %486 = vector.load %arg43[%c0_363, %c0_364, %c0_365] : memref<3x128x128xbf16, #tpu.memory_space<vmem>>, vector<1x128x128xbf16>
    %487 = vector.shape_cast %486 : vector<1x128x128xbf16> to vector<128x128xbf16>
    %cst_366 = arith.constant dense<0.000000e+00> : vector<8x128xf32>
    %488 = tpu.matmul %485, %487, %cst_366 {dimension_numbers = #tpu.dot_dimension_numbers<[1], [0], [0], [1], [0, 0, 1, 1], [], []>} : vector<8x128xbf16>, vector<128x128xbf16>, vector<8x128xf32> -> vector<8x128xf32>
    %489 = arith.addf %482, %488 : vector<8x128xf32>
    %490 = vector.extract_strided_slice %105 {offsets = [1, 0], sizes = [7, 128], strides = [1, 1]} : vector<8x128xbf16> to vector<7x128xbf16>
    %cst_367 = arith.constant 0.000000e+00 : bf16
    %491 = vector.broadcast %cst_367 : bf16 to vector<1x128xbf16>
    %492 = tpu.concatenate %490, %491 in 0 : vector<7x128xbf16>, vector<1x128xbf16> -> vector<8x128xbf16>
    %c2_368 = arith.constant 2 : index
    %c0_369 = arith.constant 0 : index
    %c0_370 = arith.constant 0 : index
    %493 = vector.load %arg43[%c2_368, %c0_369, %c0_370] : memref<3x128x128xbf16, #tpu.memory_space<vmem>>, vector<1x128x128xbf16>
    %494 = vector.shape_cast %493 : vector<1x128x128xbf16> to vector<128x128xbf16>
    %cst_371 = arith.constant dense<0.000000e+00> : vector<8x128xf32>
    %495 = tpu.matmul %492, %494, %cst_371 {dimension_numbers = #tpu.dot_dimension_numbers<[1], [0], [0], [1], [0, 0, 1, 1], [], []>} : vector<8x128xbf16>, vector<128x128xbf16>, vector<8x128xf32> -> vector<8x128xf32>
    %496 = arith.addf %489, %495 : vector<8x128xf32>
    %c0_372 = arith.constant 0 : index
    %c0_373 = arith.constant 0 : index
    %497 = vector.load %arg44[%c0_372, %c0_373] : memref<1x128xf32, #tpu.memory_space<vmem>>, vector<1x128xf32>
    %498 = vector.broadcast %497 : vector<1x128xf32> to vector<8x128xf32>
    %499 = arith.addf %496, %498 : vector<8x128xf32>
    %cst_374 = arith.constant 0.000000e+00 : f32
    %500 = vector.broadcast %cst_374 : f32 to vector<8x128xf32>
    %501 = arith.maximumf %499, %500 : vector<8x128xf32>
    %502 = arith.truncf %501 : vector<8x128xf32> to vector<8x128xbf16>
    %c1_375 = arith.constant 1 : index
    %c0_376 = arith.constant 0 : index
    %c0_377 = arith.constant 0 : index
    %503 = vector.load %arg45[%c1_375, %c0_376, %c0_377] : memref<3x128x128xbf16, #tpu.memory_space<vmem>>, vector<1x128x128xbf16>
    %504 = vector.shape_cast %503 : vector<1x128x128xbf16> to vector<128x128xbf16>
    %cst_378 = arith.constant dense<0.000000e+00> : vector<8x128xf32>
    %505 = tpu.matmul %502, %504, %cst_378 {dimension_numbers = #tpu.dot_dimension_numbers<[1], [0], [0], [1], [0, 0, 1, 1], [], []>} : vector<8x128xbf16>, vector<128x128xbf16>, vector<8x128xf32> -> vector<8x128xf32>
    %cst_379 = arith.constant 0.000000e+00 : bf16
    %506 = vector.broadcast %cst_379 : bf16 to vector<1x128xbf16>
    %507 = vector.extract_strided_slice %502 {offsets = [0, 0], sizes = [7, 128], strides = [1, 1]} : vector<8x128xbf16> to vector<7x128xbf16>
    %508 = tpu.concatenate %506, %507 in 0 : vector<1x128xbf16>, vector<7x128xbf16> -> vector<8x128xbf16>
    %c0_380 = arith.constant 0 : index
    %c0_381 = arith.constant 0 : index
    %c0_382 = arith.constant 0 : index
    %509 = vector.load %arg45[%c0_380, %c0_381, %c0_382] : memref<3x128x128xbf16, #tpu.memory_space<vmem>>, vector<1x128x128xbf16>
    %510 = vector.shape_cast %509 : vector<1x128x128xbf16> to vector<128x128xbf16>
    %cst_383 = arith.constant dense<0.000000e+00> : vector<8x128xf32>
    %511 = tpu.matmul %508, %510, %cst_383 {dimension_numbers = #tpu.dot_dimension_numbers<[1], [0], [0], [1], [0, 0, 1, 1], [], []>} : vector<8x128xbf16>, vector<128x128xbf16>, vector<8x128xf32> -> vector<8x128xf32>
    %512 = arith.addf %505, %511 : vector<8x128xf32>
    %513 = vector.extract_strided_slice %502 {offsets = [1, 0], sizes = [7, 128], strides = [1, 1]} : vector<8x128xbf16> to vector<7x128xbf16>
    %cst_384 = arith.constant 0.000000e+00 : bf16
    %514 = vector.broadcast %cst_384 : bf16 to vector<1x128xbf16>
    %515 = tpu.concatenate %513, %514 in 0 : vector<7x128xbf16>, vector<1x128xbf16> -> vector<8x128xbf16>
    %c2_385 = arith.constant 2 : index
    %c0_386 = arith.constant 0 : index
    %c0_387 = arith.constant 0 : index
    %516 = vector.load %arg45[%c2_385, %c0_386, %c0_387] : memref<3x128x128xbf16, #tpu.memory_space<vmem>>, vector<1x128x128xbf16>
    %517 = vector.shape_cast %516 : vector<1x128x128xbf16> to vector<128x128xbf16>
    %cst_388 = arith.constant dense<0.000000e+00> : vector<8x128xf32>
    %518 = tpu.matmul %515, %517, %cst_388 {dimension_numbers = #tpu.dot_dimension_numbers<[1], [0], [0], [1], [0, 0, 1, 1], [], []>} : vector<8x128xbf16>, vector<128x128xbf16>, vector<8x128xf32> -> vector<8x128xf32>
    %519 = arith.addf %512, %518 : vector<8x128xf32>
    %c0_389 = arith.constant 0 : index
    %c0_390 = arith.constant 0 : index
    %520 = vector.load %arg46[%c0_389, %c0_390] : memref<1x128xf32, #tpu.memory_space<vmem>>, vector<1x128xf32>
    %521 = vector.broadcast %520 : vector<1x128xf32> to vector<8x128xf32>
    %522 = arith.addf %519, %521 : vector<8x128xf32>
    %cst_391 = arith.constant 0.000000e+00 : f32
    %523 = vector.broadcast %cst_391 : f32 to vector<8x128xf32>
    %524 = arith.maximumf %522, %523 : vector<8x128xf32>
    %525 = arith.truncf %524 : vector<8x128xf32> to vector<8x128xbf16>
    %c0_392 = arith.constant 0 : index
    %c0_393 = arith.constant 0 : index
    %c0_394 = arith.constant 0 : index
    %526 = vector.load %arg47[%c0_392, %c0_393, %c0_394] : memref<2x128x128xbf16, #tpu.memory_space<vmem>>, vector<1x128x128xbf16>
    %527 = vector.shape_cast %526 : vector<1x128x128xbf16> to vector<128x128xbf16>
    %cst_395 = arith.constant dense<0.000000e+00> : vector<8x128xf32>
    %528 = tpu.matmul %525, %527, %cst_395 {dimension_numbers = #tpu.dot_dimension_numbers<[1], [0], [0], [1], [0, 0, 1, 1], [], []>} : vector<8x128xbf16>, vector<128x128xbf16>, vector<8x128xf32> -> vector<8x128xf32>
    %c0_396 = arith.constant 0 : index
    %c0_397 = arith.constant 0 : index
    %529 = vector.load %arg48[%c0_396, %c0_397] : memref<1x128xf32, #tpu.memory_space<vmem>>, vector<1x128xf32>
    %530 = vector.broadcast %529 : vector<1x128xf32> to vector<8x128xf32>
    %531 = arith.addf %528, %530 : vector<8x128xf32>
    %c1_398 = arith.constant 1 : index
    %c0_399 = arith.constant 0 : index
    %c0_400 = arith.constant 0 : index
    %532 = vector.load %arg47[%c1_398, %c0_399, %c0_400] : memref<2x128x128xbf16, #tpu.memory_space<vmem>>, vector<1x128x128xbf16>
    %533 = vector.shape_cast %532 : vector<1x128x128xbf16> to vector<128x128xbf16>
    %cst_401 = arith.constant dense<0.000000e+00> : vector<8x128xf32>
    %534 = tpu.matmul %525, %533, %cst_401 {dimension_numbers = #tpu.dot_dimension_numbers<[1], [0], [0], [1], [0, 0, 1, 1], [], []>} : vector<8x128xbf16>, vector<128x128xbf16>, vector<8x128xf32> -> vector<8x128xf32>
    %c0_402 = arith.constant 0 : index
    %c0_403 = arith.constant 0 : index
    %535 = vector.load %arg48[%c0_402, %c0_403] : memref<1x128xf32, #tpu.memory_space<vmem>>, vector<1x128xf32>
    %536 = vector.broadcast %535 : vector<1x128xf32> to vector<8x128xf32>
    %537 = arith.addf %534, %536 : vector<8x128xf32>
    %538 = arith.truncf %531 : vector<8x128xf32> to vector<8x128xbf16>
    %539 = arith.truncf %537 : vector<8x128xf32> to vector<8x128xbf16>
    %540 = tpu.iota {dimensions = array<i32: 0>} : vector<16x8xi32>
    %541 = tpu.iota {dimensions = array<i32: 1>} : vector<16x8xi32>
    %c2_i32_404 = arith.constant 2 : i32
    %542 = vector.broadcast %c2_i32_404 : i32 to vector<16x8xi32>
    %543 = arith.muli %542, %541 : vector<16x8xi32>
    %544 = arith.cmpi eq, %540, %543 : vector<16x8xi32>
    %545 = arith.extui %544 : vector<16x8xi1> to vector<16x8xi32>
    %546 = arith.sitofp %545 : vector<16x8xi32> to vector<16x8xf32>
    %547 = arith.truncf %546 : vector<16x8xf32> to vector<16x8xbf16>
    %c2_i32_405 = arith.constant 2 : i32
    %548 = vector.broadcast %c2_i32_405 : i32 to vector<16x8xi32>
    %549 = arith.muli %548, %541 : vector<16x8xi32>
    %c1_i32_406 = arith.constant 1 : i32
    %550 = vector.broadcast %c1_i32_406 : i32 to vector<16x8xi32>
    %551 = arith.addi %549, %550 : vector<16x8xi32>
    %552 = arith.cmpi eq, %540, %551 : vector<16x8xi32>
    %553 = arith.extui %552 : vector<16x8xi1> to vector<16x8xi32>
    %554 = arith.sitofp %553 : vector<16x8xi32> to vector<16x8xf32>
    %555 = arith.truncf %554 : vector<16x8xf32> to vector<16x8xbf16>
    %cst_407 = arith.constant dense<0.000000e+00> : vector<16x128xf32>
    %556 = tpu.matmul %547, %538, %cst_407 {dimension_numbers = #tpu.dot_dimension_numbers<[1], [0], [0], [1], [0, 0, 1, 1], [], []>} : vector<16x8xbf16>, vector<8x128xbf16>, vector<16x128xf32> -> vector<16x128xf32>
    %cst_408 = arith.constant dense<0.000000e+00> : vector<16x128xf32>
    %557 = tpu.matmul %555, %539, %cst_408 {dimension_numbers = #tpu.dot_dimension_numbers<[1], [0], [0], [1], [0, 0, 1, 1], [], []>} : vector<16x8xbf16>, vector<8x128xbf16>, vector<16x128xf32> -> vector<16x128xf32>
    %558 = arith.addf %556, %557 : vector<16x128xf32>
    %559 = arith.truncf %558 : vector<16x128xf32> to vector<16x128xbf16>
    %c1_409 = arith.constant 1 : index
    %c0_410 = arith.constant 0 : index
    %c0_411 = arith.constant 0 : index
    %560 = vector.load %arg49[%c1_409, %c0_410, %c0_411] : memref<3x128x128xbf16, #tpu.memory_space<vmem>>, vector<1x128x128xbf16>
    %561 = vector.shape_cast %560 : vector<1x128x128xbf16> to vector<128x128xbf16>
    %cst_412 = arith.constant dense<0.000000e+00> : vector<16x128xf32>
    %562 = tpu.matmul %559, %561, %cst_412 {dimension_numbers = #tpu.dot_dimension_numbers<[1], [0], [0], [1], [0, 0, 1, 1], [], []>} : vector<16x128xbf16>, vector<128x128xbf16>, vector<16x128xf32> -> vector<16x128xf32>
    %c1_413 = arith.constant 1 : index
    %c0_414 = arith.constant 0 : index
    %c0_415 = arith.constant 0 : index
    %563 = vector.load %arg50[%c1_413, %c0_414, %c0_415] : memref<3x128x128xbf16, #tpu.memory_space<vmem>>, vector<1x128x128xbf16>
    %564 = vector.shape_cast %563 : vector<1x128x128xbf16> to vector<128x128xbf16>
    %cst_416 = arith.constant dense<0.000000e+00> : vector<16x128xf32>
    %565 = tpu.matmul %46, %564, %cst_416 {dimension_numbers = #tpu.dot_dimension_numbers<[1], [0], [0], [1], [0, 0, 1, 1], [], []>} : vector<16x128xbf16>, vector<128x128xbf16>, vector<16x128xf32> -> vector<16x128xf32>
    %566 = arith.addf %562, %565 : vector<16x128xf32>
    %cst_417 = arith.constant 0.000000e+00 : bf16
    %567 = vector.broadcast %cst_417 : bf16 to vector<1x128xbf16>
    %568 = vector.extract_strided_slice %559 {offsets = [0, 0], sizes = [15, 128], strides = [1, 1]} : vector<16x128xbf16> to vector<15x128xbf16>
    %569 = tpu.concatenate %567, %568 in 0 : vector<1x128xbf16>, vector<15x128xbf16> -> vector<16x128xbf16>
    %c0_418 = arith.constant 0 : index
    %c0_419 = arith.constant 0 : index
    %c0_420 = arith.constant 0 : index
    %570 = vector.load %arg49[%c0_418, %c0_419, %c0_420] : memref<3x128x128xbf16, #tpu.memory_space<vmem>>, vector<1x128x128xbf16>
    %571 = vector.shape_cast %570 : vector<1x128x128xbf16> to vector<128x128xbf16>
    %cst_421 = arith.constant dense<0.000000e+00> : vector<16x128xf32>
    %572 = tpu.matmul %569, %571, %cst_421 {dimension_numbers = #tpu.dot_dimension_numbers<[1], [0], [0], [1], [0, 0, 1, 1], [], []>} : vector<16x128xbf16>, vector<128x128xbf16>, vector<16x128xf32> -> vector<16x128xf32>
    %573 = arith.addf %566, %572 : vector<16x128xf32>
    %574 = vector.extract_strided_slice %559 {offsets = [1, 0], sizes = [15, 128], strides = [1, 1]} : vector<16x128xbf16> to vector<15x128xbf16>
    %cst_422 = arith.constant 0.000000e+00 : bf16
    %575 = vector.broadcast %cst_422 : bf16 to vector<1x128xbf16>
    %576 = tpu.concatenate %574, %575 in 0 : vector<15x128xbf16>, vector<1x128xbf16> -> vector<16x128xbf16>
    %c2_423 = arith.constant 2 : index
    %c0_424 = arith.constant 0 : index
    %c0_425 = arith.constant 0 : index
    %577 = vector.load %arg49[%c2_423, %c0_424, %c0_425] : memref<3x128x128xbf16, #tpu.memory_space<vmem>>, vector<1x128x128xbf16>
    %578 = vector.shape_cast %577 : vector<1x128x128xbf16> to vector<128x128xbf16>
    %cst_426 = arith.constant dense<0.000000e+00> : vector<16x128xf32>
    %579 = tpu.matmul %576, %578, %cst_426 {dimension_numbers = #tpu.dot_dimension_numbers<[1], [0], [0], [1], [0, 0, 1, 1], [], []>} : vector<16x128xbf16>, vector<128x128xbf16>, vector<16x128xf32> -> vector<16x128xf32>
    %580 = arith.addf %573, %579 : vector<16x128xf32>
    %cst_427 = arith.constant 0.000000e+00 : bf16
    %581 = vector.broadcast %cst_427 : bf16 to vector<1x128xbf16>
    %582 = vector.extract_strided_slice %46 {offsets = [0, 0], sizes = [15, 128], strides = [1, 1]} : vector<16x128xbf16> to vector<15x128xbf16>
    %583 = tpu.concatenate %581, %582 in 0 : vector<1x128xbf16>, vector<15x128xbf16> -> vector<16x128xbf16>
    %c0_428 = arith.constant 0 : index
    %c0_429 = arith.constant 0 : index
    %c0_430 = arith.constant 0 : index
    %584 = vector.load %arg50[%c0_428, %c0_429, %c0_430] : memref<3x128x128xbf16, #tpu.memory_space<vmem>>, vector<1x128x128xbf16>
    %585 = vector.shape_cast %584 : vector<1x128x128xbf16> to vector<128x128xbf16>
    %cst_431 = arith.constant dense<0.000000e+00> : vector<16x128xf32>
    %586 = tpu.matmul %583, %585, %cst_431 {dimension_numbers = #tpu.dot_dimension_numbers<[1], [0], [0], [1], [0, 0, 1, 1], [], []>} : vector<16x128xbf16>, vector<128x128xbf16>, vector<16x128xf32> -> vector<16x128xf32>
    %587 = arith.addf %580, %586 : vector<16x128xf32>
    %588 = vector.extract_strided_slice %46 {offsets = [1, 0], sizes = [15, 128], strides = [1, 1]} : vector<16x128xbf16> to vector<15x128xbf16>
    %cst_432 = arith.constant 0.000000e+00 : bf16
    %589 = vector.broadcast %cst_432 : bf16 to vector<1x128xbf16>
    %590 = tpu.concatenate %588, %589 in 0 : vector<15x128xbf16>, vector<1x128xbf16> -> vector<16x128xbf16>
    %c2_433 = arith.constant 2 : index
    %c0_434 = arith.constant 0 : index
    %c0_435 = arith.constant 0 : index
    %591 = vector.load %arg50[%c2_433, %c0_434, %c0_435] : memref<3x128x128xbf16, #tpu.memory_space<vmem>>, vector<1x128x128xbf16>
    %592 = vector.shape_cast %591 : vector<1x128x128xbf16> to vector<128x128xbf16>
    %cst_436 = arith.constant dense<0.000000e+00> : vector<16x128xf32>
    %593 = tpu.matmul %590, %592, %cst_436 {dimension_numbers = #tpu.dot_dimension_numbers<[1], [0], [0], [1], [0, 0, 1, 1], [], []>} : vector<16x128xbf16>, vector<128x128xbf16>, vector<16x128xf32> -> vector<16x128xf32>
    %594 = arith.addf %587, %593 : vector<16x128xf32>
    %c0_437 = arith.constant 0 : index
    %c0_438 = arith.constant 0 : index
    %595 = vector.load %arg51[%c0_437, %c0_438] : memref<1x128xf32, #tpu.memory_space<vmem>>, vector<1x128xf32>
    %596 = vector.broadcast %595 : vector<1x128xf32> to vector<16x128xf32>
    %597 = arith.addf %594, %596 : vector<16x128xf32>
    %cst_439 = arith.constant 0.000000e+00 : f32
    %598 = vector.broadcast %cst_439 : f32 to vector<16x128xf32>
    %599 = arith.maximumf %597, %598 : vector<16x128xf32>
    %600 = arith.truncf %599 : vector<16x128xf32> to vector<16x128xbf16>
    %c1_440 = arith.constant 1 : index
    %c0_441 = arith.constant 0 : index
    %c0_442 = arith.constant 0 : index
    %601 = vector.load %arg52[%c1_440, %c0_441, %c0_442] : memref<3x128x128xbf16, #tpu.memory_space<vmem>>, vector<1x128x128xbf16>
    %602 = vector.shape_cast %601 : vector<1x128x128xbf16> to vector<128x128xbf16>
    %cst_443 = arith.constant dense<0.000000e+00> : vector<16x128xf32>
    %603 = tpu.matmul %600, %602, %cst_443 {dimension_numbers = #tpu.dot_dimension_numbers<[1], [0], [0], [1], [0, 0, 1, 1], [], []>} : vector<16x128xbf16>, vector<128x128xbf16>, vector<16x128xf32> -> vector<16x128xf32>
    %cst_444 = arith.constant 0.000000e+00 : bf16
    %604 = vector.broadcast %cst_444 : bf16 to vector<1x128xbf16>
    %605 = vector.extract_strided_slice %600 {offsets = [0, 0], sizes = [15, 128], strides = [1, 1]} : vector<16x128xbf16> to vector<15x128xbf16>
    %606 = tpu.concatenate %604, %605 in 0 : vector<1x128xbf16>, vector<15x128xbf16> -> vector<16x128xbf16>
    %c0_445 = arith.constant 0 : index
    %c0_446 = arith.constant 0 : index
    %c0_447 = arith.constant 0 : index
    %607 = vector.load %arg52[%c0_445, %c0_446, %c0_447] : memref<3x128x128xbf16, #tpu.memory_space<vmem>>, vector<1x128x128xbf16>
    %608 = vector.shape_cast %607 : vector<1x128x128xbf16> to vector<128x128xbf16>
    %cst_448 = arith.constant dense<0.000000e+00> : vector<16x128xf32>
    %609 = tpu.matmul %606, %608, %cst_448 {dimension_numbers = #tpu.dot_dimension_numbers<[1], [0], [0], [1], [0, 0, 1, 1], [], []>} : vector<16x128xbf16>, vector<128x128xbf16>, vector<16x128xf32> -> vector<16x128xf32>
    %610 = arith.addf %603, %609 : vector<16x128xf32>
    %611 = vector.extract_strided_slice %600 {offsets = [1, 0], sizes = [15, 128], strides = [1, 1]} : vector<16x128xbf16> to vector<15x128xbf16>
    %cst_449 = arith.constant 0.000000e+00 : bf16
    %612 = vector.broadcast %cst_449 : bf16 to vector<1x128xbf16>
    %613 = tpu.concatenate %611, %612 in 0 : vector<15x128xbf16>, vector<1x128xbf16> -> vector<16x128xbf16>
    %c2_450 = arith.constant 2 : index
    %c0_451 = arith.constant 0 : index
    %c0_452 = arith.constant 0 : index
    %614 = vector.load %arg52[%c2_450, %c0_451, %c0_452] : memref<3x128x128xbf16, #tpu.memory_space<vmem>>, vector<1x128x128xbf16>
    %615 = vector.shape_cast %614 : vector<1x128x128xbf16> to vector<128x128xbf16>
    %cst_453 = arith.constant dense<0.000000e+00> : vector<16x128xf32>
    %616 = tpu.matmul %613, %615, %cst_453 {dimension_numbers = #tpu.dot_dimension_numbers<[1], [0], [0], [1], [0, 0, 1, 1], [], []>} : vector<16x128xbf16>, vector<128x128xbf16>, vector<16x128xf32> -> vector<16x128xf32>
    %617 = arith.addf %610, %616 : vector<16x128xf32>
    %c0_454 = arith.constant 0 : index
    %c0_455 = arith.constant 0 : index
    %618 = vector.load %arg53[%c0_454, %c0_455] : memref<1x128xf32, #tpu.memory_space<vmem>>, vector<1x128xf32>
    %619 = vector.broadcast %618 : vector<1x128xf32> to vector<16x128xf32>
    %620 = arith.addf %617, %619 : vector<16x128xf32>
    %cst_456 = arith.constant 0.000000e+00 : f32
    %621 = vector.broadcast %cst_456 : f32 to vector<16x128xf32>
    %622 = arith.maximumf %620, %621 : vector<16x128xf32>
    %623 = arith.truncf %622 : vector<16x128xf32> to vector<16x128xbf16>
    %c0_457 = arith.constant 0 : index
    %c0_458 = arith.constant 0 : index
    %624 = vector.load %arg54[%c0_457, %c0_458] : memref<128x256xbf16, #tpu.memory_space<vmem>>, vector<128x256xbf16>
    %cst_459 = arith.constant dense<0.000000e+00> : vector<16x256xf32>
    %625 = tpu.matmul %623, %624, %cst_459 {dimension_numbers = #tpu.dot_dimension_numbers<[1], [0], [0], [1], [0, 0, 1, 1], [], []>} : vector<16x128xbf16>, vector<128x256xbf16>, vector<16x256xf32> -> vector<16x256xf32>
    %c0_460 = arith.constant 0 : index
    %c0_461 = arith.constant 0 : index
    %626 = vector.load %arg55[%c0_460, %c0_461] : memref<1x256xf32, #tpu.memory_space<vmem>>, vector<1x256xf32>
    %627 = vector.broadcast %626 : vector<1x256xf32> to vector<16x256xf32>
    %628 = arith.addf %625, %627 : vector<16x256xf32>
    %c0_462 = arith.constant 0 : index
    %c0_463 = arith.constant 0 : index
    %629 = vector.load %arg56[%c0_462, %c0_463] : memref<16x256xf32, #tpu.memory_space<vmem>>, vector<16x256xf32>
    tpu.vector_store %arg56[%c0_462, %c0_463], %628 {strides = array<i32>} : memref<16x256xf32, #tpu.memory_space<vmem>>, vector<16x256xf32>,
    return
  }
  func.func @transform_0(%arg0: i32) -> (i32, i32) {
    %c0_i32 = arith.constant 0 : i32
    %c0_i32_0 = arith.constant 0 : i32
    return %arg0, %c0_i32 : i32, i32
  }
  func.func @transform_1(%arg0: i32) -> (i32, i32, i32) {
    %c0_i32 = arith.constant 0 : i32
    %c0_i32_0 = arith.constant 0 : i32
    %c0_i32_1 = arith.constant 0 : i32
    %c0_i32_2 = arith.constant 0 : i32
    return %c0_i32, %c0_i32_0, %c0_i32_1 : i32, i32, i32
  }
  func.func @transform_2(%arg0: i32) -> (i32, i32) {
    %c0_i32 = arith.constant 0 : i32
    %c0_i32_0 = arith.constant 0 : i32
    %c0_i32_1 = arith.constant 0 : i32
    return %c0_i32, %c0_i32_0 : i32, i32
  }
  func.func @transform_3(%arg0: i32) -> (i32, i32, i32) {
    %c0_i32 = arith.constant 0 : i32
    %c0_i32_0 = arith.constant 0 : i32
    %c0_i32_1 = arith.constant 0 : i32
    %c0_i32_2 = arith.constant 0 : i32
    return %c0_i32, %c0_i32_0, %c0_i32_1 : i32, i32, i32
  }
  func.func @transform_4(%arg0: i32) -> (i32, i32) {
    %c0_i32 = arith.constant 0 : i32
    %c0_i32_0 = arith.constant 0 : i32
    %c0_i32_1 = arith.constant 0 : i32
    return %c0_i32, %c0_i32_0 : i32, i32
  }
  func.func @transform_5(%arg0: i32) -> (i32, i32, i32) {
    %c0_i32 = arith.constant 0 : i32
    %c0_i32_0 = arith.constant 0 : i32
    %c0_i32_1 = arith.constant 0 : i32
    %c0_i32_2 = arith.constant 0 : i32
    return %c0_i32, %c0_i32_0, %c0_i32_1 : i32, i32, i32
  }
  func.func @transform_6(%arg0: i32) -> (i32, i32, i32) {
    %c0_i32 = arith.constant 0 : i32
    %c0_i32_0 = arith.constant 0 : i32
    %c0_i32_1 = arith.constant 0 : i32
    %c0_i32_2 = arith.constant 0 : i32
    return %c0_i32, %c0_i32_0, %c0_i32_1 : i32, i32, i32
  }
  func.func @transform_7(%arg0: i32) -> (i32, i32) {
    %c0_i32 = arith.constant 0 : i32
    %c0_i32_0 = arith.constant 0 : i32
    %c0_i32_1 = arith.constant 0 : i32
    return %c0_i32, %c0_i32_0 : i32, i32
  }
  func.func @transform_8(%arg0: i32) -> (i32, i32, i32) {
    %c0_i32 = arith.constant 0 : i32
    %c0_i32_0 = arith.constant 0 : i32
    %c0_i32_1 = arith.constant 0 : i32
    %c0_i32_2 = arith.constant 0 : i32
    return %c0_i32, %c0_i32_0, %c0_i32_1 : i32, i32, i32
  }
  func.func @transform_9(%arg0: i32) -> (i32, i32) {
    %c0_i32 = arith.constant 0 : i32
    %c0_i32_0 = arith.constant 0 : i32
    %c0_i32_1 = arith.constant 0 : i32
    return %c0_i32, %c0_i32_0 : i32, i32
  }
  func.func @transform_10(%arg0: i32) -> (i32, i32, i32) {
    %c0_i32 = arith.constant 0 : i32
    %c0_i32_0 = arith.constant 0 : i32
    %c0_i32_1 = arith.constant 0 : i32
    %c0_i32_2 = arith.constant 0 : i32
    return %c0_i32, %c0_i32_0, %c0_i32_1 : i32, i32, i32
  }
  func.func @transform_11(%arg0: i32) -> (i32, i32, i32) {
    %c0_i32 = arith.constant 0 : i32
    %c0_i32_0 = arith.constant 0 : i32
    %c0_i32_1 = arith.constant 0 : i32
    %c0_i32_2 = arith.constant 0 : i32
    return %c0_i32, %c0_i32_0, %c0_i32_1 : i32, i32, i32
  }
  func.func @transform_12(%arg0: i32) -> (i32, i32) {
    %c0_i32 = arith.constant 0 : i32
    %c0_i32_0 = arith.constant 0 : i32
    %c0_i32_1 = arith.constant 0 : i32
    return %c0_i32, %c0_i32_0 : i32, i32
  }
  func.func @transform_13(%arg0: i32) -> (i32, i32, i32) {
    %c0_i32 = arith.constant 0 : i32
    %c0_i32_0 = arith.constant 0 : i32
    %c0_i32_1 = arith.constant 0 : i32
    %c0_i32_2 = arith.constant 0 : i32
    return %c0_i32, %c0_i32_0, %c0_i32_1 : i32, i32, i32
  }
  func.func @transform_14(%arg0: i32) -> (i32, i32) {
    %c0_i32 = arith.constant 0 : i32
    %c0_i32_0 = arith.constant 0 : i32
    %c0_i32_1 = arith.constant 0 : i32
    return %c0_i32, %c0_i32_0 : i32, i32
  }
  func.func @transform_15(%arg0: i32) -> (i32, i32, i32) {
    %c0_i32 = arith.constant 0 : i32
    %c0_i32_0 = arith.constant 0 : i32
    %c0_i32_1 = arith.constant 0 : i32
    %c0_i32_2 = arith.constant 0 : i32
    return %c0_i32, %c0_i32_0, %c0_i32_1 : i32, i32, i32
  }
  func.func @transform_16(%arg0: i32) -> (i32, i32, i32) {
    %c0_i32 = arith.constant 0 : i32
    %c0_i32_0 = arith.constant 0 : i32
    %c0_i32_1 = arith.constant 0 : i32
    %c0_i32_2 = arith.constant 0 : i32
    return %c0_i32, %c0_i32_0, %c0_i32_1 : i32, i32, i32
  }
  func.func @transform_17(%arg0: i32) -> (i32, i32) {
    %c0_i32 = arith.constant 0 : i32
    %c0_i32_0 = arith.constant 0 : i32
    %c0_i32_1 = arith.constant 0 : i32
    return %c0_i32, %c0_i32_0 : i32, i32
  }
  func.func @transform_18(%arg0: i32) -> (i32, i32, i32) {
    %c0_i32 = arith.constant 0 : i32
    %c0_i32_0 = arith.constant 0 : i32
    %c0_i32_1 = arith.constant 0 : i32
    %c0_i32_2 = arith.constant 0 : i32
    return %c0_i32, %c0_i32_0, %c0_i32_1 : i32, i32, i32
  }
  func.func @transform_19(%arg0: i32) -> (i32, i32) {
    %c0_i32 = arith.constant 0 : i32
    %c0_i32_0 = arith.constant 0 : i32
    %c0_i32_1 = arith.constant 0 : i32
    return %c0_i32, %c0_i32_0 : i32, i32
  }
  func.func @transform_20(%arg0: i32) -> (i32, i32, i32) {
    %c0_i32 = arith.constant 0 : i32
    %c0_i32_0 = arith.constant 0 : i32
    %c0_i32_1 = arith.constant 0 : i32
    %c0_i32_2 = arith.constant 0 : i32
    return %c0_i32, %c0_i32_0, %c0_i32_1 : i32, i32, i32
  }
  func.func @transform_21(%arg0: i32) -> (i32, i32, i32) {
    %c0_i32 = arith.constant 0 : i32
    %c0_i32_0 = arith.constant 0 : i32
    %c0_i32_1 = arith.constant 0 : i32
    %c0_i32_2 = arith.constant 0 : i32
    return %c0_i32, %c0_i32_0, %c0_i32_1 : i32, i32, i32
  }
  func.func @transform_22(%arg0: i32) -> (i32, i32) {
    %c0_i32 = arith.constant 0 : i32
    %c0_i32_0 = arith.constant 0 : i32
    %c0_i32_1 = arith.constant 0 : i32
    return %c0_i32, %c0_i32_0 : i32, i32
  }
  func.func @transform_23(%arg0: i32) -> (i32, i32, i32) {
    %c0_i32 = arith.constant 0 : i32
    %c0_i32_0 = arith.constant 0 : i32
    %c0_i32_1 = arith.constant 0 : i32
    %c0_i32_2 = arith.constant 0 : i32
    return %c0_i32, %c0_i32_0, %c0_i32_1 : i32, i32, i32
  }
  func.func @transform_24(%arg0: i32) -> (i32, i32) {
    %c0_i32 = arith.constant 0 : i32
    %c0_i32_0 = arith.constant 0 : i32
    %c0_i32_1 = arith.constant 0 : i32
    return %c0_i32, %c0_i32_0 : i32, i32
  }
  func.func @transform_25(%arg0: i32) -> (i32, i32, i32) {
    %c0_i32 = arith.constant 0 : i32
    %c0_i32_0 = arith.constant 0 : i32
    %c0_i32_1 = arith.constant 0 : i32
    %c0_i32_2 = arith.constant 0 : i32
    return %c0_i32, %c0_i32_0, %c0_i32_1 : i32, i32, i32
  }
  func.func @transform_26(%arg0: i32) -> (i32, i32) {
    %c0_i32 = arith.constant 0 : i32
    %c0_i32_0 = arith.constant 0 : i32
    %c0_i32_1 = arith.constant 0 : i32
    return %c0_i32, %c0_i32_0 : i32, i32
  }
  func.func @transform_27(%arg0: i32) -> (i32, i32, i32) {
    %c0_i32 = arith.constant 0 : i32
    %c0_i32_0 = arith.constant 0 : i32
    %c0_i32_1 = arith.constant 0 : i32
    %c0_i32_2 = arith.constant 0 : i32
    return %c0_i32, %c0_i32_0, %c0_i32_1 : i32, i32, i32
  }
  func.func @transform_28(%arg0: i32) -> (i32, i32, i32) {
    %c0_i32 = arith.constant 0 : i32
    %c0_i32_0 = arith.constant 0 : i32
    %c0_i32_1 = arith.constant 0 : i32
    %c0_i32_2 = arith.constant 0 : i32
    return %c0_i32, %c0_i32_0, %c0_i32_1 : i32, i32, i32
  }
  func.func @transform_29(%arg0: i32) -> (i32, i32) {
    %c0_i32 = arith.constant 0 : i32
    %c0_i32_0 = arith.constant 0 : i32
    %c0_i32_1 = arith.constant 0 : i32
    return %c0_i32, %c0_i32_0 : i32, i32
  }
  func.func @transform_30(%arg0: i32) -> (i32, i32, i32) {
    %c0_i32 = arith.constant 0 : i32
    %c0_i32_0 = arith.constant 0 : i32
    %c0_i32_1 = arith.constant 0 : i32
    %c0_i32_2 = arith.constant 0 : i32
    return %c0_i32, %c0_i32_0, %c0_i32_1 : i32, i32, i32
  }
  func.func @transform_31(%arg0: i32) -> (i32, i32) {
    %c0_i32 = arith.constant 0 : i32
    %c0_i32_0 = arith.constant 0 : i32
    %c0_i32_1 = arith.constant 0 : i32
    return %c0_i32, %c0_i32_0 : i32, i32
  }
  func.func @transform_32(%arg0: i32) -> (i32, i32, i32) {
    %c0_i32 = arith.constant 0 : i32
    %c0_i32_0 = arith.constant 0 : i32
    %c0_i32_1 = arith.constant 0 : i32
    %c0_i32_2 = arith.constant 0 : i32
    return %c0_i32, %c0_i32_0, %c0_i32_1 : i32, i32, i32
  }
  func.func @transform_33(%arg0: i32) -> (i32, i32) {
    %c0_i32 = arith.constant 0 : i32
    %c0_i32_0 = arith.constant 0 : i32
    %c0_i32_1 = arith.constant 0 : i32
    return %c0_i32, %c0_i32_0 : i32, i32
  }
  func.func @transform_34(%arg0: i32) -> (i32, i32, i32) {
    %c0_i32 = arith.constant 0 : i32
    %c0_i32_0 = arith.constant 0 : i32
    %c0_i32_1 = arith.constant 0 : i32
    %c0_i32_2 = arith.constant 0 : i32
    return %c0_i32, %c0_i32_0, %c0_i32_1 : i32, i32, i32
  }
  func.func @transform_35(%arg0: i32) -> (i32, i32, i32) {
    %c0_i32 = arith.constant 0 : i32
    %c0_i32_0 = arith.constant 0 : i32
    %c0_i32_1 = arith.constant 0 : i32
    %c0_i32_2 = arith.constant 0 : i32
    return %c0_i32, %c0_i32_0, %c0_i32_1 : i32, i32, i32
  }
  func.func @transform_36(%arg0: i32) -> (i32, i32) {
    %c0_i32 = arith.constant 0 : i32
    %c0_i32_0 = arith.constant 0 : i32
    %c0_i32_1 = arith.constant 0 : i32
    return %c0_i32, %c0_i32_0 : i32, i32
  }
  func.func @transform_37(%arg0: i32) -> (i32, i32, i32) {
    %c0_i32 = arith.constant 0 : i32
    %c0_i32_0 = arith.constant 0 : i32
    %c0_i32_1 = arith.constant 0 : i32
    %c0_i32_2 = arith.constant 0 : i32
    return %c0_i32, %c0_i32_0, %c0_i32_1 : i32, i32, i32
  }
  func.func @transform_38(%arg0: i32) -> (i32, i32) {
    %c0_i32 = arith.constant 0 : i32
    %c0_i32_0 = arith.constant 0 : i32
    %c0_i32_1 = arith.constant 0 : i32
    return %c0_i32, %c0_i32_0 : i32, i32
  }
  func.func @transform_39(%arg0: i32) -> (i32, i32, i32) {
    %c0_i32 = arith.constant 0 : i32
    %c0_i32_0 = arith.constant 0 : i32
    %c0_i32_1 = arith.constant 0 : i32
    %c0_i32_2 = arith.constant 0 : i32
    return %c0_i32, %c0_i32_0, %c0_i32_1 : i32, i32, i32
  }
  func.func @transform_40(%arg0: i32) -> (i32, i32) {
    %c0_i32 = arith.constant 0 : i32
    %c0_i32_0 = arith.constant 0 : i32
    %c0_i32_1 = arith.constant 0 : i32
    return %c0_i32, %c0_i32_0 : i32, i32
  }
  func.func @transform_41(%arg0: i32) -> (i32, i32, i32) {
    %c0_i32 = arith.constant 0 : i32
    %c0_i32_0 = arith.constant 0 : i32
    %c0_i32_1 = arith.constant 0 : i32
    %c0_i32_2 = arith.constant 0 : i32
    return %c0_i32, %c0_i32_0, %c0_i32_1 : i32, i32, i32
  }
  func.func @transform_42(%arg0: i32) -> (i32, i32, i32) {
    %c0_i32 = arith.constant 0 : i32
    %c0_i32_0 = arith.constant 0 : i32
    %c0_i32_1 = arith.constant 0 : i32
    %c0_i32_2 = arith.constant 0 : i32
    return %c0_i32, %c0_i32_0, %c0_i32_1 : i32, i32, i32
  }
  func.func @transform_43(%arg0: i32) -> (i32, i32) {
    %c0_i32 = arith.constant 0 : i32
    %c0_i32_0 = arith.constant 0 : i32
    %c0_i32_1 = arith.constant 0 : i32
    return %c0_i32, %c0_i32_0 : i32, i32
  }
  func.func @transform_44(%arg0: i32) -> (i32, i32, i32) {
    %c0_i32 = arith.constant 0 : i32
    %c0_i32_0 = arith.constant 0 : i32
    %c0_i32_1 = arith.constant 0 : i32
    %c0_i32_2 = arith.constant 0 : i32
    return %c0_i32, %c0_i32_0, %c0_i32_1 : i32, i32, i32
  }
  func.func @transform_45(%arg0: i32) -> (i32, i32) {
    %c0_i32 = arith.constant 0 : i32
    %c0_i32_0 = arith.constant 0 : i32
    %c0_i32_1 = arith.constant 0 : i32
    return %c0_i32, %c0_i32_0 : i32, i32
  }
  func.func @transform_46(%arg0: i32) -> (i32, i32, i32) {
    %c0_i32 = arith.constant 0 : i32
    %c0_i32_0 = arith.constant 0 : i32
    %c0_i32_1 = arith.constant 0 : i32
    %c0_i32_2 = arith.constant 0 : i32
    return %c0_i32, %c0_i32_0, %c0_i32_1 : i32, i32, i32
  }
  func.func @transform_47(%arg0: i32) -> (i32, i32) {
    %c0_i32 = arith.constant 0 : i32
    %c0_i32_0 = arith.constant 0 : i32
    %c0_i32_1 = arith.constant 0 : i32
    return %c0_i32, %c0_i32_0 : i32, i32
  }
  func.func @transform_48(%arg0: i32) -> (i32, i32, i32) {
    %c0_i32 = arith.constant 0 : i32
    %c0_i32_0 = arith.constant 0 : i32
    %c0_i32_1 = arith.constant 0 : i32
    %c0_i32_2 = arith.constant 0 : i32
    return %c0_i32, %c0_i32_0, %c0_i32_1 : i32, i32, i32
  }
  func.func @transform_49(%arg0: i32) -> (i32, i32, i32) {
    %c0_i32 = arith.constant 0 : i32
    %c0_i32_0 = arith.constant 0 : i32
    %c0_i32_1 = arith.constant 0 : i32
    %c0_i32_2 = arith.constant 0 : i32
    return %c0_i32, %c0_i32_0, %c0_i32_1 : i32, i32, i32
  }
  func.func @transform_50(%arg0: i32) -> (i32, i32) {
    %c0_i32 = arith.constant 0 : i32
    %c0_i32_0 = arith.constant 0 : i32
    %c0_i32_1 = arith.constant 0 : i32
    return %c0_i32, %c0_i32_0 : i32, i32
  }
  func.func @transform_51(%arg0: i32) -> (i32, i32, i32) {
    %c0_i32 = arith.constant 0 : i32
    %c0_i32_0 = arith.constant 0 : i32
    %c0_i32_1 = arith.constant 0 : i32
    %c0_i32_2 = arith.constant 0 : i32
    return %c0_i32, %c0_i32_0, %c0_i32_1 : i32, i32, i32
  }
  func.func @transform_52(%arg0: i32) -> (i32, i32) {
    %c0_i32 = arith.constant 0 : i32
    %c0_i32_0 = arith.constant 0 : i32
    %c0_i32_1 = arith.constant 0 : i32
    return %c0_i32, %c0_i32_0 : i32, i32
  }
  func.func @transform_53(%arg0: i32) -> (i32, i32) {
    %c0_i32 = arith.constant 0 : i32
    %c0_i32_0 = arith.constant 0 : i32
    %c0_i32_1 = arith.constant 0 : i32
    return %c0_i32, %c0_i32_0 : i32, i32
  }
  func.func @transform_54(%arg0: i32) -> (i32, i32) {
    %c0_i32 = arith.constant 0 : i32
    %c0_i32_0 = arith.constant 0 : i32
    %c0_i32_1 = arith.constant 0 : i32
    return %c0_i32, %c0_i32_0 : i32, i32
  }
  func.func @transform_55(%arg0: i32) -> (i32, i32) {
    %c0_i32 = arith.constant 0 : i32
    %c0_i32_0 = arith.constant 0 : i32
    return %arg0, %c0_i32 : i32, i32
  }
}

</mosaic_0001>

<llo_original>
// kernel: forward.1
$region0: #{forward.1}
  #allocation0 [shape = 'u32[]', space=smem, size = 0x4, offset = 0x4, fixed_abs, tag = 'smem constant byte address 0x4 - core index']
  #allocation1 [shape = 'u32[72,128]{1,0:T(1,128)}', space=vmem, size = 0x9000, scoped, tag = 'internal scratch']
  #allocation2 [shape = 'f32[16,128]{1,0:T(8,128)}', space=vmem, size = 0x2000, scoped, tag = 'scratch operand']
  #allocation3 [shape = 'f32[8,128]{1,0:T(8,128)}', space=vmem, size = 0x1000, scoped, tag = 'scratch operand']
  #allocation4 [shape = 'f32[4,128]{1,0:T(4,128)}', space=vmem, size = 0x800, scoped, tag = 'scratch operand']
  #allocation5 [shape = 'f32[2,128]{1,0:T(2,128)}', space=vmem, size = 0x400, scoped, tag = 'scratch operand']
  %s0 = inlined_call_operand.smem [shape: u32[56], index: -1, kind: input, shape index: {}]
  %s1 = sld [smem:[%s0]]
  %s2 = scalar_lea.smem %s0, 1
  %s3 = sld [smem:[%s2]]
  %s4 = scalar_lea.smem %s0, 2
  %s5 = sld [smem:[%s4]]
  %s6 = scalar_lea.smem %s0, 3
  %s7 = sld [smem:[%s6]]
  %s8 = scalar_lea.smem %s0, 4
  %s9 = sld [smem:[%s8]]
  %s10 = scalar_lea.smem %s0, 5
  %s11 = sld [smem:[%s10]]
  %s12 = scalar_lea.smem %s0, 6
  %s13 = sld [smem:[%s12]]
  %s14 = scalar_lea.smem %s0, 7
  %s15 = sld [smem:[%s14]]
  %s16 = scalar_lea.smem %s0, 8
  %s17 = sld [smem:[%s16]]
  %s18 = scalar_lea.smem %s0, 9
  %s19 = sld [smem:[%s18]]
  %s20 = scalar_lea.smem %s0, 10
  %s21 = sld [smem:[%s20]]
  %s22 = scalar_lea.smem %s0, 11
  %s23 = sld [smem:[%s22]]
  %s24 = scalar_lea.smem %s0, 12
  %s25 = sld [smem:[%s24]]
  %s26 = scalar_lea.smem %s0, 13
  %s27 = sld [smem:[%s26]]
  %s28 = scalar_lea.smem %s0, 14
  %s29 = sld [smem:[%s28]]
  %s30 = scalar_lea.smem %s0, 15
  %s31 = sld [smem:[%s30]]
  %s32 = scalar_lea.smem %s0, 16
  %s33 = sld [smem:[%s32]]
  %s34 = scalar_lea.smem %s0, 17
  %s35 = sld [smem:[%s34]]
  %s36 = scalar_lea.smem %s0, 18
  %s37 = sld [smem:[%s36]]
  %s38 = scalar_lea.smem %s0, 19
  %s39 = sld [smem:[%s38]]
  %s40 = scalar_lea.smem %s0, 20
  %s41 = sld [smem:[%s40]]
  %s42 = scalar_lea.smem %s0, 21
  %s43 = sld [smem:[%s42]]
  %s44 = scalar_lea.smem %s0, 22
  %s45 = sld [smem:[%s44]]
  %s46 = scalar_lea.smem %s0, 23
  %s47 = sld [smem:[%s46]]
  %s48 = scalar_lea.smem %s0, 24
  %s49 = sld [smem:[%s48]]
  %s50 = scalar_lea.smem %s0, 25
  %s51 = sld [smem:[%s50]]
  %s52 = scalar_lea.smem %s0, 26
  %s53 = sld [smem:[%s52]]
  %s54 = scalar_lea.smem %s0, 27
  %s55 = sld [smem:[%s54]]
  %s56 = scalar_lea.smem %s0, 28
  %s57 = sld [smem:[%s56]]
  %s58 = scalar_lea.smem %s0, 29
  %s59 = sld [smem:[%s58]]
  %s60 = scalar_lea.smem %s0, 30
  %s61 = sld [smem:[%s60]]
  %s62 = scalar_lea.smem %s0, 31
  %s63 = sld [smem:[%s62]]
  %s64 = scalar_lea.smem %s0, 32
  %s65 = sld [smem:[%s64]]
  %s66 = scalar_lea.smem %s0, 33
  %s67 = sld [smem:[%s66]]
  %s68 = scalar_lea.smem %s0, 34
  %s69 = sld [smem:[%s68]]
  %s70 = scalar_lea.smem %s0, 35
  %s71 = sld [smem:[%s70]]
  %s72 = scalar_lea.smem %s0, 36
  %s73 = sld [smem:[%s72]]
  %s74 = scalar_lea.smem %s0, 37
  %s75 = sld [smem:[%s74]]
  %s76 = scalar_lea.smem %s0, 38
  %s77 = sld [smem:[%s76]]
  %s78 = scalar_lea.smem %s0, 39
  %s79 = sld [smem:[%s78]]
  %s80 = scalar_lea.smem %s0, 40
  %s81 = sld [smem:[%s80]]
  %s82 = scalar_lea.smem %s0, 41
  %s83 = sld [smem:[%s82]]
  %s84 = scalar_lea.smem %s0, 42
  %s85 = sld [smem:[%s84]]
  %s86 = scalar_lea.smem %s0, 43
  %s87 = sld [smem:[%s86]]
  %s88 = scalar_lea.smem %s0, 44
  %s89 = sld [smem:[%s88]]
  %s90 = scalar_lea.smem %s0, 45
  %s91 = sld [smem:[%s90]]
  %s92 = scalar_lea.smem %s0, 46
  %s93 = sld [smem:[%s92]]
  %s94 = scalar_lea.smem %s0, 47
  %s95 = sld [smem:[%s94]]
  %s96 = scalar_lea.smem %s0, 48
  %s97 = sld [smem:[%s96]]
  %s98 = scalar_lea.smem %s0, 49
  %s99 = sld [smem:[%s98]]
  %s100 = scalar_lea.smem %s0, 50
  %s101 = sld [smem:[%s100]]
  %s102 = scalar_lea.smem %s0, 51
  %s103 = sld [smem:[%s102]]
  %s104 = scalar_lea.smem %s0, 52
  %s105 = sld [smem:[%s104]]
  %s106 = scalar_lea.smem %s0, 53
  %s107 = sld [smem:[%s106]]
  %s108 = scalar_lea.smem %s0, 54
  %s109 = sld [smem:[%s108]]
  %s110 = scalar_lea.smem %s0, 55
  %s111 = sld [smem:[%s110]]
  %s112 = sld [smem:[#allocation0]]
  $region341: #{forward.1} parent=0
    _
  %s114 = ssub.s32 1, %s112
  %s115 = scalar_select 0, %s114, %s112
  $region1: #{forward.1} parent=0
    #allocation6 [shape = 'u8[49152]{0}', space=vmem, size = 0xc000, scoped, tag = 'input window, operand 1, single buffered']
    #allocation7 [shape = 's32[2]{0}', space=sflag, size = 0x8, scoped, tag = 'scoped memory for forward.1']
    #allocation8 [shape = 'u8[49152]{0}', space=vmem, size = 0xc000, scoped, tag = 'input window, operand 6, single buffered']
    #allocation9 [shape = 's32[1]{0}', space=sflag, size = 0x4, scoped, tag = 'scoped memory for forward.1']
    #allocation10 [shape = 'u8[49152]{0}', space=vmem, size = 0xc000, scoped, tag = 'input window, operand 11, single buffered']
    #allocation11 [shape = 'u8[49152]{0}', space=vmem, size = 0xc000, scoped, tag = 'input window, operand 16, single buffered']
    #allocation12 [shape = 's32[1]{0}', space=sflag, size = 0x4, scoped, tag = 'scoped memory for forward.1']
    #allocation13 [shape = 'u8[49152]{0}', space=vmem, size = 0xc000, scoped, tag = 'input window, operand 21, single buffered']
    #allocation14 [shape = 'u8[65536]{0}', space=vmem, size = 0x10000, scoped, tag = 'input window, operand 25, single buffered']
    #allocation15 [shape = 's32[1]{0}', space=sflag, size = 0x4, scoped, tag = 'scoped memory for forward.1']
    #allocation16 [shape = 'u8[98304]{0}', space=vmem, size = 0x18000, scoped, tag = 'input window, operand 27, single buffered']
    #allocation17 [shape = 'u8[98304]{0}', space=vmem, size = 0x18000, scoped, tag = 'input window, operand 28, single buffered']
    #allocation18 [shape = 's32[1]{0}', space=sflag, size = 0x4, scoped, tag = 'scoped memory for forward.1']
    #allocation19 [shape = 'u8[98304]{0}', space=vmem, size = 0x18000, scoped, tag = 'input window, operand 30, single buffered']
    #allocation20 [shape = 'u8[65536]{0}', space=vmem, size = 0x10000, scoped, tag = 'input window, operand 32, single buffered']
    #allocation21 [shape = 's32[1]{0}', space=sflag, size = 0x4, scoped, tag = 'scoped memory for forward.1']
    #allocation22 [shape = 'u8[98304]{0}', space=vmem, size = 0x18000, scoped, tag = 'input window, operand 34, single buffered']
    #allocation23 [shape = 'u8[98304]{0}', space=vmem, size = 0x18000, scoped, tag = 'input window, operand 35, single buffered']
    #allocation24 [shape = 's32[1]{0}', space=sflag, size = 0x4, scoped, tag = 'scoped memory for forward.1']
    #allocation25 [shape = 'u8[98304]{0}', space=vmem, size = 0x18000, scoped, tag = 'input window, operand 37, single buffered']
    #allocation26 [shape = 'u8[65536]{0}', space=vmem, size = 0x10000, scoped, tag = 'input window, operand 39, single buffered']
    #allocation27 [shape = 's32[1]{0}', space=sflag, size = 0x4, scoped, tag = 'scoped memory for forward.1']
    #allocation28 [shape = 'u8[98304]{0}', space=vmem, size = 0x18000, scoped, tag = 'input window, operand 41, single buffered']
    #allocation29 [shape = 'u8[98304]{0}', space=vmem, size = 0x18000, scoped, tag = 'input window, operand 42, single buffered']
    #allocation30 [shape = 's32[1]{0}', space=sflag, size = 0x4, scoped, tag = 'scoped memory for forward.1']
    #allocation31 [shape = 'u8[98304]{0}', space=vmem, size = 0x18000, scoped, tag = 'input window, operand 44, single buffered']
    #allocation32 [shape = 'u8[65536]{0}', space=vmem, size = 0x10000, scoped, tag = 'input window, operand 46, single buffered']
    #allocation33 [shape = 's32[1]{0}', space=sflag, size = 0x4, scoped, tag = 'scoped memory for forward.1']
    #allocation34 [shape = 'u8[98304]{0}', space=vmem, size = 0x18000, scoped, tag = 'input window, operand 48, single buffered']
    #allocation35 [shape = 'u8[98304]{0}', space=vmem, size = 0x18000, scoped, tag = 'input window, operand 49, single buffered']
    #allocation36 [shape = 's32[1]{0}', space=sflag, size = 0x4, scoped, tag = 'scoped memory for forward.1']
    #allocation37 [shape = 'u8[98304]{0}', space=vmem, size = 0x18000, scoped, tag = 'input window, operand 51, single buffered']
    #allocation38 [shape = 'u8[65536]{0}', space=vmem, size = 0x10000, scoped, tag = 'input window, operand 53, single buffered']
    #allocation39 [shape = 's32[1]{0}', space=sflag, size = 0x4, scoped, tag = 'scoped memory for forward.1']
    %116 = vsyncpa [#allocation7], 0
    %117 = vsyncpa [#allocation9], 0
    %118 = vsyncpa [#allocation12], 0
    %119 = vsyncpa [#allocation15], 0
    %120 = vsyncpa [#allocation18], 0
    %121 = vsyncpa [#allocation21], 0
    %122 = vsyncpa [#allocation24], 0
    %123 = vsyncpa [#allocation27], 0
    %124 = vsyncpa [#allocation30], 0
    %125 = vsyncpa [#allocation33], 0
    %126 = vsyncpa [#allocation36], 0
    %127 = vsyncpa [#allocation39], 0
    loop: start=0, step=1, limit=4
    $region2: #{forward.1} parent=1 // loop_pre_header
      _
    $region3: #{forward.1} parent=1 // loop_header
      %s129 = sphi 0, %s133
      %p130 = scmp.ge.s32.totalorder %s129, 4
      %s139 = sphi 0, %s141
      %s142 = sphi 0, %s139
      %s143 = sphi 0, %s142
      %s159 = sphi 0, %s143
      %s163 = sphi 0, %s163
      %s165 = sphi 0, %s163
      %s166 = sphi 0, %s165
      %s180 = sphi 0, %s166
      %s184 = sphi 0, %s184
      %s186 = sphi 0, %s184
      %s187 = sphi 0, %s186
      %s201 = sphi 0, %s187
      %s205 = sphi 0, %s205
      %s207 = sphi 0, %s205
      %s208 = sphi 0, %s207
      %s222 = sphi 0, %s208
      %s226 = sphi 0, %s226
      %s228 = sphi 0, %s226
      %s229 = sphi 0, %s228
      %s243 = sphi 0, %s229
      %s247 = sphi 0, %s247
      %s249 = sphi 0, %s247
      %s250 = sphi 0, %s249
      %s264 = sphi 0, %s250
      %s268 = sphi 0, %s268
      %s270 = sphi 0, %s268
      %s271 = sphi 0, %s270
      %s285 = sphi 0, %s271
      %s289 = sphi 0, %s289
      %s291 = sphi 0, %s289
      %s292 = sphi 0, %s291
      %s306 = sphi 0, %s292
      %s310 = sphi 0, %s310
      %s312 = sphi 0, %s310
      %s313 = sphi 0, %s312
      %s327 = sphi 0, %s313
      %s331 = sphi 0, %s331
      %s333 = sphi 0, %s331
      %s334 = sphi 0, %s333
      %s348 = sphi 0, %s334
      %s352 = sphi 0, %s352
      %s354 = sphi 0, %s352
      %s355 = sphi 0, %s354
      %s369 = sphi 0, %s355
      %s373 = sphi 0, %s373
      %s375 = sphi 0, %s373
      %s376 = sphi 0, %s375
      %s390 = sphi 0, %s376
      %s394 = sphi 0, %s394
      %s396 = sphi 0, %s394
      %s397 = sphi 0, %s396
      %s411 = sphi 0, %s397
      %s415 = sphi 0, %s415
      %s417 = sphi 0, %s415
      %s418 = sphi 0, %s417
      %s432 = sphi 0, %s418
      %s436 = sphi 0, %s436
      %s438 = sphi 0, %s436
      %s439 = sphi 0, %s438
      %s453 = sphi 0, %s439
      %s457 = sphi 0, %s457
      %s459 = sphi 0, %s457
      %s460 = sphi 0, %s459
      %s474 = sphi 0, %s460
      %s478 = sphi 0, %s478
      %s480 = sphi 0, %s478
      %s481 = sphi 0, %s480
      %s495 = sphi 0, %s481
      %s499 = sphi 0, %s499
      %s501 = sphi 0, %s499
      %s502 = sphi 0, %s501
      %s516 = sphi 0, %s502
      %s520 = sphi 0, %s520
      %s522 = sphi 0, %s520
      %s523 = sphi 0, %s522
      %s537 = sphi 0, %s523
      %s541 = sphi 0, %s541
      %s543 = sphi 0, %s541
      %s544 = sphi 0, %s543
      %s558 = sphi 0, %s544
      %s562 = sphi 0, %s562
      %s564 = sphi 0, %s562
      %s565 = sphi 0, %s564
      %s579 = sphi 0, %s565
      %s583 = sphi 0, %s583
      %s585 = sphi 0, %s583
      %s586 = sphi 0, %s585
      %s600 = sphi 0, %s586
      %s604 = sphi 0, %s604
      %s606 = sphi 0, %s604
      %s607 = sphi 0, %s606
      %s621 = sphi 0, %s607
      %s625 = sphi 0, %s625
      %s627 = sphi 0, %s625
      %s628 = sphi 0, %s627
      %s642 = sphi 0, %s628
      %s646 = sphi 0, %s646
      %s648 = sphi 0, %s646
      %s649 = sphi 0, %s648
      %s663 = sphi 0, %s649
      %s667 = sphi 0, %s667
      %s669 = sphi 0, %s667
      %s670 = sphi 0, %s669
      %s684 = sphi 0, %s670
      %s688 = sphi 0, %s688
      %s690 = sphi 0, %s688
      %s691 = sphi 0, %s690
      %s705 = sphi 0, %s691
      %s709 = sphi 0, %s709
      %s711 = sphi 0, %s709
      %s712 = sphi 0, %s711
      %s726 = sphi 0, %s712
      %s730 = sphi 0, %s730
      %s732 = sphi 0, %s730
      %s733 = sphi 0, %s732
      %s747 = sphi 0, %s733
      %s751 = sphi 0, %s751
      %s753 = sphi 0, %s751
      %s754 = sphi 0, %s753
      %s768 = sphi 0, %s754
      %s772 = sphi 0, %s772
      %s774 = sphi 0, %s772
      %s775 = sphi 0, %s774
      %s789 = sphi 0, %s775
      %s793 = sphi 0, %s793
      %s795 = sphi 0, %s793
      %s796 = sphi 0, %s795
      %s810 = sphi 0, %s796
      %s814 = sphi 0, %s814
      %s816 = sphi 0, %s814
      %s817 = sphi 0, %s816
      %s831 = sphi 0, %s817
      %s835 = sphi 0, %s835
      %s837 = sphi 0, %s835
      %s838 = sphi 0, %s837
      %s852 = sphi 0, %s838
      %s856 = sphi 0, %s856
      %s858 = sphi 0, %s856
      %s859 = sphi 0, %s858
      %s873 = sphi 0, %s859
      %s877 = sphi 0, %s877
      %s879 = sphi 0, %s877
      %s880 = sphi 0, %s879
      %s894 = sphi 0, %s880
      %s898 = sphi 0, %s898
      %s900 = sphi 0, %s898
      %s901 = sphi 0, %s900
      %s915 = sphi 0, %s901
      %s919 = sphi 0, %s919
      %s921 = sphi 0, %s919
      %s922 = sphi 0, %s921
      %s936 = sphi 0, %s922
      %s940 = sphi 0, %s940
      %s942 = sphi 0, %s940
      %s943 = sphi 0, %s942
      %s957 = sphi 0, %s943
      %s961 = sphi 0, %s961
      %s963 = sphi 0, %s961
      %s964 = sphi 0, %s963
      %s978 = sphi 0, %s964
      %s982 = sphi 0, %s982
      %s984 = sphi 0, %s982
      %s985 = sphi 0, %s984
      %s999 = sphi 0, %s985
      %s1003 = sphi 0, %s1003
      %s1005 = sphi 0, %s1003
      %s1006 = sphi 0, %s1005
      %s1020 = sphi 0, %s1006
      %s1024 = sphi 0, %s1024
      %s1026 = sphi 0, %s1024
      %s1027 = sphi 0, %s1026
      %s1041 = sphi 0, %s1027
      %s1045 = sphi 0, %s1045
      %s1047 = sphi 0, %s1045
      %s1048 = sphi 0, %s1047
      %s1062 = sphi 0, %s1048
      %s1066 = sphi 0, %s1066
      %s1068 = sphi 0, %s1066
      %s1069 = sphi 0, %s1068
      %s1083 = sphi 0, %s1069
      %s1087 = sphi 0, %s1087
      %s1089 = sphi 0, %s1087
      %s1090 = sphi 0, %s1089
      %s1104 = sphi 0, %s1090
      %s1108 = sphi 0, %s1108
      %s1110 = sphi 0, %s1108
      %s1111 = sphi 0, %s1110
      %s1125 = sphi 0, %s1111
      %s1129 = sphi 0, %s1129
      %s1131 = sphi 0, %s1129
      %s1132 = sphi 0, %s1131
      %s1146 = sphi 0, %s1132
      %s1150 = sphi 0, %s1150
      %s1152 = sphi 0, %s1150
      %s1153 = sphi 0, %s1152
      %s1167 = sphi 0, %s1153
      %s1171 = sphi 0, %s1171
      %s1173 = sphi 0, %s1171
      %s1174 = sphi 0, %s1173
      %s1188 = sphi 0, %s1174
      %s1192 = sphi 0, %s1192
      %s1194 = sphi 0, %s1192
      %s1195 = sphi 0, %s1194
      %s1209 = sphi 0, %s1195
      %s1213 = sphi 0, %s1213
      %s1215 = sphi 0, %s1213
      %s1216 = sphi 0, %s1215
      %s1230 = sphi 0, %s1216
      %s1234 = sphi 0, %s1234
      %s1236 = sphi 0, %s1234
      %s1237 = sphi 0, %s1236
      %s1251 = sphi 0, %s1237
      %s1255 = sphi 0, %s1255
      %s1257 = sphi 0, %s1255
      %s1258 = sphi 0, %s1257
      %s1272 = sphi 0, %s1258
      %s1276 = sphi 0, %s1276
      %s1278 = sphi 0, %s1276
      %s1279 = sphi 0, %s1278
      %s1293 = sphi 0, %s1279
      %s1299 = sphi 0, %s1301
      %s1302 = sphi 0, %s1299
      %s1303 = sphi 0, %s1302
      %s1319 = sphi 0, %s1303
    $region4: #{forward.1} parent=1 // loop_header_branch
      %132 = sbr.rel (%p130) target = $region8
    $region5: #{forward.1} parent=1 // loop_body
      %s134 = ssub.s32 %s129, 1
      %s135 = ssub.s32 %s129, 2
      %s136 = sadd.s32 %s129, 1
      %s137 = ssub.s32 %s129, %s136
      %p138 = scmp.eq.s32.totalorder %s137, 0
      %s140 = sadd.s32 %s139, 1
      %s141 = scalar_select %p138, %s139, %s140
      %p144 = pneg %p138
      %p145 = scmp.eq.s32.totalorder %s129, 1
      %p146 = por %p144, %p145
      %p147 = scmp.ne.s32.totalorder %s139, %s142
      %p148 = scmp.eq.s32.totalorder %s129, 0
      %p149 = por %p147, %p148
      %p150 = scmp.ne.s32.totalorder %s139, %s142
      %p151 = scmp.eq.s32.totalorder %s134, 1
      %p152 = por %p150, %p151
      %p153 = scmp.ne.s32.totalorder %s142, %s143
      %p154 = scmp.eq.s32.totalorder %s134, 0
      %p155 = por %p153, %p154
      %p156 = scmp.ne.s32.totalorder %s142, %s143
      %p157 = scmp.eq.s32.totalorder %s135, 1
      %p158 = por %p156, %p157
      %p160 = scmp.ne.s32.totalorder %s143, %s159
      %p161 = scmp.eq.s32.totalorder %s135, 0
      %p162 = por %p160, %p161
      %s164 = sadd.s32 %s163, 1
      %p167 = scmp.eq.s32.totalorder %s129, 1
      %p168 = scmp.ne.s32.totalorder %s163, %s165
      %p169 = scmp.eq.s32.totalorder %s129, 0
      %p170 = por %p168, %p169
      %p171 = scmp.ne.s32.totalorder %s163, %s165
      %p172 = scmp.eq.s32.totalorder %s134, 1
      %p173 = por %p171, %p172
      %p174 = scmp.ne.s32.totalorder %s165, %s166
      %p175 = scmp.eq.s32.totalorder %s134, 0
      %p176 = por %p174, %p175
      %p177 = scmp.ne.s32.totalorder %s165, %s166
      %p178 = scmp.eq.s32.totalorder %s135, 1
      %p179 = por %p177, %p178
      %p181 = scmp.ne.s32.totalorder %s166, %s180
      %p182 = scmp.eq.s32.totalorder %s135, 0
      %p183 = por %p181, %p182
      %s185 = sadd.s32 %s184, 1
      %p188 = scmp.eq.s32.totalorder %s129, 1
      %p189 = scmp.ne.s32.totalorder %s184, %s186
      %p190 = scmp.eq.s32.totalorder %s129, 0
      %p191 = por %p189, %p190
      %p192 = scmp.ne.s32.totalorder %s184, %s186
      %p193 = scmp.eq.s32.totalorder %s134, 1
      %p194 = por %p192, %p193
      %p195 = scmp.ne.s32.totalorder %s186, %s187
      %p196 = scmp.eq.s32.totalorder %s134, 0
      %p197 = por %p195, %p196
      %p198 = scmp.ne.s32.totalorder %s186, %s187
      %p199 = scmp.eq.s32.totalorder %s135, 1
      %p200 = por %p198, %p199
      %p202 = scmp.ne.s32.totalorder %s187, %s201
      %p203 = scmp.eq.s32.totalorder %s135, 0
      %p204 = por %p202, %p203
      %s206 = sadd.s32 %s205, 1
      %p209 = scmp.eq.s32.totalorder %s129, 1
      %p210 = scmp.ne.s32.totalorder %s205, %s207
      %p211 = scmp.eq.s32.totalorder %s129, 0
      %p212 = por %p210, %p211
      %p213 = scmp.ne.s32.totalorder %s205, %s207
      %p214 = scmp.eq.s32.totalorder %s134, 1
      %p215 = por %p213, %p214
      %p216 = scmp.ne.s32.totalorder %s207, %s208
      %p217 = scmp.eq.s32.totalorder %s134, 0
      %p218 = por %p216, %p217
      %p219 = scmp.ne.s32.totalorder %s207, %s208
      %p220 = scmp.eq.s32.totalorder %s135, 1
      %p221 = por %p219, %p220
      %p223 = scmp.ne.s32.totalorder %s208, %s222
      %p224 = scmp.eq.s32.totalorder %s135, 0
      %p225 = por %p223, %p224
      %s227 = sadd.s32 %s226, 1
      %p230 = scmp.eq.s32.totalorder %s129, 1
      %p231 = scmp.ne.s32.totalorder %s226, %s228
      %p232 = scmp.eq.s32.totalorder %s129, 0
      %p233 = por %p231, %p232
      %p234 = scmp.ne.s32.totalorder %s226, %s228
      %p235 = scmp.eq.s32.totalorder %s134, 1
      %p236 = por %p234, %p235
      %p237 = scmp.ne.s32.totalorder %s228, %s229
      %p238 = scmp.eq.s32.totalorder %s134, 0
      %p239 = por %p237, %p238
      %p240 = scmp.ne.s32.totalorder %s228, %s229
      %p241 = scmp.eq.s32.totalorder %s135, 1
      %p242 = por %p240, %p241
      %p244 = scmp.ne.s32.totalorder %s229, %s243
      %p245 = scmp.eq.s32.totalorder %s135, 0
      %p246 = por %p244, %p245
      %s248 = sadd.s32 %s247, 1
      %p251 = scmp.eq.s32.totalorder %s129, 1
      %p252 = scmp.ne.s32.totalorder %s247, %s249
      %p253 = scmp.eq.s32.totalorder %s129, 0
      %p254 = por %p252, %p253
      %p255 = scmp.ne.s32.totalorder %s247, %s249
      %p256 = scmp.eq.s32.totalorder %s134, 1
      %p257 = por %p255, %p256
      %p258 = scmp.ne.s32.totalorder %s249, %s250
      %p259 = scmp.eq.s32.totalorder %s134, 0
      %p260 = por %p258, %p259
      %p261 = scmp.ne.s32.totalorder %s249, %s250
      %p262 = scmp.eq.s32.totalorder %s135, 1
      %p263 = por %p261, %p262
      %p265 = scmp.ne.s32.totalorder %s250, %s264
      %p266 = scmp.eq.s32.totalorder %s135, 0
      %p267 = por %p265, %p266
      %s269 = sadd.s32 %s268, 1
      %p272 = scmp.eq.s32.totalorder %s129, 1
      %p273 = scmp.ne.s32.totalorder %s268, %s270
      %p274 = scmp.eq.s32.totalorder %s129, 0
      %p275 = por %p273, %p274
      %p276 = scmp.ne.s32.totalorder %s268, %s270
      %p277 = scmp.eq.s32.totalorder %s134, 1
      %p278 = por %p276, %p277
      %p279 = scmp.ne.s32.totalorder %s270, %s271
      %p280 = scmp.eq.s32.totalorder %s134, 0
      %p281 = por %p279, %p280
      %p282 = scmp.ne.s32.totalorder %s270, %s271
      %p283 = scmp.eq.s32.totalorder %s135, 1
      %p284 = por %p282, %p283
      %p286 = scmp.ne.s32.totalorder %s271, %s285
      %p287 = scmp.eq.s32.totalorder %s135, 0
      %p288 = por %p286, %p287
      %s290 = sadd.s32 %s289, 1
      %p293 = scmp.eq.s32.totalorder %s129, 1
      %p294 = scmp.ne.s32.totalorder %s289, %s291
      %p295 = scmp.eq.s32.totalorder %s129, 0
      %p296 = por %p294, %p295
      %p297 = scmp.ne.s32.totalorder %s289, %s291
      %p298 = scmp.eq.s32.totalorder %s134, 1
      %p299 = por %p297, %p298
      %p300 = scmp.ne.s32.totalorder %s291, %s292
      %p301 = scmp.eq.s32.totalorder %s134, 0
      %p302 = por %p300, %p301
      %p303 = scmp.ne.s32.totalorder %s291, %s292
      %p304 = scmp.eq.s32.totalorder %s135, 1
      %p305 = por %p303, %p304
      %p307 = scmp.ne.s32.totalorder %s292, %s306
      %p308 = scmp.eq.s32.totalorder %s135, 0
      %p309 = por %p307, %p308
      %s311 = sadd.s32 %s310, 1
      %p314 = scmp.eq.s32.totalorder %s129, 1
      %p315 = scmp.ne.s32.totalorder %s310, %s312
      %p316 = scmp.eq.s32.totalorder %s129, 0
      %p317 = por %p315, %p316
      %p318 = scmp.ne.s32.totalorder %s310, %s312
      %p319 = scmp.eq.s32.totalorder %s134, 1
      %p320 = por %p318, %p319
      %p321 = scmp.ne.s32.totalorder %s312, %s313
      %p322 = scmp.eq.s32.totalorder %s134, 0
      %p323 = por %p321, %p322
      %p324 = scmp.ne.s32.totalorder %s312, %s313
      %p325 = scmp.eq.s32.totalorder %s135, 1
      %p326 = por %p324, %p325
      %p328 = scmp.ne.s32.totalorder %s313, %s327
      %p329 = scmp.eq.s32.totalorder %s135, 0
      %p330 = por %p328, %p329
      %s332 = sadd.s32 %s331, 1
      %p335 = scmp.eq.s32.totalorder %s129, 1
      %p336 = scmp.ne.s32.totalorder %s331, %s333
      %p337 = scmp.eq.s32.totalorder %s129, 0
      %p338 = por %p336, %p337
      %p339 = scmp.ne.s32.totalorder %s331, %s333
      %p340 = scmp.eq.s32.totalorder %s134, 1
      %p341 = por %p339, %p340
      %p342 = scmp.ne.s32.totalorder %s333, %s334
      %p343 = scmp.eq.s32.totalorder %s134, 0
      %p344 = por %p342, %p343
      %p345 = scmp.ne.s32.totalorder %s333, %s334
      %p346 = scmp.eq.s32.totalorder %s135, 1
      %p347 = por %p345, %p346
      %p349 = scmp.ne.s32.totalorder %s334, %s348
      %p350 = scmp.eq.s32.totalorder %s135, 0
      %p351 = por %p349, %p350
      %s353 = sadd.s32 %s352, 1
      %p356 = scmp.eq.s32.totalorder %s129, 1
      %p357 = scmp.ne.s32.totalorder %s352, %s354
      %p358 = scmp.eq.s32.totalorder %s129, 0
      %p359 = por %p357, %p358
      %p360 = scmp.ne.s32.totalorder %s352, %s354
      %p361 = scmp.eq.s32.totalorder %s134, 1
      %p362 = por %p360, %p361
      %p363 = scmp.ne.s32.totalorder %s354, %s355
      %p364 = scmp.eq.s32.totalorder %s134, 0
      %p365 = por %p363, %p364
      %p366 = scmp.ne.s32.totalorder %s354, %s355
      %p367 = scmp.eq.s32.totalorder %s135, 1
      %p368 = por %p366, %p367
      %p370 = scmp.ne.s32.totalorder %s355, %s369
      %p371 = scmp.eq.s32.totalorder %s135, 0
      %p372 = por %p370, %p371
      %s374 = sadd.s32 %s373, 1
      %p377 = scmp.eq.s32.totalorder %s129, 1
      %p378 = scmp.ne.s32.totalorder %s373, %s375
      %p379 = scmp.eq.s32.totalorder %s129, 0
      %p380 = por %p378, %p379
      %p381 = scmp.ne.s32.totalorder %s373, %s375
      %p382 = scmp.eq.s32.totalorder %s134, 1
      %p383 = por %p381, %p382
      %p384 = scmp.ne.s32.totalorder %s375, %s376
      %p385 = scmp.eq.s32.totalorder %s134, 0
      %p386 = por %p384, %p385
      %p387 = scmp.ne.s32.totalorder %s375, %s376
      %p388 = scmp.eq.s32.totalorder %s135, 1
      %p389 = por %p387, %p388
      %p391 = scmp.ne.s32.totalorder %s376, %s390
      %p392 = scmp.eq.s32.totalorder %s135, 0
      %p393 = por %p391, %p392
      %s395 = sadd.s32 %s394, 1
      %p398 = scmp.eq.s32.totalorder %s129, 1
      %p399 = scmp.ne.s32.totalorder %s394, %s396
      %p400 = scmp.eq.s32.totalorder %s129, 0
      %p401 = por %p399, %p400
      %p402 = scmp.ne.s32.totalorder %s394, %s396
      %p403 = scmp.eq.s32.totalorder %s134, 1
      %p404 = por %p402, %p403
      %p405 = scmp.ne.s32.totalorder %s396, %s397
      %p406 = scmp.eq.s32.totalorder %s134, 0
      %p407 = por %p405, %p406
      %p408 = scmp.ne.s32.totalorder %s396, %s397
      %p409 = scmp.eq.s32.totalorder %s135, 1
      %p410 = por %p408, %p409
      %p412 = scmp.ne.s32.totalorder %s397, %s411
      %p413 = scmp.eq.s32.totalorder %s135, 0
      %p414 = por %p412, %p413
      %s416 = sadd.s32 %s415, 1
      %p419 = scmp.eq.s32.totalorder %s129, 1
      %p420 = scmp.ne.s32.totalorder %s415, %s417
      %p421 = scmp.eq.s32.totalorder %s129, 0
      %p422 = por %p420, %p421
      %p423 = scmp.ne.s32.totalorder %s415, %s417
      %p424 = scmp.eq.s32.totalorder %s134, 1
      %p425 = por %p423, %p424
      %p426 = scmp.ne.s32.totalorder %s417, %s418
      %p427 = scmp.eq.s32.totalorder %s134, 0
      %p428 = por %p426, %p427
      %p429 = scmp.ne.s32.totalorder %s417, %s418
      %p430 = scmp.eq.s32.totalorder %s135, 1
      %p431 = por %p429, %p430
      %p433 = scmp.ne.s32.totalorder %s418, %s432
      %p434 = scmp.eq.s32.totalorder %s135, 0
      %p435 = por %p433, %p434
      %s437 = sadd.s32 %s436, 1
      %p440 = scmp.eq.s32.totalorder %s129, 1
      %p441 = scmp.ne.s32.totalorder %s436, %s438
      %p442 = scmp.eq.s32.totalorder %s129, 0
      %p443 = por %p441, %p442
      %p444 = scmp.ne.s32.totalorder %s436, %s438
      %p445 = scmp.eq.s32.totalorder %s134, 1
      %p446 = por %p444, %p445
      %p447 = scmp.ne.s32.totalorder %s438, %s439
      %p448 = scmp.eq.s32.totalorder %s134, 0
      %p449 = por %p447, %p448
      %p450 = scmp.ne.s32.totalorder %s438, %s439
      %p451 = scmp.eq.s32.totalorder %s135, 1
      %p452 = por %p450, %p451
      %p454 = scmp.ne.s32.totalorder %s439, %s453
      %p455 = scmp.eq.s32.totalorder %s135, 0
      %p456 = por %p454, %p455
      %s458 = sadd.s32 %s457, 1
      %p461 = scmp.eq.s32.totalorder %s129, 1
      %p462 = scmp.ne.s32.totalorder %s457, %s459
      %p463 = scmp.eq.s32.totalorder %s129, 0
      %p464 = por %p462, %p463
      %p465 = scmp.ne.s32.totalorder %s457, %s459
      %p466 = scmp.eq.s32.totalorder %s134, 1
      %p467 = por %p465, %p466
      %p468 = scmp.ne.s32.totalorder %s459, %s460
      %p469 = scmp.eq.s32.totalorder %s134, 0
      %p470 = por %p468, %p469
      %p471 = scmp.ne.s32.totalorder %s459, %s460
      %p472 = scmp.eq.s32.totalorder %s135, 1
      %p473 = por %p471, %p472
      %p475 = scmp.ne.s32.totalorder %s460, %s474
      %p476 = scmp.eq.s32.totalorder %s135, 0
      %p477 = por %p475, %p476
      %s479 = sadd.s32 %s478, 1
      %p482 = scmp.eq.s32.totalorder %s129, 1
      %p483 = scmp.ne.s32.totalorder %s478, %s480
      %p484 = scmp.eq.s32.totalorder %s129, 0
      %p485 = por %p483, %p484
      %p486 = scmp.ne.s32.totalorder %s478, %s480
      %p487 = scmp.eq.s32.totalorder %s134, 1
      %p488 = por %p486, %p487
      %p489 = scmp.ne.s32.totalorder %s480, %s481
      %p490 = scmp.eq.s32.totalorder %s134, 0
      %p491 = por %p489, %p490
      %p492 = scmp.ne.s32.totalorder %s480, %s481
      %p493 = scmp.eq.s32.totalorder %s135, 1
      %p494 = por %p492, %p493
      %p496 = scmp.ne.s32.totalorder %s481, %s495
      %p497 = scmp.eq.s32.totalorder %s135, 0
      %p498 = por %p496, %p497
      %s500 = sadd.s32 %s499, 1
      %p503 = scmp.eq.s32.totalorder %s129, 1
      %p504 = scmp.ne.s32.totalorder %s499, %s501
      %p505 = scmp.eq.s32.totalorder %s129, 0
      %p506 = por %p504, %p505
      %p507 = scmp.ne.s32.totalorder %s499, %s501
      %p508 = scmp.eq.s32.totalorder %s134, 1
      %p509 = por %p507, %p508
      %p510 = scmp.ne.s32.totalorder %s501, %s502
      %p511 = scmp.eq.s32.totalorder %s134, 0
      %p512 = por %p510, %p511
      %p513 = scmp.ne.s32.totalorder %s501, %s502
      %p514 = scmp.eq.s32.totalorder %s135, 1
      %p515 = por %p513, %p514
      %p517 = scmp.ne.s32.totalorder %s502, %s516
      %p518 = scmp.eq.s32.totalorder %s135, 0
      %p519 = por %p517, %p518
      %s521 = sadd.s32 %s520, 1
      %p524 = scmp.eq.s32.totalorder %s129, 1
      %p525 = scmp.ne.s32.totalorder %s520, %s522
      %p526 = scmp.eq.s32.totalorder %s129, 0
      %p527 = por %p525, %p526
      %p528 = scmp.ne.s32.totalorder %s520, %s522
      %p529 = scmp.eq.s32.totalorder %s134, 1
      %p530 = por %p528, %p529
      %p531 = scmp.ne.s32.totalorder %s522, %s523
      %p532 = scmp.eq.s32.totalorder %s134, 0
      %p533 = por %p531, %p532
      %p534 = scmp.ne.s32.totalorder %s522, %s523
      %p535 = scmp.eq.s32.totalorder %s135, 1
      %p536 = por %p534, %p535
      %p538 = scmp.ne.s32.totalorder %s523, %s537
      %p539 = scmp.eq.s32.totalorder %s135, 0
      %p540 = por %p538, %p539
      %s542 = sadd.s32 %s541, 1
      %p545 = scmp.eq.s32.totalorder %s129, 1
      %p546 = scmp.ne.s32.totalorder %s541, %s543
      %p547 = scmp.eq.s32.totalorder %s129, 0
      %p548 = por %p546, %p547
      %p549 = scmp.ne.s32.totalorder %s541, %s543
      %p550 = scmp.eq.s32.totalorder %s134, 1
      %p551 = por %p549, %p550
      %p552 = scmp.ne.s32.totalorder %s543, %s544
      %p553 = scmp.eq.s32.totalorder %s134, 0
      %p554 = por %p552, %p553
      %p555 = scmp.ne.s32.totalorder %s543, %s544
      %p556 = scmp.eq.s32.totalorder %s135, 1
      %p557 = por %p555, %p556
      %p559 = scmp.ne.s32.totalorder %s544, %s558
      %p560 = scmp.eq.s32.totalorder %s135, 0
      %p561 = por %p559, %p560
      %s563 = sadd.s32 %s562, 1
      %p566 = scmp.eq.s32.totalorder %s129, 1
      %p567 = scmp.ne.s32.totalorder %s562, %s564
      %p568 = scmp.eq.s32.totalorder %s129, 0
      %p569 = por %p567, %p568
      %p570 = scmp.ne.s32.totalorder %s562, %s564
      %p571 = scmp.eq.s32.totalorder %s134, 1
      %p572 = por %p570, %p571
      %p573 = scmp.ne.s32.totalorder %s564, %s565
      %p574 = scmp.eq.s32.totalorder %s134, 0
      %p575 = por %p573, %p574
      %p576 = scmp.ne.s32.totalorder %s564, %s565
      %p577 = scmp.eq.s32.totalorder %s135, 1
      %p578 = por %p576, %p577
      %p580 = scmp.ne.s32.totalorder %s565, %s579
      %p581 = scmp.eq.s32.totalorder %s135, 0
      %p582 = por %p580, %p581
      %s584 = sadd.s32 %s583, 1
      %p587 = scmp.eq.s32.totalorder %s129, 1
      %p588 = scmp.ne.s32.totalorder %s583, %s585
      %p589 = scmp.eq.s32.totalorder %s129, 0
      %p590 = por %p588, %p589
      %p591 = scmp.ne.s32.totalorder %s583, %s585
      %p592 = scmp.eq.s32.totalorder %s134, 1
      %p593 = por %p591, %p592
      %p594 = scmp.ne.s32.totalorder %s585, %s586
      %p595 = scmp.eq.s32.totalorder %s134, 0
      %p596 = por %p594, %p595
      %p597 = scmp.ne.s32.totalorder %s585, %s586
      %p598 = scmp.eq.s32.totalorder %s135, 1
      %p599 = por %p597, %p598
      %p601 = scmp.ne.s32.totalorder %s586, %s600
      %p602 = scmp.eq.s32.totalorder %s135, 0
      %p603 = por %p601, %p602
      %s605 = sadd.s32 %s604, 1
      %p608 = scmp.eq.s32.totalorder %s129, 1
      %p609 = scmp.ne.s32.totalorder %s604, %s606
      %p610 = scmp.eq.s32.totalorder %s129, 0
      %p611 = por %p609, %p610
      %p612 = scmp.ne.s32.totalorder %s604, %s606
      %p613 = scmp.eq.s32.totalorder %s134, 1
      %p614 = por %p612, %p613
      %p615 = scmp.ne.s32.totalorder %s606, %s607
      %p616 = scmp.eq.s32.totalorder %s134, 0
      %p617 = por %p615, %p616
      %p618 = scmp.ne.s32.totalorder %s606, %s607
      %p619 = scmp.eq.s32.totalorder %s135, 1
      %p620 = por %p618, %p619
      %p622 = scmp.ne.s32.totalorder %s607, %s621
      %p623 = scmp.eq.s32.totalorder %s135, 0
      %p624 = por %p622, %p623
      %s626 = sadd.s32 %s625, 1
      %p629 = scmp.eq.s32.totalorder %s129, 1
      %p630 = scmp.ne.s32.totalorder %s625, %s627
      %p631 = scmp.eq.s32.totalorder %s129, 0
      %p632 = por %p630, %p631
      %p633 = scmp.ne.s32.totalorder %s625, %s627
      %p634 = scmp.eq.s32.totalorder %s134, 1
      %p635 = por %p633, %p634
      %p636 = scmp.ne.s32.totalorder %s627, %s628
      %p637 = scmp.eq.s32.totalorder %s134, 0
      %p638 = por %p636, %p637
      %p639 = scmp.ne.s32.totalorder %s627, %s628
      %p640 = scmp.eq.s32.totalorder %s135, 1
      %p641 = por %p639, %p640
      %p643 = scmp.ne.s32.totalorder %s628, %s642
      %p644 = scmp.eq.s32.totalorder %s135, 0
      %p645 = por %p643, %p644
      %s647 = sadd.s32 %s646, 1
      %p650 = scmp.eq.s32.totalorder %s129, 1
      %p651 = scmp.ne.s32.totalorder %s646, %s648
      %p652 = scmp.eq.s32.totalorder %s129, 0
      %p653 = por %p651, %p652
      %p654 = scmp.ne.s32.totalorder %s646, %s648
      %p655 = scmp.eq.s32.totalorder %s134, 1
      %p656 = por %p654, %p655
      %p657 = scmp.ne.s32.totalorder %s648, %s649
      %p658 = scmp.eq.s32.totalorder %s134, 0
      %p659 = por %p657, %p658
      %p660 = scmp.ne.s32.totalorder %s648, %s649
      %p661 = scmp.eq.s32.totalorder %s135, 1
      %p662 = por %p660, %p661
      %p664 = scmp.ne.s32.totalorder %s649, %s663
      %p665 = scmp.eq.s32.totalorder %s135, 0
      %p666 = por %p664, %p665
      %s668 = sadd.s32 %s667, 1
      %p671 = scmp.eq.s32.totalorder %s129, 1
      %p672 = scmp.ne.s32.totalorder %s667, %s669
      %p673 = scmp.eq.s32.totalorder %s129, 0
      %p674 = por %p672, %p673
      %p675 = scmp.ne.s32.totalorder %s667, %s669
      %p676 = scmp.eq.s32.totalorder %s134, 1
      %p677 = por %p675, %p676
      %p678 = scmp.ne.s32.totalorder %s669, %s670
      %p679 = scmp.eq.s32.totalorder %s134, 0
      %p680 = por %p678, %p679
      %p681 = scmp.ne.s32.totalorder %s669, %s670
      %p682 = scmp.eq.s32.totalorder %s135, 1
      %p683 = por %p681, %p682
      %p685 = scmp.ne.s32.totalorder %s670, %s684
      %p686 = scmp.eq.s32.totalorder %s135, 0
      %p687 = por %p685, %p686
      %s689 = sadd.s32 %s688, 1
      %p692 = scmp.eq.s32.totalorder %s129, 1
      %p693 = scmp.ne.s32.totalorder %s688, %s690
      %p694 = scmp.eq.s32.totalorder %s129, 0
      %p695 = por %p693, %p694
      %p696 = scmp.ne.s32.totalorder %s688, %s690
      %p697 = scmp.eq.s32.totalorder %s134, 1
      %p698 = por %p696, %p697
      %p699 = scmp.ne.s32.totalorder %s690, %s691
      %p700 = scmp.eq.s32.totalorder %s134, 0
      %p701 = por %p699, %p700
      %p702 = scmp.ne.s32.totalorder %s690, %s691
      %p703 = scmp.eq.s32.totalorder %s135, 1
      %p704 = por %p702, %p703
      %p706 = scmp.ne.s32.totalorder %s691, %s705
      %p707 = scmp.eq.s32.totalorder %s135, 0
      %p708 = por %p706, %p707
      %s710 = sadd.s32 %s709, 1
      %p713 = scmp.eq.s32.totalorder %s129, 1
      %p714 = scmp.ne.s32.totalorder %s709, %s711
      %p715 = scmp.eq.s32.totalorder %s129, 0
      %p716 = por %p714, %p715
      %p717 = scmp.ne.s32.totalorder %s709, %s711
      %p718 = scmp.eq.s32.totalorder %s134, 1
      %p719 = por %p717, %p718
      %p720 = scmp.ne.s32.totalorder %s711, %s712
      %p721 = scmp.eq.s32.totalorder %s134, 0
      %p722 = por %p720, %p721
      %p723 = scmp.ne.s32.totalorder %s711, %s712
      %p724 = scmp.eq.s32.totalorder %s135, 1
      %p725 = por %p723, %p724
      %p727 = scmp.ne.s32.totalorder %s712, %s726
      %p728 = scmp.eq.s32.totalorder %s135, 0
      %p729 = por %p727, %p728
      %s731 = sadd.s32 %s730, 1
      %p734 = scmp.eq.s32.totalorder %s129, 1
      %p735 = scmp.ne.s32.totalorder %s730, %s732
      %p736 = scmp.eq.s32.totalorder %s129, 0
      %p737 = por %p735, %p736
      %p738 = scmp.ne.s32.totalorder %s730, %s732
      %p739 = scmp.eq.s32.totalorder %s134, 1
      %p740 = por %p738, %p739
      %p741 = scmp.ne.s32.totalorder %s732, %s733
      %p742 = scmp.eq.s32.totalorder %s134, 0
      %p743 = por %p741, %p742
      %p744 = scmp.ne.s32.totalorder %s732, %s733
      %p745 = scmp.eq.s32.totalorder %s135, 1
      %p746 = por %p744, %p745
      %p748 = scmp.ne.s32.totalorder %s733, %s747
      %p749 = scmp.eq.s32.totalorder %s135, 0
      %p750 = por %p748, %p749
      %s752 = sadd.s32 %s751, 1
      %p755 = scmp.eq.s32.totalorder %s129, 1
      %p756 = scmp.ne.s32.totalorder %s751, %s753
      %p757 = scmp.eq.s32.totalorder %s129, 0
      %p758 = por %p756, %p757
      %p759 = scmp.ne.s32.totalorder %s751, %s753
      %p760 = scmp.eq.s32.totalorder %s134, 1
      %p761 = por %p759, %p760
      %p762 = scmp.ne.s32.totalorder %s753, %s754
      %p763 = scmp.eq.s32.totalorder %s134, 0
      %p764 = por %p762, %p763
      %p765 = scmp.ne.s32.totalorder %s753, %s754
      %p766 = scmp.eq.s32.totalorder %s135, 1
      %p767 = por %p765, %p766
      %p769 = scmp.ne.s32.totalorder %s754, %s768
      %p770 = scmp.eq.s32.totalorder %s135, 0
      %p771 = por %p769, %p770
      %s773 = sadd.s32 %s772, 1
      %p776 = scmp.eq.s32.totalorder %s129, 1
      %p777 = scmp.ne.s32.totalorder %s772, %s774
      %p778 = scmp.eq.s32.totalorder %s129, 0
      %p779 = por %p777, %p778
      %p780 = scmp.ne.s32.totalorder %s772, %s774
      %p781 = scmp.eq.s32.totalorder %s134, 1
      %p782 = por %p780, %p781
      %p783 = scmp.ne.s32.totalorder %s774, %s775
      %p784 = scmp.eq.s32.totalorder %s134, 0
      %p785 = por %p783, %p784
      %p786 = scmp.ne.s32.totalorder %s774, %s775
      %p787 = scmp.eq.s32.totalorder %s135, 1
      %p788 = por %p786, %p787
      %p790 = scmp.ne.s32.totalorder %s775, %s789
      %p791 = scmp.eq.s32.totalorder %s135, 0
      %p792 = por %p790, %p791
      %s794 = sadd.s32 %s793, 1
      %p797 = scmp.eq.s32.totalorder %s129, 1
      %p798 = scmp.ne.s32.totalorder %s793, %s795
      %p799 = scmp.eq.s32.totalorder %s129, 0
      %p800 = por %p798, %p799
      %p801 = scmp.ne.s32.totalorder %s793, %s795
      %p802 = scmp.eq.s32.totalorder %s134, 1
      %p803 = por %p801, %p802
      %p804 = scmp.ne.s32.totalorder %s795, %s796
      %p805 = scmp.eq.s32.totalorder %s134, 0
      %p806 = por %p804, %p805
      %p807 = scmp.ne.s32.totalorder %s795, %s796
      %p808 = scmp.eq.s32.totalorder %s135, 1
      %p809 = por %p807, %p808
      %p811 = scmp.ne.s32.totalorder %s796, %s810
      %p812 = scmp.eq.s32.totalorder %s135, 0
      %p813 = por %p811, %p812
      %s815 = sadd.s32 %s814, 1
      %p818 = scmp.eq.s32.totalorder %s129, 1
      %p819 = scmp.ne.s32.totalorder %s814, %s816
      %p820 = scmp.eq.s32.totalorder %s129, 0
      %p821 = por %p819, %p820
      %p822 = scmp.ne.s32.totalorder %s814, %s816
      %p823 = scmp.eq.s32.totalorder %s134, 1
      %p824 = por %p822, %p823
      %p825 = scmp.ne.s32.totalorder %s816, %s817
      %p826 = scmp.eq.s32.totalorder %s134, 0
      %p827 = por %p825, %p826
      %p828 = scmp.ne.s32.totalorder %s816, %s817
      %p829 = scmp.eq.s32.totalorder %s135, 1
      %p830 = por %p828, %p829
      %p832 = scmp.ne.s32.totalorder %s817, %s831
      %p833 = scmp.eq.s32.totalorder %s135, 0
      %p834 = por %p832, %p833
      %s836 = sadd.s32 %s835, 1
      %p839 = scmp.eq.s32.totalorder %s129, 1
      %p840 = scmp.ne.s32.totalorder %s835, %s837
      %p841 = scmp.eq.s32.totalorder %s129, 0
      %p842 = por %p840, %p841
      %p843 = scmp.ne.s32.totalorder %s835, %s837
      %p844 = scmp.eq.s32.totalorder %s134, 1
      %p845 = por %p843, %p844
      %p846 = scmp.ne.s32.totalorder %s837, %s838
      %p847 = scmp.eq.s32.totalorder %s134, 0
      %p848 = por %p846, %p847
      %p849 = scmp.ne.s32.totalorder %s837, %s838
      %p850 = scmp.eq.s32.totalorder %s135, 1
      %p851 = por %p849, %p850
      %p853 = scmp.ne.s32.totalorder %s838, %s852
      %p854 = scmp.eq.s32.totalorder %s135, 0
      %p855 = por %p853, %p854
      %s857 = sadd.s32 %s856, 1
      %p860 = scmp.eq.s32.totalorder %s129, 1
      %p861 = scmp.ne.s32.totalorder %s856, %s858
      %p862 = scmp.eq.s32.totalorder %s129, 0
      %p863 = por %p861, %p862
      %p864 = scmp.ne.s32.totalorder %s856, %s858
      %p865 = scmp.eq.s32.totalorder %s134, 1
      %p866 = por %p864, %p865
      %p867 = scmp.ne.s32.totalorder %s858, %s859
      %p868 = scmp.eq.s32.totalorder %s134, 0
      %p869 = por %p867, %p868
      %p870 = scmp.ne.s32.totalorder %s858, %s859
      %p871 = scmp.eq.s32.totalorder %s135, 1
      %p872 = por %p870, %p871
      %p874 = scmp.ne.s32.totalorder %s859, %s873
      %p875 = scmp.eq.s32.totalorder %s135, 0
      %p876 = por %p874, %p875
      %s878 = sadd.s32 %s877, 1
      %p881 = scmp.eq.s32.totalorder %s129, 1
      %p882 = scmp.ne.s32.totalorder %s877, %s879
      %p883 = scmp.eq.s32.totalorder %s129, 0
      %p884 = por %p882, %p883
      %p885 = scmp.ne.s32.totalorder %s877, %s879
      %p886 = scmp.eq.s32.totalorder %s134, 1
      %p887 = por %p885, %p886
      %p888 = scmp.ne.s32.totalorder %s879, %s880
      %p889 = scmp.eq.s32.totalorder %s134, 0
      %p890 = por %p888, %p889
      %p891 = scmp.ne.s32.totalorder %s879, %s880
      %p892 = scmp.eq.s32.totalorder %s135, 1
      %p893 = por %p891, %p892
      %p895 = scmp.ne.s32.totalorder %s880, %s894
      %p896 = scmp.eq.s32.totalorder %s135, 0
      %p897 = por %p895, %p896
      %s899 = sadd.s32 %s898, 1
      %p902 = scmp.eq.s32.totalorder %s129, 1
      %p903 = scmp.ne.s32.totalorder %s898, %s900
      %p904 = scmp.eq.s32.totalorder %s129, 0
      %p905 = por %p903, %p904
      %p906 = scmp.ne.s32.totalorder %s898, %s900
      %p907 = scmp.eq.s32.totalorder %s134, 1
      %p908 = por %p906, %p907
      %p909 = scmp.ne.s32.totalorder %s900, %s901
      %p910 = scmp.eq.s32.totalorder %s134, 0
      %p911 = por %p909, %p910
      %p912 = scmp.ne.s32.totalorder %s900, %s901
      %p913 = scmp.eq.s32.totalorder %s135, 1
      %p914 = por %p912, %p913
      %p916 = scmp.ne.s32.totalorder %s901, %s915
      %p917 = scmp.eq.s32.totalorder %s135, 0
      %p918 = por %p916, %p917
      %s920 = sadd.s32 %s919, 1
      %p923 = scmp.eq.s32.totalorder %s129, 1
      %p924 = scmp.ne.s32.totalorder %s919, %s921
      %p925 = scmp.eq.s32.totalorder %s129, 0
      %p926 = por %p924, %p925
      %p927 = scmp.ne.s32.totalorder %s919, %s921
      %p928 = scmp.eq.s32.totalorder %s134, 1
      %p929 = por %p927, %p928
      %p930 = scmp.ne.s32.totalorder %s921, %s922
      %p931 = scmp.eq.s32.totalorder %s134, 0
      %p932 = por %p930, %p931
      %p933 = scmp.ne.s32.totalorder %s921, %s922
      %p934 = scmp.eq.s32.totalorder %s135, 1
      %p935 = por %p933, %p934
      %p937 = scmp.ne.s32.totalorder %s922, %s936
      %p938 = scmp.eq.s32.totalorder %s135, 0
      %p939 = por %p937, %p938
      %s941 = sadd.s32 %s940, 1
      %p944 = scmp.eq.s32.totalorder %s129, 1
      %p945 = scmp.ne.s32.totalorder %s940, %s942
      %p946 = scmp.eq.s32.totalorder %s129, 0
      %p947 = por %p945, %p946
      %p948 = scmp.ne.s32.totalorder %s940, %s942
      %p949 = scmp.eq.s32.totalorder %s134, 1
      %p950 = por %p948, %p949
      %p951 = scmp.ne.s32.totalorder %s942, %s943
      %p952 = scmp.eq.s32.totalorder %s134, 0
      %p953 = por %p951, %p952
      %p954 = scmp.ne.s32.totalorder %s942, %s943
      %p955 = scmp.eq.s32.totalorder %s135, 1
      %p956 = por %p954, %p955
      %p958 = scmp.ne.s32.totalorder %s943, %s957
      %p959 = scmp.eq.s32.totalorder %s135, 0
      %p960 = por %p958, %p959
      %s962 = sadd.s32 %s961, 1
      %p965 = scmp.eq.s32.totalorder %s129, 1
      %p966 = scmp.ne.s32.totalorder %s961, %s963
      %p967 = scmp.eq.s32.totalorder %s129, 0
      %p968 = por %p966, %p967
      %p969 = scmp.ne.s32.totalorder %s961, %s963
      %p970 = scmp.eq.s32.totalorder %s134, 1
      %p971 = por %p969, %p970
      %p972 = scmp.ne.s32.totalorder %s963, %s964
      %p973 = scmp.eq.s32.totalorder %s134, 0
      %p974 = por %p972, %p973
      %p975 = scmp.ne.s32.totalorder %s963, %s964
      %p976 = scmp.eq.s32.totalorder %s135, 1
      %p977 = por %p975, %p976
      %p979 = scmp.ne.s32.totalorder %s964, %s978
      %p980 = scmp.eq.s32.totalorder %s135, 0
      %p981 = por %p979, %p980
      %s983 = sadd.s32 %s982, 1
      %p986 = scmp.eq.s32.totalorder %s129, 1
      %p987 = scmp.ne.s32.totalorder %s982, %s984
      %p988 = scmp.eq.s32.totalorder %s129, 0
      %p989 = por %p987, %p988
      %p990 = scmp.ne.s32.totalorder %s982, %s984
      %p991 = scmp.eq.s32.totalorder %s134, 1
      %p992 = por %p990, %p991
      %p993 = scmp.ne.s32.totalorder %s984, %s985
      %p994 = scmp.eq.s32.totalorder %s134, 0
      %p995 = por %p993, %p994
      %p996 = scmp.ne.s32.totalorder %s984, %s985
      %p997 = scmp.eq.s32.totalorder %s135, 1
      %p998 = por %p996, %p997
      %p1000 = scmp.ne.s32.totalorder %s985, %s999
      %p1001 = scmp.eq.s32.totalorder %s135, 0
      %p1002 = por %p1000, %p1001
      %s1004 = sadd.s32 %s1003, 1
      %p1007 = scmp.eq.s32.totalorder %s129, 1
      %p1008 = scmp.ne.s32.totalorder %s1003, %s1005
      %p1009 = scmp.eq.s32.totalorder %s129, 0
      %p1010 = por %p1008, %p1009
      %p1011 = scmp.ne.s32.totalorder %s1003, %s1005
      %p1012 = scmp.eq.s32.totalorder %s134, 1
      %p1013 = por %p1011, %p1012
      %p1014 = scmp.ne.s32.totalorder %s1005, %s1006
      %p1015 = scmp.eq.s32.totalorder %s134, 0
      %p1016 = por %p1014, %p1015
      %p1017 = scmp.ne.s32.totalorder %s1005, %s1006
      %p1018 = scmp.eq.s32.totalorder %s135, 1
      %p1019 = por %p1017, %p1018
      %p1021 = scmp.ne.s32.totalorder %s1006, %s1020
      %p1022 = scmp.eq.s32.totalorder %s135, 0
      %p1023 = por %p1021, %p1022
      %s1025 = sadd.s32 %s1024, 1
      %p1028 = scmp.eq.s32.totalorder %s129, 1
      %p1029 = scmp.ne.s32.totalorder %s1024, %s1026
      %p1030 = scmp.eq.s32.totalorder %s129, 0
      %p1031 = por %p1029, %p1030
      %p1032 = scmp.ne.s32.totalorder %s1024, %s1026
      %p1033 = scmp.eq.s32.totalorder %s134, 1
      %p1034 = por %p1032, %p1033
      %p1035 = scmp.ne.s32.totalorder %s1026, %s1027
      %p1036 = scmp.eq.s32.totalorder %s134, 0
      %p1037 = por %p1035, %p1036
      %p1038 = scmp.ne.s32.totalorder %s1026, %s1027
      %p1039 = scmp.eq.s32.totalorder %s135, 1
      %p1040 = por %p1038, %p1039
      %p1042 = scmp.ne.s32.totalorder %s1027, %s1041
      %p1043 = scmp.eq.s32.totalorder %s135, 0
      %p1044 = por %p1042, %p1043
      %s1046 = sadd.s32 %s1045, 1
      %p1049 = scmp.eq.s32.totalorder %s129, 1
      %p1050 = scmp.ne.s32.totalorder %s1045, %s1047
      %p1051 = scmp.eq.s32.totalorder %s129, 0
      %p1052 = por %p1050, %p1051
      %p1053 = scmp.ne.s32.totalorder %s1045, %s1047
      %p1054 = scmp.eq.s32.totalorder %s134, 1
      %p1055 = por %p1053, %p1054
      %p1056 = scmp.ne.s32.totalorder %s1047, %s1048
      %p1057 = scmp.eq.s32.totalorder %s134, 0
      %p1058 = por %p1056, %p1057
      %p1059 = scmp.ne.s32.totalorder %s1047, %s1048
      %p1060 = scmp.eq.s32.totalorder %s135, 1
      %p1061 = por %p1059, %p1060
      %p1063 = scmp.ne.s32.totalorder %s1048, %s1062
      %p1064 = scmp.eq.s32.totalorder %s135, 0
      %p1065 = por %p1063, %p1064
      %s1067 = sadd.s32 %s1066, 1
      %p1070 = scmp.eq.s32.totalorder %s129, 1
      %p1071 = scmp.ne.s32.totalorder %s1066, %s1068
      %p1072 = scmp.eq.s32.totalorder %s129, 0
      %p1073 = por %p1071, %p1072
      %p1074 = scmp.ne.s32.totalorder %s1066, %s1068
      %p1075 = scmp.eq.s32.totalorder %s134, 1
      %p1076 = por %p1074, %p1075
      %p1077 = scmp.ne.s32.totalorder %s1068, %s1069
      %p1078 = scmp.eq.s32.totalorder %s134, 0
      %p1079 = por %p1077, %p1078
      %p1080 = scmp.ne.s32.totalorder %s1068, %s1069
      %p1081 = scmp.eq.s32.totalorder %s135, 1
      %p1082 = por %p1080, %p1081
      %p1084 = scmp.ne.s32.totalorder %s1069, %s1083
      %p1085 = scmp.eq.s32.totalorder %s135, 0
      %p1086 = por %p1084, %p1085
      %s1088 = sadd.s32 %s1087, 1
      %p1091 = scmp.eq.s32.totalorder %s129, 1
      %p1092 = scmp.ne.s32.totalorder %s1087, %s1089
      %p1093 = scmp.eq.s32.totalorder %s129, 0
      %p1094 = por %p1092, %p1093
      %p1095 = scmp.ne.s32.totalorder %s1087, %s1089
      %p1096 = scmp.eq.s32.totalorder %s134, 1
      %p1097 = por %p1095, %p1096
      %p1098 = scmp.ne.s32.totalorder %s1089, %s1090
      %p1099 = scmp.eq.s32.totalorder %s134, 0
      %p1100 = por %p1098, %p1099
      %p1101 = scmp.ne.s32.totalorder %s1089, %s1090
      %p1102 = scmp.eq.s32.totalorder %s135, 1
      %p1103 = por %p1101, %p1102
      %p1105 = scmp.ne.s32.totalorder %s1090, %s1104
      %p1106 = scmp.eq.s32.totalorder %s135, 0
      %p1107 = por %p1105, %p1106
      %s1109 = sadd.s32 %s1108, 1
      %p1112 = scmp.eq.s32.totalorder %s129, 1
      %p1113 = scmp.ne.s32.totalorder %s1108, %s1110
      %p1114 = scmp.eq.s32.totalorder %s129, 0
      %p1115 = por %p1113, %p1114
      %p1116 = scmp.ne.s32.totalorder %s1108, %s1110
      %p1117 = scmp.eq.s32.totalorder %s134, 1
      %p1118 = por %p1116, %p1117
      %p1119 = scmp.ne.s32.totalorder %s1110, %s1111
      %p1120 = scmp.eq.s32.totalorder %s134, 0
      %p1121 = por %p1119, %p1120
      %p1122 = scmp.ne.s32.totalorder %s1110, %s1111
      %p1123 = scmp.eq.s32.totalorder %s135, 1
      %p1124 = por %p1122, %p1123
      %p1126 = scmp.ne.s32.totalorder %s1111, %s1125
      %p1127 = scmp.eq.s32.totalorder %s135, 0
      %p1128 = por %p1126, %p1127
      %s1130 = sadd.s32 %s1129, 1
      %p1133 = scmp.eq.s32.totalorder %s129, 1
      %p1134 = scmp.ne.s32.totalorder %s1129, %s1131
      %p1135 = scmp.eq.s32.totalorder %s129, 0
      %p1136 = por %p1134, %p1135
      %p1137 = scmp.ne.s32.totalorder %s1129, %s1131
      %p1138 = scmp.eq.s32.totalorder %s134, 1
      %p1139 = por %p1137, %p1138
      %p1140 = scmp.ne.s32.totalorder %s1131, %s1132
      %p1141 = scmp.eq.s32.totalorder %s134, 0
      %p1142 = por %p1140, %p1141
      %p1143 = scmp.ne.s32.totalorder %s1131, %s1132
      %p1144 = scmp.eq.s32.totalorder %s135, 1
      %p1145 = por %p1143, %p1144
      %p1147 = scmp.ne.s32.totalorder %s1132, %s1146
      %p1148 = scmp.eq.s32.totalorder %s135, 0
      %p1149 = por %p1147, %p1148
      %s1151 = sadd.s32 %s1150, 1
      %p1154 = scmp.eq.s32.totalorder %s129, 1
      %p1155 = scmp.ne.s32.totalorder %s1150, %s1152
      %p1156 = scmp.eq.s32.totalorder %s129, 0
      %p1157 = por %p1155, %p1156
      %p1158 = scmp.ne.s32.totalorder %s1150, %s1152
      %p1159 = scmp.eq.s32.totalorder %s134, 1
      %p1160 = por %p1158, %p1159
      %p1161 = scmp.ne.s32.totalorder %s1152, %s1153
      %p1162 = scmp.eq.s32.totalorder %s134, 0
      %p1163 = por %p1161, %p1162
      %p1164 = scmp.ne.s32.totalorder %s1152, %s1153
      %p1165 = scmp.eq.s32.totalorder %s135, 1
      %p1166 = por %p1164, %p1165
      %p1168 = scmp.ne.s32.totalorder %s1153, %s1167
      %p1169 = scmp.eq.s32.totalorder %s135, 0
      %p1170 = por %p1168, %p1169
      %s1172 = sadd.s32 %s1171, 1
      %p1175 = scmp.eq.s32.totalorder %s129, 1
      %p1176 = scmp.ne.s32.totalorder %s1171, %s1173
      %p1177 = scmp.eq.s32.totalorder %s129, 0
      %p1178 = por %p1176, %p1177
      %p1179 = scmp.ne.s32.totalorder %s1171, %s1173
      %p1180 = scmp.eq.s32.totalorder %s134, 1
      %p1181 = por %p1179, %p1180
      %p1182 = scmp.ne.s32.totalorder %s1173, %s1174
      %p1183 = scmp.eq.s32.totalorder %s134, 0
      %p1184 = por %p1182, %p1183
      %p1185 = scmp.ne.s32.totalorder %s1173, %s1174
      %p1186 = scmp.eq.s32.totalorder %s135, 1
      %p1187 = por %p1185, %p1186
      %p1189 = scmp.ne.s32.totalorder %s1174, %s1188
      %p1190 = scmp.eq.s32.totalorder %s135, 0
      %p1191 = por %p1189, %p1190
      %s1193 = sadd.s32 %s1192, 1
      %p1196 = scmp.eq.s32.totalorder %s129, 1
      %p1197 = scmp.ne.s32.totalorder %s1192, %s1194
      %p1198 = scmp.eq.s32.totalorder %s129, 0
      %p1199 = por %p1197, %p1198
      %p1200 = scmp.ne.s32.totalorder %s1192, %s1194
      %p1201 = scmp.eq.s32.totalorder %s134, 1
      %p1202 = por %p1200, %p1201
      %p1203 = scmp.ne.s32.totalorder %s1194, %s1195
      %p1204 = scmp.eq.s32.totalorder %s134, 0
      %p1205 = por %p1203, %p1204
      %p1206 = scmp.ne.s32.totalorder %s1194, %s1195
      %p1207 = scmp.eq.s32.totalorder %s135, 1
      %p1208 = por %p1206, %p1207
      %p1210 = scmp.ne.s32.totalorder %s1195, %s1209
      %p1211 = scmp.eq.s32.totalorder %s135, 0
      %p1212 = por %p1210, %p1211
      %s1214 = sadd.s32 %s1213, 1
      %p1217 = scmp.eq.s32.totalorder %s129, 1
      %p1218 = scmp.ne.s32.totalorder %s1213, %s1215
      %p1219 = scmp.eq.s32.totalorder %s129, 0
      %p1220 = por %p1218, %p1219
      %p1221 = scmp.ne.s32.totalorder %s1213, %s1215
      %p1222 = scmp.eq.s32.totalorder %s134, 1
      %p1223 = por %p1221, %p1222
      %p1224 = scmp.ne.s32.totalorder %s1215, %s1216
      %p1225 = scmp.eq.s32.totalorder %s134, 0
      %p1226 = por %p1224, %p1225
      %p1227 = scmp.ne.s32.totalorder %s1215, %s1216
      %p1228 = scmp.eq.s32.totalorder %s135, 1
      %p1229 = por %p1227, %p1228
      %p1231 = scmp.ne.s32.totalorder %s1216, %s1230
      %p1232 = scmp.eq.s32.totalorder %s135, 0
      %p1233 = por %p1231, %p1232
      %s1235 = sadd.s32 %s1234, 1
      %p1238 = scmp.eq.s32.totalorder %s129, 1
      %p1239 = scmp.ne.s32.totalorder %s1234, %s1236
      %p1240 = scmp.eq.s32.totalorder %s129, 0
      %p1241 = por %p1239, %p1240
      %p1242 = scmp.ne.s32.totalorder %s1234, %s1236
      %p1243 = scmp.eq.s32.totalorder %s134, 1
      %p1244 = por %p1242, %p1243
      %p1245 = scmp.ne.s32.totalorder %s1236, %s1237
      %p1246 = scmp.eq.s32.totalorder %s134, 0
      %p1247 = por %p1245, %p1246
      %p1248 = scmp.ne.s32.totalorder %s1236, %s1237
      %p1249 = scmp.eq.s32.totalorder %s135, 1
      %p1250 = por %p1248, %p1249
      %p1252 = scmp.ne.s32.totalorder %s1237, %s1251
      %p1253 = scmp.eq.s32.totalorder %s135, 0
      %p1254 = por %p1252, %p1253
      %s1256 = sadd.s32 %s1255, 1
      %p1259 = scmp.eq.s32.totalorder %s129, 1
      %p1260 = scmp.ne.s32.totalorder %s1255, %s1257
      %p1261 = scmp.eq.s32.totalorder %s129, 0
      %p1262 = por %p1260, %p1261
      %p1263 = scmp.ne.s32.totalorder %s1255, %s1257
      %p1264 = scmp.eq.s32.totalorder %s134, 1
      %p1265 = por %p1263, %p1264
      %p1266 = scmp.ne.s32.totalorder %s1257, %s1258
      %p1267 = scmp.eq.s32.totalorder %s134, 0
      %p1268 = por %p1266, %p1267
      %p1269 = scmp.ne.s32.totalorder %s1257, %s1258
      %p1270 = scmp.eq.s32.totalorder %s135, 1
      %p1271 = por %p1269, %p1270
      %p1273 = scmp.ne.s32.totalorder %s1258, %s1272
      %p1274 = scmp.eq.s32.totalorder %s135, 0
      %p1275 = por %p1273, %p1274
      %s1277 = sadd.s32 %s1276, 1
      %p1280 = scmp.eq.s32.totalorder %s129, 1
      %p1281 = scmp.ne.s32.totalorder %s1276, %s1278
      %p1282 = scmp.eq.s32.totalorder %s129, 0
      %p1283 = por %p1281, %p1282
      %p1284 = scmp.ne.s32.totalorder %s1276, %s1278
      %p1285 = scmp.eq.s32.totalorder %s134, 1
      %p1286 = por %p1284, %p1285
      %p1287 = scmp.ne.s32.totalorder %s1278, %s1279
      %p1288 = scmp.eq.s32.totalorder %s134, 0
      %p1289 = por %p1287, %p1288
      %p1290 = scmp.ne.s32.totalorder %s1278, %s1279
      %p1291 = scmp.eq.s32.totalorder %s135, 1
      %p1292 = por %p1290, %p1291
      %p1294 = scmp.ne.s32.totalorder %s1279, %s1293
      %p1295 = scmp.eq.s32.totalorder %s135, 0
      %p1296 = por %p1294, %p1295
      %s1297 = ssub.s32 %s129, %s136
      %p1298 = scmp.eq.s32.totalorder %s1297, 0
      %s1300 = sadd.s32 %s1299, 1
      %s1301 = scalar_select %p1298, %s1299, %s1300
      %p1304 = pneg %p1298
      %p1305 = scmp.eq.s32.totalorder %s129, 1
      %p1306 = por %p1304, %p1305
      %p1307 = scmp.ne.s32.totalorder %s1299, %s1302
      %p1308 = scmp.eq.s32.totalorder %s129, 0
      %p1309 = por %p1307, %p1308
      %p1310 = scmp.ne.s32.totalorder %s1299, %s1302
      %p1311 = scmp.eq.s32.totalorder %s134, 1
      %p1312 = por %p1310, %p1311
      %p1313 = scmp.ne.s32.totalorder %s1302, %s1303
      %p1314 = scmp.eq.s32.totalorder %s134, 0
      %p1315 = por %p1313, %p1314
      %p1316 = scmp.ne.s32.totalorder %s1302, %s1303
      %p1317 = scmp.eq.s32.totalorder %s135, 1
      %p1318 = por %p1316, %p1317
      %p1320 = scmp.ne.s32.totalorder %s1303, %s1319
      %p1321 = scmp.eq.s32.totalorder %s135, 0
      %p1322 = por %p1320, %p1321
      %p1323 = scmp.le.s32.totalorder 1, %s129
      %p1324 = scmp.lt.s32.totalorder %s129, 3
      %p1325 = pnand %p1323, %p1324
      %p1326 = pneg %p1325
      // Predicated region
      $region9: #{forward.1} parent=5 // pred_check
        _
      $region10: #{forward.1} parent=5 // pred_check_branch
        %1328 = sbr.rel (%p1325) target = $region12
      $region11: #{forward.1} parent=5 // pred_region
        %s1329 = ssub.s32 %s129, 1
        // Predicated region
        $region13: #{forward.1} parent=11 // pred_check
          %p1330 = pneg %p176
        $region14: #{forward.1} parent=11 // pred_check_branch
          %1332 = sbr.rel (%p1330) target = $region16
        $region15: #{forward.1} parent=11 // pred_region
          %1334 = vsyncadd [#allocation7], 0
          %s1335 = sshll.u32 %s3, 4
          %s1336 = int_to_ptr.hbm [resolvable:$true] %s1335
          %s1337 = sshll.u32 [#allocation6], 4
          %s1338 = int_to_ptr.vmem [resolvable:$true] %s1337
          %1343 = dma.hbm_to_vmem [thread:$0]  %s1336, 1536, %s1338, [#allocation7], 64, 64, 4
        $region16: #{forward.1} parent=11 // pred_fallthru
          _
        // Predicated region
        $region17: #{forward.1} parent=11 // pred_check
          %p1344 = pneg %p197
        $region18: #{forward.1} parent=11 // pred_check_branch
          %1346 = sbr.rel (%p1344) target = $region20
        $region19: #{forward.1} parent=11 // pred_region
          _
        $region20: #{forward.1} parent=11 // pred_fallthru
          _
        // Predicated region
        $region21: #{forward.1} parent=11 // pred_check
          %p1347 = pneg %p218
        $region22: #{forward.1} parent=11 // pred_check_branch
          %1349 = sbr.rel (%p1347) target = $region24
        $region23: #{forward.1} parent=11 // pred_region
          _
        $region24: #{forward.1} parent=11 // pred_fallthru
          _
        // Predicated region
        $region25: #{forward.1} parent=11 // pred_check
          %p1350 = pneg %p239
        $region26: #{forward.1} parent=11 // pred_check_branch
          %1352 = sbr.rel (%p1350) target = $region28
        $region27: #{forward.1} parent=11 // pred_region
          _
        $region28: #{forward.1} parent=11 // pred_fallthru
          _
        // Predicated region
        $region29: #{forward.1} parent=11 // pred_check
          %p1353 = pneg %p260
        $region30: #{forward.1} parent=11 // pred_check_branch
          %1355 = sbr.rel (%p1353) target = $region32
        $region31: #{forward.1} parent=11 // pred_region
          _
        $region32: #{forward.1} parent=11 // pred_fallthru
          _
        // Predicated region
        $region33: #{forward.1} parent=11 // pred_check
          %p1356 = pneg %p281
        $region34: #{forward.1} parent=11 // pred_check_branch
          %1358 = sbr.rel (%p1356) target = $region36
        $region35: #{forward.1} parent=11 // pred_region
          %1360 = vsyncadd [#allocation9], 0
          %s1361 = sshll.u32 %s13, 4
          %s1362 = int_to_ptr.hbm [resolvable:$true] %s1361
          %s1363 = sshll.u32 [#allocation8], 4
          %s1364 = int_to_ptr.vmem [resolvable:$true] %s1363
          %1369 = dma.hbm_to_vmem [thread:$0]  %s1362, 1536, %s1364, [#allocation9], 64, 64, 4
        $region36: #{forward.1} parent=11 // pred_fallthru
          _
        // Predicated region
        $region37: #{forward.1} parent=11 // pred_check
          %p1370 = pneg %p302
        $region38: #{forward.1} parent=11 // pred_check_branch
          %1372 = sbr.rel (%p1370) target = $region40
        $region39: #{forward.1} parent=11 // pred_region
          _
        $region40: #{forward.1} parent=11 // pred_fallthru
          _
        // Predicated region
        $region41: #{forward.1} parent=11 // pred_check
          %p1373 = pneg %p323
        $region42: #{forward.1} parent=11 // pred_check_branch
          %1375 = sbr.rel (%p1373) target = $region44
        $region43: #{forward.1} parent=11 // pred_region
          _
        $region44: #{forward.1} parent=11 // pred_fallthru
          _
        // Predicated region
        $region45: #{forward.1} parent=11 // pred_check
          %p1376 = pneg %p344
        $region46: #{forward.1} parent=11 // pred_check_branch
          %1378 = sbr.rel (%p1376) target = $region48
        $region47: #{forward.1} parent=11 // pred_region
          _
        $region48: #{forward.1} parent=11 // pred_fallthru
          _
        // Predicated region
        $region49: #{forward.1} parent=11 // pred_check
          %p1379 = pneg %p365
        $region50: #{forward.1} parent=11 // pred_check_branch
          %1381 = sbr.rel (%p1379) target = $region52
        $region51: #{forward.1} parent=11 // pred_region
          _
        $region52: #{forward.1} parent=11 // pred_fallthru
          _
        // Predicated region
        $region53: #{forward.1} parent=11 // pred_check
          %p1382 = pneg %p386
        $region54: #{forward.1} parent=11 // pred_check_branch
          %1384 = sbr.rel (%p1382) target = $region56
        $region55: #{forward.1} parent=11 // pred_region
          %1386 = vsyncadd [#allocation9], 0
          %s1387 = sshll.u32 %s23, 4
          %s1388 = int_to_ptr.hbm [resolvable:$true] %s1387
          %s1389 = sshll.u32 [#allocation10], 4
          %s1390 = int_to_ptr.vmem [resolvable:$true] %s1389
          %1395 = dma.hbm_to_vmem [thread:$0]  %s1388, 1536, %s1390, [#allocation9], 64, 64, 4
        $region56: #{forward.1} parent=11 // pred_fallthru
          _
        // Predicated region
        $region57: #{forward.1} parent=11 // pred_check
          %p1396 = pneg %p407
        $region58: #{forward.1} parent=11 // pred_check_branch
          %1398 = sbr.rel (%p1396) target = $region60
        $region59: #{forward.1} parent=11 // pred_region
          _
        $region60: #{forward.1} parent=11 // pred_fallthru
          _
        // Predicated region
        $region61: #{forward.1} parent=11 // pred_check
          %p1399 = pneg %p428
        $region62: #{forward.1} parent=11 // pred_check_branch
          %1401 = sbr.rel (%p1399) target = $region64
        $region63: #{forward.1} parent=11 // pred_region
          _
        $region64: #{forward.1} parent=11 // pred_fallthru
          _
        // Predicated region
        $region65: #{forward.1} parent=11 // pred_check
          %p1402 = pneg %p449
        $region66: #{forward.1} parent=11 // pred_check_branch
          %1404 = sbr.rel (%p1402) target = $region68
        $region67: #{forward.1} parent=11 // pred_region
          _
        $region68: #{forward.1} parent=11 // pred_fallthru
          _
        // Predicated region
        $region69: #{forward.1} parent=11 // pred_check
          %p1405 = pneg %p470
        $region70: #{forward.1} parent=11 // pred_check_branch
          %1407 = sbr.rel (%p1405) target = $region72
        $region71: #{forward.1} parent=11 // pred_region
          _
        $region72: #{forward.1} parent=11 // pred_fallthru
          _
        // Predicated region
        $region73: #{forward.1} parent=11 // pred_check
          %p1408 = pneg %p491
        $region74: #{forward.1} parent=11 // pred_check_branch
          %1410 = sbr.rel (%p1408) target = $region76
        $region75: #{forward.1} parent=11 // pred_region
          %1412 = vsyncadd [#allocation12], 0
          %s1413 = sshll.u32 %s33, 4
          %s1414 = int_to_ptr.hbm [resolvable:$true] %s1413
          %s1415 = sshll.u32 [#allocation11], 4
          %s1416 = int_to_ptr.vmem [resolvable:$true] %s1415
          %1421 = dma.hbm_to_vmem [thread:$0]  %s1414, 1536, %s1416, [#allocation12], 64, 64, 4
        $region76: #{forward.1} parent=11 // pred_fallthru
          _
        // Predicated region
        $region77: #{forward.1} parent=11 // pred_check
          %p1422 = pneg %p512
        $region78: #{forward.1} parent=11 // pred_check_branch
          %1424 = sbr.rel (%p1422) target = $region80
        $region79: #{forward.1} parent=11 // pred_region
          _
        $region80: #{forward.1} parent=11 // pred_fallthru
          _
        // Predicated region
        $region81: #{forward.1} parent=11 // pred_check
          %p1425 = pneg %p533
        $region82: #{forward.1} parent=11 // pred_check_branch
          %1427 = sbr.rel (%p1425) target = $region84
        $region83: #{forward.1} parent=11 // pred_region
          _
        $region84: #{forward.1} parent=11 // pred_fallthru
          _
        // Predicated region
        $region85: #{forward.1} parent=11 // pred_check
          %p1428 = pneg %p554
        $region86: #{forward.1} parent=11 // pred_check_branch
          %1430 = sbr.rel (%p1428) target = $region88
        $region87: #{forward.1} parent=11 // pred_region
          _
        $region88: #{forward.1} parent=11 // pred_fallthru
          _
        // Predicated region
        $region89: #{forward.1} parent=11 // pred_check
          %p1431 = pneg %p575
        $region90: #{forward.1} parent=11 // pred_check_branch
          %1433 = sbr.rel (%p1431) target = $region92
        $region91: #{forward.1} parent=11 // pred_region
          _
        $region92: #{forward.1} parent=11 // pred_fallthru
          _
        // Predicated region
        $region93: #{forward.1} parent=11 // pred_check
          %p1434 = pneg %p596
        $region94: #{forward.1} parent=11 // pred_check_branch
          %1436 = sbr.rel (%p1434) target = $region96
        $region95: #{forward.1} parent=11 // pred_region
          %1438 = vsyncadd [#allocation12], 0
          %s1439 = sshll.u32 %s43, 4
          %s1440 = int_to_ptr.hbm [resolvable:$true] %s1439
          %s1441 = sshll.u32 [#allocation13], 4
          %s1442 = int_to_ptr.vmem [resolvable:$true] %s1441
          %1447 = dma.hbm_to_vmem [thread:$0]  %s1440, 1536, %s1442, [#allocation12], 64, 64, 4
        $region96: #{forward.1} parent=11 // pred_fallthru
          _
        // Predicated region
        $region97: #{forward.1} parent=11 // pred_check
          %p1448 = pneg %p617
        $region98: #{forward.1} parent=11 // pred_check_branch
          %1450 = sbr.rel (%p1448) target = $region100
        $region99: #{forward.1} parent=11 // pred_region
          _
        $region100: #{forward.1} parent=11 // pred_fallthru
          _
        // Predicated region
        $region101: #{forward.1} parent=11 // pred_check
          %p1451 = pneg %p638
        $region102: #{forward.1} parent=11 // pred_check_branch
          %1453 = sbr.rel (%p1451) target = $region104
        $region103: #{forward.1} parent=11 // pred_region
          _
        $region104: #{forward.1} parent=11 // pred_fallthru
          _
        // Predicated region
        $region105: #{forward.1} parent=11 // pred_check
          %p1454 = pneg %p659
        $region106: #{forward.1} parent=11 // pred_check_branch
          %1456 = sbr.rel (%p1454) target = $region108
        $region107: #{forward.1} parent=11 // pred_region
          _
        $region108: #{forward.1} parent=11 // pred_fallthru
          _
        // Predicated region
        $region109: #{forward.1} parent=11 // pred_check
          %p1457 = pneg %p680
        $region110: #{forward.1} parent=11 // pred_check_branch
          %1459 = sbr.rel (%p1457) target = $region112
        $region111: #{forward.1} parent=11 // pred_region
          %1461 = vsyncadd [#allocation15], 0
          %s1462 = sshll.u32 %s51, 4
          %s1463 = int_to_ptr.hbm [resolvable:$true] %s1462
          %s1464 = sshll.u32 [#allocation14], 4
          %s1465 = int_to_ptr.vmem [resolvable:$true] %s1464
          %1470 = dma.hbm_to_vmem [thread:$0]  %s1463, 2048, %s1465, [#allocation15], 64, 64, 4
        $region112: #{forward.1} parent=11 // pred_fallthru
          _
        // Predicated region
        $region113: #{forward.1} parent=11 // pred_check
          %p1471 = pneg %p701
        $region114: #{forward.1} parent=11 // pred_check_branch
          %1473 = sbr.rel (%p1471) target = $region116
        $region115: #{forward.1} parent=11 // pred_region
          _
        $region116: #{forward.1} parent=11 // pred_fallthru
          _
        // Predicated region
        $region117: #{forward.1} parent=11 // pred_check
          %p1474 = pneg %p722
        $region118: #{forward.1} parent=11 // pred_check_branch
          %1476 = sbr.rel (%p1474) target = $region120
        $region119: #{forward.1} parent=11 // pred_region
          %1478 = vsyncadd [#allocation15], 0
          %s1479 = sshll.u32 %s55, 4
          %s1480 = int_to_ptr.hbm [resolvable:$true] %s1479
          %s1481 = sshll.u32 [#allocation16], 4
          %s1482 = int_to_ptr.vmem [resolvable:$true] %s1481
          %1487 = dma.hbm_to_vmem [thread:$0]  %s1480, 3072, %s1482, [#allocation15], 64, 64, 4
        $region120: #{forward.1} parent=11 // pred_fallthru
          _
        // Predicated region
        $region121: #{forward.1} parent=11 // pred_check
          %p1488 = pneg %p743
        $region122: #{forward.1} parent=11 // pred_check_branch
          %1490 = sbr.rel (%p1488) target = $region124
        $region123: #{forward.1} parent=11 // pred_region
          %1492 = vsyncadd [#allocation18], 0
          %s1493 = sshll.u32 %s57, 4
          %s1494 = int_to_ptr.hbm [resolvable:$true] %s1493
          %s1495 = sshll.u32 [#allocation17], 4
          %s1496 = int_to_ptr.vmem [resolvable:$true] %s1495
          %1501 = dma.hbm_to_vmem [thread:$0]  %s1494, 3072, %s1496, [#allocation18], 64, 64, 4
        $region124: #{forward.1} parent=11 // pred_fallthru
          _
        // Predicated region
        $region125: #{forward.1} parent=11 // pred_check
          %p1502 = pneg %p764
        $region126: #{forward.1} parent=11 // pred_check_branch
          %1504 = sbr.rel (%p1502) target = $region128
        $region127: #{forward.1} parent=11 // pred_region
          _
        $region128: #{forward.1} parent=11 // pred_fallthru
          _
        // Predicated region
        $region129: #{forward.1} parent=11 // pred_check
          %p1505 = pneg %p785
        $region130: #{forward.1} parent=11 // pred_check_branch
          %1507 = sbr.rel (%p1505) target = $region132
        $region131: #{forward.1} parent=11 // pred_region
          %1509 = vsyncadd [#allocation18], 0
          %s1510 = sshll.u32 %s61, 4
          %s1511 = int_to_ptr.hbm [resolvable:$true] %s1510
          %s1512 = sshll.u32 [#allocation19], 4
          %s1513 = int_to_ptr.vmem [resolvable:$true] %s1512
          %1518 = dma.hbm_to_vmem [thread:$0]  %s1511, 3072, %s1513, [#allocation18], 64, 64, 4
        $region132: #{forward.1} parent=11 // pred_fallthru
          _
        // Predicated region
        $region133: #{forward.1} parent=11 // pred_check
          %p1519 = pneg %p806
        $region134: #{forward.1} parent=11 // pred_check_branch
          %1521 = sbr.rel (%p1519) target = $region136
        $region135: #{forward.1} parent=11 // pred_region
          _
        $region136: #{forward.1} parent=11 // pred_fallthru
          _
        // Predicated region
        $region137: #{forward.1} parent=11 // pred_check
          %p1522 = pneg %p827
        $region138: #{forward.1} parent=11 // pred_check_branch
          %1524 = sbr.rel (%p1522) target = $region140
        $region139: #{forward.1} parent=11 // pred_region
          %1526 = vsyncadd [#allocation21], 0
          %s1527 = sshll.u32 %s65, 4
          %s1528 = int_to_ptr.hbm [resolvable:$true] %s1527
          %s1529 = sshll.u32 [#allocation20], 4
          %s1530 = int_to_ptr.vmem [resolvable:$true] %s1529
          %1535 = dma.hbm_to_vmem [thread:$0]  %s1528, 2048, %s1530, [#allocation21], 64, 64, 4
        $region140: #{forward.1} parent=11 // pred_fallthru
          _
        // Predicated region
        $region141: #{forward.1} parent=11 // pred_check
          %p1536 = pneg %p848
        $region142: #{forward.1} parent=11 // pred_check_branch
          %1538 = sbr.rel (%p1536) target = $region144
        $region143: #{forward.1} parent=11 // pred_region
          _
        $region144: #{forward.1} parent=11 // pred_fallthru
          _
        // Predicated region
        $region145: #{forward.1} parent=11 // pred_check
          %p1539 = pneg %p869
        $region146: #{forward.1} parent=11 // pred_check_branch
          %1541 = sbr.rel (%p1539) target = $region148
        $region147: #{forward.1} parent=11 // pred_region
          %1543 = vsyncadd [#allocation21], 0
          %s1544 = sshll.u32 %s69, 4
          %s1545 = int_to_ptr.hbm [resolvable:$true] %s1544
          %s1546 = sshll.u32 [#allocation22], 4
          %s1547 = int_to_ptr.vmem [resolvable:$true] %s1546
          %1552 = dma.hbm_to_vmem [thread:$0]  %s1545, 3072, %s1547, [#allocation21], 64, 64, 4
        $region148: #{forward.1} parent=11 // pred_fallthru
          _
        // Predicated region
        $region149: #{forward.1} parent=11 // pred_check
          %p1553 = pneg %p890
        $region150: #{forward.1} parent=11 // pred_check_branch
          %1555 = sbr.rel (%p1553) target = $region152
        $region151: #{forward.1} parent=11 // pred_region
          %1557 = vsyncadd [#allocation24], 0
          %s1558 = sshll.u32 %s71, 4
          %s1559 = int_to_ptr.hbm [resolvable:$true] %s1558
          %s1560 = sshll.u32 [#allocation23], 4
          %s1561 = int_to_ptr.vmem [resolvable:$true] %s1560
          %1566 = dma.hbm_to_vmem [thread:$0]  %s1559, 3072, %s1561, [#allocation24], 64, 64, 4
        $region152: #{forward.1} parent=11 // pred_fallthru
          _
        // Predicated region
        $region153: #{forward.1} parent=11 // pred_check
          %p1567 = pneg %p911
        $region154: #{forward.1} parent=11 // pred_check_branch
          %1569 = sbr.rel (%p1567) target = $region156
        $region155: #{forward.1} parent=11 // pred_region
          _
        $region156: #{forward.1} parent=11 // pred_fallthru
          _
        // Predicated region
        $region157: #{forward.1} parent=11 // pred_check
          %p1570 = pneg %p932
        $region158: #{forward.1} parent=11 // pred_check_branch
          %1572 = sbr.rel (%p1570) target = $region160
        $region159: #{forward.1} parent=11 // pred_region
          %1574 = vsyncadd [#allocation24], 0
          %s1575 = sshll.u32 %s75, 4
          %s1576 = int_to_ptr.hbm [resolvable:$true] %s1575
          %s1577 = sshll.u32 [#allocation25], 4
          %s1578 = int_to_ptr.vmem [resolvable:$true] %s1577
          %1583 = dma.hbm_to_vmem [thread:$0]  %s1576, 3072, %s1578, [#allocation24], 64, 64, 4
        $region160: #{forward.1} parent=11 // pred_fallthru
          _
        // Predicated region
        $region161: #{forward.1} parent=11 // pred_check
          %p1584 = pneg %p953
        $region162: #{forward.1} parent=11 // pred_check_branch
          %1586 = sbr.rel (%p1584) target = $region164
        $region163: #{forward.1} parent=11 // pred_region
          _
        $region164: #{forward.1} parent=11 // pred_fallthru
          _
        // Predicated region
        $region165: #{forward.1} parent=11 // pred_check
          %p1587 = pneg %p974
        $region166: #{forward.1} parent=11 // pred_check_branch
          %1589 = sbr.rel (%p1587) target = $region168
        $region167: #{forward.1} parent=11 // pred_region
          %1591 = vsyncadd [#allocation27], 0
          %s1592 = sshll.u32 %s79, 4
          %s1593 = int_to_ptr.hbm [resolvable:$true] %s1592
          %s1594 = sshll.u32 [#allocation26], 4
          %s1595 = int_to_ptr.vmem [resolvable:$true] %s1594
          %1600 = dma.hbm_to_vmem [thread:$0]  %s1593, 2048, %s1595, [#allocation27], 64, 64, 4
        $region168: #{forward.1} parent=11 // pred_fallthru
          _
        // Predicated region
        $region169: #{forward.1} parent=11 // pred_check
          %p1601 = pneg %p995
        $region170: #{forward.1} parent=11 // pred_check_branch
          %1603 = sbr.rel (%p1601) target = $region172
        $region171: #{forward.1} parent=11 // pred_region
          _
        $region172: #{forward.1} parent=11 // pred_fallthru
          _
        // Predicated region
        $region173: #{forward.1} parent=11 // pred_check
          %p1604 = pneg %p1016
        $region174: #{forward.1} parent=11 // pred_check_branch
          %1606 = sbr.rel (%p1604) target = $region176
        $region175: #{forward.1} parent=11 // pred_region
          %1608 = vsyncadd [#allocation27], 0
          %s1609 = sshll.u32 %s83, 4
          %s1610 = int_to_ptr.hbm [resolvable:$true] %s1609
          %s1611 = sshll.u32 [#allocation28], 4
          %s1612 = int_to_ptr.vmem [resolvable:$true] %s1611
          %1617 = dma.hbm_to_vmem [thread:$0]  %s1610, 3072, %s1612, [#allocation27], 64, 64, 4
        $region176: #{forward.1} parent=11 // pred_fallthru
          _
        // Predicated region
        $region177: #{forward.1} parent=11 // pred_check
          %p1618 = pneg %p1037
        $region178: #{forward.1} parent=11 // pred_check_branch
          %1620 = sbr.rel (%p1618) target = $region180
        $region179: #{forward.1} parent=11 // pred_region
          %1622 = vsyncadd [#allocation30], 0
          %s1623 = sshll.u32 %s85, 4
          %s1624 = int_to_ptr.hbm [resolvable:$true] %s1623
          %s1625 = sshll.u32 [#allocation29], 4
          %s1626 = int_to_ptr.vmem [resolvable:$true] %s1625
          %1631 = dma.hbm_to_vmem [thread:$0]  %s1624, 3072, %s1626, [#allocation30], 64, 64, 4
        $region180: #{forward.1} parent=11 // pred_fallthru
          _
        // Predicated region
        $region181: #{forward.1} parent=11 // pred_check
          %p1632 = pneg %p1058
        $region182: #{forward.1} parent=11 // pred_check_branch
          %1634 = sbr.rel (%p1632) target = $region184
        $region183: #{forward.1} parent=11 // pred_region
          _
        $region184: #{forward.1} parent=11 // pred_fallthru
          _
        // Predicated region
        $region185: #{forward.1} parent=11 // pred_check
          %p1635 = pneg %p1079
        $region186: #{forward.1} parent=11 // pred_check_branch
          %1637 = sbr.rel (%p1635) target = $region188
        $region187: #{forward.1} parent=11 // pred_region
          %1639 = vsyncadd [#allocation30], 0
          %s1640 = sshll.u32 %s89, 4
          %s1641 = int_to_ptr.hbm [resolvable:$true] %s1640
          %s1642 = sshll.u32 [#allocation31], 4
          %s1643 = int_to_ptr.vmem [resolvable:$true] %s1642
          %1648 = dma.hbm_to_vmem [thread:$0]  %s1641, 3072, %s1643, [#allocation30], 64, 64, 4
        $region188: #{forward.1} parent=11 // pred_fallthru
          _
        // Predicated region
        $region189: #{forward.1} parent=11 // pred_check
          %p1649 = pneg %p1100
        $region190: #{forward.1} parent=11 // pred_check_branch
          %1651 = sbr.rel (%p1649) target = $region192
        $region191: #{forward.1} parent=11 // pred_region
          _
        $region192: #{forward.1} parent=11 // pred_fallthru
          _
        // Predicated region
        $region193: #{forward.1} parent=11 // pred_check
          %p1652 = pneg %p1121
        $region194: #{forward.1} parent=11 // pred_check_branch
          %1654 = sbr.rel (%p1652) target = $region196
        $region195: #{forward.1} parent=11 // pred_region
          %1656 = vsyncadd [#allocation33], 0
          %s1657 = sshll.u32 %s93, 4
          %s1658 = int_to_ptr.hbm [resolvable:$true] %s1657
          %s1659 = sshll.u32 [#allocation32], 4
          %s1660 = int_to_ptr.vmem [resolvable:$true] %s1659
          %1665 = dma.hbm_to_vmem [thread:$0]  %s1658, 2048, %s1660, [#allocation33], 64, 64, 4
        $region196: #{forward.1} parent=11 // pred_fallthru
          _
        // Predicated region
        $region197: #{forward.1} parent=11 // pred_check
          %p1666 = pneg %p1142
        $region198: #{forward.1} parent=11 // pred_check_branch
          %1668 = sbr.rel (%p1666) target = $region200
        $region199: #{forward.1} parent=11 // pred_region
          _
        $region200: #{forward.1} parent=11 // pred_fallthru
          _
        // Predicated region
        $region201: #{forward.1} parent=11 // pred_check
          %p1669 = pneg %p1163
        $region202: #{forward.1} parent=11 // pred_check_branch
          %1671 = sbr.rel (%p1669) target = $region204
        $region203: #{forward.1} parent=11 // pred_region
          %1673 = vsyncadd [#allocation33], 0
          %s1674 = sshll.u32 %s97, 4
          %s1675 = int_to_ptr.hbm [resolvable:$true] %s1674
          %s1676 = sshll.u32 [#allocation34], 4
          %s1677 = int_to_ptr.vmem [resolvable:$true] %s1676
          %1682 = dma.hbm_to_vmem [thread:$0]  %s1675, 3072, %s1677, [#allocation33], 64, 64, 4
        $region204: #{forward.1} parent=11 // pred_fallthru
          _
        // Predicated region
        $region205: #{forward.1} parent=11 // pred_check
          %p1683 = pneg %p1184
        $region206: #{forward.1} parent=11 // pred_check_branch
          %1685 = sbr.rel (%p1683) target = $region208
        $region207: #{forward.1} parent=11 // pred_region
          %1687 = vsyncadd [#allocation36], 0
          %s1688 = sshll.u32 %s99, 4
          %s1689 = int_to_ptr.hbm [resolvable:$true] %s1688
          %s1690 = sshll.u32 [#allocation35], 4
          %s1691 = int_to_ptr.vmem [resolvable:$true] %s1690
          %1696 = dma.hbm_to_vmem [thread:$0]  %s1689, 3072, %s1691, [#allocation36], 64, 64, 4
        $region208: #{forward.1} parent=11 // pred_fallthru
          _
        // Predicated region
        $region209: #{forward.1} parent=11 // pred_check
          %p1697 = pneg %p1205
        $region210: #{forward.1} parent=11 // pred_check_branch
          %1699 = sbr.rel (%p1697) target = $region212
        $region211: #{forward.1} parent=11 // pred_region
          _
        $region212: #{forward.1} parent=11 // pred_fallthru
          _
        // Predicated region
        $region213: #{forward.1} parent=11 // pred_check
          %p1700 = pneg %p1226
        $region214: #{forward.1} parent=11 // pred_check_branch
          %1702 = sbr.rel (%p1700) target = $region216
        $region215: #{forward.1} parent=11 // pred_region
          %1704 = vsyncadd [#allocation36], 0
          %s1705 = sshll.u32 %s103, 4
          %s1706 = int_to_ptr.hbm [resolvable:$true] %s1705
          %s1707 = sshll.u32 [#allocation37], 4
          %s1708 = int_to_ptr.vmem [resolvable:$true] %s1707
          %1713 = dma.hbm_to_vmem [thread:$0]  %s1706, 3072, %s1708, [#allocation36], 64, 64, 4
        $region216: #{forward.1} parent=11 // pred_fallthru
          _
        // Predicated region
        $region217: #{forward.1} parent=11 // pred_check
          %p1714 = pneg %p1247
        $region218: #{forward.1} parent=11 // pred_check_branch
          %1716 = sbr.rel (%p1714) target = $region220
        $region219: #{forward.1} parent=11 // pred_region
          _
        $region220: #{forward.1} parent=11 // pred_fallthru
          _
        // Predicated region
        $region221: #{forward.1} parent=11 // pred_check
          %p1717 = pneg %p1268
        $region222: #{forward.1} parent=11 // pred_check_branch
          %1719 = sbr.rel (%p1717) target = $region224
        $region223: #{forward.1} parent=11 // pred_region
          %1721 = vsyncadd [#allocation39], 0
          %s1722 = sshll.u32 %s107, 4
          %s1723 = int_to_ptr.hbm [resolvable:$true] %s1722
          %s1724 = sshll.u32 [#allocation38], 4
          %s1725 = int_to_ptr.vmem [resolvable:$true] %s1724
          %1730 = dma.hbm_to_vmem [thread:$0]  %s1723, 2048, %s1725, [#allocation39], 128, 128, 8
        $region224: #{forward.1} parent=11 // pred_fallthru
          _
        // Predicated region
        $region225: #{forward.1} parent=11 // pred_check
          %p1731 = pneg %p1289
        $region226: #{forward.1} parent=11 // pred_check_branch
          %1733 = sbr.rel (%p1731) target = $region228
        $region227: #{forward.1} parent=11 // pred_region
          _
        $region228: #{forward.1} parent=11 // pred_fallthru
          _
      $region12: #{forward.1} parent=5 // pred_fallthru
        _
      %p1734 = scmp.lt.s32.totalorder %s129, 2
      // Predicated region
      $region229: #{forward.1} parent=5 // pred_check
        %p1735 = pneg %p1734
      $region230: #{forward.1} parent=5 // pred_check_branch
        %1737 = sbr.rel (%p1735) target = $region232
      $region231: #{forward.1} parent=5 // pred_region
        // Predicated region
        $region233: #{forward.1} parent=231 // pred_check
          %p1738 = pneg %p149
        $region234: #{forward.1} parent=231 // pred_check_branch
          %1740 = sbr.rel (%p1738) target = $region236
        $region235: #{forward.1} parent=231 // pred_region
          %s1741 = smul.u32 2, %s129
          %p1742 = scmp.lt.s32.totalorder %s1741, 3
          %s1743 = scalar_select %p1742, %s1741, 3
          %s1744 = smul.addr %s1743, 4
          %s1745 = scalar_lea.vmem %s1, %s1744
          %s1746 = smul.u32 2, %s129
        $region236: #{forward.1} parent=231 // pred_fallthru
          _
      $region232: #{forward.1} parent=5 // pred_fallthru
        _
      %p1747 = scmp.le.s32.totalorder 1, %s129
      %p1748 = scmp.lt.s32.totalorder %s129, 3
      %p1749 = pnand %p1747, %p1748
      %p1750 = pneg %p1749
      // Predicated region
      $region237: #{forward.1} parent=5 // pred_check
        _
      $region238: #{forward.1} parent=5 // pred_check_branch
        %1752 = sbr.rel (%p1749) target = $region240
      $region239: #{forward.1} parent=5 // pred_region
        %s1753 = ssub.s32 %s129, 1
        // Predicated region
        $region241: #{forward.1} parent=239 // pred_check
          %p1754 = pneg %p176
        $region242: #{forward.1} parent=239 // pred_check_branch
          %1756 = sbr.rel (%p1754) target = $region244
        $region243: #{forward.1} parent=239 // pred_region
          %1758 = dma.done [#allocation7], 1536
        $region244: #{forward.1} parent=239 // pred_fallthru
          _
        // Predicated region
        $region245: #{forward.1} parent=239 // pred_check
          %p1759 = pneg %p281
        $region246: #{forward.1} parent=239 // pred_check_branch
          %1761 = sbr.rel (%p1759) target = $region248
        $region247: #{forward.1} parent=239 // pred_region
          %1763 = dma.done [#allocation9], 1536
        $region248: #{forward.1} parent=239 // pred_fallthru
          _
        // Predicated region
        $region249: #{forward.1} parent=239 // pred_check
          %p1764 = pneg %p386
        $region250: #{forward.1} parent=239 // pred_check_branch
          %1766 = sbr.rel (%p1764) target = $region252
        $region251: #{forward.1} parent=239 // pred_region
          %1768 = dma.done [#allocation9], 1536
        $region252: #{forward.1} parent=239 // pred_fallthru
          _
        // Predicated region
        $region253: #{forward.1} parent=239 // pred_check
          %p1769 = pneg %p491
        $region254: #{forward.1} parent=239 // pred_check_branch
          %1771 = sbr.rel (%p1769) target = $region256
        $region255: #{forward.1} parent=239 // pred_region
          %1773 = dma.done [#allocation12], 1536
        $region256: #{forward.1} parent=239 // pred_fallthru
          _
        // Predicated region
        $region257: #{forward.1} parent=239 // pred_check
          %p1774 = pneg %p596
        $region258: #{forward.1} parent=239 // pred_check_branch
          %1776 = sbr.rel (%p1774) target = $region260
        $region259: #{forward.1} parent=239 // pred_region
          %1778 = dma.done [#allocation12], 1536
        $region260: #{forward.1} parent=239 // pred_fallthru
          _
        // Predicated region
        $region261: #{forward.1} parent=239 // pred_check
          %p1779 = pneg %p680
        $region262: #{forward.1} parent=239 // pred_check_branch
          %1781 = sbr.rel (%p1779) target = $region264
        $region263: #{forward.1} parent=239 // pred_region
          %1783 = dma.done [#allocation15], 2048
        $region264: #{forward.1} parent=239 // pred_fallthru
          _
        // Predicated region
        $region265: #{forward.1} parent=239 // pred_check
          %p1784 = pneg %p722
        $region266: #{forward.1} parent=239 // pred_check_branch
          %1786 = sbr.rel (%p1784) target = $region268
        $region267: #{forward.1} parent=239 // pred_region
          %1788 = dma.done [#allocation15], 3072
        $region268: #{forward.1} parent=239 // pred_fallthru
          _
        // Predicated region
        $region269: #{forward.1} parent=239 // pred_check
          %p1789 = pneg %p743
        $region270: #{forward.1} parent=239 // pred_check_branch
          %1791 = sbr.rel (%p1789) target = $region272
        $region271: #{forward.1} parent=239 // pred_region
          %1793 = dma.done [#allocation18], 3072
        $region272: #{forward.1} parent=239 // pred_fallthru
          _
        // Predicated region
        $region273: #{forward.1} parent=239 // pred_check
          %p1794 = pneg %p785
        $region274: #{forward.1} parent=239 // pred_check_branch
          %1796 = sbr.rel (%p1794) target = $region276
        $region275: #{forward.1} parent=239 // pred_region
          %1798 = dma.done [#allocation18], 3072
        $region276: #{forward.1} parent=239 // pred_fallthru
          _
        // Predicated region
        $region277: #{forward.1} parent=239 // pred_check
          %p1799 = pneg %p827
        $region278: #{forward.1} parent=239 // pred_check_branch
          %1801 = sbr.rel (%p1799) target = $region280
        $region279: #{forward.1} parent=239 // pred_region
          %1803 = dma.done [#allocation21], 2048
        $region280: #{forward.1} parent=239 // pred_fallthru
          _
        // Predicated region
        $region281: #{forward.1} parent=239 // pred_check
          %p1804 = pneg %p869
        $region282: #{forward.1} parent=239 // pred_check_branch
          %1806 = sbr.rel (%p1804) target = $region284
        $region283: #{forward.1} parent=239 // pred_region
          %1808 = dma.done [#allocation21], 3072
        $region284: #{forward.1} parent=239 // pred_fallthru
          _
        // Predicated region
        $region285: #{forward.1} parent=239 // pred_check
          %p1809 = pneg %p890
        $region286: #{forward.1} parent=239 // pred_check_branch
          %1811 = sbr.rel (%p1809) target = $region288
        $region287: #{forward.1} parent=239 // pred_region
          %1813 = dma.done [#allocation24], 3072
        $region288: #{forward.1} parent=239 // pred_fallthru
          _
        // Predicated region
        $region289: #{forward.1} parent=239 // pred_check
          %p1814 = pneg %p932
        $region290: #{forward.1} parent=239 // pred_check_branch
          %1816 = sbr.rel (%p1814) target = $region292
        $region291: #{forward.1} parent=239 // pred_region
          %1818 = dma.done [#allocation24], 3072
        $region292: #{forward.1} parent=239 // pred_fallthru
          _
        // Predicated region
        $region293: #{forward.1} parent=239 // pred_check
          %p1819 = pneg %p974
        $region294: #{forward.1} parent=239 // pred_check_branch
          %1821 = sbr.rel (%p1819) target = $region296
        $region295: #{forward.1} parent=239 // pred_region
          %1823 = dma.done [#allocation27], 2048
        $region296: #{forward.1} parent=239 // pred_fallthru
          _
        // Predicated region
        $region297: #{forward.1} parent=239 // pred_check
          %p1824 = pneg %p1016
        $region298: #{forward.1} parent=239 // pred_check_branch
          %1826 = sbr.rel (%p1824) target = $region300
        $region299: #{forward.1} parent=239 // pred_region
          %1828 = dma.done [#allocation27], 3072
        $region300: #{forward.1} parent=239 // pred_fallthru
          _
        // Predicated region
        $region301: #{forward.1} parent=239 // pred_check
          %p1829 = pneg %p1037
        $region302: #{forward.1} parent=239 // pred_check_branch
          %1831 = sbr.rel (%p1829) target = $region304
        $region303: #{forward.1} parent=239 // pred_region
          %1833 = dma.done [#allocation30], 3072
        $region304: #{forward.1} parent=239 // pred_fallthru
          _
        // Predicated region
        $region305: #{forward.1} parent=239 // pred_check
          %p1834 = pneg %p1079
        $region306: #{forward.1} parent=239 // pred_check_branch
          %1836 = sbr.rel (%p1834) target = $region308
        $region307: #{forward.1} parent=239 // pred_region
          %1838 = dma.done [#allocation30], 3072
        $region308: #{forward.1} parent=239 // pred_fallthru
          _
        // Predicated region
        $region309: #{forward.1} parent=239 // pred_check
          %p1839 = pneg %p1121
        $region310: #{forward.1} parent=239 // pred_check_branch
          %1841 = sbr.rel (%p1839) target = $region312
        $region311: #{forward.1} parent=239 // pred_region
          %1843 = dma.done [#allocation33], 2048
        $region312: #{forward.1} parent=239 // pred_fallthru
          _
        // Predicated region
        $region313: #{forward.1} parent=239 // pred_check
          %p1844 = pneg %p1163
        $region314: #{forward.1} parent=239 // pred_check_branch
          %1846 = sbr.rel (%p1844) target = $region316
        $region315: #{forward.1} parent=239 // pred_region
          %1848 = dma.done [#allocation33], 3072
        $region316: #{forward.1} parent=239 // pred_fallthru
          _
        // Predicated region
        $region317: #{forward.1} parent=239 // pred_check
          %p1849 = pneg %p1184
        $region318: #{forward.1} parent=239 // pred_check_branch
          %1851 = sbr.rel (%p1849) target = $region320
        $region319: #{forward.1} parent=239 // pred_region
          %1853 = dma.done [#allocation36], 3072
        $region320: #{forward.1} parent=239 // pred_fallthru
          _
        // Predicated region
        $region321: #{forward.1} parent=239 // pred_check
          %p1854 = pneg %p1226
        $region322: #{forward.1} parent=239 // pred_check_branch
          %1856 = sbr.rel (%p1854) target = $region324
        $region323: #{forward.1} parent=239 // pred_region
          %1858 = dma.done [#allocation36], 3072
        $region324: #{forward.1} parent=239 // pred_fallthru
          _
        // Predicated region
        $region325: #{forward.1} parent=239 // pred_check
          %p1859 = pneg %p1268
        $region326: #{forward.1} parent=239 // pred_check_branch
          %1861 = sbr.rel (%p1859) target = $region328
        $region327: #{forward.1} parent=239 // pred_region
          %1863 = dma.done [#allocation39], 2048
        $region328: #{forward.1} parent=239 // pred_fallthru
          _
        %s1864 = smul.u32 2, %s134
        %p1865 = scmp.lt.s32.totalorder %s1864, 3
        %s1866 = scalar_select %p1865, %s1864, 3
        %s1867 = smul.addr %s1866, 4
        %s1868 = scalar_lea.vmem %s1, %s1867
        %p1869 = pneg %p155
        %p1870 = pneg %p152
        %p1871 = pneg %p176
        %p1872 = pneg %p173
        %p1873 = pneg %p197
        %p1874 = pneg %p194
        %p1875 = pneg %p218
        %p1876 = pneg %p215
        %p1877 = pneg %p239
        %p1878 = pneg %p236
        %p1879 = pneg %p260
        %p1880 = pneg %p257
        %p1881 = pneg %p281
        %p1882 = pneg %p278
        %p1883 = pneg %p302
        %p1884 = pneg %p299
        %p1885 = pneg %p323
        %p1886 = pneg %p320
        %p1887 = pneg %p344
        %p1888 = pneg %p341
        %p1889 = pneg %p365
        %p1890 = pneg %p362
        %p1891 = pneg %p386
        %p1892 = pneg %p383
        %p1893 = pneg %p407
        %p1894 = pneg %p404
        %p1895 = pneg %p428
        %p1896 = pneg %p425
        %p1897 = pneg %p449
        %p1898 = pneg %p446
        %p1899 = pneg %p470
        %p1900 = pneg %p467
        %p1901 = pneg %p491
        %p1902 = pneg %p488
        %p1903 = pneg %p512
        %p1904 = pneg %p509
        %p1905 = pneg %p533
        %p1906 = pneg %p530
        %p1907 = pneg %p554
        %p1908 = pneg %p551
        %p1909 = pneg %p575
        %p1910 = pneg %p572
        %p1911 = pneg %p596
        %p1912 = pneg %p593
        %p1913 = pneg %p617
        %p1914 = pneg %p614
        %p1915 = pneg %p638
        %p1916 = pneg %p635
        %p1917 = pneg %p659
        %p1918 = pneg %p656
        %p1919 = pneg %p680
        %p1920 = pneg %p677
        %p1921 = pneg %p701
        %p1922 = pneg %p698
        %p1923 = pneg %p722
        %p1924 = pneg %p719
        %p1925 = pneg %p743
        %p1926 = pneg %p740
        %p1927 = pneg %p764
        %p1928 = pneg %p761
        %p1929 = pneg %p785
        %p1930 = pneg %p782
        %p1931 = pneg %p806
        %p1932 = pneg %p803
        %p1933 = pneg %p827
        %p1934 = pneg %p824
        %p1935 = pneg %p848
        %p1936 = pneg %p845
        %p1937 = pneg %p869
        %p1938 = pneg %p866
        %p1939 = pneg %p890
        %p1940 = pneg %p887
        %p1941 = pneg %p911
        %p1942 = pneg %p908
        %p1943 = pneg %p932
        %p1944 = pneg %p929
        %p1945 = pneg %p953
        %p1946 = pneg %p950
        %p1947 = pneg %p974
        %p1948 = pneg %p971
        %p1949 = pneg %p995
        %p1950 = pneg %p992
        %p1951 = pneg %p1016
        %p1952 = pneg %p1013
        %p1953 = pneg %p1037
        %p1954 = pneg %p1034
        %p1955 = pneg %p1058
        %p1956 = pneg %p1055
        %p1957 = pneg %p1079
        %p1958 = pneg %p1076
        %p1959 = pneg %p1100
        %p1960 = pneg %p1097
        %p1961 = pneg %p1121
        %p1962 = pneg %p1118
        %p1963 = pneg %p1142
        %p1964 = pneg %p1139
        %p1965 = pneg %p1163
        %p1966 = pneg %p1160
        %p1967 = pneg %p1184
        %p1968 = pneg %p1181
        %p1969 = pneg %p1205
        %p1970 = pneg %p1202
        %p1971 = pneg %p1226
        %p1972 = pneg %p1223
        %p1973 = pneg %p1247
        %p1974 = pneg %p1244
        %p1975 = pneg %p1268
        %p1976 = pneg %p1265
        %p1977 = pneg %p1289
        %p1978 = pneg %p1286
        %p1979 = pneg %p1315
        %p1980 = pneg %p1312
        %s1981 = smul.u32 2, %s134
        %p1982 = scmp.lt.s32.totalorder %s1981, 3
        %s1983 = scalar_select %p1982, %s1981, 3
        %s1984 = smul.addr %s1983, 2
        %s1985 = smul.addr %s1984, 8
        %s1986 = scalar_lea.vmem %s111, %s1985
        %s1987 = smul.u32 2, %s134
        %p1988 = scmp.lt.s32.totalorder %s1987, 3
        %s1989 = scalar_select %p1988, %s1987, 3
        %s1990 = smul.addr %s1989, 4
        %s1991 = scalar_lea.vmem %s1, %s1990
        %s1992 = smul.u32 2, %s134
        %s1993 = smul.u32 2, %s134
        %p1994 = scmp.lt.s32.totalorder %s1993, 3
        %s1995 = scalar_select %p1994, %s1993, 3
        %s1996 = smul.addr %s1995, 2
        %s1997 = smul.addr %s1996, 8
        %s1998 = scalar_lea.vmem %s111, %s1997
        %s1999 = smul.u32 2, %s134
        %v2001 = vld [vmem:[%s1991] sm:$0xf]
        %v2002 = vld [vmem:[%s1991 + $0x4] sm:$0xf]
        %s2003 = scalar_lea.vmem [#allocation6], 32
        %v2004 = vld [vmem:[%s2003] sm:$0xf]
        %v2005 = vld [vmem:[%s2003 + $0x4] sm:$0xf]
        %v2006 = vld [vmem:[%s2003 + $0x8] sm:$0xf]
        %v2007 = vld [vmem:[%s2003 + $0xc] sm:$0xf]
        %v2008 = vld [vmem:[%s2003 + $0x10] sm:$0xf]
        %v2009 = vld [vmem:[%s2003 + $0x14] sm:$0xf]
        %v2010 = vld [vmem:[%s2003 + $0x18] sm:$0xf]
        %v2011 = vld [vmem:[%s2003 + $0x1c] sm:$0xf]
        %v2014 = vunpack.c.l.b16 %v2001
        %v2015 = vunpack.c.l.b16 %v2002
        %v2016 = vpack.c.b16 %v2015, %v2014
        %v2018 = vshrl.u32 %v2016, 16
        %v2020 = vrot.slane %v2018, 7
        %v2021 = vshll.u32 %v2016, 16
        %v2023 = vor.u32 %v2020, %v2021
        %vm2025 = vcmask 1040384
        %vm2026 = vsmask.f32 256
        %vm2027 = vmand %vm2025, %vm2026
        %v2028 = vsel %vm2027, 0, %v2023
        %v2029 = vld [vmem:[#allocation6] sm:$0xf]
        %v2030 = vld [vmem:[#allocation6 + $0x4] sm:$0xf]
        %v2031 = vld [vmem:[#allocation6 + $0x8] sm:$0xf]
        %v2032 = vld [vmem:[#allocation6 + $0xc] sm:$0xf]
        %v2033 = vld [vmem:[#allocation6 + $0x10] sm:$0xf]
        %v2034 = vld [vmem:[#allocation6 + $0x14] sm:$0xf]
        %v2035 = vld [vmem:[#allocation6 + $0x18] sm:$0xf]
        %v2036 = vld [vmem:[#allocation6 + $0x1c] sm:$0xf]
        %v2045 = vunpack.c.l.b16 %v2029
        %v2046 = vunpack.c.l.b16 %v2030
        %v2047 = vunpack.c.l.b16 %v2031
        %v2048 = vunpack.c.l.b16 %v2032
        %v2049 = vunpack.c.l.b16 %v2033
        %v2050 = vunpack.c.l.b16 %v2034
        %v2051 = vunpack.c.l.b16 %v2035
        %v2052 = vunpack.c.l.b16 %v2036
        %v2053 = vpack.c.b16 %v2046, %v2045
        %v2054 = vpack.c.b16 %v2048, %v2047
        %v2055 = vpack.c.b16 %v2050, %v2049
        %v2056 = vpack.c.b16 %v2052, %v2051
        %vm2061 = vcmask 523264
        %v2063 = vsel %vm2061, %v2028, 0
        %2065 = vmatpush.bf16.msra.mxu0 0
        %2066 = vmatpush.bf16.msra.mxu0 0
        %2067 = vmatpush.bf16.msra.mxu0 0
        %2068 = vmatpush.bf16.msra.mxu0 0
        %2069 = vmatpush.bf16.msra.mxu0 %v2056
        %2070 = vmatpush.bf16.msra.mxu0 %v2055
        %2071 = vmatpush.bf16.msra.mxu0 %v2054
        %2072 = vmatpush.bf16.msra.mxu0 %v2053
        %2073 = vmatmul.bf16.gmra.mxu0 %v2063
        %v2074 = vpop.f32.mrf.mxu0
        %v2075 = vadd.f32 0.0, %v2074
        %v2076 = vpop.f32.mrf.mxu0
        %v2077 = vadd.f32 0.0, %v2076
        %2078 = vdwg.mxu0
        %v2087 = vunpack.c.l.b16 %v2004
        %v2088 = vunpack.c.l.b16 %v2005
        %v2089 = vunpack.c.l.b16 %v2006
        %v2090 = vunpack.c.l.b16 %v2007
        %v2091 = vunpack.c.l.b16 %v2008
        %v2092 = vunpack.c.l.b16 %v2009
        %v2093 = vunpack.c.l.b16 %v2010
        %v2094 = vunpack.c.l.b16 %v2011
        %v2095 = vpack.c.b16 %v2088, %v2087
        %v2096 = vpack.c.b16 %v2090, %v2089
        %v2097 = vpack.c.b16 %v2092, %v2091
        %v2098 = vpack.c.b16 %v2094, %v2093
        %v2103 = vsel %vm2061, %v2016, 0
        %2105 = vmatpush.bf16.msra.mxu0 0
        %2106 = vmatpush.bf16.msra.mxu0 0
        %2107 = vmatpush.bf16.msra.mxu0 0
        %2108 = vmatpush.bf16.msra.mxu0 0
        %2109 = vmatpush.bf16.msra.mxu0 %v2098
        %2110 = vmatpush.bf16.msra.mxu0 %v2097
        %2111 = vmatpush.bf16.msra.mxu0 %v2096
        %2112 = vmatpush.bf16.msra.mxu0 %v2095
        %2113 = vmatmul.bf16.gmra.mxu0 %v2103
        %v2114 = vpop.f32.mrf.mxu0
        %v2115 = vadd.f32 %v2075, %v2114
        %v2116 = vpop.f32.mrf.mxu0
        %v2117 = vadd.f32 %v2077, %v2116
        %2118 = vdwg.mxu0
        %v2119 = vrot.slane %v2021, 1
        %v2120 = vor.u32 %v2018, %v2119
        %vm2122 = vcmask 1047552
        %vm2123 = vsmask.f32 7424
        %vm2124 = vmand %vm2122, %vm2123
        %v2125 = vsel %vm2124, %v2120, 0
        %s2126 = scalar_lea.vmem [#allocation6], 64
        %v2127 = vld [vmem:[%s2126] sm:$0xf]
        %v2128 = vld [vmem:[%s2126 + $0x4] sm:$0xf]
        %v2129 = vld [vmem:[%s2126 + $0x8] sm:$0xf]
        %v2130 = vld [vmem:[%s2126 + $0xc] sm:$0xf]
        %v2131 = vld [vmem:[%s2126 + $0x10] sm:$0xf]
        %v2132 = vld [vmem:[%s2126 + $0x14] sm:$0xf]
        %v2133 = vld [vmem:[%s2126 + $0x18] sm:$0xf]
        %v2134 = vld [vmem:[%s2126 + $0x1c] sm:$0xf]
        %v2143 = vunpack.c.l.b16 %v2127
        %v2144 = vunpack.c.l.b16 %v2128
        %v2145 = vunpack.c.l.b16 %v2129
        %v2146 = vunpack.c.l.b16 %v2130
        %v2147 = vunpack.c.l.b16 %v2131
        %v2148 = vunpack.c.l.b16 %v2132
        %v2149 = vunpack.c.l.b16 %v2133
        %v2150 = vunpack.c.l.b16 %v2134
        %v2151 = vpack.c.b16 %v2144, %v2143
        %v2152 = vpack.c.b16 %v2146, %v2145
        %v2153 = vpack.c.b16 %v2148, %v2147
        %v2154 = vpack.c.b16 %v2150, %v2149
        %v2160 = vsel %vm2061, %v2125, 0
        %2162 = vmatpush.bf16.msra.mxu0 0
        %2163 = vmatpush.bf16.msra.mxu0 0
        %2164 = vmatpush.bf16.msra.mxu0 0
        %2165 = vmatpush.bf16.msra.mxu0 0
        %2166 = vmatpush.bf16.msra.mxu0 %v2154
        %2167 = vmatpush.bf16.msra.mxu0 %v2153
        %2168 = vmatpush.bf16.msra.mxu0 %v2152
        %2169 = vmatpush.bf16.msra.mxu0 %v2151
        %2170 = vmatmul.bf16.gmra.mxu0 %v2160
        %v2171 = vpop.f32.mrf.mxu0
        %v2172 = vadd.f32 0.0, %v2171
        %v2173 = vpop.f32.mrf.mxu0
        %v2174 = vadd.f32 0.0, %v2173
        %2175 = vdwg.mxu0
        %v2176 = vadd.f32 %v2115, %v2172
        %v2177 = vadd.f32 %v2117, %v2174
        %v2178 = vld [vmem:[%s5] sm:$0x1]
        %v2180 = vperm.slane %v2178, 0
        %v2182 = vadd.f32 %v2176, %v2180
        %v2183 = vadd.f32 %v2177, %v2180
        %v2184 = vmax.f32 %v2182, 0.0
        %v2185 = vmax.f32 %v2183, 0.0
        %v2186 = vpack.c.bf16 %v2184, %v2184
        %v2187 = vpack.c.bf16 %v2185, %v2185
        %s2188 = scalar_lea.vmem %s7, 64
        %v2189 = vld [vmem:[%s2188] sm:$0xf]
        %v2190 = vld [vmem:[%s2188 + $0x4] sm:$0xf]
        %v2191 = vld [vmem:[%s2188 + $0x8] sm:$0xf]
        %v2192 = vld [vmem:[%s2188 + $0xc] sm:$0xf]
        %v2193 = vld [vmem:[%s2188 + $0x10] sm:$0xf]
        %v2194 = vld [vmem:[%s2188 + $0x14] sm:$0xf]
        %v2195 = vld [vmem:[%s2188 + $0x18] sm:$0xf]
        %v2196 = vld [vmem:[%s2188 + $0x1c] sm:$0xf]
        %v2197 = vld [vmem:[%s2188 + $0x20] sm:$0xf]
        %v2198 = vld [vmem:[%s2188 + $0x24] sm:$0xf]
        %v2199 = vld [vmem:[%s2188 + $0x28] sm:$0xf]
        %v2200 = vld [vmem:[%s2188 + $0x2c] sm:$0xf]
        %v2201 = vld [vmem:[%s2188 + $0x30] sm:$0xf]
        %v2202 = vld [vmem:[%s2188 + $0x34] sm:$0xf]
        %v2203 = vld [vmem:[%s2188 + $0x38] sm:$0xf]
        %v2204 = vld [vmem:[%s2188 + $0x3c] sm:$0xf]
        %v2207 = vunpack.c.l.b16 %v2186
        %v2208 = vunpack.c.l.b16 %v2187
        %v2209 = vpack.c.b16 %v2208, %v2207
        %v2211 = vshrl.u32 %v2209, 16
        %v2213 = vrot.slane %v2211, 7
        %v2214 = vshll.u32 %v2209, 16
        %v2216 = vor.u32 %v2213, %v2214
        %v2218 = vsel %vm2027, 0, %v2216
        %v2219 = vld [vmem:[%s7] sm:$0xf]
        %v2220 = vld [vmem:[%s7 + $0x4] sm:$0xf]
        %v2221 = vld [vmem:[%s7 + $0x8] sm:$0xf]
        %v2222 = vld [vmem:[%s7 + $0xc] sm:$0xf]
        %v2223 = vld [vmem:[%s7 + $0x10] sm:$0xf]
        %v2224 = vld [vmem:[%s7 + $0x14] sm:$0xf]
        %v2225 = vld [vmem:[%s7 + $0x18] sm:$0xf]
        %v2226 = vld [vmem:[%s7 + $0x1c] sm:$0xf]
        %v2227 = vld [vmem:[%s7 + $0x20] sm:$0xf]
        %v2228 = vld [vmem:[%s7 + $0x24] sm:$0xf]
        %v2229 = vld [vmem:[%s7 + $0x28] sm:$0xf]
        %v2230 = vld [vmem:[%s7 + $0x2c] sm:$0xf]
        %v2231 = vld [vmem:[%s7 + $0x30] sm:$0xf]
        %v2232 = vld [vmem:[%s7 + $0x34] sm:$0xf]
        %v2233 = vld [vmem:[%s7 + $0x38] sm:$0xf]
        %v2234 = vld [vmem:[%s7 + $0x3c] sm:$0xf]
        %v2251 = vunpack.c.l.b16 %v2219
        %v2252 = vunpack.c.l.b16 %v2220
        %v2253 = vunpack.c.l.b16 %v2221
        %v2254 = vunpack.c.l.b16 %v2222
        %v2255 = vunpack.c.l.b16 %v2223
        %v2256 = vunpack.c.l.b16 %v2224
        %v2257 = vunpack.c.l.b16 %v2225
        %v2258 = vunpack.c.l.b16 %v2226
        %v2259 = vunpack.c.l.b16 %v2227
        %v2260 = vunpack.c.l.b16 %v2228
        %v2261 = vunpack.c.l.b16 %v2229
        %v2262 = vunpack.c.l.b16 %v2230
        %v2263 = vunpack.c.l.b16 %v2231
        %v2264 = vunpack.c.l.b16 %v2232
        %v2265 = vunpack.c.l.b16 %v2233
        %v2266 = vunpack.c.l.b16 %v2234
        %v2267 = vpack.c.b16 %v2252, %v2251
        %v2268 = vpack.c.b16 %v2254, %v2253
        %v2269 = vpack.c.b16 %v2256, %v2255
        %v2270 = vpack.c.b16 %v2258, %v2257
        %v2271 = vpack.c.b16 %v2260, %v2259
        %v2272 = vpack.c.b16 %v2262, %v2261
        %v2273 = vpack.c.b16 %v2264, %v2263
        %v2274 = vpack.c.b16 %v2266, %v2265
        %2283 = vmatpush.bf16.msra.mxu0 %v2274
        %2284 = vmatpush.bf16.msra.mxu0 %v2273
        %2285 = vmatpush.bf16.msra.mxu0 %v2272
        %2286 = vmatpush.bf16.msra.mxu0 %v2271
        %2287 = vmatpush.bf16.msra.mxu0 %v2270
        %2288 = vmatpush.bf16.msra.mxu0 %v2269
        %2289 = vmatpush.bf16.msra.mxu0 %v2268
        %2290 = vmatpush.bf16.msra.mxu0 %v2267
        %2291 = vmatmul.bf16.gmra.mxu0 %v2218
        %v2292 = vpop.f32.mrf.mxu0
        %v2293 = vadd.f32 0.0, %v2292
        %v2294 = vpop.f32.mrf.mxu0
        %v2295 = vadd.f32 0.0, %v2294
        %2296 = vdwg.mxu0
        %v2314 = vunpack.c.l.b16 %v2189
        %v2315 = vunpack.c.l.b16 %v2190
        %v2316 = vunpack.c.l.b16 %v2191
        %v2317 = vunpack.c.l.b16 %v2192
        %v2318 = vunpack.c.l.b16 %v2193
        %v2319 = vunpack.c.l.b16 %v2194
        %v2320 = vunpack.c.l.b16 %v2195
        %v2321 = vunpack.c.l.b16 %v2196
        %v2322 = vunpack.c.l.b16 %v2197
        %v2323 = vunpack.c.l.b16 %v2198
        %v2324 = vunpack.c.l.b16 %v2199
        %v2325 = vunpack.c.l.b16 %v2200
        %v2326 = vunpack.c.l.b16 %v2201
        %v2327 = vunpack.c.l.b16 %v2202
        %v2328 = vunpack.c.l.b16 %v2203
        %v2329 = vunpack.c.l.b16 %v2204
        %v2330 = vpack.c.b16 %v2315, %v2314
        %v2331 = vpack.c.b16 %v2317, %v2316
        %v2332 = vpack.c.b16 %v2319, %v2318
        %v2333 = vpack.c.b16 %v2321, %v2320
        %v2334 = vpack.c.b16 %v2323, %v2322
        %v2335 = vpack.c.b16 %v2325, %v2324
        %v2336 = vpack.c.b16 %v2327, %v2326
        %v2337 = vpack.c.b16 %v2329, %v2328
        %2346 = vmatpush.bf16.msra.mxu0 %v2337
        %2347 = vmatpush.bf16.msra.mxu0 %v2336
        %2348 = vmatpush.bf16.msra.mxu0 %v2335
        %2349 = vmatpush.bf16.msra.mxu0 %v2334
        %2350 = vmatpush.bf16.msra.mxu0 %v2333
        %2351 = vmatpush.bf16.msra.mxu0 %v2332
        %2352 = vmatpush.bf16.msra.mxu0 %v2331
        %2353 = vmatpush.bf16.msra.mxu0 %v2330
        %2354 = vmatmul.bf16.gmra.mxu0 %v2209
        %v2355 = vpop.f32.mrf.mxu0
        %v2356 = vadd.f32 %v2293, %v2355
        %v2357 = vpop.f32.mrf.mxu0
        %v2358 = vadd.f32 %v2295, %v2357
        %2359 = vdwg.mxu0
        %v2360 = vrot.slane %v2214, 1
        %v2361 = vor.u32 %v2211, %v2360
        %v2363 = vsel %vm2124, %v2361, 0
        %s2364 = scalar_lea.vmem %s7, 128
        %v2365 = vld [vmem:[%s2364] sm:$0xf]
        %v2366 = vld [vmem:[%s2364 + $0x4] sm:$0xf]
        %v2367 = vld [vmem:[%s2364 + $0x8] sm:$0xf]
        %v2368 = vld [vmem:[%s2364 + $0xc] sm:$0xf]
        %v2369 = vld [vmem:[%s2364 + $0x10] sm:$0xf]
        %v2370 = vld [vmem:[%s2364 + $0x14] sm:$0xf]
        %v2371 = vld [vmem:[%s2364 + $0x18] sm:$0xf]
        %v2372 = vld [vmem:[%s2364 + $0x1c] sm:$0xf]
        %v2373 = vld [vmem:[%s2364 + $0x20] sm:$0xf]
        %v2374 = vld [vmem:[%s2364 + $0x24] sm:$0xf]
        %v2375 = vld [vmem:[%s2364 + $0x28] sm:$0xf]
        %v2376 = vld [vmem:[%s2364 + $0x2c] sm:$0xf]
        %v2377 = vld [vmem:[%s2364 + $0x30] sm:$0xf]
        %v2378 = vld [vmem:[%s2364 + $0x34] sm:$0xf]
        %v2379 = vld [vmem:[%s2364 + $0x38] sm:$0xf]
        %v2380 = vld [vmem:[%s2364 + $0x3c] sm:$0xf]
        %v2397 = vunpack.c.l.b16 %v2365
        %v2398 = vunpack.c.l.b16 %v2366
        %v2399 = vunpack.c.l.b16 %v2367
        %v2400 = vunpack.c.l.b16 %v2368
        %v2401 = vunpack.c.l.b16 %v2369
        %v2402 = vunpack.c.l.b16 %v2370
        %v2403 = vunpack.c.l.b16 %v2371
        %v2404 = vunpack.c.l.b16 %v2372
        %v2405 = vunpack.c.l.b16 %v2373
        %v2406 = vunpack.c.l.b16 %v2374
        %v2407 = vunpack.c.l.b16 %v2375
        %v2408 = vunpack.c.l.b16 %v2376
        %v2409 = vunpack.c.l.b16 %v2377
        %v2410 = vunpack.c.l.b16 %v2378
        %v2411 = vunpack.c.l.b16 %v2379
        %v2412 = vunpack.c.l.b16 %v2380
        %v2413 = vpack.c.b16 %v2398, %v2397
        %v2414 = vpack.c.b16 %v2400, %v2399
        %v2415 = vpack.c.b16 %v2402, %v2401
        %v2416 = vpack.c.b16 %v2404, %v2403
        %v2417 = vpack.c.b16 %v2406, %v2405
        %v2418 = vpack.c.b16 %v2408, %v2407
        %v2419 = vpack.c.b16 %v2410, %v2409
        %v2420 = vpack.c.b16 %v2412, %v2411
        %2429 = vmatpush.bf16.msra.mxu0 %v2420
        %2430 = vmatpush.bf16.msra.mxu0 %v2419
        %2431 = vmatpush.bf16.msra.mxu0 %v2418
        %2432 = vmatpush.bf16.msra.mxu0 %v2417
        %2433 = vmatpush.bf16.msra.mxu0 %v2416
        %2434 = vmatpush.bf16.msra.mxu0 %v2415
        %2435 = vmatpush.bf16.msra.mxu0 %v2414
        %2436 = vmatpush.bf16.msra.mxu0 %v2413
        %2437 = vmatmul.bf16.gmra.mxu0 %v2363
        %v2438 = vpop.f32.mrf.mxu0
        %v2439 = vadd.f32 0.0, %v2438
        %v2440 = vpop.f32.mrf.mxu0
        %v2441 = vadd.f32 0.0, %v2440
        %2442 = vdwg.mxu0
        %v2443 = vadd.f32 %v2356, %v2439
        %v2444 = vadd.f32 %v2358, %v2441
        %v2445 = vld [vmem:[%s9] sm:$0x1]
        %v2447 = vperm.slane %v2445, 0
        %v2449 = vadd.f32 %v2443, %v2447
        %v2450 = vadd.f32 %v2444, %v2447
        %v2451 = vmax.f32 %v2449, 0.0
        %v2452 = vmax.f32 %v2450, 0.0
        %v2453 = vpack.c.bf16 %v2451, %v2451
        %v2454 = vpack.c.bf16 %v2452, %v2452
        %2455 = vst [vmem:[#allocation2] sm:$0xff] %v2451
        %2456 = vst [vmem:[#allocation2 + $0x8] sm:$0xff] %v2452
        %v2457 = vld [vmem:[#allocation2] ss:$2 sm:$0xff]
        %s2458 = scalar_lea.vmem [#allocation2], 1
        %v2459 = vld [vmem:[%s2458] ss:$2 sm:$0xff]
        %v2460 = vmax.f32 %v2457, %v2459
        %v2461 = vpack.c.bf16 %v2460, %v2460
        %v2462 = vld [vmem:[%s11] sm:$0xf]
        %v2463 = vld [vmem:[%s11 + $0x4] sm:$0xf]
        %v2464 = vld [vmem:[%s11 + $0x8] sm:$0xf]
        %v2465 = vld [vmem:[%s11 + $0xc] sm:$0xf]
        %v2466 = vld [vmem:[%s11 + $0x10] sm:$0xf]
        %v2467 = vld [vmem:[%s11 + $0x14] sm:$0xf]
        %v2468 = vld [vmem:[%s11 + $0x18] sm:$0xf]
        %v2469 = vld [vmem:[%s11 + $0x1c] sm:$0xf]
        %v2470 = vld [vmem:[%s11 + $0x20] sm:$0xf]
        %v2471 = vld [vmem:[%s11 + $0x24] sm:$0xf]
        %v2472 = vld [vmem:[%s11 + $0x28] sm:$0xf]
        %v2473 = vld [vmem:[%s11 + $0x2c] sm:$0xf]
        %v2474 = vld [vmem:[%s11 + $0x30] sm:$0xf]
        %v2475 = vld [vmem:[%s11 + $0x34] sm:$0xf]
        %v2476 = vld [vmem:[%s11 + $0x38] sm:$0xf]
        %v2477 = vld [vmem:[%s11 + $0x3c] sm:$0xf]
        %v2494 = vunpack.c.l.b16 %v2462
        %v2495 = vunpack.c.l.b16 %v2463
        %v2496 = vunpack.c.l.b16 %v2464
        %v2497 = vunpack.c.l.b16 %v2465
        %v2498 = vunpack.c.l.b16 %v2466
        %v2499 = vunpack.c.l.b16 %v2467
        %v2500 = vunpack.c.l.b16 %v2468
        %v2501 = vunpack.c.l.b16 %v2469
        %v2502 = vunpack.c.l.b16 %v2470
        %v2503 = vunpack.c.l.b16 %v2471
        %v2504 = vunpack.c.l.b16 %v2472
        %v2505 = vunpack.c.l.b16 %v2473
        %v2506 = vunpack.c.l.b16 %v2474
        %v2507 = vunpack.c.l.b16 %v2475
        %v2508 = vunpack.c.l.b16 %v2476
        %v2509 = vunpack.c.l.b16 %v2477
        %v2510 = vpack.c.b16 %v2495, %v2494
        %v2511 = vpack.c.b16 %v2497, %v2496
        %v2512 = vpack.c.b16 %v2499, %v2498
        %v2513 = vpack.c.b16 %v2501, %v2500
        %v2514 = vpack.c.b16 %v2503, %v2502
        %v2515 = vpack.c.b16 %v2505, %v2504
        %v2516 = vpack.c.b16 %v2507, %v2506
        %v2517 = vpack.c.b16 %v2509, %v2508
        %2526 = vmatpush.bf16.msra.mxu0 %v2517
        %2527 = vmatpush.bf16.msra.mxu0 %v2516
        %2528 = vmatpush.bf16.msra.mxu0 %v2515
        %2529 = vmatpush.bf16.msra.mxu0 %v2514
        %2530 = vmatpush.bf16.msra.mxu0 %v2513
        %2531 = vmatpush.bf16.msra.mxu0 %v2512
        %2532 = vmatpush.bf16.msra.mxu0 %v2511
        %2533 = vmatpush.bf16.msra.mxu0 %v2510
        %2534 = vmatmul.bf16.gmra.mxu0 %v2461
        %v2535 = vpop.f32.mrf.mxu0
        %v2536 = vadd.f32 0.0, %v2535
        %v2537 = vpop.f32.mrf.mxu0
        %2538 = vdwg.mxu0
        %s2539 = scalar_lea.vmem %s11, 64
        %v2540 = vld [vmem:[%s2539] sm:$0xf]
        %v2541 = vld [vmem:[%s2539 + $0x4] sm:$0xf]
        %v2542 = vld [vmem:[%s2539 + $0x8] sm:$0xf]
        %v2543 = vld [vmem:[%s2539 + $0xc] sm:$0xf]
        %v2544 = vld [vmem:[%s2539 + $0x10] sm:$0xf]
        %v2545 = vld [vmem:[%s2539 + $0x14] sm:$0xf]
        %v2546 = vld [vmem:[%s2539 + $0x18] sm:$0xf]
        %v2547 = vld [vmem:[%s2539 + $0x1c] sm:$0xf]
        %v2548 = vld [vmem:[%s2539 + $0x20] sm:$0xf]
        %v2549 = vld [vmem:[%s2539 + $0x24] sm:$0xf]
        %v2550 = vld [vmem:[%s2539 + $0x28] sm:$0xf]
        %v2551 = vld [vmem:[%s2539 + $0x2c] sm:$0xf]
        %v2552 = vld [vmem:[%s2539 + $0x30] sm:$0xf]
        %v2553 = vld [vmem:[%s2539 + $0x34] sm:$0xf]
        %v2554 = vld [vmem:[%s2539 + $0x38] sm:$0xf]
        %v2555 = vld [vmem:[%s2539 + $0x3c] sm:$0xf]
        %v2572 = vunpack.c.l.b16 %v2540
        %v2573 = vunpack.c.l.b16 %v2541
        %v2574 = vunpack.c.l.b16 %v2542
        %v2575 = vunpack.c.l.b16 %v2543
        %v2576 = vunpack.c.l.b16 %v2544
        %v2577 = vunpack.c.l.b16 %v2545
        %v2578 = vunpack.c.l.b16 %v2546
        %v2579 = vunpack.c.l.b16 %v2547
        %v2580 = vunpack.c.l.b16 %v2548
        %v2581 = vunpack.c.l.b16 %v2549
        %v2582 = vunpack.c.l.b16 %v2550
        %v2583 = vunpack.c.l.b16 %v2551
        %v2584 = vunpack.c.l.b16 %v2552
        %v2585 = vunpack.c.l.b16 %v2553
        %v2586 = vunpack.c.l.b16 %v2554
        %v2587 = vunpack.c.l.b16 %v2555
        %v2588 = vpack.c.b16 %v2573, %v2572
        %v2589 = vpack.c.b16 %v2575, %v2574
        %v2590 = vpack.c.b16 %v2577, %v2576
        %v2591 = vpack.c.b16 %v2579, %v2578
        %v2592 = vpack.c.b16 %v2581, %v2580
        %v2593 = vpack.c.b16 %v2583, %v2582
        %v2594 = vpack.c.b16 %v2585, %v2584
        %v2595 = vpack.c.b16 %v2587, %v2586
        %2604 = vmatpush.bf16.msra.mxu0 %v2595
        %2605 = vmatpush.bf16.msra.mxu0 %v2594
        %2606 = vmatpush.bf16.msra.mxu0 %v2593
        %2607 = vmatpush.bf16.msra.mxu0 %v2592
        %2608 = vmatpush.bf16.msra.mxu0 %v2591
        %2609 = vmatpush.bf16.msra.mxu0 %v2590
        %2610 = vmatpush.bf16.msra.mxu0 %v2589
        %2611 = vmatpush.bf16.msra.mxu0 %v2588
        %2612 = vmatmul.bf16.gmra.mxu0 %v2461
        %v2613 = vpop.f32.mrf.mxu0
        %v2614 = vadd.f32 0.0, %v2613
        %v2615 = vpop.f32.mrf.mxu0
        %2616 = vdwg.mxu0
        %v2617 = vmax.f32 %v2536, %v2614
        %v2618 = vpack.c.bf16 %v2617, %v2617
        %s2619 = scalar_lea.vmem [#allocation8], 32
        %v2620 = vld [vmem:[%s2619] sm:$0xf]
        %v2621 = vld [vmem:[%s2619 + $0x4] sm:$0xf]
        %v2622 = vld [vmem:[%s2619 + $0x8] sm:$0xf]
        %v2623 = vld [vmem:[%s2619 + $0xc] sm:$0xf]
        %v2624 = vld [vmem:[%s2619 + $0x10] sm:$0xf]
        %v2625 = vld [vmem:[%s2619 + $0x14] sm:$0xf]
        %v2626 = vld [vmem:[%s2619 + $0x18] sm:$0xf]
        %v2627 = vld [vmem:[%s2619 + $0x1c] sm:$0xf]
        %v2629 = vunpack.c.l.b16 %v2618
        %v2630 = vpack.c.b16 %v2629, %v2629
        %v2632 = vshrl.u32 %v2630, 16
        %v2634 = vrot.slane %v2632, 7
        %v2635 = vshll.u32 %v2630, 16
        %v2637 = vor.u32 %v2634, %v2635
        %v2639 = vsel %vm2027, 0, %v2637
        %v2640 = vld [vmem:[#allocation8] sm:$0xf]
        %v2641 = vld [vmem:[#allocation8 + $0x4] sm:$0xf]
        %v2642 = vld [vmem:[#allocation8 + $0x8] sm:$0xf]
        %v2643 = vld [vmem:[#allocation8 + $0xc] sm:$0xf]
        %v2644 = vld [vmem:[#allocation8 + $0x10] sm:$0xf]
        %v2645 = vld [vmem:[#allocation8 + $0x14] sm:$0xf]
        %v2646 = vld [vmem:[#allocation8 + $0x18] sm:$0xf]
        %v2647 = vld [vmem:[#allocation8 + $0x1c] sm:$0xf]
        %v2656 = vunpack.c.l.b16 %v2640
        %v2657 = vunpack.c.l.b16 %v2641
        %v2658 = vunpack.c.l.b16 %v2642
        %v2659 = vunpack.c.l.b16 %v2643
        %v2660 = vunpack.c.l.b16 %v2644
        %v2661 = vunpack.c.l.b16 %v2645
        %v2662 = vunpack.c.l.b16 %v2646
        %v2663 = vunpack.c.l.b16 %v2647
        %v2664 = vpack.c.b16 %v2657, %v2656
        %v2665 = vpack.c.b16 %v2659, %v2658
        %v2666 = vpack.c.b16 %v2661, %v2660
        %v2667 = vpack.c.b16 %v2663, %v2662
        %v2673 = vsel %vm2061, %v2639, 0
        %2675 = vmatpush.bf16.msra.mxu0 0
        %2676 = vmatpush.bf16.msra.mxu0 0
        %2677 = vmatpush.bf16.msra.mxu0 0
        %2678 = vmatpush.bf16.msra.mxu0 0
        %2679 = vmatpush.bf16.msra.mxu0 %v2667
        %2680 = vmatpush.bf16.msra.mxu0 %v2666
        %2681 = vmatpush.bf16.msra.mxu0 %v2665
        %2682 = vmatpush.bf16.msra.mxu0 %v2664
        %2683 = vmatmul.bf16.gmra.mxu0 %v2673
        %v2684 = vpop.f32.mrf.mxu0
        %v2685 = vadd.f32 0.0, %v2684
        %v2686 = vpop.f32.mrf.mxu0
        %2687 = vdwg.mxu0
        %v2696 = vunpack.c.l.b16 %v2620
        %v2697 = vunpack.c.l.b16 %v2621
        %v2698 = vunpack.c.l.b16 %v2622
        %v2699 = vunpack.c.l.b16 %v2623
        %v2700 = vunpack.c.l.b16 %v2624
        %v2701 = vunpack.c.l.b16 %v2625
        %v2702 = vunpack.c.l.b16 %v2626
        %v2703 = vunpack.c.l.b16 %v2627
        %v2704 = vpack.c.b16 %v2697, %v2696
        %v2705 = vpack.c.b16 %v2699, %v2698
        %v2706 = vpack.c.b16 %v2701, %v2700
        %v2707 = vpack.c.b16 %v2703, %v2702
        %v2713 = vsel %vm2061, %v2618, 0
        %2715 = vmatpush.bf16.msra.mxu0 0
        %2716 = vmatpush.bf16.msra.mxu0 0
        %2717 = vmatpush.bf16.msra.mxu0 0
        %2718 = vmatpush.bf16.msra.mxu0 0
        %2719 = vmatpush.bf16.msra.mxu0 %v2707
        %2720 = vmatpush.bf16.msra.mxu0 %v2706
        %2721 = vmatpush.bf16.msra.mxu0 %v2705
        %2722 = vmatpush.bf16.msra.mxu0 %v2704
        %2723 = vmatmul.bf16.gmra.mxu0 %v2713
        %v2724 = vpop.f32.mrf.mxu0
        %v2725 = vadd.f32 %v2685, %v2724
        %v2726 = vpop.f32.mrf.mxu0
        %2727 = vdwg.mxu0
        %v2728 = vrot.slane %v2635, 1
        %v2729 = vor.u32 %v2632, %v2728
        %vm2731 = vcmask 1043456
        %vm2732 = vsmask.f32 3328
        %vm2733 = vmand %vm2731, %vm2732
        %v2734 = vsel %vm2733, %v2729, 0
        %s2735 = scalar_lea.vmem [#allocation8], 64
        %v2736 = vld [vmem:[%s2735] sm:$0xf]
        %v2737 = vld [vmem:[%s2735 + $0x4] sm:$0xf]
        %v2738 = vld [vmem:[%s2735 + $0x8] sm:$0xf]
        %v2739 = vld [vmem:[%s2735 + $0xc] sm:$0xf]
        %v2740 = vld [vmem:[%s2735 + $0x10] sm:$0xf]
        %v2741 = vld [vmem:[%s2735 + $0x14] sm:$0xf]
        %v2742 = vld [vmem:[%s2735 + $0x18] sm:$0xf]
        %v2743 = vld [vmem:[%s2735 + $0x1c] sm:$0xf]
        %v2752 = vunpack.c.l.b16 %v2736
        %v2753 = vunpack.c.l.b16 %v2737
        %v2754 = vunpack.c.l.b16 %v2738
        %v2755 = vunpack.c.l.b16 %v2739
        %v2756 = vunpack.c.l.b16 %v2740
        %v2757 = vunpack.c.l.b16 %v2741
        %v2758 = vunpack.c.l.b16 %v2742
        %v2759 = vunpack.c.l.b16 %v2743
        %v2760 = vpack.c.b16 %v2753, %v2752
        %v2761 = vpack.c.b16 %v2755, %v2754
        %v2762 = vpack.c.b16 %v2757, %v2756
        %v2763 = vpack.c.b16 %v2759, %v2758
        %v2769 = vsel %vm2061, %v2734, 0
        %2771 = vmatpush.bf16.msra.mxu0 0
        %2772 = vmatpush.bf16.msra.mxu0 0
        %2773 = vmatpush.bf16.msra.mxu0 0
        %2774 = vmatpush.bf16.msra.mxu0 0
        %2775 = vmatpush.bf16.msra.mxu0 %v2763
        %2776 = vmatpush.bf16.msra.mxu0 %v2762
        %2777 = vmatpush.bf16.msra.mxu0 %v2761
        %2778 = vmatpush.bf16.msra.mxu0 %v2760
        %2779 = vmatmul.bf16.gmra.mxu0 %v2769
        %v2780 = vpop.f32.mrf.mxu0
        %v2781 = vadd.f32 0.0, %v2780
        %v2782 = vpop.f32.mrf.mxu0
        %2783 = vdwg.mxu0
        %v2784 = vadd.f32 %v2725, %v2781
        %v2785 = vld [vmem:[%s15] sm:$0x1]
        %v2787 = vperm.slane %v2785, 0
        %v2789 = vadd.f32 %v2784, %v2787
        %v2790 = vmax.f32 %v2789, 0.0
        %v2791 = vpack.c.bf16 %v2790, %v2790
        %s2792 = scalar_lea.vmem %s17, 64
        %v2793 = vld [vmem:[%s2792] sm:$0xf]
        %v2794 = vld [vmem:[%s2792 + $0x4] sm:$0xf]
        %v2795 = vld [vmem:[%s2792 + $0x8] sm:$0xf]
        %v2796 = vld [vmem:[%s2792 + $0xc] sm:$0xf]
        %v2797 = vld [vmem:[%s2792 + $0x10] sm:$0xf]
        %v2798 = vld [vmem:[%s2792 + $0x14] sm:$0xf]
        %v2799 = vld [vmem:[%s2792 + $0x18] sm:$0xf]
        %v2800 = vld [vmem:[%s2792 + $0x1c] sm:$0xf]
        %v2801 = vld [vmem:[%s2792 + $0x20] sm:$0xf]
        %v2802 = vld [vmem:[%s2792 + $0x24] sm:$0xf]
        %v2803 = vld [vmem:[%s2792 + $0x28] sm:$0xf]
        %v2804 = vld [vmem:[%s2792 + $0x2c] sm:$0xf]
        %v2805 = vld [vmem:[%s2792 + $0x30] sm:$0xf]
        %v2806 = vld [vmem:[%s2792 + $0x34] sm:$0xf]
        %v2807 = vld [vmem:[%s2792 + $0x38] sm:$0xf]
        %v2808 = vld [vmem:[%s2792 + $0x3c] sm:$0xf]
        %v2810 = vunpack.c.l.b16 %v2791
        %v2811 = vpack.c.b16 %v2810, %v2810
        %v2813 = vshrl.u32 %v2811, 16
        %v2815 = vrot.slane %v2813, 7
        %v2816 = vshll.u32 %v2811, 16
        %v2818 = vor.u32 %v2815, %v2816
        %v2820 = vsel %vm2027, 0, %v2818
        %v2821 = vld [vmem:[%s17] sm:$0xf]
        %v2822 = vld [vmem:[%s17 + $0x4] sm:$0xf]
        %v2823 = vld [vmem:[%s17 + $0x8] sm:$0xf]
        %v2824 = vld [vmem:[%s17 + $0xc] sm:$0xf]
        %v2825 = vld [vmem:[%s17 + $0x10] sm:$0xf]
        %v2826 = vld [vmem:[%s17 + $0x14] sm:$0xf]
        %v2827 = vld [vmem:[%s17 + $0x18] sm:$0xf]
        %v2828 = vld [vmem:[%s17 + $0x1c] sm:$0xf]
        %v2829 = vld [vmem:[%s17 + $0x20] sm:$0xf]
        %v2830 = vld [vmem:[%s17 + $0x24] sm:$0xf]
        %v2831 = vld [vmem:[%s17 + $0x28] sm:$0xf]
        %v2832 = vld [vmem:[%s17 + $0x2c] sm:$0xf]
        %v2833 = vld [vmem:[%s17 + $0x30] sm:$0xf]
        %v2834 = vld [vmem:[%s17 + $0x34] sm:$0xf]
        %v2835 = vld [vmem:[%s17 + $0x38] sm:$0xf]
        %v2836 = vld [vmem:[%s17 + $0x3c] sm:$0xf]
        %v2853 = vunpack.c.l.b16 %v2821
        %v2854 = vunpack.c.l.b16 %v2822
        %v2855 = vunpack.c.l.b16 %v2823
        %v2856 = vunpack.c.l.b16 %v2824
        %v2857 = vunpack.c.l.b16 %v2825
        %v2858 = vunpack.c.l.b16 %v2826
        %v2859 = vunpack.c.l.b16 %v2827
        %v2860 = vunpack.c.l.b16 %v2828
        %v2861 = vunpack.c.l.b16 %v2829
        %v2862 = vunpack.c.l.b16 %v2830
        %v2863 = vunpack.c.l.b16 %v2831
        %v2864 = vunpack.c.l.b16 %v2832
        %v2865 = vunpack.c.l.b16 %v2833
        %v2866 = vunpack.c.l.b16 %v2834
        %v2867 = vunpack.c.l.b16 %v2835
        %v2868 = vunpack.c.l.b16 %v2836
        %v2869 = vpack.c.b16 %v2854, %v2853
        %v2870 = vpack.c.b16 %v2856, %v2855
        %v2871 = vpack.c.b16 %v2858, %v2857
        %v2872 = vpack.c.b16 %v2860, %v2859
        %v2873 = vpack.c.b16 %v2862, %v2861
        %v2874 = vpack.c.b16 %v2864, %v2863
        %v2875 = vpack.c.b16 %v2866, %v2865
        %v2876 = vpack.c.b16 %v2868, %v2867
        %2885 = vmatpush.bf16.msra.mxu0 %v2876
        %2886 = vmatpush.bf16.msra.mxu0 %v2875
        %2887 = vmatpush.bf16.msra.mxu0 %v2874
        %2888 = vmatpush.bf16.msra.mxu0 %v2873
        %2889 = vmatpush.bf16.msra.mxu0 %v2872
        %2890 = vmatpush.bf16.msra.mxu0 %v2871
        %2891 = vmatpush.bf16.msra.mxu0 %v2870
        %2892 = vmatpush.bf16.msra.mxu0 %v2869
        %2893 = vmatmul.bf16.gmra.mxu0 %v2820
        %v2894 = vpop.f32.mrf.mxu0
        %v2895 = vadd.f32 0.0, %v2894
        %v2896 = vpop.f32.mrf.mxu0
        %2897 = vdwg.mxu0
        %v2914 = vunpack.c.l.b16 %v2793
        %v2915 = vunpack.c.l.b16 %v2794
        %v2916 = vunpack.c.l.b16 %v2795
        %v2917 = vunpack.c.l.b16 %v2796
        %v2918 = vunpack.c.l.b16 %v2797
        %v2919 = vunpack.c.l.b16 %v2798
        %v2920 = vunpack.c.l.b16 %v2799
        %v2921 = vunpack.c.l.b16 %v2800
        %v2922 = vunpack.c.l.b16 %v2801
        %v2923 = vunpack.c.l.b16 %v2802
        %v2924 = vunpack.c.l.b16 %v2803
        %v2925 = vunpack.c.l.b16 %v2804
        %v2926 = vunpack.c.l.b16 %v2805
        %v2927 = vunpack.c.l.b16 %v2806
        %v2928 = vunpack.c.l.b16 %v2807
        %v2929 = vunpack.c.l.b16 %v2808
        %v2930 = vpack.c.b16 %v2915, %v2914
        %v2931 = vpack.c.b16 %v2917, %v2916
        %v2932 = vpack.c.b16 %v2919, %v2918
        %v2933 = vpack.c.b16 %v2921, %v2920
        %v2934 = vpack.c.b16 %v2923, %v2922
        %v2935 = vpack.c.b16 %v2925, %v2924
        %v2936 = vpack.c.b16 %v2927, %v2926
        %v2937 = vpack.c.b16 %v2929, %v2928
        %2946 = vmatpush.bf16.msra.mxu0 %v2937
        %2947 = vmatpush.bf16.msra.mxu0 %v2936
        %2948 = vmatpush.bf16.msra.mxu0 %v2935
        %2949 = vmatpush.bf16.msra.mxu0 %v2934
        %2950 = vmatpush.bf16.msra.mxu0 %v2933
        %2951 = vmatpush.bf16.msra.mxu0 %v2932
        %2952 = vmatpush.bf16.msra.mxu0 %v2931
        %2953 = vmatpush.bf16.msra.mxu0 %v2930
        %2954 = vmatmul.bf16.gmra.mxu0 %v2791
        %v2955 = vpop.f32.mrf.mxu0
        %v2956 = vadd.f32 %v2895, %v2955
        %v2957 = vpop.f32.mrf.mxu0
        %2958 = vdwg.mxu0
        %v2959 = vrot.slane %v2816, 1
        %v2960 = vor.u32 %v2813, %v2959
        %v2962 = vsel %vm2733, %v2960, 0
        %s2963 = scalar_lea.vmem %s17, 128
        %v2964 = vld [vmem:[%s2963] sm:$0xf]
        %v2965 = vld [vmem:[%s2963 + $0x4] sm:$0xf]
        %v2966 = vld [vmem:[%s2963 + $0x8] sm:$0xf]
        %v2967 = vld [vmem:[%s2963 + $0xc] sm:$0xf]
        %v2968 = vld [vmem:[%s2963 + $0x10] sm:$0xf]
        %v2969 = vld [vmem:[%s2963 + $0x14] sm:$0xf]
        %v2970 = vld [vmem:[%s2963 + $0x18] sm:$0xf]
        %v2971 = vld [vmem:[%s2963 + $0x1c] sm:$0xf]
        %v2972 = vld [vmem:[%s2963 + $0x20] sm:$0xf]
        %v2973 = vld [vmem:[%s2963 + $0x24] sm:$0xf]
        %v2974 = vld [vmem:[%s2963 + $0x28] sm:$0xf]
        %v2975 = vld [vmem:[%s2963 + $0x2c] sm:$0xf]
        %v2976 = vld [vmem:[%s2963 + $0x30] sm:$0xf]
        %v2977 = vld [vmem:[%s2963 + $0x34] sm:$0xf]
        %v2978 = vld [vmem:[%s2963 + $0x38] sm:$0xf]
        %v2979 = vld [vmem:[%s2963 + $0x3c] sm:$0xf]
        %v2996 = vunpack.c.l.b16 %v2964
        %v2997 = vunpack.c.l.b16 %v2965
        %v2998 = vunpack.c.l.b16 %v2966
        %v2999 = vunpack.c.l.b16 %v2967
        %v3000 = vunpack.c.l.b16 %v2968
        %v3001 = vunpack.c.l.b16 %v2969
        %v3002 = vunpack.c.l.b16 %v2970
        %v3003 = vunpack.c.l.b16 %v2971
        %v3004 = vunpack.c.l.b16 %v2972
        %v3005 = vunpack.c.l.b16 %v2973
        %v3006 = vunpack.c.l.b16 %v2974
        %v3007 = vunpack.c.l.b16 %v2975
        %v3008 = vunpack.c.l.b16 %v2976
        %v3009 = vunpack.c.l.b16 %v2977
        %v3010 = vunpack.c.l.b16 %v2978
        %v3011 = vunpack.c.l.b16 %v2979
        %v3012 = vpack.c.b16 %v2997, %v2996
        %v3013 = vpack.c.b16 %v2999, %v2998
        %v3014 = vpack.c.b16 %v3001, %v3000
        %v3015 = vpack.c.b16 %v3003, %v3002
        %v3016 = vpack.c.b16 %v3005, %v3004
        %v3017 = vpack.c.b16 %v3007, %v3006
        %v3018 = vpack.c.b16 %v3009, %v3008
        %v3019 = vpack.c.b16 %v3011, %v3010
        %3028 = vmatpush.bf16.msra.mxu0 %v3019
        %3029 = vmatpush.bf16.msra.mxu0 %v3018
        %3030 = vmatpush.bf16.msra.mxu0 %v3017
        %3031 = vmatpush.bf16.msra.mxu0 %v3016
        %3032 = vmatpush.bf16.msra.mxu0 %v3015
        %3033 = vmatpush.bf16.msra.mxu0 %v3014
        %3034 = vmatpush.bf16.msra.mxu0 %v3013
        %3035 = vmatpush.bf16.msra.mxu0 %v3012
        %3036 = vmatmul.bf16.gmra.mxu0 %v2962
        %v3037 = vpop.f32.mrf.mxu0
        %v3038 = vadd.f32 0.0, %v3037
        %v3039 = vpop.f32.mrf.mxu0
        %3040 = vdwg.mxu0
        %v3041 = vadd.f32 %v2956, %v3038
        %v3042 = vld [vmem:[%s19] sm:$0x1]
        %v3044 = vperm.slane %v3042, 0
        %v3046 = vadd.f32 %v3041, %v3044
        %v3047 = vmax.f32 %v3046, 0.0
        %v3048 = vpack.c.bf16 %v3047, %v3047
        %3049 = vst [vmem:[#allocation3] sm:$0xff] %v3047
        %v3050 = vld [vmem:[#allocation3] ss:$2 sm:$0xf]
        %s3051 = scalar_lea.vmem [#allocation3], 1
        %v3052 = vld [vmem:[%s3051] ss:$2 sm:$0xf]
        %v3053 = vmax.f32 %v3050, %v3052
        %v3054 = vpack.c.bf16 %v3053, %v3053
        %v3055 = vld [vmem:[%s21] sm:$0xf]
        %v3056 = vld [vmem:[%s21 + $0x4] sm:$0xf]
        %v3057 = vld [vmem:[%s21 + $0x8] sm:$0xf]
        %v3058 = vld [vmem:[%s21 + $0xc] sm:$0xf]
        %v3059 = vld [vmem:[%s21 + $0x10] sm:$0xf]
        %v3060 = vld [vmem:[%s21 + $0x14] sm:$0xf]
        %v3061 = vld [vmem:[%s21 + $0x18] sm:$0xf]
        %v3062 = vld [vmem:[%s21 + $0x1c] sm:$0xf]
        %v3063 = vld [vmem:[%s21 + $0x20] sm:$0xf]
        %v3064 = vld [vmem:[%s21 + $0x24] sm:$0xf]
        %v3065 = vld [vmem:[%s21 + $0x28] sm:$0xf]
        %v3066 = vld [vmem:[%s21 + $0x2c] sm:$0xf]
        %v3067 = vld [vmem:[%s21 + $0x30] sm:$0xf]
        %v3068 = vld [vmem:[%s21 + $0x34] sm:$0xf]
        %v3069 = vld [vmem:[%s21 + $0x38] sm:$0xf]
        %v3070 = vld [vmem:[%s21 + $0x3c] sm:$0xf]
        %v3087 = vunpack.c.l.b16 %v3055
        %v3088 = vunpack.c.l.b16 %v3056
        %v3089 = vunpack.c.l.b16 %v3057
        %v3090 = vunpack.c.l.b16 %v3058
        %v3091 = vunpack.c.l.b16 %v3059
        %v3092 = vunpack.c.l.b16 %v3060
        %v3093 = vunpack.c.l.b16 %v3061
        %v3094 = vunpack.c.l.b16 %v3062
        %v3095 = vunpack.c.l.b16 %v3063
        %v3096 = vunpack.c.l.b16 %v3064
        %v3097 = vunpack.c.l.b16 %v3065
        %v3098 = vunpack.c.l.b16 %v3066
        %v3099 = vunpack.c.l.b16 %v3067
        %v3100 = vunpack.c.l.b16 %v3068
        %v3101 = vunpack.c.l.b16 %v3069
        %v3102 = vunpack.c.l.b16 %v3070
        %v3103 = vpack.c.b16 %v3088, %v3087
        %v3104 = vpack.c.b16 %v3090, %v3089
        %v3105 = vpack.c.b16 %v3092, %v3091
        %v3106 = vpack.c.b16 %v3094, %v3093
        %v3107 = vpack.c.b16 %v3096, %v3095
        %v3108 = vpack.c.b16 %v3098, %v3097
        %v3109 = vpack.c.b16 %v3100, %v3099
        %v3110 = vpack.c.b16 %v3102, %v3101
        %3119 = vmatpush.bf16.msra.mxu0 %v3110
        %3120 = vmatpush.bf16.msra.mxu0 %v3109
        %3121 = vmatpush.bf16.msra.mxu0 %v3108
        %3122 = vmatpush.bf16.msra.mxu0 %v3107
        %3123 = vmatpush.bf16.msra.mxu0 %v3106
        %3124 = vmatpush.bf16.msra.mxu0 %v3105
        %3125 = vmatpush.bf16.msra.mxu0 %v3104
        %3126 = vmatpush.bf16.msra.mxu0 %v3103
        %3127 = vmatmul.bf16.gmra.mxu0 %v3054
        %v3128 = vpop.f32.mrf.mxu0
        %v3129 = vadd.f32 0.0, %v3128
        %v3130 = vpop.f32.mrf.mxu0
        %3131 = vdwg.mxu0
        %s3132 = scalar_lea.vmem %s21, 64
        %v3133 = vld [vmem:[%s3132] sm:$0xf]
        %v3134 = vld [vmem:[%s3132 + $0x4] sm:$0xf]
        %v3135 = vld [vmem:[%s3132 + $0x8] sm:$0xf]
        %v3136 = vld [vmem:[%s3132 + $0xc] sm:$0xf]
        %v3137 = vld [vmem:[%s3132 + $0x10] sm:$0xf]
        %v3138 = vld [vmem:[%s3132 + $0x14] sm:$0xf]
        %v3139 = vld [vmem:[%s3132 + $0x18] sm:$0xf]
        %v3140 = vld [vmem:[%s3132 + $0x1c] sm:$0xf]
        %v3141 = vld [vmem:[%s3132 + $0x20] sm:$0xf]
        %v3142 = vld [vmem:[%s3132 + $0x24] sm:$0xf]
        %v3143 = vld [vmem:[%s3132 + $0x28] sm:$0xf]
        %v3144 = vld [vmem:[%s3132 + $0x2c] sm:$0xf]
        %v3145 = vld [vmem:[%s3132 + $0x30] sm:$0xf]
        %v3146 = vld [vmem:[%s3132 + $0x34] sm:$0xf]
        %v3147 = vld [vmem:[%s3132 + $0x38] sm:$0xf]
        %v3148 = vld [vmem:[%s3132 + $0x3c] sm:$0xf]
        %v3165 = vunpack.c.l.b16 %v3133
        %v3166 = vunpack.c.l.b16 %v3134
        %v3167 = vunpack.c.l.b16 %v3135
        %v3168 = vunpack.c.l.b16 %v3136
        %v3169 = vunpack.c.l.b16 %v3137
        %v3170 = vunpack.c.l.b16 %v3138
        %v3171 = vunpack.c.l.b16 %v3139
        %v3172 = vunpack.c.l.b16 %v3140
        %v3173 = vunpack.c.l.b16 %v3141
        %v3174 = vunpack.c.l.b16 %v3142
        %v3175 = vunpack.c.l.b16 %v3143
        %v3176 = vunpack.c.l.b16 %v3144
        %v3177 = vunpack.c.l.b16 %v3145
        %v3178 = vunpack.c.l.b16 %v3146
        %v3179 = vunpack.c.l.b16 %v3147
        %v3180 = vunpack.c.l.b16 %v3148
        %v3181 = vpack.c.b16 %v3166, %v3165
        %v3182 = vpack.c.b16 %v3168, %v3167
        %v3183 = vpack.c.b16 %v3170, %v3169
        %v3184 = vpack.c.b16 %v3172, %v3171
        %v3185 = vpack.c.b16 %v3174, %v3173
        %v3186 = vpack.c.b16 %v3176, %v3175
        %v3187 = vpack.c.b16 %v3178, %v3177
        %v3188 = vpack.c.b16 %v3180, %v3179
        %3197 = vmatpush.bf16.msra.mxu0 %v3188
        %3198 = vmatpush.bf16.msra.mxu0 %v3187
        %3199 = vmatpush.bf16.msra.mxu0 %v3186
        %3200 = vmatpush.bf16.msra.mxu0 %v3185
        %3201 = vmatpush.bf16.msra.mxu0 %v3184
        %3202 = vmatpush.bf16.msra.mxu0 %v3183
        %3203 = vmatpush.bf16.msra.mxu0 %v3182
        %3204 = vmatpush.bf16.msra.mxu0 %v3181
        %3205 = vmatmul.bf16.gmra.mxu0 %v3054
        %v3206 = vpop.f32.mrf.mxu0
        %v3207 = vadd.f32 0.0, %v3206
        %v3208 = vpop.f32.mrf.mxu0
        %3209 = vdwg.mxu0
        %v3210 = vmax.f32 %v3129, %v3207
        %v3211 = vpack.c.bf16 %v3210, %v3210
        %s3212 = scalar_lea.vmem [#allocation10], 32
        %v3213 = vld [vmem:[%s3212] sm:$0xf]
        %v3214 = vld [vmem:[%s3212 + $0x4] sm:$0xf]
        %v3215 = vld [vmem:[%s3212 + $0x8] sm:$0xf]
        %v3216 = vld [vmem:[%s3212 + $0xc] sm:$0xf]
        %v3217 = vld [vmem:[%s3212 + $0x10] sm:$0xf]
        %v3218 = vld [vmem:[%s3212 + $0x14] sm:$0xf]
        %v3219 = vld [vmem:[%s3212 + $0x18] sm:$0xf]
        %v3220 = vld [vmem:[%s3212 + $0x1c] sm:$0xf]
        %v3222 = vunpack.c.l.b16 %v3211
        %v3223 = vpack.c.b16 %v3222, %v3222
        %v3225 = vshrl.u32 %v3223, 16
        %v3227 = vrot.slane %v3225, 7
        %v3228 = vshll.u32 %v3223, 16
        %v3230 = vor.u32 %v3227, %v3228
        %v3232 = vsel %vm2027, 0, %v3230
        %v3233 = vld [vmem:[#allocation10] sm:$0xf]
        %v3234 = vld [vmem:[#allocation10 + $0x4] sm:$0xf]
        %v3235 = vld [vmem:[#allocation10 + $0x8] sm:$0xf]
        %v3236 = vld [vmem:[#allocation10 + $0xc] sm:$0xf]
        %v3237 = vld [vmem:[#allocation10 + $0x10] sm:$0xf]
        %v3238 = vld [vmem:[#allocation10 + $0x14] sm:$0xf]
        %v3239 = vld [vmem:[#allocation10 + $0x18] sm:$0xf]
        %v3240 = vld [vmem:[#allocation10 + $0x1c] sm:$0xf]
        %v3249 = vunpack.c.l.b16 %v3233
        %v3250 = vunpack.c.l.b16 %v3234
        %v3251 = vunpack.c.l.b16 %v3235
        %v3252 = vunpack.c.l.b16 %v3236
        %v3253 = vunpack.c.l.b16 %v3237
        %v3254 = vunpack.c.l.b16 %v3238
        %v3255 = vunpack.c.l.b16 %v3239
        %v3256 = vunpack.c.l.b16 %v3240
        %v3257 = vpack.c.b16 %v3250, %v3249
        %v3258 = vpack.c.b16 %v3252, %v3251
        %v3259 = vpack.c.b16 %v3254, %v3253
        %v3260 = vpack.c.b16 %v3256, %v3255
        %v3266 = vsel %vm2061, %v3232, 0
        %3268 = vmatpush.bf16.msra.mxu0 0
        %3269 = vmatpush.bf16.msra.mxu0 0
        %3270 = vmatpush.bf16.msra.mxu0 0
        %3271 = vmatpush.bf16.msra.mxu0 0
        %3272 = vmatpush.bf16.msra.mxu0 %v3260
        %3273 = vmatpush.bf16.msra.mxu0 %v3259
        %3274 = vmatpush.bf16.msra.mxu0 %v3258
        %3275 = vmatpush.bf16.msra.mxu0 %v3257
        %3276 = vmatmul.bf16.gmra.mxu0 %v3266
        %v3277 = vpop.f32.mrf.mxu0
        %v3278 = vadd.f32 0.0, %v3277
        %v3279 = vpop.f32.mrf.mxu0
        %3280 = vdwg.mxu0
        %v3289 = vunpack.c.l.b16 %v3213
        %v3290 = vunpack.c.l.b16 %v3214
        %v3291 = vunpack.c.l.b16 %v3215
        %v3292 = vunpack.c.l.b16 %v3216
        %v3293 = vunpack.c.l.b16 %v3217
        %v3294 = vunpack.c.l.b16 %v3218
        %v3295 = vunpack.c.l.b16 %v3219
        %v3296 = vunpack.c.l.b16 %v3220
        %v3297 = vpack.c.b16 %v3290, %v3289
        %v3298 = vpack.c.b16 %v3292, %v3291
        %v3299 = vpack.c.b16 %v3294, %v3293
        %v3300 = vpack.c.b16 %v3296, %v3295
        %v3306 = vsel %vm2061, %v3211, 0
        %3308 = vmatpush.bf16.msra.mxu0 0
        %3309 = vmatpush.bf16.msra.mxu0 0
        %3310 = vmatpush.bf16.msra.mxu0 0
        %3311 = vmatpush.bf16.msra.mxu0 0
        %3312 = vmatpush.bf16.msra.mxu0 %v3300
        %3313 = vmatpush.bf16.msra.mxu0 %v3299
        %3314 = vmatpush.bf16.msra.mxu0 %v3298
        %3315 = vmatpush.bf16.msra.mxu0 %v3297
        %3316 = vmatmul.bf16.gmra.mxu0 %v3306
        %v3317 = vpop.f32.mrf.mxu0
        %v3318 = vadd.f32 %v3278, %v3317
        %v3319 = vpop.f32.mrf.mxu0
        %3320 = vdwg.mxu0
        %v3321 = vrot.slane %v3228, 1
        %v3322 = vor.u32 %v3225, %v3321
        %vm3324 = vcmask 1041408
        %vm3325 = vsmask.f32 1280
        %vm3326 = vmand %vm3324, %vm3325
        %v3327 = vsel %vm3326, %v3322, 0
        %s3328 = scalar_lea.vmem [#allocation10], 64
        %v3329 = vld [vmem:[%s3328] sm:$0xf]
        %v3330 = vld [vmem:[%s3328 + $0x4] sm:$0xf]
        %v3331 = vld [vmem:[%s3328 + $0x8] sm:$0xf]
        %v3332 = vld [vmem:[%s3328 + $0xc] sm:$0xf]
        %v3333 = vld [vmem:[%s3328 + $0x10] sm:$0xf]
        %v3334 = vld [vmem:[%s3328 + $0x14] sm:$0xf]
        %v3335 = vld [vmem:[%s3328 + $0x18] sm:$0xf]
        %v3336 = vld [vmem:[%s3328 + $0x1c] sm:$0xf]
        %v3345 = vunpack.c.l.b16 %v3329
        %v3346 = vunpack.c.l.b16 %v3330
        %v3347 = vunpack.c.l.b16 %v3331
        %v3348 = vunpack.c.l.b16 %v3332
        %v3349 = vunpack.c.l.b16 %v3333
        %v3350 = vunpack.c.l.b16 %v3334
        %v3351 = vunpack.c.l.b16 %v3335
        %v3352 = vunpack.c.l.b16 %v3336
        %v3353 = vpack.c.b16 %v3346, %v3345
        %v3354 = vpack.c.b16 %v3348, %v3347
        %v3355 = vpack.c.b16 %v3350, %v3349
        %v3356 = vpack.c.b16 %v3352, %v3351
        %v3362 = vsel %vm2061, %v3327, 0
        %3364 = vmatpush.bf16.msra.mxu0 0
        %3365 = vmatpush.bf16.msra.mxu0 0
        %3366 = vmatpush.bf16.msra.mxu0 0
        %3367 = vmatpush.bf16.msra.mxu0 0
        %3368 = vmatpush.bf16.msra.mxu0 %v3356
        %3369 = vmatpush.bf16.msra.mxu0 %v3355
        %3370 = vmatpush.bf16.msra.mxu0 %v3354
        %3371 = vmatpush.bf16.msra.mxu0 %v3353
        %3372 = vmatmul.bf16.gmra.mxu0 %v3362
        %v3373 = vpop.f32.mrf.mxu0
        %v3374 = vadd.f32 0.0, %v3373
        %v3375 = vpop.f32.mrf.mxu0
        %3376 = vdwg.mxu0
        %v3377 = vadd.f32 %v3318, %v3374
        %v3378 = vld [vmem:[%s25] sm:$0x1]
        %v3380 = vperm.slane %v3378, 0
        %v3382 = vadd.f32 %v3377, %v3380
        %v3383 = vmax.f32 %v3382, 0.0
        %v3384 = vpack.c.bf16 %v3383, %v3383
        %s3385 = scalar_lea.vmem %s27, 64
        %v3386 = vld [vmem:[%s3385] sm:$0xf]
        %v3387 = vld [vmem:[%s3385 + $0x4] sm:$0xf]
        %v3388 = vld [vmem:[%s3385 + $0x8] sm:$0xf]
        %v3389 = vld [vmem:[%s3385 + $0xc] sm:$0xf]
        %v3390 = vld [vmem:[%s3385 + $0x10] sm:$0xf]
        %v3391 = vld [vmem:[%s3385 + $0x14] sm:$0xf]
        %v3392 = vld [vmem:[%s3385 + $0x18] sm:$0xf]
        %v3393 = vld [vmem:[%s3385 + $0x1c] sm:$0xf]
        %v3394 = vld [vmem:[%s3385 + $0x20] sm:$0xf]
        %v3395 = vld [vmem:[%s3385 + $0x24] sm:$0xf]
        %v3396 = vld [vmem:[%s3385 + $0x28] sm:$0xf]
        %v3397 = vld [vmem:[%s3385 + $0x2c] sm:$0xf]
        %v3398 = vld [vmem:[%s3385 + $0x30] sm:$0xf]
        %v3399 = vld [vmem:[%s3385 + $0x34] sm:$0xf]
        %v3400 = vld [vmem:[%s3385 + $0x38] sm:$0xf]
        %v3401 = vld [vmem:[%s3385 + $0x3c] sm:$0xf]
        %v3403 = vunpack.c.l.b16 %v3384
        %v3404 = vpack.c.b16 %v3403, %v3403
        %v3406 = vshrl.u32 %v3404, 16
        %v3408 = vrot.slane %v3406, 7
        %v3409 = vshll.u32 %v3404, 16
        %v3411 = vor.u32 %v3408, %v3409
        %v3413 = vsel %vm2027, 0, %v3411
        %v3414 = vld [vmem:[%s27] sm:$0xf]
        %v3415 = vld [vmem:[%s27 + $0x4] sm:$0xf]
        %v3416 = vld [vmem:[%s27 + $0x8] sm:$0xf]
        %v3417 = vld [vmem:[%s27 + $0xc] sm:$0xf]
        %v3418 = vld [vmem:[%s27 + $0x10] sm:$0xf]
        %v3419 = vld [vmem:[%s27 + $0x14] sm:$0xf]
        %v3420 = vld [vmem:[%s27 + $0x18] sm:$0xf]
        %v3421 = vld [vmem:[%s27 + $0x1c] sm:$0xf]
        %v3422 = vld [vmem:[%s27 + $0x20] sm:$0xf]
        %v3423 = vld [vmem:[%s27 + $0x24] sm:$0xf]
        %v3424 = vld [vmem:[%s27 + $0x28] sm:$0xf]
        %v3425 = vld [vmem:[%s27 + $0x2c] sm:$0xf]
        %v3426 = vld [vmem:[%s27 + $0x30] sm:$0xf]
        %v3427 = vld [vmem:[%s27 + $0x34] sm:$0xf]
        %v3428 = vld [vmem:[%s27 + $0x38] sm:$0xf]
        %v3429 = vld [vmem:[%s27 + $0x3c] sm:$0xf]
        %v3446 = vunpack.c.l.b16 %v3414
        %v3447 = vunpack.c.l.b16 %v3415
        %v3448 = vunpack.c.l.b16 %v3416
        %v3449 = vunpack.c.l.b16 %v3417
        %v3450 = vunpack.c.l.b16 %v3418
        %v3451 = vunpack.c.l.b16 %v3419
        %v3452 = vunpack.c.l.b16 %v3420
        %v3453 = vunpack.c.l.b16 %v3421
        %v3454 = vunpack.c.l.b16 %v3422
        %v3455 = vunpack.c.l.b16 %v3423
        %v3456 = vunpack.c.l.b16 %v3424
        %v3457 = vunpack.c.l.b16 %v3425
        %v3458 = vunpack.c.l.b16 %v3426
        %v3459 = vunpack.c.l.b16 %v3427
        %v3460 = vunpack.c.l.b16 %v3428
        %v3461 = vunpack.c.l.b16 %v3429
        %v3462 = vpack.c.b16 %v3447, %v3446
        %v3463 = vpack.c.b16 %v3449, %v3448
        %v3464 = vpack.c.b16 %v3451, %v3450
        %v3465 = vpack.c.b16 %v3453, %v3452
        %v3466 = vpack.c.b16 %v3455, %v3454
        %v3467 = vpack.c.b16 %v3457, %v3456
        %v3468 = vpack.c.b16 %v3459, %v3458
        %v3469 = vpack.c.b16 %v3461, %v3460
        %3478 = vmatpush.bf16.msra.mxu0 %v3469
        %3479 = vmatpush.bf16.msra.mxu0 %v3468
        %3480 = vmatpush.bf16.msra.mxu0 %v3467
        %3481 = vmatpush.bf16.msra.mxu0 %v3466
        %3482 = vmatpush.bf16.msra.mxu0 %v3465
        %3483 = vmatpush.bf16.msra.mxu0 %v3464
        %3484 = vmatpush.bf16.msra.mxu0 %v3463
        %3485 = vmatpush.bf16.msra.mxu0 %v3462
        %3486 = vmatmul.bf16.gmra.mxu0 %v3413
        %v3487 = vpop.f32.mrf.mxu0
        %v3488 = vadd.f32 0.0, %v3487
        %v3489 = vpop.f32.mrf.mxu0
        %3490 = vdwg.mxu0
        %v3507 = vunpack.c.l.b16 %v3386
        %v3508 = vunpack.c.l.b16 %v3387
        %v3509 = vunpack.c.l.b16 %v3388
        %v3510 = vunpack.c.l.b16 %v3389
        %v3511 = vunpack.c.l.b16 %v3390
        %v3512 = vunpack.c.l.b16 %v3391
        %v3513 = vunpack.c.l.b16 %v3392
        %v3514 = vunpack.c.l.b16 %v3393
        %v3515 = vunpack.c.l.b16 %v3394
        %v3516 = vunpack.c.l.b16 %v3395
        %v3517 = vunpack.c.l.b16 %v3396
        %v3518 = vunpack.c.l.b16 %v3397
        %v3519 = vunpack.c.l.b16 %v3398
        %v3520 = vunpack.c.l.b16 %v3399
        %v3521 = vunpack.c.l.b16 %v3400
        %v3522 = vunpack.c.l.b16 %v3401
        %v3523 = vpack.c.b16 %v3508, %v3507
        %v3524 = vpack.c.b16 %v3510, %v3509
        %v3525 = vpack.c.b16 %v3512, %v3511
        %v3526 = vpack.c.b16 %v3514, %v3513
        %v3527 = vpack.c.b16 %v3516, %v3515
        %v3528 = vpack.c.b16 %v3518, %v3517
        %v3529 = vpack.c.b16 %v3520, %v3519
        %v3530 = vpack.c.b16 %v3522, %v3521
        %3539 = vmatpush.bf16.msra.mxu0 %v3530
        %3540 = vmatpush.bf16.msra.mxu0 %v3529
        %3541 = vmatpush.bf16.msra.mxu0 %v3528
        %3542 = vmatpush.bf16.msra.mxu0 %v3527
        %3543 = vmatpush.bf16.msra.mxu0 %v3526
        %3544 = vmatpush.bf16.msra.mxu0 %v3525
        %3545 = vmatpush.bf16.msra.mxu0 %v3524
        %3546 = vmatpush.bf16.msra.mxu0 %v3523
        %3547 = vmatmul.bf16.gmra.mxu0 %v3384
        %v3548 = vpop.f32.mrf.mxu0
        %v3549 = vadd.f32 %v3488, %v3548
        %v3550 = vpop.f32.mrf.mxu0
        %3551 = vdwg.mxu0
        %v3552 = vrot.slane %v3409, 1
        %v3553 = vor.u32 %v3406, %v3552
        %v3555 = vsel %vm3326, %v3553, 0
        %s3556 = scalar_lea.vmem %s27, 128
        %v3557 = vld [vmem:[%s3556] sm:$0xf]
        %v3558 = vld [vmem:[%s3556 + $0x4] sm:$0xf]
        %v3559 = vld [vmem:[%s3556 + $0x8] sm:$0xf]
        %v3560 = vld [vmem:[%s3556 + $0xc] sm:$0xf]
        %v3561 = vld [vmem:[%s3556 + $0x10] sm:$0xf]
        %v3562 = vld [vmem:[%s3556 + $0x14] sm:$0xf]
        %v3563 = vld [vmem:[%s3556 + $0x18] sm:$0xf]
        %v3564 = vld [vmem:[%s3556 + $0x1c] sm:$0xf]
        %v3565 = vld [vmem:[%s3556 + $0x20] sm:$0xf]
        %v3566 = vld [vmem:[%s3556 + $0x24] sm:$0xf]
        %v3567 = vld [vmem:[%s3556 + $0x28] sm:$0xf]
        %v3568 = vld [vmem:[%s3556 + $0x2c] sm:$0xf]
        %v3569 = vld [vmem:[%s3556 + $0x30] sm:$0xf]
        %v3570 = vld [vmem:[%s3556 + $0x34] sm:$0xf]
        %v3571 = vld [vmem:[%s3556 + $0x38] sm:$0xf]
        %v3572 = vld [vmem:[%s3556 + $0x3c] sm:$0xf]
        %v3589 = vunpack.c.l.b16 %v3557
        %v3590 = vunpack.c.l.b16 %v3558
        %v3591 = vunpack.c.l.b16 %v3559
        %v3592 = vunpack.c.l.b16 %v3560
        %v3593 = vunpack.c.l.b16 %v3561
        %v3594 = vunpack.c.l.b16 %v3562
        %v3595 = vunpack.c.l.b16 %v3563
        %v3596 = vunpack.c.l.b16 %v3564
        %v3597 = vunpack.c.l.b16 %v3565
        %v3598 = vunpack.c.l.b16 %v3566
        %v3599 = vunpack.c.l.b16 %v3567
        %v3600 = vunpack.c.l.b16 %v3568
        %v3601 = vunpack.c.l.b16 %v3569
        %v3602 = vunpack.c.l.b16 %v3570
        %v3603 = vunpack.c.l.b16 %v3571
        %v3604 = vunpack.c.l.b16 %v3572
        %v3605 = vpack.c.b16 %v3590, %v3589
        %v3606 = vpack.c.b16 %v3592, %v3591
        %v3607 = vpack.c.b16 %v3594, %v3593
        %v3608 = vpack.c.b16 %v3596, %v3595
        %v3609 = vpack.c.b16 %v3598, %v3597
        %v3610 = vpack.c.b16 %v3600, %v3599
        %v3611 = vpack.c.b16 %v3602, %v3601
        %v3612 = vpack.c.b16 %v3604, %v3603
        %3621 = vmatpush.bf16.msra.mxu0 %v3612
        %3622 = vmatpush.bf16.msra.mxu0 %v3611
        %3623 = vmatpush.bf16.msra.mxu0 %v3610
        %3624 = vmatpush.bf16.msra.mxu0 %v3609
        %3625 = vmatpush.bf16.msra.mxu0 %v3608
        %3626 = vmatpush.bf16.msra.mxu0 %v3607
        %3627 = vmatpush.bf16.msra.mxu0 %v3606
        %3628 = vmatpush.bf16.msra.mxu0 %v3605
        %3629 = vmatmul.bf16.gmra.mxu0 %v3555
        %v3630 = vpop.f32.mrf.mxu0
        %v3631 = vadd.f32 0.0, %v3630
        %v3632 = vpop.f32.mrf.mxu0
        %3633 = vdwg.mxu0
        %v3634 = vadd.f32 %v3549, %v3631
        %v3635 = vld [vmem:[%s29] sm:$0x1]
        %v3637 = vperm.slane %v3635, 0
        %v3639 = vadd.f32 %v3634, %v3637
        %v3640 = vmax.f32 %v3639, 0.0
        %v3641 = vpack.c.bf16 %v3640, %v3640
        %3642 = vst [vmem:[#allocation4] sm:$0xf] %v3640
        %v3643 = vld [vmem:[#allocation4] ss:$2 sm:$0x3]
        %s3644 = scalar_lea.vmem [#allocation4], 1
        %v3645 = vld [vmem:[%s3644] ss:$2 sm:$0x3]
        %v3646 = vmax.f32 %v3643, %v3645
        %v3647 = vpack.c.bf16 %v3646, %v3646
        %v3648 = vld [vmem:[%s31] sm:$0xf]
        %v3649 = vld [vmem:[%s31 + $0x4] sm:$0xf]
        %v3650 = vld [vmem:[%s31 + $0x8] sm:$0xf]
        %v3651 = vld [vmem:[%s31 + $0xc] sm:$0xf]
        %v3652 = vld [vmem:[%s31 + $0x10] sm:$0xf]
        %v3653 = vld [vmem:[%s31 + $0x14] sm:$0xf]
        %v3654 = vld [vmem:[%s31 + $0x18] sm:$0xf]
        %v3655 = vld [vmem:[%s31 + $0x1c] sm:$0xf]
        %v3656 = vld [vmem:[%s31 + $0x20] sm:$0xf]
        %v3657 = vld [vmem:[%s31 + $0x24] sm:$0xf]
        %v3658 = vld [vmem:[%s31 + $0x28] sm:$0xf]
        %v3659 = vld [vmem:[%s31 + $0x2c] sm:$0xf]
        %v3660 = vld [vmem:[%s31 + $0x30] sm:$0xf]
        %v3661 = vld [vmem:[%s31 + $0x34] sm:$0xf]
        %v3662 = vld [vmem:[%s31 + $0x38] sm:$0xf]
        %v3663 = vld [vmem:[%s31 + $0x3c] sm:$0xf]
        %v3680 = vunpack.c.l.b16 %v3648
        %v3681 = vunpack.c.l.b16 %v3649
        %v3682 = vunpack.c.l.b16 %v3650
        %v3683 = vunpack.c.l.b16 %v3651
        %v3684 = vunpack.c.l.b16 %v3652
        %v3685 = vunpack.c.l.b16 %v3653
        %v3686 = vunpack.c.l.b16 %v3654
        %v3687 = vunpack.c.l.b16 %v3655
        %v3688 = vunpack.c.l.b16 %v3656
        %v3689 = vunpack.c.l.b16 %v3657
        %v3690 = vunpack.c.l.b16 %v3658
        %v3691 = vunpack.c.l.b16 %v3659
        %v3692 = vunpack.c.l.b16 %v3660
        %v3693 = vunpack.c.l.b16 %v3661
        %v3694 = vunpack.c.l.b16 %v3662
        %v3695 = vunpack.c.l.b16 %v3663
        %v3696 = vpack.c.b16 %v3681, %v3680
        %v3697 = vpack.c.b16 %v3683, %v3682
        %v3698 = vpack.c.b16 %v3685, %v3684
        %v3699 = vpack.c.b16 %v3687, %v3686
        %v3700 = vpack.c.b16 %v3689, %v3688
        %v3701 = vpack.c.b16 %v3691, %v3690
        %v3702 = vpack.c.b16 %v3693, %v3692
        %v3703 = vpack.c.b16 %v3695, %v3694
        %3712 = vmatpush.bf16.msra.mxu0 %v3703
        %3713 = vmatpush.bf16.msra.mxu0 %v3702
        %3714 = vmatpush.bf16.msra.mxu0 %v3701
        %3715 = vmatpush.bf16.msra.mxu0 %v3700
        %3716 = vmatpush.bf16.msra.mxu0 %v3699
        %3717 = vmatpush.bf16.msra.mxu0 %v3698
        %3718 = vmatpush.bf16.msra.mxu0 %v3697
        %3719 = vmatpush.bf16.msra.mxu0 %v3696
        %3720 = vmatmul.bf16.gmra.mxu0 %v3647
        %v3721 = vpop.f32.mrf.mxu0
        %v3722 = vadd.f32 0.0, %v3721
        %v3723 = vpop.f32.mrf.mxu0
        %3724 = vdwg.mxu0
        %s3725 = scalar_lea.vmem %s31, 64
        %v3726 = vld [vmem:[%s3725] sm:$0xf]
        %v3727 = vld [vmem:[%s3725 + $0x4] sm:$0xf]
        %v3728 = vld [vmem:[%s3725 + $0x8] sm:$0xf]
        %v3729 = vld [vmem:[%s3725 + $0xc] sm:$0xf]
        %v3730 = vld [vmem:[%s3725 + $0x10] sm:$0xf]
        %v3731 = vld [vmem:[%s3725 + $0x14] sm:$0xf]
        %v3732 = vld [vmem:[%s3725 + $0x18] sm:$0xf]
        %v3733 = vld [vmem:[%s3725 + $0x1c] sm:$0xf]
        %v3734 = vld [vmem:[%s3725 + $0x20] sm:$0xf]
        %v3735 = vld [vmem:[%s3725 + $0x24] sm:$0xf]
        %v3736 = vld [vmem:[%s3725 + $0x28] sm:$0xf]
        %v3737 = vld [vmem:[%s3725 + $0x2c] sm:$0xf]
        %v3738 = vld [vmem:[%s3725 + $0x30] sm:$0xf]
        %v3739 = vld [vmem:[%s3725 + $0x34] sm:$0xf]
        %v3740 = vld [vmem:[%s3725 + $0x38] sm:$0xf]
        %v3741 = vld [vmem:[%s3725 + $0x3c] sm:$0xf]
        %v3758 = vunpack.c.l.b16 %v3726
        %v3759 = vunpack.c.l.b16 %v3727
        %v3760 = vunpack.c.l.b16 %v3728
        %v3761 = vunpack.c.l.b16 %v3729
        %v3762 = vunpack.c.l.b16 %v3730
        %v3763 = vunpack.c.l.b16 %v3731
        %v3764 = vunpack.c.l.b16 %v3732
        %v3765 = vunpack.c.l.b16 %v3733
        %v3766 = vunpack.c.l.b16 %v3734
        %v3767 = vunpack.c.l.b16 %v3735
        %v3768 = vunpack.c.l.b16 %v3736
        %v3769 = vunpack.c.l.b16 %v3737
        %v3770 = vunpack.c.l.b16 %v3738
        %v3771 = vunpack.c.l.b16 %v3739
        %v3772 = vunpack.c.l.b16 %v3740
        %v3773 = vunpack.c.l.b16 %v3741
        %v3774 = vpack.c.b16 %v3759, %v3758
        %v3775 = vpack.c.b16 %v3761, %v3760
        %v3776 = vpack.c.b16 %v3763, %v3762
        %v3777 = vpack.c.b16 %v3765, %v3764
        %v3778 = vpack.c.b16 %v3767, %v3766
        %v3779 = vpack.c.b16 %v3769, %v3768
        %v3780 = vpack.c.b16 %v3771, %v3770
        %v3781 = vpack.c.b16 %v3773, %v3772
        %3790 = vmatpush.bf16.msra.mxu0 %v3781
        %3791 = vmatpush.bf16.msra.mxu0 %v3780
        %3792 = vmatpush.bf16.msra.mxu0 %v3779
        %3793 = vmatpush.bf16.msra.mxu0 %v3778
        %3794 = vmatpush.bf16.msra.mxu0 %v3777
        %3795 = vmatpush.bf16.msra.mxu0 %v3776
        %3796 = vmatpush.bf16.msra.mxu0 %v3775
        %3797 = vmatpush.bf16.msra.mxu0 %v3774
        %3798 = vmatmul.bf16.gmra.mxu0 %v3647
        %v3799 = vpop.f32.mrf.mxu0
        %v3800 = vadd.f32 0.0, %v3799
        %v3801 = vpop.f32.mrf.mxu0
        %3802 = vdwg.mxu0
        %v3803 = vmax.f32 %v3722, %v3800
        %v3804 = vpack.c.bf16 %v3803, %v3803
        %s3805 = scalar_lea.vmem [#allocation11], 32
        %v3806 = vld [vmem:[%s3805] sm:$0xf]
        %v3807 = vld [vmem:[%s3805 + $0x4] sm:$0xf]
        %v3808 = vld [vmem:[%s3805 + $0x8] sm:$0xf]
        %v3809 = vld [vmem:[%s3805 + $0xc] sm:$0xf]
        %v3810 = vld [vmem:[%s3805 + $0x10] sm:$0xf]
        %v3811 = vld [vmem:[%s3805 + $0x14] sm:$0xf]
        %v3812 = vld [vmem:[%s3805 + $0x18] sm:$0xf]
        %v3813 = vld [vmem:[%s3805 + $0x1c] sm:$0xf]
        %v3815 = vunpack.c.l.b16 %v3804
        %v3816 = vpack.c.b16 %v3815, %v3815
        %v3818 = vshll.u32 %v3816, 16
        %v3821 = vsel %vm2027, 0, %v3818
        %v3822 = vld [vmem:[#allocation11] sm:$0xf]
        %v3823 = vld [vmem:[#allocation11 + $0x4] sm:$0xf]
        %v3824 = vld [vmem:[#allocation11 + $0x8] sm:$0xf]
        %v3825 = vld [vmem:[#allocation11 + $0xc] sm:$0xf]
        %v3826 = vld [vmem:[#allocation11 + $0x10] sm:$0xf]
        %v3827 = vld [vmem:[#allocation11 + $0x14] sm:$0xf]
        %v3828 = vld [vmem:[#allocation11 + $0x18] sm:$0xf]
        %v3829 = vld [vmem:[#allocation11 + $0x1c] sm:$0xf]
        %v3838 = vunpack.c.l.b16 %v3822
        %v3839 = vunpack.c.l.b16 %v3823
        %v3840 = vunpack.c.l.b16 %v3824
        %v3841 = vunpack.c.l.b16 %v3825
        %v3842 = vunpack.c.l.b16 %v3826
        %v3843 = vunpack.c.l.b16 %v3827
        %v3844 = vunpack.c.l.b16 %v3828
        %v3845 = vunpack.c.l.b16 %v3829
        %v3846 = vpack.c.b16 %v3839, %v3838
        %v3847 = vpack.c.b16 %v3841, %v3840
        %v3848 = vpack.c.b16 %v3843, %v3842
        %v3849 = vpack.c.b16 %v3845, %v3844
        %v3855 = vsel %vm2061, %v3821, 0
        %3857 = vmatpush.bf16.msra.mxu0 0
        %3858 = vmatpush.bf16.msra.mxu0 0
        %3859 = vmatpush.bf16.msra.mxu0 0
        %3860 = vmatpush.bf16.msra.mxu0 0
        %3861 = vmatpush.bf16.msra.mxu0 %v3849
        %3862 = vmatpush.bf16.msra.mxu0 %v3848
        %3863 = vmatpush.bf16.msra.mxu0 %v3847
        %3864 = vmatpush.bf16.msra.mxu0 %v3846
        %3865 = vmatmul.bf16.gmra.mxu0 %v3855
        %v3866 = vpop.f32.mrf.mxu0
        %v3867 = vadd.f32 0.0, %v3866
        %v3868 = vpop.f32.mrf.mxu0
        %3869 = vdwg.mxu0
        %v3878 = vunpack.c.l.b16 %v3806
        %v3879 = vunpack.c.l.b16 %v3807
        %v3880 = vunpack.c.l.b16 %v3808
        %v3881 = vunpack.c.l.b16 %v3809
        %v3882 = vunpack.c.l.b16 %v3810
        %v3883 = vunpack.c.l.b16 %v3811
        %v3884 = vunpack.c.l.b16 %v3812
        %v3885 = vunpack.c.l.b16 %v3813
        %v3886 = vpack.c.b16 %v3879, %v3878
        %v3887 = vpack.c.b16 %v3881, %v3880
        %v3888 = vpack.c.b16 %v3883, %v3882
        %v3889 = vpack.c.b16 %v3885, %v3884
        %v3895 = vsel %vm2061, %v3804, 0
        %3897 = vmatpush.bf16.msra.mxu0 0
        %3898 = vmatpush.bf16.msra.mxu0 0
        %3899 = vmatpush.bf16.msra.mxu0 0
        %3900 = vmatpush.bf16.msra.mxu0 0
        %3901 = vmatpush.bf16.msra.mxu0 %v3889
        %3902 = vmatpush.bf16.msra.mxu0 %v3888
        %3903 = vmatpush.bf16.msra.mxu0 %v3887
        %3904 = vmatpush.bf16.msra.mxu0 %v3886
        %3905 = vmatmul.bf16.gmra.mxu0 %v3895
        %v3906 = vpop.f32.mrf.mxu0
        %v3907 = vadd.f32 %v3867, %v3906
        %v3908 = vpop.f32.mrf.mxu0
        %3909 = vdwg.mxu0
        %v3910 = vshrl.u32 %v3816, 16
        %v3913 = vsel %vm2027, %v3910, 0
        %s3914 = scalar_lea.vmem [#allocation11], 64
        %v3915 = vld [vmem:[%s3914] sm:$0xf]
        %v3916 = vld [vmem:[%s3914 + $0x4] sm:$0xf]
        %v3917 = vld [vmem:[%s3914 + $0x8] sm:$0xf]
        %v3918 = vld [vmem:[%s3914 + $0xc] sm:$0xf]
        %v3919 = vld [vmem:[%s3914 + $0x10] sm:$0xf]
        %v3920 = vld [vmem:[%s3914 + $0x14] sm:$0xf]
        %v3921 = vld [vmem:[%s3914 + $0x18] sm:$0xf]
        %v3922 = vld [vmem:[%s3914 + $0x1c] sm:$0xf]
        %v3931 = vunpack.c.l.b16 %v3915
        %v3932 = vunpack.c.l.b16 %v3916
        %v3933 = vunpack.c.l.b16 %v3917
        %v3934 = vunpack.c.l.b16 %v3918
        %v3935 = vunpack.c.l.b16 %v3919
        %v3936 = vunpack.c.l.b16 %v3920
        %v3937 = vunpack.c.l.b16 %v3921
        %v3938 = vunpack.c.l.b16 %v3922
        %v3939 = vpack.c.b16 %v3932, %v3931
        %v3940 = vpack.c.b16 %v3934, %v3933
        %v3941 = vpack.c.b16 %v3936, %v3935
        %v3942 = vpack.c.b16 %v3938, %v3937
        %v3948 = vsel %vm2061, %v3913, 0
        %3950 = vmatpush.bf16.msra.mxu0 0
        %3951 = vmatpush.bf16.msra.mxu0 0
        %3952 = vmatpush.bf16.msra.mxu0 0
        %3953 = vmatpush.bf16.msra.mxu0 0
        %3954 = vmatpush.bf16.msra.mxu0 %v3942
        %3955 = vmatpush.bf16.msra.mxu0 %v3941
        %3956 = vmatpush.bf16.msra.mxu0 %v3940
        %3957 = vmatpush.bf16.msra.mxu0 %v3939
        %3958 = vmatmul.bf16.gmra.mxu0 %v3948
        %v3959 = vpop.f32.mrf.mxu0
        %v3960 = vadd.f32 0.0, %v3959
        %v3961 = vpop.f32.mrf.mxu0
        %3962 = vdwg.mxu0
        %v3963 = vadd.f32 %v3907, %v3960
        %v3964 = vld [vmem:[%s35] sm:$0x1]
        %v3966 = vperm.slane %v3964, 0
        %v3968 = vadd.f32 %v3963, %v3966
        %v3969 = vmax.f32 %v3968, 0.0
        %v3970 = vpack.c.bf16 %v3969, %v3969
        %s3971 = scalar_lea.vmem %s37, 64
        %v3972 = vld [vmem:[%s3971] sm:$0xf]
        %v3973 = vld [vmem:[%s3971 + $0x4] sm:$0xf]
        %v3974 = vld [vmem:[%s3971 + $0x8] sm:$0xf]
        %v3975 = vld [vmem:[%s3971 + $0xc] sm:$0xf]
        %v3976 = vld [vmem:[%s3971 + $0x10] sm:$0xf]
        %v3977 = vld [vmem:[%s3971 + $0x14] sm:$0xf]
        %v3978 = vld [vmem:[%s3971 + $0x18] sm:$0xf]
        %v3979 = vld [vmem:[%s3971 + $0x1c] sm:$0xf]
        %v3980 = vld [vmem:[%s3971 + $0x20] sm:$0xf]
        %v3981 = vld [vmem:[%s3971 + $0x24] sm:$0xf]
        %v3982 = vld [vmem:[%s3971 + $0x28] sm:$0xf]
        %v3983 = vld [vmem:[%s3971 + $0x2c] sm:$0xf]
        %v3984 = vld [vmem:[%s3971 + $0x30] sm:$0xf]
        %v3985 = vld [vmem:[%s3971 + $0x34] sm:$0xf]
        %v3986 = vld [vmem:[%s3971 + $0x38] sm:$0xf]
        %v3987 = vld [vmem:[%s3971 + $0x3c] sm:$0xf]
        %v3989 = vunpack.c.l.b16 %v3970
        %v3990 = vpack.c.b16 %v3989, %v3989
        %v3992 = vshll.u32 %v3990, 16
        %v3995 = vsel %vm2027, 0, %v3992
        %v3996 = vld [vmem:[%s37] sm:$0xf]
        %v3997 = vld [vmem:[%s37 + $0x4] sm:$0xf]
        %v3998 = vld [vmem:[%s37 + $0x8] sm:$0xf]
        %v3999 = vld [vmem:[%s37 + $0xc] sm:$0xf]
        %v4000 = vld [vmem:[%s37 + $0x10] sm:$0xf]
        %v4001 = vld [vmem:[%s37 + $0x14] sm:$0xf]
        %v4002 = vld [vmem:[%s37 + $0x18] sm:$0xf]
        %v4003 = vld [vmem:[%s37 + $0x1c] sm:$0xf]
        %v4004 = vld [vmem:[%s37 + $0x20] sm:$0xf]
        %v4005 = vld [vmem:[%s37 + $0x24] sm:$0xf]
        %v4006 = vld [vmem:[%s37 + $0x28] sm:$0xf]
        %v4007 = vld [vmem:[%s37 + $0x2c] sm:$0xf]
        %v4008 = vld [vmem:[%s37 + $0x30] sm:$0xf]
        %v4009 = vld [vmem:[%s37 + $0x34] sm:$0xf]
        %v4010 = vld [vmem:[%s37 + $0x38] sm:$0xf]
        %v4011 = vld [vmem:[%s37 + $0x3c] sm:$0xf]
        %v4028 = vunpack.c.l.b16 %v3996
        %v4029 = vunpack.c.l.b16 %v3997
        %v4030 = vunpack.c.l.b16 %v3998
        %v4031 = vunpack.c.l.b16 %v3999
        %v4032 = vunpack.c.l.b16 %v4000
        %v4033 = vunpack.c.l.b16 %v4001
        %v4034 = vunpack.c.l.b16 %v4002
        %v4035 = vunpack.c.l.b16 %v4003
        %v4036 = vunpack.c.l.b16 %v4004
        %v4037 = vunpack.c.l.b16 %v4005
        %v4038 = vunpack.c.l.b16 %v4006
        %v4039 = vunpack.c.l.b16 %v4007
        %v4040 = vunpack.c.l.b16 %v4008
        %v4041 = vunpack.c.l.b16 %v4009
        %v4042 = vunpack.c.l.b16 %v4010
        %v4043 = vunpack.c.l.b16 %v4011
        %v4044 = vpack.c.b16 %v4029, %v4028
        %v4045 = vpack.c.b16 %v4031, %v4030
        %v4046 = vpack.c.b16 %v4033, %v4032
        %v4047 = vpack.c.b16 %v4035, %v4034
        %v4048 = vpack.c.b16 %v4037, %v4036
        %v4049 = vpack.c.b16 %v4039, %v4038
        %v4050 = vpack.c.b16 %v4041, %v4040
        %v4051 = vpack.c.b16 %v4043, %v4042
        %4060 = vmatpush.bf16.msra.mxu0 %v4051
        %4061 = vmatpush.bf16.msra.mxu0 %v4050
        %4062 = vmatpush.bf16.msra.mxu0 %v4049
        %4063 = vmatpush.bf16.msra.mxu0 %v4048
        %4064 = vmatpush.bf16.msra.mxu0 %v4047
        %4065 = vmatpush.bf16.msra.mxu0 %v4046
        %4066 = vmatpush.bf16.msra.mxu0 %v4045
        %4067 = vmatpush.bf16.msra.mxu0 %v4044
        %4068 = vmatmul.bf16.gmra.mxu0 %v3995
        %v4069 = vpop.f32.mrf.mxu0
        %v4070 = vadd.f32 0.0, %v4069
        %v4071 = vpop.f32.mrf.mxu0
        %4072 = vdwg.mxu0
        %v4089 = vunpack.c.l.b16 %v3972
        %v4090 = vunpack.c.l.b16 %v3973
        %v4091 = vunpack.c.l.b16 %v3974
        %v4092 = vunpack.c.l.b16 %v3975
        %v4093 = vunpack.c.l.b16 %v3976
        %v4094 = vunpack.c.l.b16 %v3977
        %v4095 = vunpack.c.l.b16 %v3978
        %v4096 = vunpack.c.l.b16 %v3979
        %v4097 = vunpack.c.l.b16 %v3980
        %v4098 = vunpack.c.l.b16 %v3981
        %v4099 = vunpack.c.l.b16 %v3982
        %v4100 = vunpack.c.l.b16 %v3983
        %v4101 = vunpack.c.l.b16 %v3984
        %v4102 = vunpack.c.l.b16 %v3985
        %v4103 = vunpack.c.l.b16 %v3986
        %v4104 = vunpack.c.l.b16 %v3987
        %v4105 = vpack.c.b16 %v4090, %v4089
        %v4106 = vpack.c.b16 %v4092, %v4091
        %v4107 = vpack.c.b16 %v4094, %v4093
        %v4108 = vpack.c.b16 %v4096, %v4095
        %v4109 = vpack.c.b16 %v4098, %v4097
        %v4110 = vpack.c.b16 %v4100, %v4099
        %v4111 = vpack.c.b16 %v4102, %v4101
        %v4112 = vpack.c.b16 %v4104, %v4103
        %4121 = vmatpush.bf16.msra.mxu0 %v4112
        %4122 = vmatpush.bf16.msra.mxu0 %v4111
        %4123 = vmatpush.bf16.msra.mxu0 %v4110
        %4124 = vmatpush.bf16.msra.mxu0 %v4109
        %4125 = vmatpush.bf16.msra.mxu0 %v4108
        %4126 = vmatpush.bf16.msra.mxu0 %v4107
        %4127 = vmatpush.bf16.msra.mxu0 %v4106
        %4128 = vmatpush.bf16.msra.mxu0 %v4105
        %4129 = vmatmul.bf16.gmra.mxu0 %v3970
        %v4130 = vpop.f32.mrf.mxu0
        %v4131 = vadd.f32 %v4070, %v4130
        %v4132 = vpop.f32.mrf.mxu0
        %4133 = vdwg.mxu0
        %v4134 = vshrl.u32 %v3990, 16
        %v4137 = vsel %vm2027, %v4134, 0
        %s4138 = scalar_lea.vmem %s37, 128
        %v4139 = vld [vmem:[%s4138] sm:$0xf]
        %v4140 = vld [vmem:[%s4138 + $0x4] sm:$0xf]
        %v4141 = vld [vmem:[%s4138 + $0x8] sm:$0xf]
        %v4142 = vld [vmem:[%s4138 + $0xc] sm:$0xf]
        %v4143 = vld [vmem:[%s4138 + $0x10] sm:$0xf]
        %v4144 = vld [vmem:[%s4138 + $0x14] sm:$0xf]
        %v4145 = vld [vmem:[%s4138 + $0x18] sm:$0xf]
        %v4146 = vld [vmem:[%s4138 + $0x1c] sm:$0xf]
        %v4147 = vld [vmem:[%s4138 + $0x20] sm:$0xf]
        %v4148 = vld [vmem:[%s4138 + $0x24] sm:$0xf]
        %v4149 = vld [vmem:[%s4138 + $0x28] sm:$0xf]
        %v4150 = vld [vmem:[%s4138 + $0x2c] sm:$0xf]
        %v4151 = vld [vmem:[%s4138 + $0x30] sm:$0xf]
        %v4152 = vld [vmem:[%s4138 + $0x34] sm:$0xf]
        %v4153 = vld [vmem:[%s4138 + $0x38] sm:$0xf]
        %v4154 = vld [vmem:[%s4138 + $0x3c] sm:$0xf]
        %v4171 = vunpack.c.l.b16 %v4139
        %v4172 = vunpack.c.l.b16 %v4140
        %v4173 = vunpack.c.l.b16 %v4141
        %v4174 = vunpack.c.l.b16 %v4142
        %v4175 = vunpack.c.l.b16 %v4143
        %v4176 = vunpack.c.l.b16 %v4144
        %v4177 = vunpack.c.l.b16 %v4145
        %v4178 = vunpack.c.l.b16 %v4146
        %v4179 = vunpack.c.l.b16 %v4147
        %v4180 = vunpack.c.l.b16 %v4148
        %v4181 = vunpack.c.l.b16 %v4149
        %v4182 = vunpack.c.l.b16 %v4150
        %v4183 = vunpack.c.l.b16 %v4151
        %v4184 = vunpack.c.l.b16 %v4152
        %v4185 = vunpack.c.l.b16 %v4153
        %v4186 = vunpack.c.l.b16 %v4154
        %v4187 = vpack.c.b16 %v4172, %v4171
        %v4188 = vpack.c.b16 %v4174, %v4173
        %v4189 = vpack.c.b16 %v4176, %v4175
        %v4190 = vpack.c.b16 %v4178, %v4177
        %v4191 = vpack.c.b16 %v4180, %v4179
        %v4192 = vpack.c.b16 %v4182, %v4181
        %v4193 = vpack.c.b16 %v4184, %v4183
        %v4194 = vpack.c.b16 %v4186, %v4185
        %4203 = vmatpush.bf16.msra.mxu0 %v4194
        %4204 = vmatpush.bf16.msra.mxu0 %v4193
        %4205 = vmatpush.bf16.msra.mxu0 %v4192
        %4206 = vmatpush.bf16.msra.mxu0 %v4191
        %4207 = vmatpush.bf16.msra.mxu0 %v4190
        %4208 = vmatpush.bf16.msra.mxu0 %v4189
        %4209 = vmatpush.bf16.msra.mxu0 %v4188
        %4210 = vmatpush.bf16.msra.mxu0 %v4187
        %4211 = vmatmul.bf16.gmra.mxu0 %v4137
        %v4212 = vpop.f32.mrf.mxu0
        %v4213 = vadd.f32 0.0, %v4212
        %v4214 = vpop.f32.mrf.mxu0
        %4215 = vdwg.mxu0
        %v4216 = vadd.f32 %v4131, %v4213
        %v4217 = vld [vmem:[%s39] sm:$0x1]
        %v4219 = vperm.slane %v4217, 0
        %v4221 = vadd.f32 %v4216, %v4219
        %v4222 = vmax.f32 %v4221, 0.0
        %v4223 = vpack.c.bf16 %v4222, %v4222
        %4224 = vst [vmem:[#allocation5] sm:$0x3] %v4222
        %v4225 = vld [vmem:[#allocation5] ss:$2 sm:$0x1]
        %s4226 = scalar_lea.vmem [#allocation5], 1
        %v4227 = vld [vmem:[%s4226] ss:$2 sm:$0x1]
        %v4228 = vmax.f32 %v4225, %v4227
        %v4229 = vpack.c.bf16 %v4228, %v4228
        %v4230 = vld [vmem:[%s41] sm:$0xf]
        %v4231 = vld [vmem:[%s41 + $0x4] sm:$0xf]
        %v4232 = vld [vmem:[%s41 + $0x8] sm:$0xf]
        %v4233 = vld [vmem:[%s41 + $0xc] sm:$0xf]
        %v4234 = vld [vmem:[%s41 + $0x10] sm:$0xf]
        %v4235 = vld [vmem:[%s41 + $0x14] sm:$0xf]
        %v4236 = vld [vmem:[%s41 + $0x18] sm:$0xf]
        %v4237 = vld [vmem:[%s41 + $0x1c] sm:$0xf]
        %v4238 = vld [vmem:[%s41 + $0x20] sm:$0xf]
        %v4239 = vld [vmem:[%s41 + $0x24] sm:$0xf]
        %v4240 = vld [vmem:[%s41 + $0x28] sm:$0xf]
        %v4241 = vld [vmem:[%s41 + $0x2c] sm:$0xf]
        %v4242 = vld [vmem:[%s41 + $0x30] sm:$0xf]
        %v4243 = vld [vmem:[%s41 + $0x34] sm:$0xf]
        %v4244 = vld [vmem:[%s41 + $0x38] sm:$0xf]
        %v4245 = vld [vmem:[%s41 + $0x3c] sm:$0xf]
        %v4262 = vunpack.c.l.b16 %v4230
        %v4263 = vunpack.c.l.b16 %v4231
        %v4264 = vunpack.c.l.b16 %v4232
        %v4265 = vunpack.c.l.b16 %v4233
        %v4266 = vunpack.c.l.b16 %v4234
        %v4267 = vunpack.c.l.b16 %v4235
        %v4268 = vunpack.c.l.b16 %v4236
        %v4269 = vunpack.c.l.b16 %v4237
        %v4270 = vunpack.c.l.b16 %v4238
        %v4271 = vunpack.c.l.b16 %v4239
        %v4272 = vunpack.c.l.b16 %v4240
        %v4273 = vunpack.c.l.b16 %v4241
        %v4274 = vunpack.c.l.b16 %v4242
        %v4275 = vunpack.c.l.b16 %v4243
        %v4276 = vunpack.c.l.b16 %v4244
        %v4277 = vunpack.c.l.b16 %v4245
        %v4278 = vpack.c.b16 %v4263, %v4262
        %v4279 = vpack.c.b16 %v4265, %v4264
        %v4280 = vpack.c.b16 %v4267, %v4266
        %v4281 = vpack.c.b16 %v4269, %v4268
        %v4282 = vpack.c.b16 %v4271, %v4270
        %v4283 = vpack.c.b16 %v4273, %v4272
        %v4284 = vpack.c.b16 %v4275, %v4274
        %v4285 = vpack.c.b16 %v4277, %v4276
        %4294 = vmatpush.bf16.msra.mxu0 %v4285
        %4295 = vmatpush.bf16.msra.mxu0 %v4284
        %4296 = vmatpush.bf16.msra.mxu0 %v4283
        %4297 = vmatpush.bf16.msra.mxu0 %v4282
        %4298 = vmatpush.bf16.msra.mxu0 %v4281
        %4299 = vmatpush.bf16.msra.mxu0 %v4280
        %4300 = vmatpush.bf16.msra.mxu0 %v4279
        %4301 = vmatpush.bf16.msra.mxu0 %v4278
        %4302 = vmatmul.bf16.gmra.mxu0 %v4229
        %v4303 = vpop.f32.mrf.mxu0
        %v4304 = vadd.f32 0.0, %v4303
        %v4305 = vpop.f32.mrf.mxu0
        %4306 = vdwg.mxu0
        %s4307 = scalar_lea.vmem %s41, 64
        %v4308 = vld [vmem:[%s4307] sm:$0xf]
        %v4309 = vld [vmem:[%s4307 + $0x4] sm:$0xf]
        %v4310 = vld [vmem:[%s4307 + $0x8] sm:$0xf]
        %v4311 = vld [vmem:[%s4307 + $0xc] sm:$0xf]
        %v4312 = vld [vmem:[%s4307 + $0x10] sm:$0xf]
        %v4313 = vld [vmem:[%s4307 + $0x14] sm:$0xf]
        %v4314 = vld [vmem:[%s4307 + $0x18] sm:$0xf]
        %v4315 = vld [vmem:[%s4307 + $0x1c] sm:$0xf]
        %v4316 = vld [vmem:[%s4307 + $0x20] sm:$0xf]
        %v4317 = vld [vmem:[%s4307 + $0x24] sm:$0xf]
        %v4318 = vld [vmem:[%s4307 + $0x28] sm:$0xf]
        %v4319 = vld [vmem:[%s4307 + $0x2c] sm:$0xf]
        %v4320 = vld [vmem:[%s4307 + $0x30] sm:$0xf]
        %v4321 = vld [vmem:[%s4307 + $0x34] sm:$0xf]
        %v4322 = vld [vmem:[%s4307 + $0x38] sm:$0xf]
        %v4323 = vld [vmem:[%s4307 + $0x3c] sm:$0xf]
        %v4340 = vunpack.c.l.b16 %v4308
        %v4341 = vunpack.c.l.b16 %v4309
        %v4342 = vunpack.c.l.b16 %v4310
        %v4343 = vunpack.c.l.b16 %v4311
        %v4344 = vunpack.c.l.b16 %v4312
        %v4345 = vunpack.c.l.b16 %v4313
        %v4346 = vunpack.c.l.b16 %v4314
        %v4347 = vunpack.c.l.b16 %v4315
        %v4348 = vunpack.c.l.b16 %v4316
        %v4349 = vunpack.c.l.b16 %v4317
        %v4350 = vunpack.c.l.b16 %v4318
        %v4351 = vunpack.c.l.b16 %v4319
        %v4352 = vunpack.c.l.b16 %v4320
        %v4353 = vunpack.c.l.b16 %v4321
        %v4354 = vunpack.c.l.b16 %v4322
        %v4355 = vunpack.c.l.b16 %v4323
        %v4356 = vpack.c.b16 %v4341, %v4340
        %v4357 = vpack.c.b16 %v4343, %v4342
        %v4358 = vpack.c.b16 %v4345, %v4344
        %v4359 = vpack.c.b16 %v4347, %v4346
        %v4360 = vpack.c.b16 %v4349, %v4348
        %v4361 = vpack.c.b16 %v4351, %v4350
        %v4362 = vpack.c.b16 %v4353, %v4352
        %v4363 = vpack.c.b16 %v4355, %v4354
        %4372 = vmatpush.bf16.msra.mxu0 %v4363
        %4373 = vmatpush.bf16.msra.mxu0 %v4362
        %4374 = vmatpush.bf16.msra.mxu0 %v4361
        %4375 = vmatpush.bf16.msra.mxu0 %v4360
        %4376 = vmatpush.bf16.msra.mxu0 %v4359
        %4377 = vmatpush.bf16.msra.mxu0 %v4358
        %4378 = vmatpush.bf16.msra.mxu0 %v4357
        %4379 = vmatpush.bf16.msra.mxu0 %v4356
        %4380 = vmatmul.bf16.gmra.mxu0 %v4229
        %v4381 = vpop.f32.mrf.mxu0
        %v4382 = vadd.f32 0.0, %v4381
        %v4383 = vpop.f32.mrf.mxu0
        %4384 = vdwg.mxu0
        %v4385 = vmax.f32 %v4304, %v4382
        %v4386 = vpack.c.bf16 %v4385, %v4385
        %s4387 = scalar_lea.vmem [#allocation13], 32
        %v4388 = vld [vmem:[%s4387] sm:$0xf]
        %v4389 = vld [vmem:[%s4387 + $0x4] sm:$0xf]
        %v4390 = vld [vmem:[%s4387 + $0x8] sm:$0xf]
        %v4391 = vld [vmem:[%s4387 + $0xc] sm:$0xf]
        %v4392 = vld [vmem:[%s4387 + $0x10] sm:$0xf]
        %v4393 = vld [vmem:[%s4387 + $0x14] sm:$0xf]
        %v4394 = vld [vmem:[%s4387 + $0x18] sm:$0xf]
        %v4395 = vld [vmem:[%s4387 + $0x1c] sm:$0xf]
        %v4396 = vld [vmem:[%s45] sm:$0x1]
        %v4405 = vunpack.c.l.b16 %v4388
        %v4406 = vunpack.c.l.b16 %v4389
        %v4407 = vunpack.c.l.b16 %v4390
        %v4408 = vunpack.c.l.b16 %v4391
        %v4409 = vunpack.c.l.b16 %v4392
        %v4410 = vunpack.c.l.b16 %v4393
        %v4411 = vunpack.c.l.b16 %v4394
        %v4412 = vunpack.c.l.b16 %v4395
        %v4413 = vpack.c.b16 %v4406, %v4405
        %v4414 = vpack.c.b16 %v4408, %v4407
        %v4415 = vpack.c.b16 %v4410, %v4409
        %v4416 = vpack.c.b16 %v4412, %v4411
        %v4422 = vsel %vm2061, %v4386, 0
        %4424 = vmatpush.bf16.msra.mxu0 0
        %4425 = vmatpush.bf16.msra.mxu0 0
        %4426 = vmatpush.bf16.msra.mxu0 0
        %4427 = vmatpush.bf16.msra.mxu0 0
        %4428 = vmatpush.bf16.msra.mxu0 %v4416
        %4429 = vmatpush.bf16.msra.mxu0 %v4415
        %4430 = vmatpush.bf16.msra.mxu0 %v4414
        %4431 = vmatpush.bf16.msra.mxu0 %v4413
        %4432 = vmatmul.bf16.gmra.mxu0 %v4422
        %v4433 = vpop.f32.mrf.mxu0
        %v4434 = vadd.f32 %v4396, %v4433
        %v4435 = vpop.f32.mrf.mxu0
        %4436 = vdwg.mxu0
        %v4437 = vmax.f32 %v4434, 0.0
        %v4438 = vpack.c.bf16 %v4437, %v4437
        %s4439 = scalar_lea.vmem %s47, 64
        %v4440 = vld [vmem:[%s4439] sm:$0xf]
        %v4441 = vld [vmem:[%s4439 + $0x4] sm:$0xf]
        %v4442 = vld [vmem:[%s4439 + $0x8] sm:$0xf]
        %v4443 = vld [vmem:[%s4439 + $0xc] sm:$0xf]
        %v4444 = vld [vmem:[%s4439 + $0x10] sm:$0xf]
        %v4445 = vld [vmem:[%s4439 + $0x14] sm:$0xf]
        %v4446 = vld [vmem:[%s4439 + $0x18] sm:$0xf]
        %v4447 = vld [vmem:[%s4439 + $0x1c] sm:$0xf]
        %v4448 = vld [vmem:[%s4439 + $0x20] sm:$0xf]
        %v4449 = vld [vmem:[%s4439 + $0x24] sm:$0xf]
        %v4450 = vld [vmem:[%s4439 + $0x28] sm:$0xf]
        %v4451 = vld [vmem:[%s4439 + $0x2c] sm:$0xf]
        %v4452 = vld [vmem:[%s4439 + $0x30] sm:$0xf]
        %v4453 = vld [vmem:[%s4439 + $0x34] sm:$0xf]
        %v4454 = vld [vmem:[%s4439 + $0x38] sm:$0xf]
        %v4455 = vld [vmem:[%s4439 + $0x3c] sm:$0xf]
        %v4456 = vld [vmem:[%s49] sm:$0x1]
        %v4473 = vunpack.c.l.b16 %v4440
        %v4474 = vunpack.c.l.b16 %v4441
        %v4475 = vunpack.c.l.b16 %v4442
        %v4476 = vunpack.c.l.b16 %v4443
        %v4477 = vunpack.c.l.b16 %v4444
        %v4478 = vunpack.c.l.b16 %v4445
        %v4479 = vunpack.c.l.b16 %v4446
        %v4480 = vunpack.c.l.b16 %v4447
        %v4481 = vunpack.c.l.b16 %v4448
        %v4482 = vunpack.c.l.b16 %v4449
        %v4483 = vunpack.c.l.b16 %v4450
        %v4484 = vunpack.c.l.b16 %v4451
        %v4485 = vunpack.c.l.b16 %v4452
        %v4486 = vunpack.c.l.b16 %v4453
        %v4487 = vunpack.c.l.b16 %v4454
        %v4488 = vunpack.c.l.b16 %v4455
        %v4489 = vpack.c.b16 %v4474, %v4473
        %v4490 = vpack.c.b16 %v4476, %v4475
        %v4491 = vpack.c.b16 %v4478, %v4477
        %v4492 = vpack.c.b16 %v4480, %v4479
        %v4493 = vpack.c.b16 %v4482, %v4481
        %v4494 = vpack.c.b16 %v4484, %v4483
        %v4495 = vpack.c.b16 %v4486, %v4485
        %v4496 = vpack.c.b16 %v4488, %v4487
        %4505 = vmatpush.bf16.msra.mxu0 %v4496
        %4506 = vmatpush.bf16.msra.mxu0 %v4495
        %4507 = vmatpush.bf16.msra.mxu0 %v4494
        %4508 = vmatpush.bf16.msra.mxu0 %v4493
        %4509 = vmatpush.bf16.msra.mxu0 %v4492
        %4510 = vmatpush.bf16.msra.mxu0 %v4491
        %4511 = vmatpush.bf16.msra.mxu0 %v4490
        %4512 = vmatpush.bf16.msra.mxu0 %v4489
        %4513 = vmatmul.bf16.gmra.mxu0 %v4438
        %v4514 = vpop.f32.mrf.mxu0
        %v4515 = vadd.f32 %v4456, %v4514
        %v4516 = vpop.f32.mrf.mxu0
        %4517 = vdwg.mxu0
        %v4518 = vmax.f32 %v4515, 0.0
        %v4519 = vpack.c.bf16 %v4518, %v4518
        %v4520 = vld [vmem:[#allocation14] sm:$0xf]
        %v4521 = vld [vmem:[#allocation14 + $0x4] sm:$0xf]
        %v4522 = vld [vmem:[#allocation14 + $0x8] sm:$0xf]
        %v4523 = vld [vmem:[#allocation14 + $0xc] sm:$0xf]
        %v4524 = vld [vmem:[#allocation14 + $0x10] sm:$0xf]
        %v4525 = vld [vmem:[#allocation14 + $0x14] sm:$0xf]
        %v4526 = vld [vmem:[#allocation14 + $0x18] sm:$0xf]
        %v4527 = vld [vmem:[#allocation14 + $0x1c] sm:$0xf]
        %v4528 = vld [vmem:[#allocation14 + $0x20] sm:$0xf]
        %v4529 = vld [vmem:[#allocation14 + $0x24] sm:$0xf]
        %v4530 = vld [vmem:[#allocation14 + $0x28] sm:$0xf]
        %v4531 = vld [vmem:[#allocation14 + $0x2c] sm:$0xf]
        %v4532 = vld [vmem:[#allocation14 + $0x30] sm:$0xf]
        %v4533 = vld [vmem:[#allocation14 + $0x34] sm:$0xf]
        %v4534 = vld [vmem:[#allocation14 + $0x38] sm:$0xf]
        %v4535 = vld [vmem:[#allocation14 + $0x3c] sm:$0xf]
        %v4536 = vld [vmem:[%s53] sm:$0x1]
        %v4553 = vunpack.c.l.b16 %v4520
        %v4554 = vunpack.c.l.b16 %v4521
        %v4555 = vunpack.c.l.b16 %v4522
        %v4556 = vunpack.c.l.b16 %v4523
        %v4557 = vunpack.c.l.b16 %v4524
        %v4558 = vunpack.c.l.b16 %v4525
        %v4559 = vunpack.c.l.b16 %v4526
        %v4560 = vunpack.c.l.b16 %v4527
        %v4561 = vunpack.c.l.b16 %v4528
        %v4562 = vunpack.c.l.b16 %v4529
        %v4563 = vunpack.c.l.b16 %v4530
        %v4564 = vunpack.c.l.b16 %v4531
        %v4565 = vunpack.c.l.b16 %v4532
        %v4566 = vunpack.c.l.b16 %v4533
        %v4567 = vunpack.c.l.b16 %v4534
        %v4568 = vunpack.c.l.b16 %v4535
        %v4569 = vpack.c.b16 %v4554, %v4553
        %v4570 = vpack.c.b16 %v4556, %v4555
        %v4571 = vpack.c.b16 %v4558, %v4557
        %v4572 = vpack.c.b16 %v4560, %v4559
        %v4573 = vpack.c.b16 %v4562, %v4561
        %v4574 = vpack.c.b16 %v4564, %v4563
        %v4575 = vpack.c.b16 %v4566, %v4565
        %v4576 = vpack.c.b16 %v4568, %v4567
        %4585 = vmatpush.bf16.msra.mxu0 %v4576
        %4586 = vmatpush.bf16.msra.mxu0 %v4575
        %4587 = vmatpush.bf16.msra.mxu0 %v4574
        %4588 = vmatpush.bf16.msra.mxu0 %v4573
        %4589 = vmatpush.bf16.msra.mxu0 %v4572
        %4590 = vmatpush.bf16.msra.mxu0 %v4571
        %4591 = vmatpush.bf16.msra.mxu0 %v4570
        %4592 = vmatpush.bf16.msra.mxu0 %v4569
        %4593 = vmatmul.bf16.gmra.mxu0 %v4519
        %v4594 = vpop.f32.mrf.mxu0
        %v4595 = vadd.f32 %v4536, %v4594
        %v4596 = vpop.f32.mrf.mxu0
        %4597 = vdwg.mxu0
        %s4598 = scalar_lea.vmem [#allocation14], 64
        %v4599 = vld [vmem:[%s4598] sm:$0xf]
        %v4600 = vld [vmem:[%s4598 + $0x4] sm:$0xf]
        %v4601 = vld [vmem:[%s4598 + $0x8] sm:$0xf]
        %v4602 = vld [vmem:[%s4598 + $0xc] sm:$0xf]
        %v4603 = vld [vmem:[%s4598 + $0x10] sm:$0xf]
        %v4604 = vld [vmem:[%s4598 + $0x14] sm:$0xf]
        %v4605 = vld [vmem:[%s4598 + $0x18] sm:$0xf]
        %v4606 = vld [vmem:[%s4598 + $0x1c] sm:$0xf]
        %v4607 = vld [vmem:[%s4598 + $0x20] sm:$0xf]
        %v4608 = vld [vmem:[%s4598 + $0x24] sm:$0xf]
        %v4609 = vld [vmem:[%s4598 + $0x28] sm:$0xf]
        %v4610 = vld [vmem:[%s4598 + $0x2c] sm:$0xf]
        %v4611 = vld [vmem:[%s4598 + $0x30] sm:$0xf]
        %v4612 = vld [vmem:[%s4598 + $0x34] sm:$0xf]
        %v4613 = vld [vmem:[%s4598 + $0x38] sm:$0xf]
        %v4614 = vld [vmem:[%s4598 + $0x3c] sm:$0xf]
        %v4631 = vunpack.c.l.b16 %v4599
        %v4632 = vunpack.c.l.b16 %v4600
        %v4633 = vunpack.c.l.b16 %v4601
        %v4634 = vunpack.c.l.b16 %v4602
        %v4635 = vunpack.c.l.b16 %v4603
        %v4636 = vunpack.c.l.b16 %v4604
        %v4637 = vunpack.c.l.b16 %v4605
        %v4638 = vunpack.c.l.b16 %v4606
        %v4639 = vunpack.c.l.b16 %v4607
        %v4640 = vunpack.c.l.b16 %v4608
        %v4641 = vunpack.c.l.b16 %v4609
        %v4642 = vunpack.c.l.b16 %v4610
        %v4643 = vunpack.c.l.b16 %v4611
        %v4644 = vunpack.c.l.b16 %v4612
        %v4645 = vunpack.c.l.b16 %v4613
        %v4646 = vunpack.c.l.b16 %v4614
        %v4647 = vpack.c.b16 %v4632, %v4631
        %v4648 = vpack.c.b16 %v4634, %v4633
        %v4649 = vpack.c.b16 %v4636, %v4635
        %v4650 = vpack.c.b16 %v4638, %v4637
        %v4651 = vpack.c.b16 %v4640, %v4639
        %v4652 = vpack.c.b16 %v4642, %v4641
        %v4653 = vpack.c.b16 %v4644, %v4643
        %v4654 = vpack.c.b16 %v4646, %v4645
        %4663 = vmatpush.bf16.msra.mxu0 %v4654
        %4664 = vmatpush.bf16.msra.mxu0 %v4653
        %4665 = vmatpush.bf16.msra.mxu0 %v4652
        %4666 = vmatpush.bf16.msra.mxu0 %v4651
        %4667 = vmatpush.bf16.msra.mxu0 %v4650
        %4668 = vmatpush.bf16.msra.mxu0 %v4649
        %4669 = vmatpush.bf16.msra.mxu0 %v4648
        %4670 = vmatpush.bf16.msra.mxu0 %v4647
        %4671 = vmatmul.bf16.gmra.mxu0 %v4519
        %v4672 = vpop.f32.mrf.mxu0
        %v4673 = vadd.f32 %v4536, %v4672
        %v4674 = vpop.f32.mrf.mxu0
        %4675 = vdwg.mxu0
        %v4676 = vpack.c.bf16 %v4595, %v4595
        %v4677 = vpack.c.bf16 %v4673, %v4673
        %v4679 = vunpack.c.l.b16 %v4677
        %v4680 = vpack.c.b16 %v4679, %v4679
        %v4682 = vshll.u32 %v4680, 16
        %v4685 = vsel %vm2027, %v4676, %v4682
        %s4686 = scalar_lea.vmem [#allocation16], 64
        %v4687 = vld [vmem:[%s4686] sm:$0xf]
        %v4688 = vld [vmem:[%s4686 + $0x4] sm:$0xf]
        %v4689 = vld [vmem:[%s4686 + $0x8] sm:$0xf]
        %v4690 = vld [vmem:[%s4686 + $0xc] sm:$0xf]
        %v4691 = vld [vmem:[%s4686 + $0x10] sm:$0xf]
        %v4692 = vld [vmem:[%s4686 + $0x14] sm:$0xf]
        %v4693 = vld [vmem:[%s4686 + $0x18] sm:$0xf]
        %v4694 = vld [vmem:[%s4686 + $0x1c] sm:$0xf]
        %v4695 = vld [vmem:[%s4686 + $0x20] sm:$0xf]
        %v4696 = vld [vmem:[%s4686 + $0x24] sm:$0xf]
        %v4697 = vld [vmem:[%s4686 + $0x28] sm:$0xf]
        %v4698 = vld [vmem:[%s4686 + $0x2c] sm:$0xf]
        %v4699 = vld [vmem:[%s4686 + $0x30] sm:$0xf]
        %v4700 = vld [vmem:[%s4686 + $0x34] sm:$0xf]
        %v4701 = vld [vmem:[%s4686 + $0x38] sm:$0xf]
        %v4702 = vld [vmem:[%s4686 + $0x3c] sm:$0xf]
        %s4703 = scalar_lea.vmem [#allocation17], 64
        %v4704 = vld [vmem:[%s4703] sm:$0xf]
        %v4705 = vld [vmem:[%s4703 + $0x4] sm:$0xf]
        %v4706 = vld [vmem:[%s4703 + $0x8] sm:$0xf]
        %v4707 = vld [vmem:[%s4703 + $0xc] sm:$0xf]
        %v4708 = vld [vmem:[%s4703 + $0x10] sm:$0xf]
        %v4709 = vld [vmem:[%s4703 + $0x14] sm:$0xf]
        %v4710 = vld [vmem:[%s4703 + $0x18] sm:$0xf]
        %v4711 = vld [vmem:[%s4703 + $0x1c] sm:$0xf]
        %v4712 = vld [vmem:[%s4703 + $0x20] sm:$0xf]
        %v4713 = vld [vmem:[%s4703 + $0x24] sm:$0xf]
        %v4714 = vld [vmem:[%s4703 + $0x28] sm:$0xf]
        %v4715 = vld [vmem:[%s4703 + $0x2c] sm:$0xf]
        %v4716 = vld [vmem:[%s4703 + $0x30] sm:$0xf]
        %v4717 = vld [vmem:[%s4703 + $0x34] sm:$0xf]
        %v4718 = vld [vmem:[%s4703 + $0x38] sm:$0xf]
        %v4719 = vld [vmem:[%s4703 + $0x3c] sm:$0xf]
        %v4736 = vunpack.c.l.b16 %v4704
        %v4737 = vunpack.c.l.b16 %v4705
        %v4738 = vunpack.c.l.b16 %v4706
        %v4739 = vunpack.c.l.b16 %v4707
        %v4740 = vunpack.c.l.b16 %v4708
        %v4741 = vunpack.c.l.b16 %v4709
        %v4742 = vunpack.c.l.b16 %v4710
        %v4743 = vunpack.c.l.b16 %v4711
        %v4744 = vunpack.c.l.b16 %v4712
        %v4745 = vunpack.c.l.b16 %v4713
        %v4746 = vunpack.c.l.b16 %v4714
        %v4747 = vunpack.c.l.b16 %v4715
        %v4748 = vunpack.c.l.b16 %v4716
        %v4749 = vunpack.c.l.b16 %v4717
        %v4750 = vunpack.c.l.b16 %v4718
        %v4751 = vunpack.c.l.b16 %v4719
        %v4752 = vpack.c.b16 %v4737, %v4736
        %v4753 = vpack.c.b16 %v4739, %v4738
        %v4754 = vpack.c.b16 %v4741, %v4740
        %v4755 = vpack.c.b16 %v4743, %v4742
        %v4756 = vpack.c.b16 %v4745, %v4744
        %v4757 = vpack.c.b16 %v4747, %v4746
        %v4758 = vpack.c.b16 %v4749, %v4748
        %v4759 = vpack.c.b16 %v4751, %v4750
        %4768 = vmatpush.bf16.msra.mxu0 %v4759
        %4769 = vmatpush.bf16.msra.mxu0 %v4758
        %4770 = vmatpush.bf16.msra.mxu0 %v4757
        %4771 = vmatpush.bf16.msra.mxu0 %v4756
        %4772 = vmatpush.bf16.msra.mxu0 %v4755
        %4773 = vmatpush.bf16.msra.mxu0 %v4754
        %4774 = vmatpush.bf16.msra.mxu0 %v4753
        %4775 = vmatpush.bf16.msra.mxu0 %v4752
        %4776 = vmatmul.bf16.gmra.mxu0 %v4223
        %v4777 = vpop.f32.mrf.mxu0
        %v4778 = vadd.f32 0.0, %v4777
        %v4779 = vpop.f32.mrf.mxu0
        %4780 = vdwg.mxu0
        %v4797 = vunpack.c.l.b16 %v4687
        %v4798 = vunpack.c.l.b16 %v4688
        %v4799 = vunpack.c.l.b16 %v4689
        %v4800 = vunpack.c.l.b16 %v4690
        %v4801 = vunpack.c.l.b16 %v4691
        %v4802 = vunpack.c.l.b16 %v4692
        %v4803 = vunpack.c.l.b16 %v4693
        %v4804 = vunpack.c.l.b16 %v4694
        %v4805 = vunpack.c.l.b16 %v4695
        %v4806 = vunpack.c.l.b16 %v4696
        %v4807 = vunpack.c.l.b16 %v4697
        %v4808 = vunpack.c.l.b16 %v4698
        %v4809 = vunpack.c.l.b16 %v4699
        %v4810 = vunpack.c.l.b16 %v4700
        %v4811 = vunpack.c.l.b16 %v4701
        %v4812 = vunpack.c.l.b16 %v4702
        %v4813 = vpack.c.b16 %v4798, %v4797
        %v4814 = vpack.c.b16 %v4800, %v4799
        %v4815 = vpack.c.b16 %v4802, %v4801
        %v4816 = vpack.c.b16 %v4804, %v4803
        %v4817 = vpack.c.b16 %v4806, %v4805
        %v4818 = vpack.c.b16 %v4808, %v4807
        %v4819 = vpack.c.b16 %v4810, %v4809
        %v4820 = vpack.c.b16 %v4812, %v4811
        %4829 = vmatpush.bf16.msra.mxu0 %v4820
        %4830 = vmatpush.bf16.msra.mxu0 %v4819
        %4831 = vmatpush.bf16.msra.mxu0 %v4818
        %4832 = vmatpush.bf16.msra.mxu0 %v4817
        %4833 = vmatpush.bf16.msra.mxu0 %v4816
        %4834 = vmatpush.bf16.msra.mxu0 %v4815
        %4835 = vmatpush.bf16.msra.mxu0 %v4814
        %4836 = vmatpush.bf16.msra.mxu0 %v4813
        %4837 = vmatmul.bf16.gmra.mxu0 %v4685
        %v4838 = vpop.f32.mrf.mxu0
        %v4839 = vadd.f32 %v4778, %v4838
        %v4840 = vpop.f32.mrf.mxu0
        %4841 = vdwg.mxu0
        %v4843 = vshll.u32 %v4685, 16
        %v4846 = vsel %vm2027, 0, %v4843
        %v4847 = vld [vmem:[#allocation16] sm:$0xf]
        %v4848 = vld [vmem:[#allocation16 + $0x4] sm:$0xf]
        %v4849 = vld [vmem:[#allocation16 + $0x8] sm:$0xf]
        %v4850 = vld [vmem:[#allocation16 + $0xc] sm:$0xf]
        %v4851 = vld [vmem:[#allocation16 + $0x10] sm:$0xf]
        %v4852 = vld [vmem:[#allocation16 + $0x14] sm:$0xf]
        %v4853 = vld [vmem:[#allocation16 + $0x18] sm:$0xf]
        %v4854 = vld [vmem:[#allocation16 + $0x1c] sm:$0xf]
        %v4855 = vld [vmem:[#allocation16 + $0x20] sm:$0xf]
        %v4856 = vld [vmem:[#allocation16 + $0x24] sm:$0xf]
        %v4857 = vld [vmem:[#allocation16 + $0x28] sm:$0xf]
        %v4858 = vld [vmem:[#allocation16 + $0x2c] sm:$0xf]
        %v4859 = vld [vmem:[#allocation16 + $0x30] sm:$0xf]
        %v4860 = vld [vmem:[#allocation16 + $0x34] sm:$0xf]
        %v4861 = vld [vmem:[#allocation16 + $0x38] sm:$0xf]
        %v4862 = vld [vmem:[#allocation16 + $0x3c] sm:$0xf]
        %v4879 = vunpack.c.l.b16 %v4847
        %v4880 = vunpack.c.l.b16 %v4848
        %v4881 = vunpack.c.l.b16 %v4849
        %v4882 = vunpack.c.l.b16 %v4850
        %v4883 = vunpack.c.l.b16 %v4851
        %v4884 = vunpack.c.l.b16 %v4852
        %v4885 = vunpack.c.l.b16 %v4853
        %v4886 = vunpack.c.l.b16 %v4854
        %v4887 = vunpack.c.l.b16 %v4855
        %v4888 = vunpack.c.l.b16 %v4856
        %v4889 = vunpack.c.l.b16 %v4857
        %v4890 = vunpack.c.l.b16 %v4858
        %v4891 = vunpack.c.l.b16 %v4859
        %v4892 = vunpack.c.l.b16 %v4860
        %v4893 = vunpack.c.l.b16 %v4861
        %v4894 = vunpack.c.l.b16 %v4862
        %v4895 = vpack.c.b16 %v4880, %v4879
        %v4896 = vpack.c.b16 %v4882, %v4881
        %v4897 = vpack.c.b16 %v4884, %v4883
        %v4898 = vpack.c.b16 %v4886, %v4885
        %v4899 = vpack.c.b16 %v4888, %v4887
        %v4900 = vpack.c.b16 %v4890, %v4889
        %v4901 = vpack.c.b16 %v4892, %v4891
        %v4902 = vpack.c.b16 %v4894, %v4893
        %4911 = vmatpush.bf16.msra.mxu0 %v4902
        %4912 = vmatpush.bf16.msra.mxu0 %v4901
        %4913 = vmatpush.bf16.msra.mxu0 %v4900
        %4914 = vmatpush.bf16.msra.mxu0 %v4899
        %4915 = vmatpush.bf16.msra.mxu0 %v4898
        %4916 = vmatpush.bf16.msra.mxu0 %v4897
        %4917 = vmatpush.bf16.msra.mxu0 %v4896
        %4918 = vmatpush.bf16.msra.mxu0 %v4895
        %4919 = vmatmul.bf16.gmra.mxu0 %v4846
        %v4920 = vpop.f32.mrf.mxu0
        %v4921 = vadd.f32 0.0, %v4920
        %v4922 = vpop.f32.mrf.mxu0
        %4923 = vdwg.mxu0
        %v4924 = vadd.f32 %v4839, %v4921
        %v4925 = vshrl.u32 %v4685, 16
        %v4928 = vsel %vm2027, %v4925, 0
        %s4929 = scalar_lea.vmem [#allocation16], 128
        %v4930 = vld [vmem:[%s4929] sm:$0xf]
        %v4931 = vld [vmem:[%s4929 + $0x4] sm:$0xf]
        %v4932 = vld [vmem:[%s4929 + $0x8] sm:$0xf]
        %v4933 = vld [vmem:[%s4929 + $0xc] sm:$0xf]
        %v4934 = vld [vmem:[%s4929 + $0x10] sm:$0xf]
        %v4935 = vld [vmem:[%s4929 + $0x14] sm:$0xf]
        %v4936 = vld [vmem:[%s4929 + $0x18] sm:$0xf]
        %v4937 = vld [vmem:[%s4929 + $0x1c] sm:$0xf]
        %v4938 = vld [vmem:[%s4929 + $0x20] sm:$0xf]
        %v4939 = vld [vmem:[%s4929 + $0x24] sm:$0xf]
        %v4940 = vld [vmem:[%s4929 + $0x28] sm:$0xf]
        %v4941 = vld [vmem:[%s4929 + $0x2c] sm:$0xf]
        %v4942 = vld [vmem:[%s4929 + $0x30] sm:$0xf]
        %v4943 = vld [vmem:[%s4929 + $0x34] sm:$0xf]
        %v4944 = vld [vmem:[%s4929 + $0x38] sm:$0xf]
        %v4945 = vld [vmem:[%s4929 + $0x3c] sm:$0xf]
        %v4962 = vunpack.c.l.b16 %v4930
        %v4963 = vunpack.c.l.b16 %v4931
        %v4964 = vunpack.c.l.b16 %v4932
        %v4965 = vunpack.c.l.b16 %v4933
        %v4966 = vunpack.c.l.b16 %v4934
        %v4967 = vunpack.c.l.b16 %v4935
        %v4968 = vunpack.c.l.b16 %v4936
        %v4969 = vunpack.c.l.b16 %v4937
        %v4970 = vunpack.c.l.b16 %v4938
        %v4971 = vunpack.c.l.b16 %v4939
        %v4972 = vunpack.c.l.b16 %v4940
        %v4973 = vunpack.c.l.b16 %v4941
        %v4974 = vunpack.c.l.b16 %v4942
        %v4975 = vunpack.c.l.b16 %v4943
        %v4976 = vunpack.c.l.b16 %v4944
        %v4977 = vunpack.c.l.b16 %v4945
        %v4978 = vpack.c.b16 %v4963, %v4962
        %v4979 = vpack.c.b16 %v4965, %v4964
        %v4980 = vpack.c.b16 %v4967, %v4966
        %v4981 = vpack.c.b16 %v4969, %v4968
        %v4982 = vpack.c.b16 %v4971, %v4970
        %v4983 = vpack.c.b16 %v4973, %v4972
        %v4984 = vpack.c.b16 %v4975, %v4974
        %v4985 = vpack.c.b16 %v4977, %v4976
        %4994 = vmatpush.bf16.msra.mxu0 %v4985
        %4995 = vmatpush.bf16.msra.mxu0 %v4984
        %4996 = vmatpush.bf16.msra.mxu0 %v4983
        %4997 = vmatpush.bf16.msra.mxu0 %v4982
        %4998 = vmatpush.bf16.msra.mxu0 %v4981
        %4999 = vmatpush.bf16.msra.mxu0 %v4980
        %5000 = vmatpush.bf16.msra.mxu0 %v4979
        %5001 = vmatpush.bf16.msra.mxu0 %v4978
        %5002 = vmatmul.bf16.gmra.mxu0 %v4928
        %v5003 = vpop.f32.mrf.mxu0
        %v5004 = vadd.f32 0.0, %v5003
        %v5005 = vpop.f32.mrf.mxu0
        %5006 = vdwg.mxu0
        %v5007 = vadd.f32 %v4924, %v5004
        %v5009 = vunpack.c.l.b16 %v4223
        %v5010 = vpack.c.b16 %v5009, %v5009
        %v5012 = vshll.u32 %v5010, 16
        %v5015 = vsel %vm2027, 0, %v5012
        %v5016 = vld [vmem:[#allocation17] sm:$0xf]
        %v5017 = vld [vmem:[#allocation17 + $0x4] sm:$0xf]
        %v5018 = vld [vmem:[#allocation17 + $0x8] sm:$0xf]
        %v5019 = vld [vmem:[#allocation17 + $0xc] sm:$0xf]
        %v5020 = vld [vmem:[#allocation17 + $0x10] sm:$0xf]
        %v5021 = vld [vmem:[#allocation17 + $0x14] sm:$0xf]
        %v5022 = vld [vmem:[#allocation17 + $0x18] sm:$0xf]
        %v5023 = vld [vmem:[#allocation17 + $0x1c] sm:$0xf]
        %v5024 = vld [vmem:[#allocation17 + $0x20] sm:$0xf]
        %v5025 = vld [vmem:[#allocation17 + $0x24] sm:$0xf]
        %v5026 = vld [vmem:[#allocation17 + $0x28] sm:$0xf]
        %v5027 = vld [vmem:[#allocation17 + $0x2c] sm:$0xf]
        %v5028 = vld [vmem:[#allocation17 + $0x30] sm:$0xf]
        %v5029 = vld [vmem:[#allocation17 + $0x34] sm:$0xf]
        %v5030 = vld [vmem:[#allocation17 + $0x38] sm:$0xf]
        %v5031 = vld [vmem:[#allocation17 + $0x3c] sm:$0xf]
        %v5048 = vunpack.c.l.b16 %v5016
        %v5049 = vunpack.c.l.b16 %v5017
        %v5050 = vunpack.c.l.b16 %v5018
        %v5051 = vunpack.c.l.b16 %v5019
        %v5052 = vunpack.c.l.b16 %v5020
        %v5053 = vunpack.c.l.b16 %v5021
        %v5054 = vunpack.c.l.b16 %v5022
        %v5055 = vunpack.c.l.b16 %v5023
        %v5056 = vunpack.c.l.b16 %v5024
        %v5057 = vunpack.c.l.b16 %v5025
        %v5058 = vunpack.c.l.b16 %v5026
        %v5059 = vunpack.c.l.b16 %v5027
        %v5060 = vunpack.c.l.b16 %v5028
        %v5061 = vunpack.c.l.b16 %v5029
        %v5062 = vunpack.c.l.b16 %v5030
        %v5063 = vunpack.c.l.b16 %v5031
        %v5064 = vpack.c.b16 %v5049, %v5048
        %v5065 = vpack.c.b16 %v5051, %v5050
        %v5066 = vpack.c.b16 %v5053, %v5052
        %v5067 = vpack.c.b16 %v5055, %v5054
        %v5068 = vpack.c.b16 %v5057, %v5056
        %v5069 = vpack.c.b16 %v5059, %v5058
        %v5070 = vpack.c.b16 %v5061, %v5060
        %v5071 = vpack.c.b16 %v5063, %v5062
        %5080 = vmatpush.bf16.msra.mxu0 %v5071
        %5081 = vmatpush.bf16.msra.mxu0 %v5070
        %5082 = vmatpush.bf16.msra.mxu0 %v5069
        %5083 = vmatpush.bf16.msra.mxu0 %v5068
        %5084 = vmatpush.bf16.msra.mxu0 %v5067
        %5085 = vmatpush.bf16.msra.mxu0 %v5066
        %5086 = vmatpush.bf16.msra.mxu0 %v5065
        %5087 = vmatpush.bf16.msra.mxu0 %v5064
        %5088 = vmatmul.bf16.gmra.mxu0 %v5015
        %v5089 = vpop.f32.mrf.mxu0
        %v5090 = vadd.f32 0.0, %v5089
        %v5091 = vpop.f32.mrf.mxu0
        %5092 = vdwg.mxu0
        %v5093 = vadd.f32 %v5007, %v5090
        %v5094 = vshrl.u32 %v5010, 16
        %v5097 = vsel %vm2027, %v5094, 0
        %s5098 = scalar_lea.vmem [#allocation17], 128
        %v5099 = vld [vmem:[%s5098] sm:$0xf]
        %v5100 = vld [vmem:[%s5098 + $0x4] sm:$0xf]
        %v5101 = vld [vmem:[%s5098 + $0x8] sm:$0xf]
        %v5102 = vld [vmem:[%s5098 + $0xc] sm:$0xf]
        %v5103 = vld [vmem:[%s5098 + $0x10] sm:$0xf]
        %v5104 = vld [vmem:[%s5098 + $0x14] sm:$0xf]
        %v5105 = vld [vmem:[%s5098 + $0x18] sm:$0xf]
        %v5106 = vld [vmem:[%s5098 + $0x1c] sm:$0xf]
        %v5107 = vld [vmem:[%s5098 + $0x20] sm:$0xf]
        %v5108 = vld [vmem:[%s5098 + $0x24] sm:$0xf]
        %v5109 = vld [vmem:[%s5098 + $0x28] sm:$0xf]
        %v5110 = vld [vmem:[%s5098 + $0x2c] sm:$0xf]
        %v5111 = vld [vmem:[%s5098 + $0x30] sm:$0xf]
        %v5112 = vld [vmem:[%s5098 + $0x34] sm:$0xf]
        %v5113 = vld [vmem:[%s5098 + $0x38] sm:$0xf]
        %v5114 = vld [vmem:[%s5098 + $0x3c] sm:$0xf]
        %v5131 = vunpack.c.l.b16 %v5099
        %v5132 = vunpack.c.l.b16 %v5100
        %v5133 = vunpack.c.l.b16 %v5101
        %v5134 = vunpack.c.l.b16 %v5102
        %v5135 = vunpack.c.l.b16 %v5103
        %v5136 = vunpack.c.l.b16 %v5104
        %v5137 = vunpack.c.l.b16 %v5105
        %v5138 = vunpack.c.l.b16 %v5106
        %v5139 = vunpack.c.l.b16 %v5107
        %v5140 = vunpack.c.l.b16 %v5108
        %v5141 = vunpack.c.l.b16 %v5109
        %v5142 = vunpack.c.l.b16 %v5110
        %v5143 = vunpack.c.l.b16 %v5111
        %v5144 = vunpack.c.l.b16 %v5112
        %v5145 = vunpack.c.l.b16 %v5113
        %v5146 = vunpack.c.l.b16 %v5114
        %v5147 = vpack.c.b16 %v5132, %v5131
        %v5148 = vpack.c.b16 %v5134, %v5133
        %v5149 = vpack.c.b16 %v5136, %v5135
        %v5150 = vpack.c.b16 %v5138, %v5137
        %v5151 = vpack.c.b16 %v5140, %v5139
        %v5152 = vpack.c.b16 %v5142, %v5141
        %v5153 = vpack.c.b16 %v5144, %v5143
        %v5154 = vpack.c.b16 %v5146, %v5145
        %5163 = vmatpush.bf16.msra.mxu0 %v5154
        %5164 = vmatpush.bf16.msra.mxu0 %v5153
        %5165 = vmatpush.bf16.msra.mxu0 %v5152
        %5166 = vmatpush.bf16.msra.mxu0 %v5151
        %5167 = vmatpush.bf16.msra.mxu0 %v5150
        %5168 = vmatpush.bf16.msra.mxu0 %v5149
        %5169 = vmatpush.bf16.msra.mxu0 %v5148
        %5170 = vmatpush.bf16.msra.mxu0 %v5147
        %5171 = vmatmul.bf16.gmra.mxu0 %v5097
        %v5172 = vpop.f32.mrf.mxu0
        %v5173 = vadd.f32 0.0, %v5172
        %v5174 = vpop.f32.mrf.mxu0
        %5175 = vdwg.mxu0
        %v5176 = vadd.f32 %v5093, %v5173
        %v5177 = vld [vmem:[%s59] sm:$0x1]
        %v5179 = vperm.slane %v5177, 0
        %v5181 = vadd.f32 %v5176, %v5179
        %v5182 = vmax.f32 %v5181, 0.0
        %v5183 = vpack.c.bf16 %v5182, %v5182
        %s5184 = scalar_lea.vmem [#allocation19], 64
        %v5185 = vld [vmem:[%s5184] sm:$0xf]
        %v5186 = vld [vmem:[%s5184 + $0x4] sm:$0xf]
        %v5187 = vld [vmem:[%s5184 + $0x8] sm:$0xf]
        %v5188 = vld [vmem:[%s5184 + $0xc] sm:$0xf]
        %v5189 = vld [vmem:[%s5184 + $0x10] sm:$0xf]
        %v5190 = vld [vmem:[%s5184 + $0x14] sm:$0xf]
        %v5191 = vld [vmem:[%s5184 + $0x18] sm:$0xf]
        %v5192 = vld [vmem:[%s5184 + $0x1c] sm:$0xf]
        %v5193 = vld [vmem:[%s5184 + $0x20] sm:$0xf]
        %v5194 = vld [vmem:[%s5184 + $0x24] sm:$0xf]
        %v5195 = vld [vmem:[%s5184 + $0x28] sm:$0xf]
        %v5196 = vld [vmem:[%s5184 + $0x2c] sm:$0xf]
        %v5197 = vld [vmem:[%s5184 + $0x30] sm:$0xf]
        %v5198 = vld [vmem:[%s5184 + $0x34] sm:$0xf]
        %v5199 = vld [vmem:[%s5184 + $0x38] sm:$0xf]
        %v5200 = vld [vmem:[%s5184 + $0x3c] sm:$0xf]
        %v5202 = vunpack.c.l.b16 %v5183
        %v5203 = vpack.c.b16 %v5202, %v5202
        %v5205 = vshll.u32 %v5203, 16
        %v5208 = vsel %vm2027, 0, %v5205
        %v5209 = vld [vmem:[#allocation19] sm:$0xf]
        %v5210 = vld [vmem:[#allocation19 + $0x4] sm:$0xf]
        %v5211 = vld [vmem:[#allocation19 + $0x8] sm:$0xf]
        %v5212 = vld [vmem:[#allocation19 + $0xc] sm:$0xf]
        %v5213 = vld [vmem:[#allocation19 + $0x10] sm:$0xf]
        %v5214 = vld [vmem:[#allocation19 + $0x14] sm:$0xf]
        %v5215 = vld [vmem:[#allocation19 + $0x18] sm:$0xf]
        %v5216 = vld [vmem:[#allocation19 + $0x1c] sm:$0xf]
        %v5217 = vld [vmem:[#allocation19 + $0x20] sm:$0xf]
        %v5218 = vld [vmem:[#allocation19 + $0x24] sm:$0xf]
        %v5219 = vld [vmem:[#allocation19 + $0x28] sm:$0xf]
        %v5220 = vld [vmem:[#allocation19 + $0x2c] sm:$0xf]
        %v5221 = vld [vmem:[#allocation19 + $0x30] sm:$0xf]
        %v5222 = vld [vmem:[#allocation19 + $0x34] sm:$0xf]
        %v5223 = vld [vmem:[#allocation19 + $0x38] sm:$0xf]
        %v5224 = vld [vmem:[#allocation19 + $0x3c] sm:$0xf]
        %v5241 = vunpack.c.l.b16 %v5209
        %v5242 = vunpack.c.l.b16 %v5210
        %v5243 = vunpack.c.l.b16 %v5211
        %v5244 = vunpack.c.l.b16 %v5212
        %v5245 = vunpack.c.l.b16 %v5213
        %v5246 = vunpack.c.l.b16 %v5214
        %v5247 = vunpack.c.l.b16 %v5215
        %v5248 = vunpack.c.l.b16 %v5216
        %v5249 = vunpack.c.l.b16 %v5217
        %v5250 = vunpack.c.l.b16 %v5218
        %v5251 = vunpack.c.l.b16 %v5219
        %v5252 = vunpack.c.l.b16 %v5220
        %v5253 = vunpack.c.l.b16 %v5221
        %v5254 = vunpack.c.l.b16 %v5222
        %v5255 = vunpack.c.l.b16 %v5223
        %v5256 = vunpack.c.l.b16 %v5224
        %v5257 = vpack.c.b16 %v5242, %v5241
        %v5258 = vpack.c.b16 %v5244, %v5243
        %v5259 = vpack.c.b16 %v5246, %v5245
        %v5260 = vpack.c.b16 %v5248, %v5247
        %v5261 = vpack.c.b16 %v5250, %v5249
        %v5262 = vpack.c.b16 %v5252, %v5251
        %v5263 = vpack.c.b16 %v5254, %v5253
        %v5264 = vpack.c.b16 %v5256, %v5255
        %5273 = vmatpush.bf16.msra.mxu0 %v5264
        %5274 = vmatpush.bf16.msra.mxu0 %v5263
        %5275 = vmatpush.bf16.msra.mxu0 %v5262
        %5276 = vmatpush.bf16.msra.mxu0 %v5261
        %5277 = vmatpush.bf16.msra.mxu0 %v5260
        %5278 = vmatpush.bf16.msra.mxu0 %v5259
        %5279 = vmatpush.bf16.msra.mxu0 %v5258
        %5280 = vmatpush.bf16.msra.mxu0 %v5257
        %5281 = vmatmul.bf16.gmra.mxu0 %v5208
        %v5282 = vpop.f32.mrf.mxu0
        %v5283 = vadd.f32 0.0, %v5282
        %v5284 = vpop.f32.mrf.mxu0
        %5285 = vdwg.mxu0
        %v5302 = vunpack.c.l.b16 %v5185
        %v5303 = vunpack.c.l.b16 %v5186
        %v5304 = vunpack.c.l.b16 %v5187
        %v5305 = vunpack.c.l.b16 %v5188
        %v5306 = vunpack.c.l.b16 %v5189
        %v5307 = vunpack.c.l.b16 %v5190
        %v5308 = vunpack.c.l.b16 %v5191
        %v5309 = vunpack.c.l.b16 %v5192
        %v5310 = vunpack.c.l.b16 %v5193
        %v5311 = vunpack.c.l.b16 %v5194
        %v5312 = vunpack.c.l.b16 %v5195
        %v5313 = vunpack.c.l.b16 %v5196
        %v5314 = vunpack.c.l.b16 %v5197
        %v5315 = vunpack.c.l.b16 %v5198
        %v5316 = vunpack.c.l.b16 %v5199
        %v5317 = vunpack.c.l.b16 %v5200
        %v5318 = vpack.c.b16 %v5303, %v5302
        %v5319 = vpack.c.b16 %v5305, %v5304
        %v5320 = vpack.c.b16 %v5307, %v5306
        %v5321 = vpack.c.b16 %v5309, %v5308
        %v5322 = vpack.c.b16 %v5311, %v5310
        %v5323 = vpack.c.b16 %v5313, %v5312
        %v5324 = vpack.c.b16 %v5315, %v5314
        %v5325 = vpack.c.b16 %v5317, %v5316
        %5334 = vmatpush.bf16.msra.mxu0 %v5325
        %5335 = vmatpush.bf16.msra.mxu0 %v5324
        %5336 = vmatpush.bf16.msra.mxu0 %v5323
        %5337 = vmatpush.bf16.msra.mxu0 %v5322
        %5338 = vmatpush.bf16.msra.mxu0 %v5321
        %5339 = vmatpush.bf16.msra.mxu0 %v5320
        %5340 = vmatpush.bf16.msra.mxu0 %v5319
        %5341 = vmatpush.bf16.msra.mxu0 %v5318
        %5342 = vmatmul.bf16.gmra.mxu0 %v5183
        %v5343 = vpop.f32.mrf.mxu0
        %v5344 = vadd.f32 %v5283, %v5343
        %v5345 = vpop.f32.mrf.mxu0
        %5346 = vdwg.mxu0
        %v5347 = vshrl.u32 %v5203, 16
        %v5350 = vsel %vm2027, %v5347, 0
        %s5351 = scalar_lea.vmem [#allocation19], 128
        %v5352 = vld [vmem:[%s5351] sm:$0xf]
        %v5353 = vld [vmem:[%s5351 + $0x4] sm:$0xf]
        %v5354 = vld [vmem:[%s5351 + $0x8] sm:$0xf]
        %v5355 = vld [vmem:[%s5351 + $0xc] sm:$0xf]
        %v5356 = vld [vmem:[%s5351 + $0x10] sm:$0xf]
        %v5357 = vld [vmem:[%s5351 + $0x14] sm:$0xf]
        %v5358 = vld [vmem:[%s5351 + $0x18] sm:$0xf]
        %v5359 = vld [vmem:[%s5351 + $0x1c] sm:$0xf]
        %v5360 = vld [vmem:[%s5351 + $0x20] sm:$0xf]
        %v5361 = vld [vmem:[%s5351 + $0x24] sm:$0xf]
        %v5362 = vld [vmem:[%s5351 + $0x28] sm:$0xf]
        %v5363 = vld [vmem:[%s5351 + $0x2c] sm:$0xf]
        %v5364 = vld [vmem:[%s5351 + $0x30] sm:$0xf]
        %v5365 = vld [vmem:[%s5351 + $0x34] sm:$0xf]
        %v5366 = vld [vmem:[%s5351 + $0x38] sm:$0xf]
        %v5367 = vld [vmem:[%s5351 + $0x3c] sm:$0xf]
        %v5384 = vunpack.c.l.b16 %v5352
        %v5385 = vunpack.c.l.b16 %v5353
        %v5386 = vunpack.c.l.b16 %v5354
        %v5387 = vunpack.c.l.b16 %v5355
        %v5388 = vunpack.c.l.b16 %v5356
        %v5389 = vunpack.c.l.b16 %v5357
        %v5390 = vunpack.c.l.b16 %v5358
        %v5391 = vunpack.c.l.b16 %v5359
        %v5392 = vunpack.c.l.b16 %v5360
        %v5393 = vunpack.c.l.b16 %v5361
        %v5394 = vunpack.c.l.b16 %v5362
        %v5395 = vunpack.c.l.b16 %v5363
        %v5396 = vunpack.c.l.b16 %v5364
        %v5397 = vunpack.c.l.b16 %v5365
        %v5398 = vunpack.c.l.b16 %v5366
        %v5399 = vunpack.c.l.b16 %v5367
        %v5400 = vpack.c.b16 %v5385, %v5384
        %v5401 = vpack.c.b16 %v5387, %v5386
        %v5402 = vpack.c.b16 %v5389, %v5388
        %v5403 = vpack.c.b16 %v5391, %v5390
        %v5404 = vpack.c.b16 %v5393, %v5392
        %v5405 = vpack.c.b16 %v5395, %v5394
        %v5406 = vpack.c.b16 %v5397, %v5396
        %v5407 = vpack.c.b16 %v5399, %v5398
        %5416 = vmatpush.bf16.msra.mxu0 %v5407
        %5417 = vmatpush.bf16.msra.mxu0 %v5406
        %5418 = vmatpush.bf16.msra.mxu0 %v5405
        %5419 = vmatpush.bf16.msra.mxu0 %v5404
        %5420 = vmatpush.bf16.msra.mxu0 %v5403
        %5421 = vmatpush.bf16.msra.mxu0 %v5402
        %5422 = vmatpush.bf16.msra.mxu0 %v5401
        %5423 = vmatpush.bf16.msra.mxu0 %v5400
        %5424 = vmatmul.bf16.gmra.mxu0 %v5350
        %v5425 = vpop.f32.mrf.mxu0
        %v5426 = vadd.f32 0.0, %v5425
        %v5427 = vpop.f32.mrf.mxu0
        %5428 = vdwg.mxu0
        %v5429 = vadd.f32 %v5344, %v5426
        %v5430 = vld [vmem:[%s63] sm:$0x1]
        %v5432 = vperm.slane %v5430, 0
        %v5434 = vadd.f32 %v5429, %v5432
        %v5435 = vmax.f32 %v5434, 0.0
        %v5436 = vpack.c.bf16 %v5435, %v5435
        %v5437 = vld [vmem:[#allocation20] sm:$0xf]
        %v5438 = vld [vmem:[#allocation20 + $0x4] sm:$0xf]
        %v5439 = vld [vmem:[#allocation20 + $0x8] sm:$0xf]
        %v5440 = vld [vmem:[#allocation20 + $0xc] sm:$0xf]
        %v5441 = vld [vmem:[#allocation20 + $0x10] sm:$0xf]
        %v5442 = vld [vmem:[#allocation20 + $0x14] sm:$0xf]
        %v5443 = vld [vmem:[#allocation20 + $0x18] sm:$0xf]
        %v5444 = vld [vmem:[#allocation20 + $0x1c] sm:$0xf]
        %v5445 = vld [vmem:[#allocation20 + $0x20] sm:$0xf]
        %v5446 = vld [vmem:[#allocation20 + $0x24] sm:$0xf]
        %v5447 = vld [vmem:[#allocation20 + $0x28] sm:$0xf]
        %v5448 = vld [vmem:[#allocation20 + $0x2c] sm:$0xf]
        %v5449 = vld [vmem:[#allocation20 + $0x30] sm:$0xf]
        %v5450 = vld [vmem:[#allocation20 + $0x34] sm:$0xf]
        %v5451 = vld [vmem:[#allocation20 + $0x38] sm:$0xf]
        %v5452 = vld [vmem:[#allocation20 + $0x3c] sm:$0xf]
        %v5453 = vld [vmem:[%s67] sm:$0x1]
        %v5455 = vperm.slane %v5453, 0
        %v5473 = vunpack.c.l.b16 %v5437
        %v5474 = vunpack.c.l.b16 %v5438
        %v5475 = vunpack.c.l.b16 %v5439
        %v5476 = vunpack.c.l.b16 %v5440
        %v5477 = vunpack.c.l.b16 %v5441
        %v5478 = vunpack.c.l.b16 %v5442
        %v5479 = vunpack.c.l.b16 %v5443
        %v5480 = vunpack.c.l.b16 %v5444
        %v5481 = vunpack.c.l.b16 %v5445
        %v5482 = vunpack.c.l.b16 %v5446
        %v5483 = vunpack.c.l.b16 %v5447
        %v5484 = vunpack.c.l.b16 %v5448
        %v5485 = vunpack.c.l.b16 %v5449
        %v5486 = vunpack.c.l.b16 %v5450
        %v5487 = vunpack.c.l.b16 %v5451
        %v5488 = vunpack.c.l.b16 %v5452
        %v5489 = vpack.c.b16 %v5474, %v5473
        %v5490 = vpack.c.b16 %v5476, %v5475
        %v5491 = vpack.c.b16 %v5478, %v5477
        %v5492 = vpack.c.b16 %v5480, %v5479
        %v5493 = vpack.c.b16 %v5482, %v5481
        %v5494 = vpack.c.b16 %v5484, %v5483
        %v5495 = vpack.c.b16 %v5486, %v5485
        %v5496 = vpack.c.b16 %v5488, %v5487
        %5505 = vmatpush.bf16.msra.mxu0 %v5496
        %5506 = vmatpush.bf16.msra.mxu0 %v5495
        %5507 = vmatpush.bf16.msra.mxu0 %v5494
        %5508 = vmatpush.bf16.msra.mxu0 %v5493
        %5509 = vmatpush.bf16.msra.mxu0 %v5492
        %5510 = vmatpush.bf16.msra.mxu0 %v5491
        %5511 = vmatpush.bf16.msra.mxu0 %v5490
        %5512 = vmatpush.bf16.msra.mxu0 %v5489
        %5513 = vmatmul.bf16.gmra.mxu0 %v5436
        %v5514 = vpop.f32.mrf.mxu0
        %v5515 = vadd.f32 %v5455, %v5514
        %v5516 = vpop.f32.mrf.mxu0
        %5517 = vdwg.mxu0
        %s5518 = scalar_lea.vmem [#allocation20], 64
        %v5519 = vld [vmem:[%s5518] sm:$0xf]
        %v5520 = vld [vmem:[%s5518 + $0x4] sm:$0xf]
        %v5521 = vld [vmem:[%s5518 + $0x8] sm:$0xf]
        %v5522 = vld [vmem:[%s5518 + $0xc] sm:$0xf]
        %v5523 = vld [vmem:[%s5518 + $0x10] sm:$0xf]
        %v5524 = vld [vmem:[%s5518 + $0x14] sm:$0xf]
        %v5525 = vld [vmem:[%s5518 + $0x18] sm:$0xf]
        %v5526 = vld [vmem:[%s5518 + $0x1c] sm:$0xf]
        %v5527 = vld [vmem:[%s5518 + $0x20] sm:$0xf]
        %v5528 = vld [vmem:[%s5518 + $0x24] sm:$0xf]
        %v5529 = vld [vmem:[%s5518 + $0x28] sm:$0xf]
        %v5530 = vld [vmem:[%s5518 + $0x2c] sm:$0xf]
        %v5531 = vld [vmem:[%s5518 + $0x30] sm:$0xf]
        %v5532 = vld [vmem:[%s5518 + $0x34] sm:$0xf]
        %v5533 = vld [vmem:[%s5518 + $0x38] sm:$0xf]
        %v5534 = vld [vmem:[%s5518 + $0x3c] sm:$0xf]
        %v5551 = vunpack.c.l.b16 %v5519
        %v5552 = vunpack.c.l.b16 %v5520
        %v5553 = vunpack.c.l.b16 %v5521
        %v5554 = vunpack.c.l.b16 %v5522
        %v5555 = vunpack.c.l.b16 %v5523
        %v5556 = vunpack.c.l.b16 %v5524
        %v5557 = vunpack.c.l.b16 %v5525
        %v5558 = vunpack.c.l.b16 %v5526
        %v5559 = vunpack.c.l.b16 %v5527
        %v5560 = vunpack.c.l.b16 %v5528
        %v5561 = vunpack.c.l.b16 %v5529
        %v5562 = vunpack.c.l.b16 %v5530
        %v5563 = vunpack.c.l.b16 %v5531
        %v5564 = vunpack.c.l.b16 %v5532
        %v5565 = vunpack.c.l.b16 %v5533
        %v5566 = vunpack.c.l.b16 %v5534
        %v5567 = vpack.c.b16 %v5552, %v5551
        %v5568 = vpack.c.b16 %v5554, %v5553
        %v5569 = vpack.c.b16 %v5556, %v5555
        %v5570 = vpack.c.b16 %v5558, %v5557
        %v5571 = vpack.c.b16 %v5560, %v5559
        %v5572 = vpack.c.b16 %v5562, %v5561
        %v5573 = vpack.c.b16 %v5564, %v5563
        %v5574 = vpack.c.b16 %v5566, %v5565
        %5583 = vmatpush.bf16.msra.mxu0 %v5574
        %5584 = vmatpush.bf16.msra.mxu0 %v5573
        %5585 = vmatpush.bf16.msra.mxu0 %v5572
        %5586 = vmatpush.bf16.msra.mxu0 %v5571
        %5587 = vmatpush.bf16.msra.mxu0 %v5570
        %5588 = vmatpush.bf16.msra.mxu0 %v5569
        %5589 = vmatpush.bf16.msra.mxu0 %v5568
        %5590 = vmatpush.bf16.msra.mxu0 %v5567
        %5591 = vmatmul.bf16.gmra.mxu0 %v5436
        %v5592 = vpop.f32.mrf.mxu0
        %v5593 = vadd.f32 %v5455, %v5592
        %v5594 = vpop.f32.mrf.mxu0
        %5595 = vdwg.mxu0
        %v5596 = vpack.c.bf16 %v5515, %v5515
        %v5597 = vpack.c.bf16 %v5593, %v5593
        %v5598 = vlaneseq
        %v5599 = vshrl.u32 %v5598, 7
        %v5600 = vlaneseq
        %v5601 = vand.u32 %v5600, 127
        %v5602 = vmul.u32 %v5601, 2
        %vm5603 = vcmp.eq.s32.totalorder %v5599, %v5602
        %v5604 = vsel %vm5603, 1, 0
        %v5605 = vcvt.s32.f32 %v5604
        %v5606 = vpack.c.bf16 %v5605, %v5605
        %v5607 = vadd.s32 %v5602, 1
        %vm5608 = vcmp.eq.s32.totalorder %v5599, %v5607
        %v5609 = vsel %vm5608, 1, 0
        %v5610 = vcvt.s32.f32 %v5609
        %v5611 = vpack.c.bf16 %v5610, %v5610
        %vm5612 = vcmask 15360
        %v5614 = vsel %vm5612, %v5611, 0
        %vm5616 = vcmask 1040384
        %v5618 = vsel %vm5616, %v5597, 0
        %5620 = vmatpush.bf16.msra.mxu0 0
        %5621 = vmatpush.bf16.msra.mxu0 0
        %5622 = vmatpush.bf16.msra.mxu0 0
        %5623 = vmatpush.bf16.msra.mxu0 0
        %5624 = vmatpush.bf16.msra.mxu0 0
        %5625 = vmatpush.bf16.msra.mxu0 0
        %5626 = vmatpush.bf16.msra.mxu0 0
        %5627 = vmatpush.bf16.msra.mxu0 %v5618
        %5628 = vmatmul.bf16.gmra.mxu0 %v5614
        %v5629 = vpop.f32.mrf.mxu0
        %v5630 = vadd.f32 0.0, %v5629
        %v5631 = vpop.f32.mrf.mxu0
        %5632 = vdwg.mxu0
        %v5634 = vsel %vm5612, %v5606, 0
        %v5637 = vsel %vm5616, %v5596, 0
        %5639 = vmatpush.bf16.msra.mxu0 0
        %5640 = vmatpush.bf16.msra.mxu0 0
        %5641 = vmatpush.bf16.msra.mxu0 0
        %5642 = vmatpush.bf16.msra.mxu0 0
        %5643 = vmatpush.bf16.msra.mxu0 0
        %5644 = vmatpush.bf16.msra.mxu0 0
        %5645 = vmatpush.bf16.msra.mxu0 0
        %5646 = vmatpush.bf16.msra.mxu0 %v5637
        %5647 = vmatmul.bf16.gmra.mxu0 %v5634
        %v5648 = vpop.f32.mrf.mxu0
        %v5649 = vadd.f32 %v5630, %v5648
        %v5650 = vpop.f32.mrf.mxu0
        %5651 = vdwg.mxu0
        %v5652 = vpack.c.bf16 %v5649, %v5649
        %s5653 = scalar_lea.vmem [#allocation22], 64
        %v5654 = vld [vmem:[%s5653] sm:$0xf]
        %v5655 = vld [vmem:[%s5653 + $0x4] sm:$0xf]
        %v5656 = vld [vmem:[%s5653 + $0x8] sm:$0xf]
        %v5657 = vld [vmem:[%s5653 + $0xc] sm:$0xf]
        %v5658 = vld [vmem:[%s5653 + $0x10] sm:$0xf]
        %v5659 = vld [vmem:[%s5653 + $0x14] sm:$0xf]
        %v5660 = vld [vmem:[%s5653 + $0x18] sm:$0xf]
        %v5661 = vld [vmem:[%s5653 + $0x1c] sm:$0xf]
        %v5662 = vld [vmem:[%s5653 + $0x20] sm:$0xf]
        %v5663 = vld [vmem:[%s5653 + $0x24] sm:$0xf]
        %v5664 = vld [vmem:[%s5653 + $0x28] sm:$0xf]
        %v5665 = vld [vmem:[%s5653 + $0x2c] sm:$0xf]
        %v5666 = vld [vmem:[%s5653 + $0x30] sm:$0xf]
        %v5667 = vld [vmem:[%s5653 + $0x34] sm:$0xf]
        %v5668 = vld [vmem:[%s5653 + $0x38] sm:$0xf]
        %v5669 = vld [vmem:[%s5653 + $0x3c] sm:$0xf]
        %s5670 = scalar_lea.vmem [#allocation23], 64
        %v5671 = vld [vmem:[%s5670] sm:$0xf]
        %v5672 = vld [vmem:[%s5670 + $0x4] sm:$0xf]
        %v5673 = vld [vmem:[%s5670 + $0x8] sm:$0xf]
        %v5674 = vld [vmem:[%s5670 + $0xc] sm:$0xf]
        %v5675 = vld [vmem:[%s5670 + $0x10] sm:$0xf]
        %v5676 = vld [vmem:[%s5670 + $0x14] sm:$0xf]
        %v5677 = vld [vmem:[%s5670 + $0x18] sm:$0xf]
        %v5678 = vld [vmem:[%s5670 + $0x1c] sm:$0xf]
        %v5679 = vld [vmem:[%s5670 + $0x20] sm:$0xf]
        %v5680 = vld [vmem:[%s5670 + $0x24] sm:$0xf]
        %v5681 = vld [vmem:[%s5670 + $0x28] sm:$0xf]
        %v5682 = vld [vmem:[%s5670 + $0x2c] sm:$0xf]
        %v5683 = vld [vmem:[%s5670 + $0x30] sm:$0xf]
        %v5684 = vld [vmem:[%s5670 + $0x34] sm:$0xf]
        %v5685 = vld [vmem:[%s5670 + $0x38] sm:$0xf]
        %v5686 = vld [vmem:[%s5670 + $0x3c] sm:$0xf]
        %v5703 = vunpack.c.l.b16 %v5671
        %v5704 = vunpack.c.l.b16 %v5672
        %v5705 = vunpack.c.l.b16 %v5673
        %v5706 = vunpack.c.l.b16 %v5674
        %v5707 = vunpack.c.l.b16 %v5675
        %v5708 = vunpack.c.l.b16 %v5676
        %v5709 = vunpack.c.l.b16 %v5677
        %v5710 = vunpack.c.l.b16 %v5678
        %v5711 = vunpack.c.l.b16 %v5679
        %v5712 = vunpack.c.l.b16 %v5680
        %v5713 = vunpack.c.l.b16 %v5681
        %v5714 = vunpack.c.l.b16 %v5682
        %v5715 = vunpack.c.l.b16 %v5683
        %v5716 = vunpack.c.l.b16 %v5684
        %v5717 = vunpack.c.l.b16 %v5685
        %v5718 = vunpack.c.l.b16 %v5686
        %v5719 = vpack.c.b16 %v5704, %v5703
        %v5720 = vpack.c.b16 %v5706, %v5705
        %v5721 = vpack.c.b16 %v5708, %v5707
        %v5722 = vpack.c.b16 %v5710, %v5709
        %v5723 = vpack.c.b16 %v5712, %v5711
        %v5724 = vpack.c.b16 %v5714, %v5713
        %v5725 = vpack.c.b16 %v5716, %v5715
        %v5726 = vpack.c.b16 %v5718, %v5717
        %5735 = vmatpush.bf16.msra.mxu0 %v5726
        %5736 = vmatpush.bf16.msra.mxu0 %v5725
        %5737 = vmatpush.bf16.msra.mxu0 %v5724
        %5738 = vmatpush.bf16.msra.mxu0 %v5723
        %5739 = vmatpush.bf16.msra.mxu0 %v5722
        %5740 = vmatpush.bf16.msra.mxu0 %v5721
        %5741 = vmatpush.bf16.msra.mxu0 %v5720
        %5742 = vmatpush.bf16.msra.mxu0 %v5719
        %5743 = vmatmul.bf16.gmra.mxu0 %v3641
        %v5744 = vpop.f32.mrf.mxu0
        %v5745 = vadd.f32 0.0, %v5744
        %v5746 = vpop.f32.mrf.mxu0
        %5747 = vdwg.mxu0
        %v5764 = vunpack.c.l.b16 %v5654
        %v5765 = vunpack.c.l.b16 %v5655
        %v5766 = vunpack.c.l.b16 %v5656
        %v5767 = vunpack.c.l.b16 %v5657
        %v5768 = vunpack.c.l.b16 %v5658
        %v5769 = vunpack.c.l.b16 %v5659
        %v5770 = vunpack.c.l.b16 %v5660
        %v5771 = vunpack.c.l.b16 %v5661
        %v5772 = vunpack.c.l.b16 %v5662
        %v5773 = vunpack.c.l.b16 %v5663
        %v5774 = vunpack.c.l.b16 %v5664
        %v5775 = vunpack.c.l.b16 %v5665
        %v5776 = vunpack.c.l.b16 %v5666
        %v5777 = vunpack.c.l.b16 %v5667
        %v5778 = vunpack.c.l.b16 %v5668
        %v5779 = vunpack.c.l.b16 %v5669
        %v5780 = vpack.c.b16 %v5765, %v5764
        %v5781 = vpack.c.b16 %v5767, %v5766
        %v5782 = vpack.c.b16 %v5769, %v5768
        %v5783 = vpack.c.b16 %v5771, %v5770
        %v5784 = vpack.c.b16 %v5773, %v5772
        %v5785 = vpack.c.b16 %v5775, %v5774
        %v5786 = vpack.c.b16 %v5777, %v5776
        %v5787 = vpack.c.b16 %v5779, %v5778
        %5796 = vmatpush.bf16.msra.mxu0 %v5787
        %5797 = vmatpush.bf16.msra.mxu0 %v5786
        %5798 = vmatpush.bf16.msra.mxu0 %v5785
        %5799 = vmatpush.bf16.msra.mxu0 %v5784
        %5800 = vmatpush.bf16.msra.mxu0 %v5783
        %5801 = vmatpush.bf16.msra.mxu0 %v5782
        %5802 = vmatpush.bf16.msra.mxu0 %v5781
        %5803 = vmatpush.bf16.msra.mxu0 %v5780
        %5804 = vmatmul.bf16.gmra.mxu0 %v5652
        %v5805 = vpop.f32.mrf.mxu0
        %v5806 = vadd.f32 %v5745, %v5805
        %v5807 = vpop.f32.mrf.mxu0
        %5808 = vdwg.mxu0
        %v5810 = vunpack.c.l.b16 %v5652
        %v5811 = vpack.c.b16 %v5810, %v5810
        %v5813 = vshrl.u32 %v5811, 16
        %v5815 = vrot.slane %v5813, 7
        %v5816 = vshll.u32 %v5811, 16
        %v5818 = vor.u32 %v5815, %v5816
        %v5820 = vsel %vm2027, 0, %v5818
        %v5821 = vld [vmem:[#allocation22] sm:$0xf]
        %v5822 = vld [vmem:[#allocation22 + $0x4] sm:$0xf]
        %v5823 = vld [vmem:[#allocation22 + $0x8] sm:$0xf]
        %v5824 = vld [vmem:[#allocation22 + $0xc] sm:$0xf]
        %v5825 = vld [vmem:[#allocation22 + $0x10] sm:$0xf]
        %v5826 = vld [vmem:[#allocation22 + $0x14] sm:$0xf]
        %v5827 = vld [vmem:[#allocation22 + $0x18] sm:$0xf]
        %v5828 = vld [vmem:[#allocation22 + $0x1c] sm:$0xf]
        %v5829 = vld [vmem:[#allocation22 + $0x20] sm:$0xf]
        %v5830 = vld [vmem:[#allocation22 + $0x24] sm:$0xf]
        %v5831 = vld [vmem:[#allocation22 + $0x28] sm:$0xf]
        %v5832 = vld [vmem:[#allocation22 + $0x2c] sm:$0xf]
        %v5833 = vld [vmem:[#allocation22 + $0x30] sm:$0xf]
        %v5834 = vld [vmem:[#allocation22 + $0x34] sm:$0xf]
        %v5835 = vld [vmem:[#allocation22 + $0x38] sm:$0xf]
        %v5836 = vld [vmem:[#allocation22 + $0x3c] sm:$0xf]
        %v5853 = vunpack.c.l.b16 %v5821
        %v5854 = vunpack.c.l.b16 %v5822
        %v5855 = vunpack.c.l.b16 %v5823
        %v5856 = vunpack.c.l.b16 %v5824
        %v5857 = vunpack.c.l.b16 %v5825
        %v5858 = vunpack.c.l.b16 %v5826
        %v5859 = vunpack.c.l.b16 %v5827
        %v5860 = vunpack.c.l.b16 %v5828
        %v5861 = vunpack.c.l.b16 %v5829
        %v5862 = vunpack.c.l.b16 %v5830
        %v5863 = vunpack.c.l.b16 %v5831
        %v5864 = vunpack.c.l.b16 %v5832
        %v5865 = vunpack.c.l.b16 %v5833
        %v5866 = vunpack.c.l.b16 %v5834
        %v5867 = vunpack.c.l.b16 %v5835
        %v5868 = vunpack.c.l.b16 %v5836
        %v5869 = vpack.c.b16 %v5854, %v5853
        %v5870 = vpack.c.b16 %v5856, %v5855
        %v5871 = vpack.c.b16 %v5858, %v5857
        %v5872 = vpack.c.b16 %v5860, %v5859
        %v5873 = vpack.c.b16 %v5862, %v5861
        %v5874 = vpack.c.b16 %v5864, %v5863
        %v5875 = vpack.c.b16 %v5866, %v5865
        %v5876 = vpack.c.b16 %v5868, %v5867
        %5885 = vmatpush.bf16.msra.mxu0 %v5876
        %5886 = vmatpush.bf16.msra.mxu0 %v5875
        %5887 = vmatpush.bf16.msra.mxu0 %v5874
        %5888 = vmatpush.bf16.msra.mxu0 %v5873
        %5889 = vmatpush.bf16.msra.mxu0 %v5872
        %5890 = vmatpush.bf16.msra.mxu0 %v5871
        %5891 = vmatpush.bf16.msra.mxu0 %v5870
        %5892 = vmatpush.bf16.msra.mxu0 %v5869
        %5893 = vmatmul.bf16.gmra.mxu0 %v5820
        %v5894 = vpop.f32.mrf.mxu0
        %v5895 = vadd.f32 0.0, %v5894
        %v5896 = vpop.f32.mrf.mxu0
        %5897 = vdwg.mxu0
        %v5898 = vadd.f32 %v5806, %v5895
        %v5899 = vrot.slane %v5816, 1
        %v5900 = vor.u32 %v5813, %v5899
        %v5902 = vsel %vm3326, %v5900, 0
        %s5903 = scalar_lea.vmem [#allocation22], 128
        %v5904 = vld [vmem:[%s5903] sm:$0xf]
        %v5905 = vld [vmem:[%s5903 + $0x4] sm:$0xf]
        %v5906 = vld [vmem:[%s5903 + $0x8] sm:$0xf]
        %v5907 = vld [vmem:[%s5903 + $0xc] sm:$0xf]
        %v5908 = vld [vmem:[%s5903 + $0x10] sm:$0xf]
        %v5909 = vld [vmem:[%s5903 + $0x14] sm:$0xf]
        %v5910 = vld [vmem:[%s5903 + $0x18] sm:$0xf]
        %v5911 = vld [vmem:[%s5903 + $0x1c] sm:$0xf]
        %v5912 = vld [vmem:[%s5903 + $0x20] sm:$0xf]
        %v5913 = vld [vmem:[%s5903 + $0x24] sm:$0xf]
        %v5914 = vld [vmem:[%s5903 + $0x28] sm:$0xf]
        %v5915 = vld [vmem:[%s5903 + $0x2c] sm:$0xf]
        %v5916 = vld [vmem:[%s5903 + $0x30] sm:$0xf]
        %v5917 = vld [vmem:[%s5903 + $0x34] sm:$0xf]
        %v5918 = vld [vmem:[%s5903 + $0x38] sm:$0xf]
        %v5919 = vld [vmem:[%s5903 + $0x3c] sm:$0xf]
        %v5936 = vunpack.c.l.b16 %v5904
        %v5937 = vunpack.c.l.b16 %v5905
        %v5938 = vunpack.c.l.b16 %v5906
        %v5939 = vunpack.c.l.b16 %v5907
        %v5940 = vunpack.c.l.b16 %v5908
        %v5941 = vunpack.c.l.b16 %v5909
        %v5942 = vunpack.c.l.b16 %v5910
        %v5943 = vunpack.c.l.b16 %v5911
        %v5944 = vunpack.c.l.b16 %v5912
        %v5945 = vunpack.c.l.b16 %v5913
        %v5946 = vunpack.c.l.b16 %v5914
        %v5947 = vunpack.c.l.b16 %v5915
        %v5948 = vunpack.c.l.b16 %v5916
        %v5949 = vunpack.c.l.b16 %v5917
        %v5950 = vunpack.c.l.b16 %v5918
        %v5951 = vunpack.c.l.b16 %v5919
        %v5952 = vpack.c.b16 %v5937, %v5936
        %v5953 = vpack.c.b16 %v5939, %v5938
        %v5954 = vpack.c.b16 %v5941, %v5940
        %v5955 = vpack.c.b16 %v5943, %v5942
        %v5956 = vpack.c.b16 %v5945, %v5944
        %v5957 = vpack.c.b16 %v5947, %v5946
        %v5958 = vpack.c.b16 %v5949, %v5948
        %v5959 = vpack.c.b16 %v5951, %v5950
        %5968 = vmatpush.bf16.msra.mxu0 %v5959
        %5969 = vmatpush.bf16.msra.mxu0 %v5958
        %5970 = vmatpush.bf16.msra.mxu0 %v5957
        %5971 = vmatpush.bf16.msra.mxu0 %v5956
        %5972 = vmatpush.bf16.msra.mxu0 %v5955
        %5973 = vmatpush.bf16.msra.mxu0 %v5954
        %5974 = vmatpush.bf16.msra.mxu0 %v5953
        %5975 = vmatpush.bf16.msra.mxu0 %v5952
        %5976 = vmatmul.bf16.gmra.mxu0 %v5902
        %v5977 = vpop.f32.mrf.mxu0
        %v5978 = vadd.f32 0.0, %v5977
        %v5979 = vpop.f32.mrf.mxu0
        %5980 = vdwg.mxu0
        %v5981 = vadd.f32 %v5898, %v5978
        %v5983 = vunpack.c.l.b16 %v3641
        %v5984 = vpack.c.b16 %v5983, %v5983
        %v5986 = vshrl.u32 %v5984, 16
        %v5988 = vrot.slane %v5986, 7
        %v5989 = vshll.u32 %v5984, 16
        %v5991 = vor.u32 %v5988, %v5989
        %v5993 = vsel %vm2027, 0, %v5991
        %v5994 = vld [vmem:[#allocation23] sm:$0xf]
        %v5995 = vld [vmem:[#allocation23 + $0x4] sm:$0xf]
        %v5996 = vld [vmem:[#allocation23 + $0x8] sm:$0xf]
        %v5997 = vld [vmem:[#allocation23 + $0xc] sm:$0xf]
        %v5998 = vld [vmem:[#allocation23 + $0x10] sm:$0xf]
        %v5999 = vld [vmem:[#allocation23 + $0x14] sm:$0xf]
        %v6000 = vld [vmem:[#allocation23 + $0x18] sm:$0xf]
        %v6001 = vld [vmem:[#allocation23 + $0x1c] sm:$0xf]
        %v6002 = vld [vmem:[#allocation23 + $0x20] sm:$0xf]
        %v6003 = vld [vmem:[#allocation23 + $0x24] sm:$0xf]
        %v6004 = vld [vmem:[#allocation23 + $0x28] sm:$0xf]
        %v6005 = vld [vmem:[#allocation23 + $0x2c] sm:$0xf]
        %v6006 = vld [vmem:[#allocation23 + $0x30] sm:$0xf]
        %v6007 = vld [vmem:[#allocation23 + $0x34] sm:$0xf]
        %v6008 = vld [vmem:[#allocation23 + $0x38] sm:$0xf]
        %v6009 = vld [vmem:[#allocation23 + $0x3c] sm:$0xf]
        %v6026 = vunpack.c.l.b16 %v5994
        %v6027 = vunpack.c.l.b16 %v5995
        %v6028 = vunpack.c.l.b16 %v5996
        %v6029 = vunpack.c.l.b16 %v5997
        %v6030 = vunpack.c.l.b16 %v5998
        %v6031 = vunpack.c.l.b16 %v5999
        %v6032 = vunpack.c.l.b16 %v6000
        %v6033 = vunpack.c.l.b16 %v6001
        %v6034 = vunpack.c.l.b16 %v6002
        %v6035 = vunpack.c.l.b16 %v6003
        %v6036 = vunpack.c.l.b16 %v6004
        %v6037 = vunpack.c.l.b16 %v6005
        %v6038 = vunpack.c.l.b16 %v6006
        %v6039 = vunpack.c.l.b16 %v6007
        %v6040 = vunpack.c.l.b16 %v6008
        %v6041 = vunpack.c.l.b16 %v6009
        %v6042 = vpack.c.b16 %v6027, %v6026
        %v6043 = vpack.c.b16 %v6029, %v6028
        %v6044 = vpack.c.b16 %v6031, %v6030
        %v6045 = vpack.c.b16 %v6033, %v6032
        %v6046 = vpack.c.b16 %v6035, %v6034
        %v6047 = vpack.c.b16 %v6037, %v6036
        %v6048 = vpack.c.b16 %v6039, %v6038
        %v6049 = vpack.c.b16 %v6041, %v6040
        %6058 = vmatpush.bf16.msra.mxu0 %v6049
        %6059 = vmatpush.bf16.msra.mxu0 %v6048
        %6060 = vmatpush.bf16.msra.mxu0 %v6047
        %6061 = vmatpush.bf16.msra.mxu0 %v6046
        %6062 = vmatpush.bf16.msra.mxu0 %v6045
        %6063 = vmatpush.bf16.msra.mxu0 %v6044
        %6064 = vmatpush.bf16.msra.mxu0 %v6043
        %6065 = vmatpush.bf16.msra.mxu0 %v6042
        %6066 = vmatmul.bf16.gmra.mxu0 %v5993
        %v6067 = vpop.f32.mrf.mxu0
        %v6068 = vadd.f32 0.0, %v6067
        %v6069 = vpop.f32.mrf.mxu0
        %6070 = vdwg.mxu0
        %v6071 = vadd.f32 %v5981, %v6068
        %v6072 = vrot.slane %v5989, 1
        %v6073 = vor.u32 %v5986, %v6072
        %v6075 = vsel %vm3326, %v6073, 0
        %s6076 = scalar_lea.vmem [#allocation23], 128
        %v6077 = vld [vmem:[%s6076] sm:$0xf]
        %v6078 = vld [vmem:[%s6076 + $0x4] sm:$0xf]
        %v6079 = vld [vmem:[%s6076 + $0x8] sm:$0xf]
        %v6080 = vld [vmem:[%s6076 + $0xc] sm:$0xf]
        %v6081 = vld [vmem:[%s6076 + $0x10] sm:$0xf]
        %v6082 = vld [vmem:[%s6076 + $0x14] sm:$0xf]
        %v6083 = vld [vmem:[%s6076 + $0x18] sm:$0xf]
        %v6084 = vld [vmem:[%s6076 + $0x1c] sm:$0xf]
        %v6085 = vld [vmem:[%s6076 + $0x20] sm:$0xf]
        %v6086 = vld [vmem:[%s6076 + $0x24] sm:$0xf]
        %v6087 = vld [vmem:[%s6076 + $0x28] sm:$0xf]
        %v6088 = vld [vmem:[%s6076 + $0x2c] sm:$0xf]
        %v6089 = vld [vmem:[%s6076 + $0x30] sm:$0xf]
        %v6090 = vld [vmem:[%s6076 + $0x34] sm:$0xf]
        %v6091 = vld [vmem:[%s6076 + $0x38] sm:$0xf]
        %v6092 = vld [vmem:[%s6076 + $0x3c] sm:$0xf]
        %v6109 = vunpack.c.l.b16 %v6077
        %v6110 = vunpack.c.l.b16 %v6078
        %v6111 = vunpack.c.l.b16 %v6079
        %v6112 = vunpack.c.l.b16 %v6080
        %v6113 = vunpack.c.l.b16 %v6081
        %v6114 = vunpack.c.l.b16 %v6082
        %v6115 = vunpack.c.l.b16 %v6083
        %v6116 = vunpack.c.l.b16 %v6084
        %v6117 = vunpack.c.l.b16 %v6085
        %v6118 = vunpack.c.l.b16 %v6086
        %v6119 = vunpack.c.l.b16 %v6087
        %v6120 = vunpack.c.l.b16 %v6088
        %v6121 = vunpack.c.l.b16 %v6089
        %v6122 = vunpack.c.l.b16 %v6090
        %v6123 = vunpack.c.l.b16 %v6091
        %v6124 = vunpack.c.l.b16 %v6092
        %v6125 = vpack.c.b16 %v6110, %v6109
        %v6126 = vpack.c.b16 %v6112, %v6111
        %v6127 = vpack.c.b16 %v6114, %v6113
        %v6128 = vpack.c.b16 %v6116, %v6115
        %v6129 = vpack.c.b16 %v6118, %v6117
        %v6130 = vpack.c.b16 %v6120, %v6119
        %v6131 = vpack.c.b16 %v6122, %v6121
        %v6132 = vpack.c.b16 %v6124, %v6123
        %6141 = vmatpush.bf16.msra.mxu0 %v6132
        %6142 = vmatpush.bf16.msra.mxu0 %v6131
        %6143 = vmatpush.bf16.msra.mxu0 %v6130
        %6144 = vmatpush.bf16.msra.mxu0 %v6129
        %6145 = vmatpush.bf16.msra.mxu0 %v6128
        %6146 = vmatpush.bf16.msra.mxu0 %v6127
        %6147 = vmatpush.bf16.msra.mxu0 %v6126
        %6148 = vmatpush.bf16.msra.mxu0 %v6125
        %6149 = vmatmul.bf16.gmra.mxu0 %v6075
        %v6150 = vpop.f32.mrf.mxu0
        %v6151 = vadd.f32 0.0, %v6150
        %v6152 = vpop.f32.mrf.mxu0
        %6153 = vdwg.mxu0
        %v6154 = vadd.f32 %v6071, %v6151
        %v6155 = vld [vmem:[%s73] sm:$0x1]
        %v6157 = vperm.slane %v6155, 0
        %v6159 = vadd.f32 %v6154, %v6157
        %v6160 = vmax.f32 %v6159, 0.0
        %v6161 = vpack.c.bf16 %v6160, %v6160
        %s6162 = scalar_lea.vmem [#allocation25], 64
        %v6163 = vld [vmem:[%s6162] sm:$0xf]
        %v6164 = vld [vmem:[%s6162 + $0x4] sm:$0xf]
        %v6165 = vld [vmem:[%s6162 + $0x8] sm:$0xf]
        %v6166 = vld [vmem:[%s6162 + $0xc] sm:$0xf]
        %v6167 = vld [vmem:[%s6162 + $0x10] sm:$0xf]
        %v6168 = vld [vmem:[%s6162 + $0x14] sm:$0xf]
        %v6169 = vld [vmem:[%s6162 + $0x18] sm:$0xf]
        %v6170 = vld [vmem:[%s6162 + $0x1c] sm:$0xf]
        %v6171 = vld [vmem:[%s6162 + $0x20] sm:$0xf]
        %v6172 = vld [vmem:[%s6162 + $0x24] sm:$0xf]
        %v6173 = vld [vmem:[%s6162 + $0x28] sm:$0xf]
        %v6174 = vld [vmem:[%s6162 + $0x2c] sm:$0xf]
        %v6175 = vld [vmem:[%s6162 + $0x30] sm:$0xf]
        %v6176 = vld [vmem:[%s6162 + $0x34] sm:$0xf]
        %v6177 = vld [vmem:[%s6162 + $0x38] sm:$0xf]
        %v6178 = vld [vmem:[%s6162 + $0x3c] sm:$0xf]
        %v6180 = vunpack.c.l.b16 %v6161
        %v6181 = vpack.c.b16 %v6180, %v6180
        %v6183 = vshrl.u32 %v6181, 16
        %v6185 = vrot.slane %v6183, 7
        %v6186 = vshll.u32 %v6181, 16
        %v6188 = vor.u32 %v6185, %v6186
        %v6190 = vsel %vm2027, 0, %v6188
        %v6191 = vld [vmem:[#allocation25] sm:$0xf]
        %v6192 = vld [vmem:[#allocation25 + $0x4] sm:$0xf]
        %v6193 = vld [vmem:[#allocation25 + $0x8] sm:$0xf]
        %v6194 = vld [vmem:[#allocation25 + $0xc] sm:$0xf]
        %v6195 = vld [vmem:[#allocation25 + $0x10] sm:$0xf]
        %v6196 = vld [vmem:[#allocation25 + $0x14] sm:$0xf]
        %v6197 = vld [vmem:[#allocation25 + $0x18] sm:$0xf]
        %v6198 = vld [vmem:[#allocation25 + $0x1c] sm:$0xf]
        %v6199 = vld [vmem:[#allocation25 + $0x20] sm:$0xf]
        %v6200 = vld [vmem:[#allocation25 + $0x24] sm:$0xf]
        %v6201 = vld [vmem:[#allocation25 + $0x28] sm:$0xf]
        %v6202 = vld [vmem:[#allocation25 + $0x2c] sm:$0xf]
        %v6203 = vld [vmem:[#allocation25 + $0x30] sm:$0xf]
        %v6204 = vld [vmem:[#allocation25 + $0x34] sm:$0xf]
        %v6205 = vld [vmem:[#allocation25 + $0x38] sm:$0xf]
        %v6206 = vld [vmem:[#allocation25 + $0x3c] sm:$0xf]
        %v6223 = vunpack.c.l.b16 %v6191
        %v6224 = vunpack.c.l.b16 %v6192
        %v6225 = vunpack.c.l.b16 %v6193
        %v6226 = vunpack.c.l.b16 %v6194
        %v6227 = vunpack.c.l.b16 %v6195
        %v6228 = vunpack.c.l.b16 %v6196
        %v6229 = vunpack.c.l.b16 %v6197
        %v6230 = vunpack.c.l.b16 %v6198
        %v6231 = vunpack.c.l.b16 %v6199
        %v6232 = vunpack.c.l.b16 %v6200
        %v6233 = vunpack.c.l.b16 %v6201
        %v6234 = vunpack.c.l.b16 %v6202
        %v6235 = vunpack.c.l.b16 %v6203
        %v6236 = vunpack.c.l.b16 %v6204
        %v6237 = vunpack.c.l.b16 %v6205
        %v6238 = vunpack.c.l.b16 %v6206
        %v6239 = vpack.c.b16 %v6224, %v6223
        %v6240 = vpack.c.b16 %v6226, %v6225
        %v6241 = vpack.c.b16 %v6228, %v6227
        %v6242 = vpack.c.b16 %v6230, %v6229
        %v6243 = vpack.c.b16 %v6232, %v6231
        %v6244 = vpack.c.b16 %v6234, %v6233
        %v6245 = vpack.c.b16 %v6236, %v6235
        %v6246 = vpack.c.b16 %v6238, %v6237
        %6255 = vmatpush.bf16.msra.mxu0 %v6246
        %6256 = vmatpush.bf16.msra.mxu0 %v6245
        %6257 = vmatpush.bf16.msra.mxu0 %v6244
        %6258 = vmatpush.bf16.msra.mxu0 %v6243
        %6259 = vmatpush.bf16.msra.mxu0 %v6242
        %6260 = vmatpush.bf16.msra.mxu0 %v6241
        %6261 = vmatpush.bf16.msra.mxu0 %v6240
        %6262 = vmatpush.bf16.msra.mxu0 %v6239
        %6263 = vmatmul.bf16.gmra.mxu0 %v6190
        %v6264 = vpop.f32.mrf.mxu0
        %v6265 = vadd.f32 0.0, %v6264
        %v6266 = vpop.f32.mrf.mxu0
        %6267 = vdwg.mxu0
        %v6284 = vunpack.c.l.b16 %v6163
        %v6285 = vunpack.c.l.b16 %v6164
        %v6286 = vunpack.c.l.b16 %v6165
        %v6287 = vunpack.c.l.b16 %v6166
        %v6288 = vunpack.c.l.b16 %v6167
        %v6289 = vunpack.c.l.b16 %v6168
        %v6290 = vunpack.c.l.b16 %v6169
        %v6291 = vunpack.c.l.b16 %v6170
        %v6292 = vunpack.c.l.b16 %v6171
        %v6293 = vunpack.c.l.b16 %v6172
        %v6294 = vunpack.c.l.b16 %v6173
        %v6295 = vunpack.c.l.b16 %v6174
        %v6296 = vunpack.c.l.b16 %v6175
        %v6297 = vunpack.c.l.b16 %v6176
        %v6298 = vunpack.c.l.b16 %v6177
        %v6299 = vunpack.c.l.b16 %v6178
        %v6300 = vpack.c.b16 %v6285, %v6284
        %v6301 = vpack.c.b16 %v6287, %v6286
        %v6302 = vpack.c.b16 %v6289, %v6288
        %v6303 = vpack.c.b16 %v6291, %v6290
        %v6304 = vpack.c.b16 %v6293, %v6292
        %v6305 = vpack.c.b16 %v6295, %v6294
        %v6306 = vpack.c.b16 %v6297, %v6296
        %v6307 = vpack.c.b16 %v6299, %v6298
        %6316 = vmatpush.bf16.msra.mxu0 %v6307
        %6317 = vmatpush.bf16.msra.mxu0 %v6306
        %6318 = vmatpush.bf16.msra.mxu0 %v6305
        %6319 = vmatpush.bf16.msra.mxu0 %v6304
        %6320 = vmatpush.bf16.msra.mxu0 %v6303
        %6321 = vmatpush.bf16.msra.mxu0 %v6302
        %6322 = vmatpush.bf16.msra.mxu0 %v6301
        %6323 = vmatpush.bf16.msra.mxu0 %v6300
        %6324 = vmatmul.bf16.gmra.mxu0 %v6161
        %v6325 = vpop.f32.mrf.mxu0
        %v6326 = vadd.f32 %v6265, %v6325
        %v6327 = vpop.f32.mrf.mxu0
        %6328 = vdwg.mxu0
        %v6329 = vrot.slane %v6186, 1
        %v6330 = vor.u32 %v6183, %v6329
        %v6332 = vsel %vm3326, %v6330, 0
        %s6333 = scalar_lea.vmem [#allocation25], 128
        %v6334 = vld [vmem:[%s6333] sm:$0xf]
        %v6335 = vld [vmem:[%s6333 + $0x4] sm:$0xf]
        %v6336 = vld [vmem:[%s6333 + $0x8] sm:$0xf]
        %v6337 = vld [vmem:[%s6333 + $0xc] sm:$0xf]
        %v6338 = vld [vmem:[%s6333 + $0x10] sm:$0xf]
        %v6339 = vld [vmem:[%s6333 + $0x14] sm:$0xf]
        %v6340 = vld [vmem:[%s6333 + $0x18] sm:$0xf]
        %v6341 = vld [vmem:[%s6333 + $0x1c] sm:$0xf]
        %v6342 = vld [vmem:[%s6333 + $0x20] sm:$0xf]
        %v6343 = vld [vmem:[%s6333 + $0x24] sm:$0xf]
        %v6344 = vld [vmem:[%s6333 + $0x28] sm:$0xf]
        %v6345 = vld [vmem:[%s6333 + $0x2c] sm:$0xf]
        %v6346 = vld [vmem:[%s6333 + $0x30] sm:$0xf]
        %v6347 = vld [vmem:[%s6333 + $0x34] sm:$0xf]
        %v6348 = vld [vmem:[%s6333 + $0x38] sm:$0xf]
        %v6349 = vld [vmem:[%s6333 + $0x3c] sm:$0xf]
        %v6366 = vunpack.c.l.b16 %v6334
        %v6367 = vunpack.c.l.b16 %v6335
        %v6368 = vunpack.c.l.b16 %v6336
        %v6369 = vunpack.c.l.b16 %v6337
        %v6370 = vunpack.c.l.b16 %v6338
        %v6371 = vunpack.c.l.b16 %v6339
        %v6372 = vunpack.c.l.b16 %v6340
        %v6373 = vunpack.c.l.b16 %v6341
        %v6374 = vunpack.c.l.b16 %v6342
        %v6375 = vunpack.c.l.b16 %v6343
        %v6376 = vunpack.c.l.b16 %v6344
        %v6377 = vunpack.c.l.b16 %v6345
        %v6378 = vunpack.c.l.b16 %v6346
        %v6379 = vunpack.c.l.b16 %v6347
        %v6380 = vunpack.c.l.b16 %v6348
        %v6381 = vunpack.c.l.b16 %v6349
        %v6382 = vpack.c.b16 %v6367, %v6366
        %v6383 = vpack.c.b16 %v6369, %v6368
        %v6384 = vpack.c.b16 %v6371, %v6370
        %v6385 = vpack.c.b16 %v6373, %v6372
        %v6386 = vpack.c.b16 %v6375, %v6374
        %v6387 = vpack.c.b16 %v6377, %v6376
        %v6388 = vpack.c.b16 %v6379, %v6378
        %v6389 = vpack.c.b16 %v6381, %v6380
        %6398 = vmatpush.bf16.msra.mxu0 %v6389
        %6399 = vmatpush.bf16.msra.mxu0 %v6388
        %6400 = vmatpush.bf16.msra.mxu0 %v6387
        %6401 = vmatpush.bf16.msra.mxu0 %v6386
        %6402 = vmatpush.bf16.msra.mxu0 %v6385
        %6403 = vmatpush.bf16.msra.mxu0 %v6384
        %6404 = vmatpush.bf16.msra.mxu0 %v6383
        %6405 = vmatpush.bf16.msra.mxu0 %v6382
        %6406 = vmatmul.bf16.gmra.mxu0 %v6332
        %v6407 = vpop.f32.mrf.mxu0
        %v6408 = vadd.f32 0.0, %v6407
        %v6409 = vpop.f32.mrf.mxu0
        %6410 = vdwg.mxu0
        %v6411 = vadd.f32 %v6326, %v6408
        %v6412 = vld [vmem:[%s77] sm:$0x1]
        %v6414 = vperm.slane %v6412, 0
        %v6416 = vadd.f32 %v6411, %v6414
        %v6417 = vmax.f32 %v6416, 0.0
        %v6418 = vpack.c.bf16 %v6417, %v6417
        %v6419 = vld [vmem:[#allocation26] sm:$0xf]
        %v6420 = vld [vmem:[#allocation26 + $0x4] sm:$0xf]
        %v6421 = vld [vmem:[#allocation26 + $0x8] sm:$0xf]
        %v6422 = vld [vmem:[#allocation26 + $0xc] sm:$0xf]
        %v6423 = vld [vmem:[#allocation26 + $0x10] sm:$0xf]
        %v6424 = vld [vmem:[#allocation26 + $0x14] sm:$0xf]
        %v6425 = vld [vmem:[#allocation26 + $0x18] sm:$0xf]
        %v6426 = vld [vmem:[#allocation26 + $0x1c] sm:$0xf]
        %v6427 = vld [vmem:[#allocation26 + $0x20] sm:$0xf]
        %v6428 = vld [vmem:[#allocation26 + $0x24] sm:$0xf]
        %v6429 = vld [vmem:[#allocation26 + $0x28] sm:$0xf]
        %v6430 = vld [vmem:[#allocation26 + $0x2c] sm:$0xf]
        %v6431 = vld [vmem:[#allocation26 + $0x30] sm:$0xf]
        %v6432 = vld [vmem:[#allocation26 + $0x34] sm:$0xf]
        %v6433 = vld [vmem:[#allocation26 + $0x38] sm:$0xf]
        %v6434 = vld [vmem:[#allocation26 + $0x3c] sm:$0xf]
        %v6435 = vld [vmem:[%s81] sm:$0x1]
        %v6437 = vperm.slane %v6435, 0
        %v6455 = vunpack.c.l.b16 %v6419
        %v6456 = vunpack.c.l.b16 %v6420
        %v6457 = vunpack.c.l.b16 %v6421
        %v6458 = vunpack.c.l.b16 %v6422
        %v6459 = vunpack.c.l.b16 %v6423
        %v6460 = vunpack.c.l.b16 %v6424
        %v6461 = vunpack.c.l.b16 %v6425
        %v6462 = vunpack.c.l.b16 %v6426
        %v6463 = vunpack.c.l.b16 %v6427
        %v6464 = vunpack.c.l.b16 %v6428
        %v6465 = vunpack.c.l.b16 %v6429
        %v6466 = vunpack.c.l.b16 %v6430
        %v6467 = vunpack.c.l.b16 %v6431
        %v6468 = vunpack.c.l.b16 %v6432
        %v6469 = vunpack.c.l.b16 %v6433
        %v6470 = vunpack.c.l.b16 %v6434
        %v6471 = vpack.c.b16 %v6456, %v6455
        %v6472 = vpack.c.b16 %v6458, %v6457
        %v6473 = vpack.c.b16 %v6460, %v6459
        %v6474 = vpack.c.b16 %v6462, %v6461
        %v6475 = vpack.c.b16 %v6464, %v6463
        %v6476 = vpack.c.b16 %v6466, %v6465
        %v6477 = vpack.c.b16 %v6468, %v6467
        %v6478 = vpack.c.b16 %v6470, %v6469
        %6487 = vmatpush.bf16.msra.mxu0 %v6478
        %6488 = vmatpush.bf16.msra.mxu0 %v6477
        %6489 = vmatpush.bf16.msra.mxu0 %v6476
        %6490 = vmatpush.bf16.msra.mxu0 %v6475
        %6491 = vmatpush.bf16.msra.mxu0 %v6474
        %6492 = vmatpush.bf16.msra.mxu0 %v6473
        %6493 = vmatpush.bf16.msra.mxu0 %v6472
        %6494 = vmatpush.bf16.msra.mxu0 %v6471
        %6495 = vmatmul.bf16.gmra.mxu0 %v6418
        %v6496 = vpop.f32.mrf.mxu0
        %v6497 = vadd.f32 %v6437, %v6496
        %v6498 = vpop.f32.mrf.mxu0
        %6499 = vdwg.mxu0
        %s6500 = scalar_lea.vmem [#allocation26], 64
        %v6501 = vld [vmem:[%s6500] sm:$0xf]
        %v6502 = vld [vmem:[%s6500 + $0x4] sm:$0xf]
        %v6503 = vld [vmem:[%s6500 + $0x8] sm:$0xf]
        %v6504 = vld [vmem:[%s6500 + $0xc] sm:$0xf]
        %v6505 = vld [vmem:[%s6500 + $0x10] sm:$0xf]
        %v6506 = vld [vmem:[%s6500 + $0x14] sm:$0xf]
        %v6507 = vld [vmem:[%s6500 + $0x18] sm:$0xf]
        %v6508 = vld [vmem:[%s6500 + $0x1c] sm:$0xf]
        %v6509 = vld [vmem:[%s6500 + $0x20] sm:$0xf]
        %v6510 = vld [vmem:[%s6500 + $0x24] sm:$0xf]
        %v6511 = vld [vmem:[%s6500 + $0x28] sm:$0xf]
        %v6512 = vld [vmem:[%s6500 + $0x2c] sm:$0xf]
        %v6513 = vld [vmem:[%s6500 + $0x30] sm:$0xf]
        %v6514 = vld [vmem:[%s6500 + $0x34] sm:$0xf]
        %v6515 = vld [vmem:[%s6500 + $0x38] sm:$0xf]
        %v6516 = vld [vmem:[%s6500 + $0x3c] sm:$0xf]
        %v6533 = vunpack.c.l.b16 %v6501
        %v6534 = vunpack.c.l.b16 %v6502
        %v6535 = vunpack.c.l.b16 %v6503
        %v6536 = vunpack.c.l.b16 %v6504
        %v6537 = vunpack.c.l.b16 %v6505
        %v6538 = vunpack.c.l.b16 %v6506
        %v6539 = vunpack.c.l.b16 %v6507
        %v6540 = vunpack.c.l.b16 %v6508
        %v6541 = vunpack.c.l.b16 %v6509
        %v6542 = vunpack.c.l.b16 %v6510
        %v6543 = vunpack.c.l.b16 %v6511
        %v6544 = vunpack.c.l.b16 %v6512
        %v6545 = vunpack.c.l.b16 %v6513
        %v6546 = vunpack.c.l.b16 %v6514
        %v6547 = vunpack.c.l.b16 %v6515
        %v6548 = vunpack.c.l.b16 %v6516
        %v6549 = vpack.c.b16 %v6534, %v6533
        %v6550 = vpack.c.b16 %v6536, %v6535
        %v6551 = vpack.c.b16 %v6538, %v6537
        %v6552 = vpack.c.b16 %v6540, %v6539
        %v6553 = vpack.c.b16 %v6542, %v6541
        %v6554 = vpack.c.b16 %v6544, %v6543
        %v6555 = vpack.c.b16 %v6546, %v6545
        %v6556 = vpack.c.b16 %v6548, %v6547
        %6565 = vmatpush.bf16.msra.mxu0 %v6556
        %6566 = vmatpush.bf16.msra.mxu0 %v6555
        %6567 = vmatpush.bf16.msra.mxu0 %v6554
        %6568 = vmatpush.bf16.msra.mxu0 %v6553
        %6569 = vmatpush.bf16.msra.mxu0 %v6552
        %6570 = vmatpush.bf16.msra.mxu0 %v6551
        %6571 = vmatpush.bf16.msra.mxu0 %v6550
        %6572 = vmatpush.bf16.msra.mxu0 %v6549
        %6573 = vmatmul.bf16.gmra.mxu0 %v6418
        %v6574 = vpop.f32.mrf.mxu0
        %v6575 = vadd.f32 %v6437, %v6574
        %v6576 = vpop.f32.mrf.mxu0
        %6577 = vdwg.mxu0
        %v6578 = vpack.c.bf16 %v6497, %v6497
        %v6579 = vpack.c.bf16 %v6575, %v6575
        %vm6580 = vcmask 31744
        %v6581 = vsel %vm6580, %v5611, 0
        %vm6583 = vcmask 1041408
        %v6585 = vsel %vm6583, %v6579, 0
        %6587 = vmatpush.bf16.msra.mxu0 0
        %6588 = vmatpush.bf16.msra.mxu0 0
        %6589 = vmatpush.bf16.msra.mxu0 0
        %6590 = vmatpush.bf16.msra.mxu0 0
        %6591 = vmatpush.bf16.msra.mxu0 0
        %6592 = vmatpush.bf16.msra.mxu0 0
        %6593 = vmatpush.bf16.msra.mxu0 0
        %6594 = vmatpush.bf16.msra.mxu0 %v6585
        %6595 = vmatmul.bf16.gmra.mxu0 %v6581
        %v6596 = vpop.f32.mrf.mxu0
        %v6597 = vadd.f32 0.0, %v6596
        %v6598 = vpop.f32.mrf.mxu0
        %6599 = vdwg.mxu0
        %v6600 = vsel %vm6580, %v5606, 0
        %v6603 = vsel %vm6583, %v6578, 0
        %6605 = vmatpush.bf16.msra.mxu0 0
        %6606 = vmatpush.bf16.msra.mxu0 0
        %6607 = vmatpush.bf16.msra.mxu0 0
        %6608 = vmatpush.bf16.msra.mxu0 0
        %6609 = vmatpush.bf16.msra.mxu0 0
        %6610 = vmatpush.bf16.msra.mxu0 0
        %6611 = vmatpush.bf16.msra.mxu0 0
        %6612 = vmatpush.bf16.msra.mxu0 %v6603
        %6613 = vmatmul.bf16.gmra.mxu0 %v6600
        %v6614 = vpop.f32.mrf.mxu0
        %v6615 = vadd.f32 %v6597, %v6614
        %v6616 = vpop.f32.mrf.mxu0
        %6617 = vdwg.mxu0
        %v6618 = vpack.c.bf16 %v6615, %v6615
        %s6619 = scalar_lea.vmem [#allocation28], 64
        %v6620 = vld [vmem:[%s6619] sm:$0xf]
        %v6621 = vld [vmem:[%s6619 + $0x4] sm:$0xf]
        %v6622 = vld [vmem:[%s6619 + $0x8] sm:$0xf]
        %v6623 = vld [vmem:[%s6619 + $0xc] sm:$0xf]
        %v6624 = vld [vmem:[%s6619 + $0x10] sm:$0xf]
        %v6625 = vld [vmem:[%s6619 + $0x14] sm:$0xf]
        %v6626 = vld [vmem:[%s6619 + $0x18] sm:$0xf]
        %v6627 = vld [vmem:[%s6619 + $0x1c] sm:$0xf]
        %v6628 = vld [vmem:[%s6619 + $0x20] sm:$0xf]
        %v6629 = vld [vmem:[%s6619 + $0x24] sm:$0xf]
        %v6630 = vld [vmem:[%s6619 + $0x28] sm:$0xf]
        %v6631 = vld [vmem:[%s6619 + $0x2c] sm:$0xf]
        %v6632 = vld [vmem:[%s6619 + $0x30] sm:$0xf]
        %v6633 = vld [vmem:[%s6619 + $0x34] sm:$0xf]
        %v6634 = vld [vmem:[%s6619 + $0x38] sm:$0xf]
        %v6635 = vld [vmem:[%s6619 + $0x3c] sm:$0xf]
        %s6636 = scalar_lea.vmem [#allocation29], 64
        %v6637 = vld [vmem:[%s6636] sm:$0xf]
        %v6638 = vld [vmem:[%s6636 + $0x4] sm:$0xf]
        %v6639 = vld [vmem:[%s6636 + $0x8] sm:$0xf]
        %v6640 = vld [vmem:[%s6636 + $0xc] sm:$0xf]
        %v6641 = vld [vmem:[%s6636 + $0x10] sm:$0xf]
        %v6642 = vld [vmem:[%s6636 + $0x14] sm:$0xf]
        %v6643 = vld [vmem:[%s6636 + $0x18] sm:$0xf]
        %v6644 = vld [vmem:[%s6636 + $0x1c] sm:$0xf]
        %v6645 = vld [vmem:[%s6636 + $0x20] sm:$0xf]
        %v6646 = vld [vmem:[%s6636 + $0x24] sm:$0xf]
        %v6647 = vld [vmem:[%s6636 + $0x28] sm:$0xf]
        %v6648 = vld [vmem:[%s6636 + $0x2c] sm:$0xf]
        %v6649 = vld [vmem:[%s6636 + $0x30] sm:$0xf]
        %v6650 = vld [vmem:[%s6636 + $0x34] sm:$0xf]
        %v6651 = vld [vmem:[%s6636 + $0x38] sm:$0xf]
        %v6652 = vld [vmem:[%s6636 + $0x3c] sm:$0xf]
        %v6669 = vunpack.c.l.b16 %v6637
        %v6670 = vunpack.c.l.b16 %v6638
        %v6671 = vunpack.c.l.b16 %v6639
        %v6672 = vunpack.c.l.b16 %v6640
        %v6673 = vunpack.c.l.b16 %v6641
        %v6674 = vunpack.c.l.b16 %v6642
        %v6675 = vunpack.c.l.b16 %v6643
        %v6676 = vunpack.c.l.b16 %v6644
        %v6677 = vunpack.c.l.b16 %v6645
        %v6678 = vunpack.c.l.b16 %v6646
        %v6679 = vunpack.c.l.b16 %v6647
        %v6680 = vunpack.c.l.b16 %v6648
        %v6681 = vunpack.c.l.b16 %v6649
        %v6682 = vunpack.c.l.b16 %v6650
        %v6683 = vunpack.c.l.b16 %v6651
        %v6684 = vunpack.c.l.b16 %v6652
        %v6685 = vpack.c.b16 %v6670, %v6669
        %v6686 = vpack.c.b16 %v6672, %v6671
        %v6687 = vpack.c.b16 %v6674, %v6673
        %v6688 = vpack.c.b16 %v6676, %v6675
        %v6689 = vpack.c.b16 %v6678, %v6677
        %v6690 = vpack.c.b16 %v6680, %v6679
        %v6691 = vpack.c.b16 %v6682, %v6681
        %v6692 = vpack.c.b16 %v6684, %v6683
        %6701 = vmatpush.bf16.msra.mxu0 %v6692
        %6702 = vmatpush.bf16.msra.mxu0 %v6691
        %6703 = vmatpush.bf16.msra.mxu0 %v6690
        %6704 = vmatpush.bf16.msra.mxu0 %v6689
        %6705 = vmatpush.bf16.msra.mxu0 %v6688
        %6706 = vmatpush.bf16.msra.mxu0 %v6687
        %6707 = vmatpush.bf16.msra.mxu0 %v6686
        %6708 = vmatpush.bf16.msra.mxu0 %v6685
        %6709 = vmatmul.bf16.gmra.mxu0 %v3048
        %v6710 = vpop.f32.mrf.mxu0
        %v6711 = vadd.f32 0.0, %v6710
        %v6712 = vpop.f32.mrf.mxu0
        %6713 = vdwg.mxu0
        %v6730 = vunpack.c.l.b16 %v6620
        %v6731 = vunpack.c.l.b16 %v6621
        %v6732 = vunpack.c.l.b16 %v6622
        %v6733 = vunpack.c.l.b16 %v6623
        %v6734 = vunpack.c.l.b16 %v6624
        %v6735 = vunpack.c.l.b16 %v6625
        %v6736 = vunpack.c.l.b16 %v6626
        %v6737 = vunpack.c.l.b16 %v6627
        %v6738 = vunpack.c.l.b16 %v6628
        %v6739 = vunpack.c.l.b16 %v6629
        %v6740 = vunpack.c.l.b16 %v6630
        %v6741 = vunpack.c.l.b16 %v6631
        %v6742 = vunpack.c.l.b16 %v6632
        %v6743 = vunpack.c.l.b16 %v6633
        %v6744 = vunpack.c.l.b16 %v6634
        %v6745 = vunpack.c.l.b16 %v6635
        %v6746 = vpack.c.b16 %v6731, %v6730
        %v6747 = vpack.c.b16 %v6733, %v6732
        %v6748 = vpack.c.b16 %v6735, %v6734
        %v6749 = vpack.c.b16 %v6737, %v6736
        %v6750 = vpack.c.b16 %v6739, %v6738
        %v6751 = vpack.c.b16 %v6741, %v6740
        %v6752 = vpack.c.b16 %v6743, %v6742
        %v6753 = vpack.c.b16 %v6745, %v6744
        %6762 = vmatpush.bf16.msra.mxu0 %v6753
        %6763 = vmatpush.bf16.msra.mxu0 %v6752
        %6764 = vmatpush.bf16.msra.mxu0 %v6751
        %6765 = vmatpush.bf16.msra.mxu0 %v6750
        %6766 = vmatpush.bf16.msra.mxu0 %v6749
        %6767 = vmatpush.bf16.msra.mxu0 %v6748
        %6768 = vmatpush.bf16.msra.mxu0 %v6747
        %6769 = vmatpush.bf16.msra.mxu0 %v6746
        %6770 = vmatmul.bf16.gmra.mxu0 %v6618
        %v6771 = vpop.f32.mrf.mxu0
        %v6772 = vadd.f32 %v6711, %v6771
        %v6773 = vpop.f32.mrf.mxu0
        %6774 = vdwg.mxu0
        %v6776 = vunpack.c.l.b16 %v6618
        %v6777 = vpack.c.b16 %v6776, %v6776
        %v6779 = vshrl.u32 %v6777, 16
        %v6781 = vrot.slane %v6779, 7
        %v6782 = vshll.u32 %v6777, 16
        %v6784 = vor.u32 %v6781, %v6782
        %v6786 = vsel %vm2027, 0, %v6784
        %v6787 = vld [vmem:[#allocation28] sm:$0xf]
        %v6788 = vld [vmem:[#allocation28 + $0x4] sm:$0xf]
        %v6789 = vld [vmem:[#allocation28 + $0x8] sm:$0xf]
        %v6790 = vld [vmem:[#allocation28 + $0xc] sm:$0xf]
        %v6791 = vld [vmem:[#allocation28 + $0x10] sm:$0xf]
        %v6792 = vld [vmem:[#allocation28 + $0x14] sm:$0xf]
        %v6793 = vld [vmem:[#allocation28 + $0x18] sm:$0xf]
        %v6794 = vld [vmem:[#allocation28 + $0x1c] sm:$0xf]
        %v6795 = vld [vmem:[#allocation28 + $0x20] sm:$0xf]
        %v6796 = vld [vmem:[#allocation28 + $0x24] sm:$0xf]
        %v6797 = vld [vmem:[#allocation28 + $0x28] sm:$0xf]
        %v6798 = vld [vmem:[#allocation28 + $0x2c] sm:$0xf]
        %v6799 = vld [vmem:[#allocation28 + $0x30] sm:$0xf]
        %v6800 = vld [vmem:[#allocation28 + $0x34] sm:$0xf]
        %v6801 = vld [vmem:[#allocation28 + $0x38] sm:$0xf]
        %v6802 = vld [vmem:[#allocation28 + $0x3c] sm:$0xf]
        %v6819 = vunpack.c.l.b16 %v6787
        %v6820 = vunpack.c.l.b16 %v6788
        %v6821 = vunpack.c.l.b16 %v6789
        %v6822 = vunpack.c.l.b16 %v6790
        %v6823 = vunpack.c.l.b16 %v6791
        %v6824 = vunpack.c.l.b16 %v6792
        %v6825 = vunpack.c.l.b16 %v6793
        %v6826 = vunpack.c.l.b16 %v6794
        %v6827 = vunpack.c.l.b16 %v6795
        %v6828 = vunpack.c.l.b16 %v6796
        %v6829 = vunpack.c.l.b16 %v6797
        %v6830 = vunpack.c.l.b16 %v6798
        %v6831 = vunpack.c.l.b16 %v6799
        %v6832 = vunpack.c.l.b16 %v6800
        %v6833 = vunpack.c.l.b16 %v6801
        %v6834 = vunpack.c.l.b16 %v6802
        %v6835 = vpack.c.b16 %v6820, %v6819
        %v6836 = vpack.c.b16 %v6822, %v6821
        %v6837 = vpack.c.b16 %v6824, %v6823
        %v6838 = vpack.c.b16 %v6826, %v6825
        %v6839 = vpack.c.b16 %v6828, %v6827
        %v6840 = vpack.c.b16 %v6830, %v6829
        %v6841 = vpack.c.b16 %v6832, %v6831
        %v6842 = vpack.c.b16 %v6834, %v6833
        %6851 = vmatpush.bf16.msra.mxu0 %v6842
        %6852 = vmatpush.bf16.msra.mxu0 %v6841
        %6853 = vmatpush.bf16.msra.mxu0 %v6840
        %6854 = vmatpush.bf16.msra.mxu0 %v6839
        %6855 = vmatpush.bf16.msra.mxu0 %v6838
        %6856 = vmatpush.bf16.msra.mxu0 %v6837
        %6857 = vmatpush.bf16.msra.mxu0 %v6836
        %6858 = vmatpush.bf16.msra.mxu0 %v6835
        %6859 = vmatmul.bf16.gmra.mxu0 %v6786
        %v6860 = vpop.f32.mrf.mxu0
        %v6861 = vadd.f32 0.0, %v6860
        %v6862 = vpop.f32.mrf.mxu0
        %6863 = vdwg.mxu0
        %v6864 = vadd.f32 %v6772, %v6861
        %v6865 = vrot.slane %v6782, 1
        %v6866 = vor.u32 %v6779, %v6865
        %v6868 = vsel %vm2733, %v6866, 0
        %s6869 = scalar_lea.vmem [#allocation28], 128
        %v6870 = vld [vmem:[%s6869] sm:$0xf]
        %v6871 = vld [vmem:[%s6869 + $0x4] sm:$0xf]
        %v6872 = vld [vmem:[%s6869 + $0x8] sm:$0xf]
        %v6873 = vld [vmem:[%s6869 + $0xc] sm:$0xf]
        %v6874 = vld [vmem:[%s6869 + $0x10] sm:$0xf]
        %v6875 = vld [vmem:[%s6869 + $0x14] sm:$0xf]
        %v6876 = vld [vmem:[%s6869 + $0x18] sm:$0xf]
        %v6877 = vld [vmem:[%s6869 + $0x1c] sm:$0xf]
        %v6878 = vld [vmem:[%s6869 + $0x20] sm:$0xf]
        %v6879 = vld [vmem:[%s6869 + $0x24] sm:$0xf]
        %v6880 = vld [vmem:[%s6869 + $0x28] sm:$0xf]
        %v6881 = vld [vmem:[%s6869 + $0x2c] sm:$0xf]
        %v6882 = vld [vmem:[%s6869 + $0x30] sm:$0xf]
        %v6883 = vld [vmem:[%s6869 + $0x34] sm:$0xf]
        %v6884 = vld [vmem:[%s6869 + $0x38] sm:$0xf]
        %v6885 = vld [vmem:[%s6869 + $0x3c] sm:$0xf]
        %v6902 = vunpack.c.l.b16 %v6870
        %v6903 = vunpack.c.l.b16 %v6871
        %v6904 = vunpack.c.l.b16 %v6872
        %v6905 = vunpack.c.l.b16 %v6873
        %v6906 = vunpack.c.l.b16 %v6874
        %v6907 = vunpack.c.l.b16 %v6875
        %v6908 = vunpack.c.l.b16 %v6876
        %v6909 = vunpack.c.l.b16 %v6877
        %v6910 = vunpack.c.l.b16 %v6878
        %v6911 = vunpack.c.l.b16 %v6879
        %v6912 = vunpack.c.l.b16 %v6880
        %v6913 = vunpack.c.l.b16 %v6881
        %v6914 = vunpack.c.l.b16 %v6882
        %v6915 = vunpack.c.l.b16 %v6883
        %v6916 = vunpack.c.l.b16 %v6884
        %v6917 = vunpack.c.l.b16 %v6885
        %v6918 = vpack.c.b16 %v6903, %v6902
        %v6919 = vpack.c.b16 %v6905, %v6904
        %v6920 = vpack.c.b16 %v6907, %v6906
        %v6921 = vpack.c.b16 %v6909, %v6908
        %v6922 = vpack.c.b16 %v6911, %v6910
        %v6923 = vpack.c.b16 %v6913, %v6912
        %v6924 = vpack.c.b16 %v6915, %v6914
        %v6925 = vpack.c.b16 %v6917, %v6916
        %6934 = vmatpush.bf16.msra.mxu0 %v6925
        %6935 = vmatpush.bf16.msra.mxu0 %v6924
        %6936 = vmatpush.bf16.msra.mxu0 %v6923
        %6937 = vmatpush.bf16.msra.mxu0 %v6922
        %6938 = vmatpush.bf16.msra.mxu0 %v6921
        %6939 = vmatpush.bf16.msra.mxu0 %v6920
        %6940 = vmatpush.bf16.msra.mxu0 %v6919
        %6941 = vmatpush.bf16.msra.mxu0 %v6918
        %6942 = vmatmul.bf16.gmra.mxu0 %v6868
        %v6943 = vpop.f32.mrf.mxu0
        %v6944 = vadd.f32 0.0, %v6943
        %v6945 = vpop.f32.mrf.mxu0
        %6946 = vdwg.mxu0
        %v6947 = vadd.f32 %v6864, %v6944
        %v6949 = vunpack.c.l.b16 %v3048
        %v6950 = vpack.c.b16 %v6949, %v6949
        %v6952 = vshrl.u32 %v6950, 16
        %v6954 = vrot.slane %v6952, 7
        %v6955 = vshll.u32 %v6950, 16
        %v6957 = vor.u32 %v6954, %v6955
        %v6959 = vsel %vm2027, 0, %v6957
        %v6960 = vld [vmem:[#allocation29] sm:$0xf]
        %v6961 = vld [vmem:[#allocation29 + $0x4] sm:$0xf]
        %v6962 = vld [vmem:[#allocation29 + $0x8] sm:$0xf]
        %v6963 = vld [vmem:[#allocation29 + $0xc] sm:$0xf]
        %v6964 = vld [vmem:[#allocation29 + $0x10] sm:$0xf]
        %v6965 = vld [vmem:[#allocation29 + $0x14] sm:$0xf]
        %v6966 = vld [vmem:[#allocation29 + $0x18] sm:$0xf]
        %v6967 = vld [vmem:[#allocation29 + $0x1c] sm:$0xf]
        %v6968 = vld [vmem:[#allocation29 + $0x20] sm:$0xf]
        %v6969 = vld [vmem:[#allocation29 + $0x24] sm:$0xf]
        %v6970 = vld [vmem:[#allocation29 + $0x28] sm:$0xf]
        %v6971 = vld [vmem:[#allocation29 + $0x2c] sm:$0xf]
        %v6972 = vld [vmem:[#allocation29 + $0x30] sm:$0xf]
        %v6973 = vld [vmem:[#allocation29 + $0x34] sm:$0xf]
        %v6974 = vld [vmem:[#allocation29 + $0x38] sm:$0xf]
        %v6975 = vld [vmem:[#allocation29 + $0x3c] sm:$0xf]
        %v6992 = vunpack.c.l.b16 %v6960
        %v6993 = vunpack.c.l.b16 %v6961
        %v6994 = vunpack.c.l.b16 %v6962
        %v6995 = vunpack.c.l.b16 %v6963
        %v6996 = vunpack.c.l.b16 %v6964
        %v6997 = vunpack.c.l.b16 %v6965
        %v6998 = vunpack.c.l.b16 %v6966
        %v6999 = vunpack.c.l.b16 %v6967
        %v7000 = vunpack.c.l.b16 %v6968
        %v7001 = vunpack.c.l.b16 %v6969
        %v7002 = vunpack.c.l.b16 %v6970
        %v7003 = vunpack.c.l.b16 %v6971
        %v7004 = vunpack.c.l.b16 %v6972
        %v7005 = vunpack.c.l.b16 %v6973
        %v7006 = vunpack.c.l.b16 %v6974
        %v7007 = vunpack.c.l.b16 %v6975
        %v7008 = vpack.c.b16 %v6993, %v6992
        %v7009 = vpack.c.b16 %v6995, %v6994
        %v7010 = vpack.c.b16 %v6997, %v6996
        %v7011 = vpack.c.b16 %v6999, %v6998
        %v7012 = vpack.c.b16 %v7001, %v7000
        %v7013 = vpack.c.b16 %v7003, %v7002
        %v7014 = vpack.c.b16 %v7005, %v7004
        %v7015 = vpack.c.b16 %v7007, %v7006
        %7024 = vmatpush.bf16.msra.mxu0 %v7015
        %7025 = vmatpush.bf16.msra.mxu0 %v7014
        %7026 = vmatpush.bf16.msra.mxu0 %v7013
        %7027 = vmatpush.bf16.msra.mxu0 %v7012
        %7028 = vmatpush.bf16.msra.mxu0 %v7011
        %7029 = vmatpush.bf16.msra.mxu0 %v7010
        %7030 = vmatpush.bf16.msra.mxu0 %v7009
        %7031 = vmatpush.bf16.msra.mxu0 %v7008
        %7032 = vmatmul.bf16.gmra.mxu0 %v6959
        %v7033 = vpop.f32.mrf.mxu0
        %v7034 = vadd.f32 0.0, %v7033
        %v7035 = vpop.f32.mrf.mxu0
        %7036 = vdwg.mxu0
        %v7037 = vadd.f32 %v6947, %v7034
        %v7038 = vrot.slane %v6955, 1
        %v7039 = vor.u32 %v6952, %v7038
        %v7041 = vsel %vm2733, %v7039, 0
        %s7042 = scalar_lea.vmem [#allocation29], 128
        %v7043 = vld [vmem:[%s7042] sm:$0xf]
        %v7044 = vld [vmem:[%s7042 + $0x4] sm:$0xf]
        %v7045 = vld [vmem:[%s7042 + $0x8] sm:$0xf]
        %v7046 = vld [vmem:[%s7042 + $0xc] sm:$0xf]
        %v7047 = vld [vmem:[%s7042 + $0x10] sm:$0xf]
        %v7048 = vld [vmem:[%s7042 + $0x14] sm:$0xf]
        %v7049 = vld [vmem:[%s7042 + $0x18] sm:$0xf]
        %v7050 = vld [vmem:[%s7042 + $0x1c] sm:$0xf]
        %v7051 = vld [vmem:[%s7042 + $0x20] sm:$0xf]
        %v7052 = vld [vmem:[%s7042 + $0x24] sm:$0xf]
        %v7053 = vld [vmem:[%s7042 + $0x28] sm:$0xf]
        %v7054 = vld [vmem:[%s7042 + $0x2c] sm:$0xf]
        %v7055 = vld [vmem:[%s7042 + $0x30] sm:$0xf]
        %v7056 = vld [vmem:[%s7042 + $0x34] sm:$0xf]
        %v7057 = vld [vmem:[%s7042 + $0x38] sm:$0xf]
        %v7058 = vld [vmem:[%s7042 + $0x3c] sm:$0xf]
        %v7075 = vunpack.c.l.b16 %v7043
        %v7076 = vunpack.c.l.b16 %v7044
        %v7077 = vunpack.c.l.b16 %v7045
        %v7078 = vunpack.c.l.b16 %v7046
        %v7079 = vunpack.c.l.b16 %v7047
        %v7080 = vunpack.c.l.b16 %v7048
        %v7081 = vunpack.c.l.b16 %v7049
        %v7082 = vunpack.c.l.b16 %v7050
        %v7083 = vunpack.c.l.b16 %v7051
        %v7084 = vunpack.c.l.b16 %v7052
        %v7085 = vunpack.c.l.b16 %v7053
        %v7086 = vunpack.c.l.b16 %v7054
        %v7087 = vunpack.c.l.b16 %v7055
        %v7088 = vunpack.c.l.b16 %v7056
        %v7089 = vunpack.c.l.b16 %v7057
        %v7090 = vunpack.c.l.b16 %v7058
        %v7091 = vpack.c.b16 %v7076, %v7075
        %v7092 = vpack.c.b16 %v7078, %v7077
        %v7093 = vpack.c.b16 %v7080, %v7079
        %v7094 = vpack.c.b16 %v7082, %v7081
        %v7095 = vpack.c.b16 %v7084, %v7083
        %v7096 = vpack.c.b16 %v7086, %v7085
        %v7097 = vpack.c.b16 %v7088, %v7087
        %v7098 = vpack.c.b16 %v7090, %v7089
        %7107 = vmatpush.bf16.msra.mxu0 %v7098
        %7108 = vmatpush.bf16.msra.mxu0 %v7097
        %7109 = vmatpush.bf16.msra.mxu0 %v7096
        %7110 = vmatpush.bf16.msra.mxu0 %v7095
        %7111 = vmatpush.bf16.msra.mxu0 %v7094
        %7112 = vmatpush.bf16.msra.mxu0 %v7093
        %7113 = vmatpush.bf16.msra.mxu0 %v7092
        %7114 = vmatpush.bf16.msra.mxu0 %v7091
        %7115 = vmatmul.bf16.gmra.mxu0 %v7041
        %v7116 = vpop.f32.mrf.mxu0
        %v7117 = vadd.f32 0.0, %v7116
        %v7118 = vpop.f32.mrf.mxu0
        %7119 = vdwg.mxu0
        %v7120 = vadd.f32 %v7037, %v7117
        %v7121 = vld [vmem:[%s87] sm:$0x1]
        %v7123 = vperm.slane %v7121, 0
        %v7125 = vadd.f32 %v7120, %v7123
        %v7126 = vmax.f32 %v7125, 0.0
        %v7127 = vpack.c.bf16 %v7126, %v7126
        %s7128 = scalar_lea.vmem [#allocation31], 64
        %v7129 = vld [vmem:[%s7128] sm:$0xf]
        %v7130 = vld [vmem:[%s7128 + $0x4] sm:$0xf]
        %v7131 = vld [vmem:[%s7128 + $0x8] sm:$0xf]
        %v7132 = vld [vmem:[%s7128 + $0xc] sm:$0xf]
        %v7133 = vld [vmem:[%s7128 + $0x10] sm:$0xf]
        %v7134 = vld [vmem:[%s7128 + $0x14] sm:$0xf]
        %v7135 = vld [vmem:[%s7128 + $0x18] sm:$0xf]
        %v7136 = vld [vmem:[%s7128 + $0x1c] sm:$0xf]
        %v7137 = vld [vmem:[%s7128 + $0x20] sm:$0xf]
        %v7138 = vld [vmem:[%s7128 + $0x24] sm:$0xf]
        %v7139 = vld [vmem:[%s7128 + $0x28] sm:$0xf]
        %v7140 = vld [vmem:[%s7128 + $0x2c] sm:$0xf]
        %v7141 = vld [vmem:[%s7128 + $0x30] sm:$0xf]
        %v7142 = vld [vmem:[%s7128 + $0x34] sm:$0xf]
        %v7143 = vld [vmem:[%s7128 + $0x38] sm:$0xf]
        %v7144 = vld [vmem:[%s7128 + $0x3c] sm:$0xf]
        %v7146 = vunpack.c.l.b16 %v7127
        %v7147 = vpack.c.b16 %v7146, %v7146
        %v7149 = vshrl.u32 %v7147, 16
        %v7151 = vrot.slane %v7149, 7
        %v7152 = vshll.u32 %v7147, 16
        %v7154 = vor.u32 %v7151, %v7152
        %v7156 = vsel %vm2027, 0, %v7154
        %v7157 = vld [vmem:[#allocation31] sm:$0xf]
        %v7158 = vld [vmem:[#allocation31 + $0x4] sm:$0xf]
        %v7159 = vld [vmem:[#allocation31 + $0x8] sm:$0xf]
        %v7160 = vld [vmem:[#allocation31 + $0xc] sm:$0xf]
        %v7161 = vld [vmem:[#allocation31 + $0x10] sm:$0xf]
        %v7162 = vld [vmem:[#allocation31 + $0x14] sm:$0xf]
        %v7163 = vld [vmem:[#allocation31 + $0x18] sm:$0xf]
        %v7164 = vld [vmem:[#allocation31 + $0x1c] sm:$0xf]
        %v7165 = vld [vmem:[#allocation31 + $0x20] sm:$0xf]
        %v7166 = vld [vmem:[#allocation31 + $0x24] sm:$0xf]
        %v7167 = vld [vmem:[#allocation31 + $0x28] sm:$0xf]
        %v7168 = vld [vmem:[#allocation31 + $0x2c] sm:$0xf]
        %v7169 = vld [vmem:[#allocation31 + $0x30] sm:$0xf]
        %v7170 = vld [vmem:[#allocation31 + $0x34] sm:$0xf]
        %v7171 = vld [vmem:[#allocation31 + $0x38] sm:$0xf]
        %v7172 = vld [vmem:[#allocation31 + $0x3c] sm:$0xf]
        %v7189 = vunpack.c.l.b16 %v7157
        %v7190 = vunpack.c.l.b16 %v7158
        %v7191 = vunpack.c.l.b16 %v7159
        %v7192 = vunpack.c.l.b16 %v7160
        %v7193 = vunpack.c.l.b16 %v7161
        %v7194 = vunpack.c.l.b16 %v7162
        %v7195 = vunpack.c.l.b16 %v7163
        %v7196 = vunpack.c.l.b16 %v7164
        %v7197 = vunpack.c.l.b16 %v7165
        %v7198 = vunpack.c.l.b16 %v7166
        %v7199 = vunpack.c.l.b16 %v7167
        %v7200 = vunpack.c.l.b16 %v7168
        %v7201 = vunpack.c.l.b16 %v7169
        %v7202 = vunpack.c.l.b16 %v7170
        %v7203 = vunpack.c.l.b16 %v7171
        %v7204 = vunpack.c.l.b16 %v7172
        %v7205 = vpack.c.b16 %v7190, %v7189
        %v7206 = vpack.c.b16 %v7192, %v7191
        %v7207 = vpack.c.b16 %v7194, %v7193
        %v7208 = vpack.c.b16 %v7196, %v7195
        %v7209 = vpack.c.b16 %v7198, %v7197
        %v7210 = vpack.c.b16 %v7200, %v7199
        %v7211 = vpack.c.b16 %v7202, %v7201
        %v7212 = vpack.c.b16 %v7204, %v7203
        %7221 = vmatpush.bf16.msra.mxu0 %v7212
        %7222 = vmatpush.bf16.msra.mxu0 %v7211
        %7223 = vmatpush.bf16.msra.mxu0 %v7210
        %7224 = vmatpush.bf16.msra.mxu0 %v7209
        %7225 = vmatpush.bf16.msra.mxu0 %v7208
        %7226 = vmatpush.bf16.msra.mxu0 %v7207
        %7227 = vmatpush.bf16.msra.mxu0 %v7206
        %7228 = vmatpush.bf16.msra.mxu0 %v7205
        %7229 = vmatmul.bf16.gmra.mxu0 %v7156
        %v7230 = vpop.f32.mrf.mxu0
        %v7231 = vadd.f32 0.0, %v7230
        %v7232 = vpop.f32.mrf.mxu0
        %7233 = vdwg.mxu0
        %v7250 = vunpack.c.l.b16 %v7129
        %v7251 = vunpack.c.l.b16 %v7130
        %v7252 = vunpack.c.l.b16 %v7131
        %v7253 = vunpack.c.l.b16 %v7132
        %v7254 = vunpack.c.l.b16 %v7133
        %v7255 = vunpack.c.l.b16 %v7134
        %v7256 = vunpack.c.l.b16 %v7135
        %v7257 = vunpack.c.l.b16 %v7136
        %v7258 = vunpack.c.l.b16 %v7137
        %v7259 = vunpack.c.l.b16 %v7138
        %v7260 = vunpack.c.l.b16 %v7139
        %v7261 = vunpack.c.l.b16 %v7140
        %v7262 = vunpack.c.l.b16 %v7141
        %v7263 = vunpack.c.l.b16 %v7142
        %v7264 = vunpack.c.l.b16 %v7143
        %v7265 = vunpack.c.l.b16 %v7144
        %v7266 = vpack.c.b16 %v7251, %v7250
        %v7267 = vpack.c.b16 %v7253, %v7252
        %v7268 = vpack.c.b16 %v7255, %v7254
        %v7269 = vpack.c.b16 %v7257, %v7256
        %v7270 = vpack.c.b16 %v7259, %v7258
        %v7271 = vpack.c.b16 %v7261, %v7260
        %v7272 = vpack.c.b16 %v7263, %v7262
        %v7273 = vpack.c.b16 %v7265, %v7264
        %7282 = vmatpush.bf16.msra.mxu0 %v7273
        %7283 = vmatpush.bf16.msra.mxu0 %v7272
        %7284 = vmatpush.bf16.msra.mxu0 %v7271
        %7285 = vmatpush.bf16.msra.mxu0 %v7270
        %7286 = vmatpush.bf16.msra.mxu0 %v7269
        %7287 = vmatpush.bf16.msra.mxu0 %v7268
        %7288 = vmatpush.bf16.msra.mxu0 %v7267
        %7289 = vmatpush.bf16.msra.mxu0 %v7266
        %7290 = vmatmul.bf16.gmra.mxu0 %v7127
        %v7291 = vpop.f32.mrf.mxu0
        %v7292 = vadd.f32 %v7231, %v7291
        %v7293 = vpop.f32.mrf.mxu0
        %7294 = vdwg.mxu0
        %v7295 = vrot.slane %v7152, 1
        %v7296 = vor.u32 %v7149, %v7295
        %v7298 = vsel %vm2733, %v7296, 0
        %s7299 = scalar_lea.vmem [#allocation31], 128
        %v7300 = vld [vmem:[%s7299] sm:$0xf]
        %v7301 = vld [vmem:[%s7299 + $0x4] sm:$0xf]
        %v7302 = vld [vmem:[%s7299 + $0x8] sm:$0xf]
        %v7303 = vld [vmem:[%s7299 + $0xc] sm:$0xf]
        %v7304 = vld [vmem:[%s7299 + $0x10] sm:$0xf]
        %v7305 = vld [vmem:[%s7299 + $0x14] sm:$0xf]
        %v7306 = vld [vmem:[%s7299 + $0x18] sm:$0xf]
        %v7307 = vld [vmem:[%s7299 + $0x1c] sm:$0xf]
        %v7308 = vld [vmem:[%s7299 + $0x20] sm:$0xf]
        %v7309 = vld [vmem:[%s7299 + $0x24] sm:$0xf]
        %v7310 = vld [vmem:[%s7299 + $0x28] sm:$0xf]
        %v7311 = vld [vmem:[%s7299 + $0x2c] sm:$0xf]
        %v7312 = vld [vmem:[%s7299 + $0x30] sm:$0xf]
        %v7313 = vld [vmem:[%s7299 + $0x34] sm:$0xf]
        %v7314 = vld [vmem:[%s7299 + $0x38] sm:$0xf]
        %v7315 = vld [vmem:[%s7299 + $0x3c] sm:$0xf]
        %v7332 = vunpack.c.l.b16 %v7300
        %v7333 = vunpack.c.l.b16 %v7301
        %v7334 = vunpack.c.l.b16 %v7302
        %v7335 = vunpack.c.l.b16 %v7303
        %v7336 = vunpack.c.l.b16 %v7304
        %v7337 = vunpack.c.l.b16 %v7305
        %v7338 = vunpack.c.l.b16 %v7306
        %v7339 = vunpack.c.l.b16 %v7307
        %v7340 = vunpack.c.l.b16 %v7308
        %v7341 = vunpack.c.l.b16 %v7309
        %v7342 = vunpack.c.l.b16 %v7310
        %v7343 = vunpack.c.l.b16 %v7311
        %v7344 = vunpack.c.l.b16 %v7312
        %v7345 = vunpack.c.l.b16 %v7313
        %v7346 = vunpack.c.l.b16 %v7314
        %v7347 = vunpack.c.l.b16 %v7315
        %v7348 = vpack.c.b16 %v7333, %v7332
        %v7349 = vpack.c.b16 %v7335, %v7334
        %v7350 = vpack.c.b16 %v7337, %v7336
        %v7351 = vpack.c.b16 %v7339, %v7338
        %v7352 = vpack.c.b16 %v7341, %v7340
        %v7353 = vpack.c.b16 %v7343, %v7342
        %v7354 = vpack.c.b16 %v7345, %v7344
        %v7355 = vpack.c.b16 %v7347, %v7346
        %7364 = vmatpush.bf16.msra.mxu0 %v7355
        %7365 = vmatpush.bf16.msra.mxu0 %v7354
        %7366 = vmatpush.bf16.msra.mxu0 %v7353
        %7367 = vmatpush.bf16.msra.mxu0 %v7352
        %7368 = vmatpush.bf16.msra.mxu0 %v7351
        %7369 = vmatpush.bf16.msra.mxu0 %v7350
        %7370 = vmatpush.bf16.msra.mxu0 %v7349
        %7371 = vmatpush.bf16.msra.mxu0 %v7348
        %7372 = vmatmul.bf16.gmra.mxu0 %v7298
        %v7373 = vpop.f32.mrf.mxu0
        %v7374 = vadd.f32 0.0, %v7373
        %v7375 = vpop.f32.mrf.mxu0
        %7376 = vdwg.mxu0
        %v7377 = vadd.f32 %v7292, %v7374
        %v7378 = vld [vmem:[%s91] sm:$0x1]
        %v7380 = vperm.slane %v7378, 0
        %v7382 = vadd.f32 %v7377, %v7380
        %v7383 = vmax.f32 %v7382, 0.0
        %v7384 = vpack.c.bf16 %v7383, %v7383
        %v7385 = vld [vmem:[#allocation32] sm:$0xf]
        %v7386 = vld [vmem:[#allocation32 + $0x4] sm:$0xf]
        %v7387 = vld [vmem:[#allocation32 + $0x8] sm:$0xf]
        %v7388 = vld [vmem:[#allocation32 + $0xc] sm:$0xf]
        %v7389 = vld [vmem:[#allocation32 + $0x10] sm:$0xf]
        %v7390 = vld [vmem:[#allocation32 + $0x14] sm:$0xf]
        %v7391 = vld [vmem:[#allocation32 + $0x18] sm:$0xf]
        %v7392 = vld [vmem:[#allocation32 + $0x1c] sm:$0xf]
        %v7393 = vld [vmem:[#allocation32 + $0x20] sm:$0xf]
        %v7394 = vld [vmem:[#allocation32 + $0x24] sm:$0xf]
        %v7395 = vld [vmem:[#allocation32 + $0x28] sm:$0xf]
        %v7396 = vld [vmem:[#allocation32 + $0x2c] sm:$0xf]
        %v7397 = vld [vmem:[#allocation32 + $0x30] sm:$0xf]
        %v7398 = vld [vmem:[#allocation32 + $0x34] sm:$0xf]
        %v7399 = vld [vmem:[#allocation32 + $0x38] sm:$0xf]
        %v7400 = vld [vmem:[#allocation32 + $0x3c] sm:$0xf]
        %v7401 = vld [vmem:[%s95] sm:$0x1]
        %v7403 = vperm.slane %v7401, 0
        %v7421 = vunpack.c.l.b16 %v7385
        %v7422 = vunpack.c.l.b16 %v7386
        %v7423 = vunpack.c.l.b16 %v7387
        %v7424 = vunpack.c.l.b16 %v7388
        %v7425 = vunpack.c.l.b16 %v7389
        %v7426 = vunpack.c.l.b16 %v7390
        %v7427 = vunpack.c.l.b16 %v7391
        %v7428 = vunpack.c.l.b16 %v7392
        %v7429 = vunpack.c.l.b16 %v7393
        %v7430 = vunpack.c.l.b16 %v7394
        %v7431 = vunpack.c.l.b16 %v7395
        %v7432 = vunpack.c.l.b16 %v7396
        %v7433 = vunpack.c.l.b16 %v7397
        %v7434 = vunpack.c.l.b16 %v7398
        %v7435 = vunpack.c.l.b16 %v7399
        %v7436 = vunpack.c.l.b16 %v7400
        %v7437 = vpack.c.b16 %v7422, %v7421
        %v7438 = vpack.c.b16 %v7424, %v7423
        %v7439 = vpack.c.b16 %v7426, %v7425
        %v7440 = vpack.c.b16 %v7428, %v7427
        %v7441 = vpack.c.b16 %v7430, %v7429
        %v7442 = vpack.c.b16 %v7432, %v7431
        %v7443 = vpack.c.b16 %v7434, %v7433
        %v7444 = vpack.c.b16 %v7436, %v7435
        %7453 = vmatpush.bf16.msra.mxu0 %v7444
        %7454 = vmatpush.bf16.msra.mxu0 %v7443
        %7455 = vmatpush.bf16.msra.mxu0 %v7442
        %7456 = vmatpush.bf16.msra.mxu0 %v7441
        %7457 = vmatpush.bf16.msra.mxu0 %v7440
        %7458 = vmatpush.bf16.msra.mxu0 %v7439
        %7459 = vmatpush.bf16.msra.mxu0 %v7438
        %7460 = vmatpush.bf16.msra.mxu0 %v7437
        %7461 = vmatmul.bf16.gmra.mxu0 %v7384
        %v7462 = vpop.f32.mrf.mxu0
        %v7463 = vadd.f32 %v7403, %v7462
        %v7464 = vpop.f32.mrf.mxu0
        %7465 = vdwg.mxu0
        %s7466 = scalar_lea.vmem [#allocation32], 64
        %v7467 = vld [vmem:[%s7466] sm:$0xf]
        %v7468 = vld [vmem:[%s7466 + $0x4] sm:$0xf]
        %v7469 = vld [vmem:[%s7466 + $0x8] sm:$0xf]
        %v7470 = vld [vmem:[%s7466 + $0xc] sm:$0xf]
        %v7471 = vld [vmem:[%s7466 + $0x10] sm:$0xf]
        %v7472 = vld [vmem:[%s7466 + $0x14] sm:$0xf]
        %v7473 = vld [vmem:[%s7466 + $0x18] sm:$0xf]
        %v7474 = vld [vmem:[%s7466 + $0x1c] sm:$0xf]
        %v7475 = vld [vmem:[%s7466 + $0x20] sm:$0xf]
        %v7476 = vld [vmem:[%s7466 + $0x24] sm:$0xf]
        %v7477 = vld [vmem:[%s7466 + $0x28] sm:$0xf]
        %v7478 = vld [vmem:[%s7466 + $0x2c] sm:$0xf]
        %v7479 = vld [vmem:[%s7466 + $0x30] sm:$0xf]
        %v7480 = vld [vmem:[%s7466 + $0x34] sm:$0xf]
        %v7481 = vld [vmem:[%s7466 + $0x38] sm:$0xf]
        %v7482 = vld [vmem:[%s7466 + $0x3c] sm:$0xf]
        %v7499 = vunpack.c.l.b16 %v7467
        %v7500 = vunpack.c.l.b16 %v7468
        %v7501 = vunpack.c.l.b16 %v7469
        %v7502 = vunpack.c.l.b16 %v7470
        %v7503 = vunpack.c.l.b16 %v7471
        %v7504 = vunpack.c.l.b16 %v7472
        %v7505 = vunpack.c.l.b16 %v7473
        %v7506 = vunpack.c.l.b16 %v7474
        %v7507 = vunpack.c.l.b16 %v7475
        %v7508 = vunpack.c.l.b16 %v7476
        %v7509 = vunpack.c.l.b16 %v7477
        %v7510 = vunpack.c.l.b16 %v7478
        %v7511 = vunpack.c.l.b16 %v7479
        %v7512 = vunpack.c.l.b16 %v7480
        %v7513 = vunpack.c.l.b16 %v7481
        %v7514 = vunpack.c.l.b16 %v7482
        %v7515 = vpack.c.b16 %v7500, %v7499
        %v7516 = vpack.c.b16 %v7502, %v7501
        %v7517 = vpack.c.b16 %v7504, %v7503
        %v7518 = vpack.c.b16 %v7506, %v7505
        %v7519 = vpack.c.b16 %v7508, %v7507
        %v7520 = vpack.c.b16 %v7510, %v7509
        %v7521 = vpack.c.b16 %v7512, %v7511
        %v7522 = vpack.c.b16 %v7514, %v7513
        %7531 = vmatpush.bf16.msra.mxu0 %v7522
        %7532 = vmatpush.bf16.msra.mxu0 %v7521
        %7533 = vmatpush.bf16.msra.mxu0 %v7520
        %7534 = vmatpush.bf16.msra.mxu0 %v7519
        %7535 = vmatpush.bf16.msra.mxu0 %v7518
        %7536 = vmatpush.bf16.msra.mxu0 %v7517
        %7537 = vmatpush.bf16.msra.mxu0 %v7516
        %7538 = vmatpush.bf16.msra.mxu0 %v7515
        %7539 = vmatmul.bf16.gmra.mxu0 %v7384
        %v7540 = vpop.f32.mrf.mxu0
        %v7541 = vadd.f32 %v7403, %v7540
        %v7542 = vpop.f32.mrf.mxu0
        %7543 = vdwg.mxu0
        %v7544 = vpack.c.bf16 %v7463, %v7463
        %v7545 = vpack.c.bf16 %v7541, %v7541
        %v7546 = vadd.s32 %v5599, 8
        %vm7547 = vcmp.eq.s32.totalorder %v7546, %v5602
        %v7548 = vsel %vm7547, 1, 0
        %v7549 = vcvt.s32.f32 %v7548
        %v7550 = vpack.c.bf16 %v7549, %v5605
        %vm7551 = vcmp.eq.s32.totalorder %v7546, %v5607
        %v7552 = vsel %vm7551, 1, 0
        %v7553 = vcvt.s32.f32 %v7552
        %v7554 = vpack.c.bf16 %v7553, %v5610
        %vm7555 = vcmask 64512
        %v7557 = vsel %vm7555, %v7554, 0
        %vm7559 = vcmask 1043456
        %v7561 = vsel %vm7559, %v7545, 0
        %7563 = vmatpush.bf16.msra.mxu0 0
        %7564 = vmatpush.bf16.msra.mxu0 0
        %7565 = vmatpush.bf16.msra.mxu0 0
        %7566 = vmatpush.bf16.msra.mxu0 0
        %7567 = vmatpush.bf16.msra.mxu0 0
        %7568 = vmatpush.bf16.msra.mxu0 0
        %7569 = vmatpush.bf16.msra.mxu0 0
        %7570 = vmatpush.bf16.msra.mxu0 %v7561
        %7571 = vmatmul.bf16.gmra.mxu0 %v7557
        %v7572 = vpop.f32.mrf.mxu0
        %v7573 = vadd.f32 0.0, %v7572
        %v7574 = vpop.f32.mrf.mxu0
        %v7575 = vadd.f32 0.0, %v7574
        %7576 = vdwg.mxu0
        %v7578 = vsel %vm7555, %v7550, 0
        %v7581 = vsel %vm7559, %v7544, 0
        %7583 = vmatpush.bf16.msra.mxu0 0
        %7584 = vmatpush.bf16.msra.mxu0 0
        %7585 = vmatpush.bf16.msra.mxu0 0
        %7586 = vmatpush.bf16.msra.mxu0 0
        %7587 = vmatpush.bf16.msra.mxu0 0
        %7588 = vmatpush.bf16.msra.mxu0 0
        %7589 = vmatpush.bf16.msra.mxu0 0
        %7590 = vmatpush.bf16.msra.mxu0 %v7581
        %7591 = vmatmul.bf16.gmra.mxu0 %v7578
        %v7592 = vpop.f32.mrf.mxu0
        %v7593 = vadd.f32 %v7573, %v7592
        %v7594 = vpop.f32.mrf.mxu0
        %v7595 = vadd.f32 %v7575, %v7594
        %7596 = vdwg.mxu0
        %v7597 = vpack.c.bf16 %v7593, %v7593
        %v7598 = vpack.c.bf16 %v7595, %v7595
        %s7599 = scalar_lea.vmem [#allocation34], 64
        %v7600 = vld [vmem:[%s7599] sm:$0xf]
        %v7601 = vld [vmem:[%s7599 + $0x4] sm:$0xf]
        %v7602 = vld [vmem:[%s7599 + $0x8] sm:$0xf]
        %v7603 = vld [vmem:[%s7599 + $0xc] sm:$0xf]
        %v7604 = vld [vmem:[%s7599 + $0x10] sm:$0xf]
        %v7605 = vld [vmem:[%s7599 + $0x14] sm:$0xf]
        %v7606 = vld [vmem:[%s7599 + $0x18] sm:$0xf]
        %v7607 = vld [vmem:[%s7599 + $0x1c] sm:$0xf]
        %v7608 = vld [vmem:[%s7599 + $0x20] sm:$0xf]
        %v7609 = vld [vmem:[%s7599 + $0x24] sm:$0xf]
        %v7610 = vld [vmem:[%s7599 + $0x28] sm:$0xf]
        %v7611 = vld [vmem:[%s7599 + $0x2c] sm:$0xf]
        %v7612 = vld [vmem:[%s7599 + $0x30] sm:$0xf]
        %v7613 = vld [vmem:[%s7599 + $0x34] sm:$0xf]
        %v7614 = vld [vmem:[%s7599 + $0x38] sm:$0xf]
        %v7615 = vld [vmem:[%s7599 + $0x3c] sm:$0xf]
        %s7616 = scalar_lea.vmem [#allocation35], 64
        %v7617 = vld [vmem:[%s7616] sm:$0xf]
        %v7618 = vld [vmem:[%s7616 + $0x4] sm:$0xf]
        %v7619 = vld [vmem:[%s7616 + $0x8] sm:$0xf]
        %v7620 = vld [vmem:[%s7616 + $0xc] sm:$0xf]
        %v7621 = vld [vmem:[%s7616 + $0x10] sm:$0xf]
        %v7622 = vld [vmem:[%s7616 + $0x14] sm:$0xf]
        %v7623 = vld [vmem:[%s7616 + $0x18] sm:$0xf]
        %v7624 = vld [vmem:[%s7616 + $0x1c] sm:$0xf]
        %v7625 = vld [vmem:[%s7616 + $0x20] sm:$0xf]
        %v7626 = vld [vmem:[%s7616 + $0x24] sm:$0xf]
        %v7627 = vld [vmem:[%s7616 + $0x28] sm:$0xf]
        %v7628 = vld [vmem:[%s7616 + $0x2c] sm:$0xf]
        %v7629 = vld [vmem:[%s7616 + $0x30] sm:$0xf]
        %v7630 = vld [vmem:[%s7616 + $0x34] sm:$0xf]
        %v7631 = vld [vmem:[%s7616 + $0x38] sm:$0xf]
        %v7632 = vld [vmem:[%s7616 + $0x3c] sm:$0xf]
        %v7635 = vunpack.c.l.b16 %v2453
        %v7636 = vunpack.c.l.b16 %v2454
        %v7637 = vpack.c.b16 %v7636, %v7635
        %v7655 = vunpack.c.l.b16 %v7617
        %v7656 = vunpack.c.l.b16 %v7618
        %v7657 = vunpack.c.l.b16 %v7619
        %v7658 = vunpack.c.l.b16 %v7620
        %v7659 = vunpack.c.l.b16 %v7621
        %v7660 = vunpack.c.l.b16 %v7622
        %v7661 = vunpack.c.l.b16 %v7623
        %v7662 = vunpack.c.l.b16 %v7624
        %v7663 = vunpack.c.l.b16 %v7625
        %v7664 = vunpack.c.l.b16 %v7626
        %v7665 = vunpack.c.l.b16 %v7627
        %v7666 = vunpack.c.l.b16 %v7628
        %v7667 = vunpack.c.l.b16 %v7629
        %v7668 = vunpack.c.l.b16 %v7630
        %v7669 = vunpack.c.l.b16 %v7631
        %v7670 = vunpack.c.l.b16 %v7632
        %v7671 = vpack.c.b16 %v7656, %v7655
        %v7672 = vpack.c.b16 %v7658, %v7657
        %v7673 = vpack.c.b16 %v7660, %v7659
        %v7674 = vpack.c.b16 %v7662, %v7661
        %v7675 = vpack.c.b16 %v7664, %v7663
        %v7676 = vpack.c.b16 %v7666, %v7665
        %v7677 = vpack.c.b16 %v7668, %v7667
        %v7678 = vpack.c.b16 %v7670, %v7669
        %7687 = vmatpush.bf16.msra.mxu0 %v7678
        %7688 = vmatpush.bf16.msra.mxu0 %v7677
        %7689 = vmatpush.bf16.msra.mxu0 %v7676
        %7690 = vmatpush.bf16.msra.mxu0 %v7675
        %7691 = vmatpush.bf16.msra.mxu0 %v7674
        %7692 = vmatpush.bf16.msra.mxu0 %v7673
        %7693 = vmatpush.bf16.msra.mxu0 %v7672
        %7694 = vmatpush.bf16.msra.mxu0 %v7671
        %7695 = vmatmul.bf16.gmra.mxu0 %v7637
        %v7696 = vpop.f32.mrf.mxu0
        %v7697 = vadd.f32 0.0, %v7696
        %v7698 = vpop.f32.mrf.mxu0
        %v7699 = vadd.f32 0.0, %v7698
        %7700 = vdwg.mxu0
        %v7703 = vunpack.c.l.b16 %v7597
        %v7704 = vunpack.c.l.b16 %v7598
        %v7705 = vpack.c.b16 %v7704, %v7703
        %v7723 = vunpack.c.l.b16 %v7600
        %v7724 = vunpack.c.l.b16 %v7601
        %v7725 = vunpack.c.l.b16 %v7602
        %v7726 = vunpack.c.l.b16 %v7603
        %v7727 = vunpack.c.l.b16 %v7604
        %v7728 = vunpack.c.l.b16 %v7605
        %v7729 = vunpack.c.l.b16 %v7606
        %v7730 = vunpack.c.l.b16 %v7607
        %v7731 = vunpack.c.l.b16 %v7608
        %v7732 = vunpack.c.l.b16 %v7609
        %v7733 = vunpack.c.l.b16 %v7610
        %v7734 = vunpack.c.l.b16 %v7611
        %v7735 = vunpack.c.l.b16 %v7612
        %v7736 = vunpack.c.l.b16 %v7613
        %v7737 = vunpack.c.l.b16 %v7614
        %v7738 = vunpack.c.l.b16 %v7615
        %v7739 = vpack.c.b16 %v7724, %v7723
        %v7740 = vpack.c.b16 %v7726, %v7725
        %v7741 = vpack.c.b16 %v7728, %v7727
        %v7742 = vpack.c.b16 %v7730, %v7729
        %v7743 = vpack.c.b16 %v7732, %v7731
        %v7744 = vpack.c.b16 %v7734, %v7733
        %v7745 = vpack.c.b16 %v7736, %v7735
        %v7746 = vpack.c.b16 %v7738, %v7737
        %7755 = vmatpush.bf16.msra.mxu0 %v7746
        %7756 = vmatpush.bf16.msra.mxu0 %v7745
        %7757 = vmatpush.bf16.msra.mxu0 %v7744
        %7758 = vmatpush.bf16.msra.mxu0 %v7743
        %7759 = vmatpush.bf16.msra.mxu0 %v7742
        %7760 = vmatpush.bf16.msra.mxu0 %v7741
        %7761 = vmatpush.bf16.msra.mxu0 %v7740
        %7762 = vmatpush.bf16.msra.mxu0 %v7739
        %7763 = vmatmul.bf16.gmra.mxu0 %v7705
        %v7764 = vpop.f32.mrf.mxu0
        %v7765 = vadd.f32 %v7697, %v7764
        %v7766 = vpop.f32.mrf.mxu0
        %v7767 = vadd.f32 %v7699, %v7766
        %7768 = vdwg.mxu0
        %v7770 = vshrl.u32 %v7705, 16
        %v7772 = vrot.slane %v7770, 7
        %v7773 = vshll.u32 %v7705, 16
        %v7775 = vor.u32 %v7772, %v7773
        %v7777 = vsel %vm2027, 0, %v7775
        %v7778 = vld [vmem:[#allocation34] sm:$0xf]
        %v7779 = vld [vmem:[#allocation34 + $0x4] sm:$0xf]
        %v7780 = vld [vmem:[#allocation34 + $0x8] sm:$0xf]
        %v7781 = vld [vmem:[#allocation34 + $0xc] sm:$0xf]
        %v7782 = vld [vmem:[#allocation34 + $0x10] sm:$0xf]
        %v7783 = vld [vmem:[#allocation34 + $0x14] sm:$0xf]
        %v7784 = vld [vmem:[#allocation34 + $0x18] sm:$0xf]
        %v7785 = vld [vmem:[#allocation34 + $0x1c] sm:$0xf]
        %v7786 = vld [vmem:[#allocation34 + $0x20] sm:$0xf]
        %v7787 = vld [vmem:[#allocation34 + $0x24] sm:$0xf]
        %v7788 = vld [vmem:[#allocation34 + $0x28] sm:$0xf]
        %v7789 = vld [vmem:[#allocation34 + $0x2c] sm:$0xf]
        %v7790 = vld [vmem:[#allocation34 + $0x30] sm:$0xf]
        %v7791 = vld [vmem:[#allocation34 + $0x34] sm:$0xf]
        %v7792 = vld [vmem:[#allocation34 + $0x38] sm:$0xf]
        %v7793 = vld [vmem:[#allocation34 + $0x3c] sm:$0xf]
        %v7810 = vunpack.c.l.b16 %v7778
        %v7811 = vunpack.c.l.b16 %v7779
        %v7812 = vunpack.c.l.b16 %v7780
        %v7813 = vunpack.c.l.b16 %v7781
        %v7814 = vunpack.c.l.b16 %v7782
        %v7815 = vunpack.c.l.b16 %v7783
        %v7816 = vunpack.c.l.b16 %v7784
        %v7817 = vunpack.c.l.b16 %v7785
        %v7818 = vunpack.c.l.b16 %v7786
        %v7819 = vunpack.c.l.b16 %v7787
        %v7820 = vunpack.c.l.b16 %v7788
        %v7821 = vunpack.c.l.b16 %v7789
        %v7822 = vunpack.c.l.b16 %v7790
        %v7823 = vunpack.c.l.b16 %v7791
        %v7824 = vunpack.c.l.b16 %v7792
        %v7825 = vunpack.c.l.b16 %v7793
        %v7826 = vpack.c.b16 %v7811, %v7810
        %v7827 = vpack.c.b16 %v7813, %v7812
        %v7828 = vpack.c.b16 %v7815, %v7814
        %v7829 = vpack.c.b16 %v7817, %v7816
        %v7830 = vpack.c.b16 %v7819, %v7818
        %v7831 = vpack.c.b16 %v7821, %v7820
        %v7832 = vpack.c.b16 %v7823, %v7822
        %v7833 = vpack.c.b16 %v7825, %v7824
        %7842 = vmatpush.bf16.msra.mxu0 %v7833
        %7843 = vmatpush.bf16.msra.mxu0 %v7832
        %7844 = vmatpush.bf16.msra.mxu0 %v7831
        %7845 = vmatpush.bf16.msra.mxu0 %v7830
        %7846 = vmatpush.bf16.msra.mxu0 %v7829
        %7847 = vmatpush.bf16.msra.mxu0 %v7828
        %7848 = vmatpush.bf16.msra.mxu0 %v7827
        %7849 = vmatpush.bf16.msra.mxu0 %v7826
        %7850 = vmatmul.bf16.gmra.mxu0 %v7777
        %v7851 = vpop.f32.mrf.mxu0
        %v7852 = vadd.f32 0.0, %v7851
        %v7853 = vpop.f32.mrf.mxu0
        %v7854 = vadd.f32 0.0, %v7853
        %7855 = vdwg.mxu0
        %v7856 = vadd.f32 %v7765, %v7852
        %v7857 = vadd.f32 %v7767, %v7854
        %v7858 = vrot.slane %v7773, 1
        %v7859 = vor.u32 %v7770, %v7858
        %v7861 = vsel %vm2124, %v7859, 0
        %s7862 = scalar_lea.vmem [#allocation34], 128
        %v7863 = vld [vmem:[%s7862] sm:$0xf]
        %v7864 = vld [vmem:[%s7862 + $0x4] sm:$0xf]
        %v7865 = vld [vmem:[%s7862 + $0x8] sm:$0xf]
        %v7866 = vld [vmem:[%s7862 + $0xc] sm:$0xf]
        %v7867 = vld [vmem:[%s7862 + $0x10] sm:$0xf]
        %v7868 = vld [vmem:[%s7862 + $0x14] sm:$0xf]
        %v7869 = vld [vmem:[%s7862 + $0x18] sm:$0xf]
        %v7870 = vld [vmem:[%s7862 + $0x1c] sm:$0xf]
        %v7871 = vld [vmem:[%s7862 + $0x20] sm:$0xf]
        %v7872 = vld [vmem:[%s7862 + $0x24] sm:$0xf]
        %v7873 = vld [vmem:[%s7862 + $0x28] sm:$0xf]
        %v7874 = vld [vmem:[%s7862 + $0x2c] sm:$0xf]
        %v7875 = vld [vmem:[%s7862 + $0x30] sm:$0xf]
        %v7876 = vld [vmem:[%s7862 + $0x34] sm:$0xf]
        %v7877 = vld [vmem:[%s7862 + $0x38] sm:$0xf]
        %v7878 = vld [vmem:[%s7862 + $0x3c] sm:$0xf]
        %v7895 = vunpack.c.l.b16 %v7863
        %v7896 = vunpack.c.l.b16 %v7864
        %v7897 = vunpack.c.l.b16 %v7865
        %v7898 = vunpack.c.l.b16 %v7866
        %v7899 = vunpack.c.l.b16 %v7867
        %v7900 = vunpack.c.l.b16 %v7868
        %v7901 = vunpack.c.l.b16 %v7869
        %v7902 = vunpack.c.l.b16 %v7870
        %v7903 = vunpack.c.l.b16 %v7871
        %v7904 = vunpack.c.l.b16 %v7872
        %v7905 = vunpack.c.l.b16 %v7873
        %v7906 = vunpack.c.l.b16 %v7874
        %v7907 = vunpack.c.l.b16 %v7875
        %v7908 = vunpack.c.l.b16 %v7876
        %v7909 = vunpack.c.l.b16 %v7877
        %v7910 = vunpack.c.l.b16 %v7878
        %v7911 = vpack.c.b16 %v7896, %v7895
        %v7912 = vpack.c.b16 %v7898, %v7897
        %v7913 = vpack.c.b16 %v7900, %v7899
        %v7914 = vpack.c.b16 %v7902, %v7901
        %v7915 = vpack.c.b16 %v7904, %v7903
        %v7916 = vpack.c.b16 %v7906, %v7905
        %v7917 = vpack.c.b16 %v7908, %v7907
        %v7918 = vpack.c.b16 %v7910, %v7909
        %7927 = vmatpush.bf16.msra.mxu0 %v7918
        %7928 = vmatpush.bf16.msra.mxu0 %v7917
        %7929 = vmatpush.bf16.msra.mxu0 %v7916
        %7930 = vmatpush.bf16.msra.mxu0 %v7915
        %7931 = vmatpush.bf16.msra.mxu0 %v7914
        %7932 = vmatpush.bf16.msra.mxu0 %v7913
        %7933 = vmatpush.bf16.msra.mxu0 %v7912
        %7934 = vmatpush.bf16.msra.mxu0 %v7911
        %7935 = vmatmul.bf16.gmra.mxu0 %v7861
        %v7936 = vpop.f32.mrf.mxu0
        %v7937 = vadd.f32 0.0, %v7936
        %v7938 = vpop.f32.mrf.mxu0
        %v7939 = vadd.f32 0.0, %v7938
        %7940 = vdwg.mxu0
        %v7941 = vadd.f32 %v7856, %v7937
        %v7942 = vadd.f32 %v7857, %v7939
        %v7944 = vshrl.u32 %v7637, 16
        %v7946 = vrot.slane %v7944, 7
        %v7947 = vshll.u32 %v7637, 16
        %v7949 = vor.u32 %v7946, %v7947
        %v7951 = vsel %vm2027, 0, %v7949
        %v7952 = vld [vmem:[#allocation35] sm:$0xf]
        %v7953 = vld [vmem:[#allocation35 + $0x4] sm:$0xf]
        %v7954 = vld [vmem:[#allocation35 + $0x8] sm:$0xf]
        %v7955 = vld [vmem:[#allocation35 + $0xc] sm:$0xf]
        %v7956 = vld [vmem:[#allocation35 + $0x10] sm:$0xf]
        %v7957 = vld [vmem:[#allocation35 + $0x14] sm:$0xf]
        %v7958 = vld [vmem:[#allocation35 + $0x18] sm:$0xf]
        %v7959 = vld [vmem:[#allocation35 + $0x1c] sm:$0xf]
        %v7960 = vld [vmem:[#allocation35 + $0x20] sm:$0xf]
        %v7961 = vld [vmem:[#allocation35 + $0x24] sm:$0xf]
        %v7962 = vld [vmem:[#allocation35 + $0x28] sm:$0xf]
        %v7963 = vld [vmem:[#allocation35 + $0x2c] sm:$0xf]
        %v7964 = vld [vmem:[#allocation35 + $0x30] sm:$0xf]
        %v7965 = vld [vmem:[#allocation35 + $0x34] sm:$0xf]
        %v7966 = vld [vmem:[#allocation35 + $0x38] sm:$0xf]
        %v7967 = vld [vmem:[#allocation35 + $0x3c] sm:$0xf]
        %v7984 = vunpack.c.l.b16 %v7952
        %v7985 = vunpack.c.l.b16 %v7953
        %v7986 = vunpack.c.l.b16 %v7954
        %v7987 = vunpack.c.l.b16 %v7955
        %v7988 = vunpack.c.l.b16 %v7956
        %v7989 = vunpack.c.l.b16 %v7957
        %v7990 = vunpack.c.l.b16 %v7958
        %v7991 = vunpack.c.l.b16 %v7959
        %v7992 = vunpack.c.l.b16 %v7960
        %v7993 = vunpack.c.l.b16 %v7961
        %v7994 = vunpack.c.l.b16 %v7962
        %v7995 = vunpack.c.l.b16 %v7963
        %v7996 = vunpack.c.l.b16 %v7964
        %v7997 = vunpack.c.l.b16 %v7965
        %v7998 = vunpack.c.l.b16 %v7966
        %v7999 = vunpack.c.l.b16 %v7967
        %v8000 = vpack.c.b16 %v7985, %v7984
        %v8001 = vpack.c.b16 %v7987, %v7986
        %v8002 = vpack.c.b16 %v7989, %v7988
        %v8003 = vpack.c.b16 %v7991, %v7990
        %v8004 = vpack.c.b16 %v7993, %v7992
        %v8005 = vpack.c.b16 %v7995, %v7994
        %v8006 = vpack.c.b16 %v7997, %v7996
        %v8007 = vpack.c.b16 %v7999, %v7998
        %8016 = vmatpush.bf16.msra.mxu0 %v8007
        %8017 = vmatpush.bf16.msra.mxu0 %v8006
        %8018 = vmatpush.bf16.msra.mxu0 %v8005
        %8019 = vmatpush.bf16.msra.mxu0 %v8004
        %8020 = vmatpush.bf16.msra.mxu0 %v8003
        %8021 = vmatpush.bf16.msra.mxu0 %v8002
        %8022 = vmatpush.bf16.msra.mxu0 %v8001
        %8023 = vmatpush.bf16.msra.mxu0 %v8000
        %8024 = vmatmul.bf16.gmra.mxu0 %v7951
        %v8025 = vpop.f32.mrf.mxu0
        %v8026 = vadd.f32 0.0, %v8025
        %v8027 = vpop.f32.mrf.mxu0
        %v8028 = vadd.f32 0.0, %v8027
        %8029 = vdwg.mxu0
        %v8030 = vadd.f32 %v7941, %v8026
        %v8031 = vadd.f32 %v7942, %v8028
        %v8032 = vrot.slane %v7947, 1
        %v8033 = vor.u32 %v7944, %v8032
        %v8035 = vsel %vm2124, %v8033, 0
        %s8036 = scalar_lea.vmem [#allocation35], 128
        %v8037 = vld [vmem:[%s8036] sm:$0xf]
        %v8038 = vld [vmem:[%s8036 + $0x4] sm:$0xf]
        %v8039 = vld [vmem:[%s8036 + $0x8] sm:$0xf]
        %v8040 = vld [vmem:[%s8036 + $0xc] sm:$0xf]
        %v8041 = vld [vmem:[%s8036 + $0x10] sm:$0xf]
        %v8042 = vld [vmem:[%s8036 + $0x14] sm:$0xf]
        %v8043 = vld [vmem:[%s8036 + $0x18] sm:$0xf]
        %v8044 = vld [vmem:[%s8036 + $0x1c] sm:$0xf]
        %v8045 = vld [vmem:[%s8036 + $0x20] sm:$0xf]
        %v8046 = vld [vmem:[%s8036 + $0x24] sm:$0xf]
        %v8047 = vld [vmem:[%s8036 + $0x28] sm:$0xf]
        %v8048 = vld [vmem:[%s8036 + $0x2c] sm:$0xf]
        %v8049 = vld [vmem:[%s8036 + $0x30] sm:$0xf]
        %v8050 = vld [vmem:[%s8036 + $0x34] sm:$0xf]
        %v8051 = vld [vmem:[%s8036 + $0x38] sm:$0xf]
        %v8052 = vld [vmem:[%s8036 + $0x3c] sm:$0xf]
        %v8069 = vunpack.c.l.b16 %v8037
        %v8070 = vunpack.c.l.b16 %v8038
        %v8071 = vunpack.c.l.b16 %v8039
        %v8072 = vunpack.c.l.b16 %v8040
        %v8073 = vunpack.c.l.b16 %v8041
        %v8074 = vunpack.c.l.b16 %v8042
        %v8075 = vunpack.c.l.b16 %v8043
        %v8076 = vunpack.c.l.b16 %v8044
        %v8077 = vunpack.c.l.b16 %v8045
        %v8078 = vunpack.c.l.b16 %v8046
        %v8079 = vunpack.c.l.b16 %v8047
        %v8080 = vunpack.c.l.b16 %v8048
        %v8081 = vunpack.c.l.b16 %v8049
        %v8082 = vunpack.c.l.b16 %v8050
        %v8083 = vunpack.c.l.b16 %v8051
        %v8084 = vunpack.c.l.b16 %v8052
        %v8085 = vpack.c.b16 %v8070, %v8069
        %v8086 = vpack.c.b16 %v8072, %v8071
        %v8087 = vpack.c.b16 %v8074, %v8073
        %v8088 = vpack.c.b16 %v8076, %v8075
        %v8089 = vpack.c.b16 %v8078, %v8077
        %v8090 = vpack.c.b16 %v8080, %v8079
        %v8091 = vpack.c.b16 %v8082, %v8081
        %v8092 = vpack.c.b16 %v8084, %v8083
        %8101 = vmatpush.bf16.msra.mxu0 %v8092
        %8102 = vmatpush.bf16.msra.mxu0 %v8091
        %8103 = vmatpush.bf16.msra.mxu0 %v8090
        %8104 = vmatpush.bf16.msra.mxu0 %v8089
        %8105 = vmatpush.bf16.msra.mxu0 %v8088
        %8106 = vmatpush.bf16.msra.mxu0 %v8087
        %8107 = vmatpush.bf16.msra.mxu0 %v8086
        %8108 = vmatpush.bf16.msra.mxu0 %v8085
        %8109 = vmatmul.bf16.gmra.mxu0 %v8035
        %v8110 = vpop.f32.mrf.mxu0
        %v8111 = vadd.f32 0.0, %v8110
        %v8112 = vpop.f32.mrf.mxu0
        %v8113 = vadd.f32 0.0, %v8112
        %8114 = vdwg.mxu0
        %v8115 = vadd.f32 %v8030, %v8111
        %v8116 = vadd.f32 %v8031, %v8113
        %v8117 = vld [vmem:[%s101] sm:$0x1]
        %v8119 = vperm.slane %v8117, 0
        %v8121 = vadd.f32 %v8115, %v8119
        %v8122 = vadd.f32 %v8116, %v8119
        %v8123 = vmax.f32 %v8121, 0.0
        %v8124 = vmax.f32 %v8122, 0.0
        %v8125 = vpack.c.bf16 %v8123, %v8123
        %v8126 = vpack.c.bf16 %v8124, %v8124
        %s8127 = scalar_lea.vmem [#allocation37], 64
        %v8128 = vld [vmem:[%s8127] sm:$0xf]
        %v8129 = vld [vmem:[%s8127 + $0x4] sm:$0xf]
        %v8130 = vld [vmem:[%s8127 + $0x8] sm:$0xf]
        %v8131 = vld [vmem:[%s8127 + $0xc] sm:$0xf]
        %v8132 = vld [vmem:[%s8127 + $0x10] sm:$0xf]
        %v8133 = vld [vmem:[%s8127 + $0x14] sm:$0xf]
        %v8134 = vld [vmem:[%s8127 + $0x18] sm:$0xf]
        %v8135 = vld [vmem:[%s8127 + $0x1c] sm:$0xf]
        %v8136 = vld [vmem:[%s8127 + $0x20] sm:$0xf]
        %v8137 = vld [vmem:[%s8127 + $0x24] sm:$0xf]
        %v8138 = vld [vmem:[%s8127 + $0x28] sm:$0xf]
        %v8139 = vld [vmem:[%s8127 + $0x2c] sm:$0xf]
        %v8140 = vld [vmem:[%s8127 + $0x30] sm:$0xf]
        %v8141 = vld [vmem:[%s8127 + $0x34] sm:$0xf]
        %v8142 = vld [vmem:[%s8127 + $0x38] sm:$0xf]
        %v8143 = vld [vmem:[%s8127 + $0x3c] sm:$0xf]
        %v8146 = vunpack.c.l.b16 %v8125
        %v8147 = vunpack.c.l.b16 %v8126
        %v8148 = vpack.c.b16 %v8147, %v8146
        %v8150 = vshrl.u32 %v8148, 16
        %v8152 = vrot.slane %v8150, 7
        %v8153 = vshll.u32 %v8148, 16
        %v8155 = vor.u32 %v8152, %v8153
        %v8157 = vsel %vm2027, 0, %v8155
        %v8158 = vld [vmem:[#allocation37] sm:$0xf]
        %v8159 = vld [vmem:[#allocation37 + $0x4] sm:$0xf]
        %v8160 = vld [vmem:[#allocation37 + $0x8] sm:$0xf]
        %v8161 = vld [vmem:[#allocation37 + $0xc] sm:$0xf]
        %v8162 = vld [vmem:[#allocation37 + $0x10] sm:$0xf]
        %v8163 = vld [vmem:[#allocation37 + $0x14] sm:$0xf]
        %v8164 = vld [vmem:[#allocation37 + $0x18] sm:$0xf]
        %v8165 = vld [vmem:[#allocation37 + $0x1c] sm:$0xf]
        %v8166 = vld [vmem:[#allocation37 + $0x20] sm:$0xf]
        %v8167 = vld [vmem:[#allocation37 + $0x24] sm:$0xf]
        %v8168 = vld [vmem:[#allocation37 + $0x28] sm:$0xf]
        %v8169 = vld [vmem:[#allocation37 + $0x2c] sm:$0xf]
        %v8170 = vld [vmem:[#allocation37 + $0x30] sm:$0xf]
        %v8171 = vld [vmem:[#allocation37 + $0x34] sm:$0xf]
        %v8172 = vld [vmem:[#allocation37 + $0x38] sm:$0xf]
        %v8173 = vld [vmem:[#allocation37 + $0x3c] sm:$0xf]
        %v8190 = vunpack.c.l.b16 %v8158
        %v8191 = vunpack.c.l.b16 %v8159
        %v8192 = vunpack.c.l.b16 %v8160
        %v8193 = vunpack.c.l.b16 %v8161
        %v8194 = vunpack.c.l.b16 %v8162
        %v8195 = vunpack.c.l.b16 %v8163
        %v8196 = vunpack.c.l.b16 %v8164
        %v8197 = vunpack.c.l.b16 %v8165
        %v8198 = vunpack.c.l.b16 %v8166
        %v8199 = vunpack.c.l.b16 %v8167
        %v8200 = vunpack.c.l.b16 %v8168
        %v8201 = vunpack.c.l.b16 %v8169
        %v8202 = vunpack.c.l.b16 %v8170
        %v8203 = vunpack.c.l.b16 %v8171
        %v8204 = vunpack.c.l.b16 %v8172
        %v8205 = vunpack.c.l.b16 %v8173
        %v8206 = vpack.c.b16 %v8191, %v8190
        %v8207 = vpack.c.b16 %v8193, %v8192
        %v8208 = vpack.c.b16 %v8195, %v8194
        %v8209 = vpack.c.b16 %v8197, %v8196
        %v8210 = vpack.c.b16 %v8199, %v8198
        %v8211 = vpack.c.b16 %v8201, %v8200
        %v8212 = vpack.c.b16 %v8203, %v8202
        %v8213 = vpack.c.b16 %v8205, %v8204
        %8222 = vmatpush.bf16.msra.mxu0 %v8213
        %8223 = vmatpush.bf16.msra.mxu0 %v8212
        %8224 = vmatpush.bf16.msra.mxu0 %v8211
        %8225 = vmatpush.bf16.msra.mxu0 %v8210
        %8226 = vmatpush.bf16.msra.mxu0 %v8209
        %8227 = vmatpush.bf16.msra.mxu0 %v8208
        %8228 = vmatpush.bf16.msra.mxu0 %v8207
        %8229 = vmatpush.bf16.msra.mxu0 %v8206
        %8230 = vmatmul.bf16.gmra.mxu0 %v8157
        %v8231 = vpop.f32.mrf.mxu0
        %v8232 = vadd.f32 0.0, %v8231
        %v8233 = vpop.f32.mrf.mxu0
        %v8234 = vadd.f32 0.0, %v8233
        %8235 = vdwg.mxu0
        %v8253 = vunpack.c.l.b16 %v8128
        %v8254 = vunpack.c.l.b16 %v8129
        %v8255 = vunpack.c.l.b16 %v8130
        %v8256 = vunpack.c.l.b16 %v8131
        %v8257 = vunpack.c.l.b16 %v8132
        %v8258 = vunpack.c.l.b16 %v8133
        %v8259 = vunpack.c.l.b16 %v8134
        %v8260 = vunpack.c.l.b16 %v8135
        %v8261 = vunpack.c.l.b16 %v8136
        %v8262 = vunpack.c.l.b16 %v8137
        %v8263 = vunpack.c.l.b16 %v8138
        %v8264 = vunpack.c.l.b16 %v8139
        %v8265 = vunpack.c.l.b16 %v8140
        %v8266 = vunpack.c.l.b16 %v8141
        %v8267 = vunpack.c.l.b16 %v8142
        %v8268 = vunpack.c.l.b16 %v8143
        %v8269 = vpack.c.b16 %v8254, %v8253
        %v8270 = vpack.c.b16 %v8256, %v8255
        %v8271 = vpack.c.b16 %v8258, %v8257
        %v8272 = vpack.c.b16 %v8260, %v8259
        %v8273 = vpack.c.b16 %v8262, %v8261
        %v8274 = vpack.c.b16 %v8264, %v8263
        %v8275 = vpack.c.b16 %v8266, %v8265
        %v8276 = vpack.c.b16 %v8268, %v8267
        %8285 = vmatpush.bf16.msra.mxu0 %v8276
        %8286 = vmatpush.bf16.msra.mxu0 %v8275
        %8287 = vmatpush.bf16.msra.mxu0 %v8274
        %8288 = vmatpush.bf16.msra.mxu0 %v8273
        %8289 = vmatpush.bf16.msra.mxu0 %v8272
        %8290 = vmatpush.bf16.msra.mxu0 %v8271
        %8291 = vmatpush.bf16.msra.mxu0 %v8270
        %8292 = vmatpush.bf16.msra.mxu0 %v8269
        %8293 = vmatmul.bf16.gmra.mxu0 %v8148
        %v8294 = vpop.f32.mrf.mxu0
        %v8295 = vadd.f32 %v8232, %v8294
        %v8296 = vpop.f32.mrf.mxu0
        %v8297 = vadd.f32 %v8234, %v8296
        %8298 = vdwg.mxu0
        %v8299 = vrot.slane %v8153, 1
        %v8300 = vor.u32 %v8150, %v8299
        %v8302 = vsel %vm2124, %v8300, 0
        %s8303 = scalar_lea.vmem [#allocation37], 128
        %v8304 = vld [vmem:[%s8303] sm:$0xf]
        %v8305 = vld [vmem:[%s8303 + $0x4] sm:$0xf]
        %v8306 = vld [vmem:[%s8303 + $0x8] sm:$0xf]
        %v8307 = vld [vmem:[%s8303 + $0xc] sm:$0xf]
        %v8308 = vld [vmem:[%s8303 + $0x10] sm:$0xf]
        %v8309 = vld [vmem:[%s8303 + $0x14] sm:$0xf]
        %v8310 = vld [vmem:[%s8303 + $0x18] sm:$0xf]
        %v8311 = vld [vmem:[%s8303 + $0x1c] sm:$0xf]
        %v8312 = vld [vmem:[%s8303 + $0x20] sm:$0xf]
        %v8313 = vld [vmem:[%s8303 + $0x24] sm:$0xf]
        %v8314 = vld [vmem:[%s8303 + $0x28] sm:$0xf]
        %v8315 = vld [vmem:[%s8303 + $0x2c] sm:$0xf]
        %v8316 = vld [vmem:[%s8303 + $0x30] sm:$0xf]
        %v8317 = vld [vmem:[%s8303 + $0x34] sm:$0xf]
        %v8318 = vld [vmem:[%s8303 + $0x38] sm:$0xf]
        %v8319 = vld [vmem:[%s8303 + $0x3c] sm:$0xf]
        %v8336 = vunpack.c.l.b16 %v8304
        %v8337 = vunpack.c.l.b16 %v8305
        %v8338 = vunpack.c.l.b16 %v8306
        %v8339 = vunpack.c.l.b16 %v8307
        %v8340 = vunpack.c.l.b16 %v8308
        %v8341 = vunpack.c.l.b16 %v8309
        %v8342 = vunpack.c.l.b16 %v8310
        %v8343 = vunpack.c.l.b16 %v8311
        %v8344 = vunpack.c.l.b16 %v8312
        %v8345 = vunpack.c.l.b16 %v8313
        %v8346 = vunpack.c.l.b16 %v8314
        %v8347 = vunpack.c.l.b16 %v8315
        %v8348 = vunpack.c.l.b16 %v8316
        %v8349 = vunpack.c.l.b16 %v8317
        %v8350 = vunpack.c.l.b16 %v8318
        %v8351 = vunpack.c.l.b16 %v8319
        %v8352 = vpack.c.b16 %v8337, %v8336
        %v8353 = vpack.c.b16 %v8339, %v8338
        %v8354 = vpack.c.b16 %v8341, %v8340
        %v8355 = vpack.c.b16 %v8343, %v8342
        %v8356 = vpack.c.b16 %v8345, %v8344
        %v8357 = vpack.c.b16 %v8347, %v8346
        %v8358 = vpack.c.b16 %v8349, %v8348
        %v8359 = vpack.c.b16 %v8351, %v8350
        %8368 = vmatpush.bf16.msra.mxu0 %v8359
        %8369 = vmatpush.bf16.msra.mxu0 %v8358
        %8370 = vmatpush.bf16.msra.mxu0 %v8357
        %8371 = vmatpush.bf16.msra.mxu0 %v8356
        %8372 = vmatpush.bf16.msra.mxu0 %v8355
        %8373 = vmatpush.bf16.msra.mxu0 %v8354
        %8374 = vmatpush.bf16.msra.mxu0 %v8353
        %8375 = vmatpush.bf16.msra.mxu0 %v8352
        %8376 = vmatmul.bf16.gmra.mxu0 %v8302
        %v8377 = vpop.f32.mrf.mxu0
        %v8378 = vadd.f32 0.0, %v8377
        %v8379 = vpop.f32.mrf.mxu0
        %v8380 = vadd.f32 0.0, %v8379
        %8381 = vdwg.mxu0
        %v8382 = vadd.f32 %v8295, %v8378
        %v8383 = vadd.f32 %v8297, %v8380
        %v8384 = vld [vmem:[%s105] sm:$0x1]
        %v8386 = vperm.slane %v8384, 0
        %v8388 = vadd.f32 %v8382, %v8386
        %v8389 = vadd.f32 %v8383, %v8386
        %v8390 = vmax.f32 %v8388, 0.0
        %v8391 = vmax.f32 %v8389, 0.0
        %v8392 = vpack.c.bf16 %v8391, %v8390
        %v8393 = vld [vmem:[#allocation38] sm:$0xff]
        %v8394 = vld [vmem:[#allocation38 + $0x8] sm:$0xff]
        %v8395 = vld [vmem:[#allocation38 + $0x10] sm:$0xff]
        %v8396 = vld [vmem:[#allocation38 + $0x18] sm:$0xff]
        %v8397 = vld [vmem:[#allocation38 + $0x20] sm:$0xff]
        %v8398 = vld [vmem:[#allocation38 + $0x28] sm:$0xff]
        %v8399 = vld [vmem:[#allocation38 + $0x30] sm:$0xff]
        %v8400 = vld [vmem:[#allocation38 + $0x38] sm:$0xff]
        %v8401 = vld [vmem:[#allocation38 + $0x40] sm:$0xff]
        %v8402 = vld [vmem:[#allocation38 + $0x48] sm:$0xff]
        %v8403 = vld [vmem:[#allocation38 + $0x50] sm:$0xff]
        %v8404 = vld [vmem:[#allocation38 + $0x58] sm:$0xff]
        %v8405 = vld [vmem:[#allocation38 + $0x60] sm:$0xff]
        %v8406 = vld [vmem:[#allocation38 + $0x68] sm:$0xff]
        %v8407 = vld [vmem:[#allocation38 + $0x70] sm:$0xff]
        %v8408 = vld [vmem:[#allocation38 + $0x78] sm:$0xff]
        %v8409 = vld [vmem:[%s109] sm:$0x3]
        %v8411 = vperm.slane %v8409, 0
        %v8412 = vperm.slane %v8409, 1
        %v8431 = vunpack.c.l.b16 %v8393
        %v8432 = vunpack.c.h.b16 %v8393
        %v8433 = vunpack.c.l.b16 %v8394
        %v8434 = vunpack.c.h.b16 %v8394
        %v8435 = vunpack.c.l.b16 %v8395
        %v8436 = vunpack.c.h.b16 %v8395
        %v8437 = vunpack.c.l.b16 %v8396
        %v8438 = vunpack.c.h.b16 %v8396
        %v8439 = vunpack.c.l.b16 %v8397
        %v8440 = vunpack.c.h.b16 %v8397
        %v8441 = vunpack.c.l.b16 %v8398
        %v8442 = vunpack.c.h.b16 %v8398
        %v8443 = vunpack.c.l.b16 %v8399
        %v8444 = vunpack.c.h.b16 %v8399
        %v8445 = vunpack.c.l.b16 %v8400
        %v8446 = vunpack.c.h.b16 %v8400
        %v8447 = vunpack.c.l.b16 %v8401
        %v8448 = vunpack.c.h.b16 %v8401
        %v8449 = vunpack.c.l.b16 %v8402
        %v8450 = vunpack.c.h.b16 %v8402
        %v8451 = vunpack.c.l.b16 %v8403
        %v8452 = vunpack.c.h.b16 %v8403
        %v8453 = vunpack.c.l.b16 %v8404
        %v8454 = vunpack.c.h.b16 %v8404
        %v8455 = vunpack.c.l.b16 %v8405
        %v8456 = vunpack.c.h.b16 %v8405
        %v8457 = vunpack.c.l.b16 %v8406
        %v8458 = vunpack.c.h.b16 %v8406
        %v8459 = vunpack.c.l.b16 %v8407
        %v8460 = vunpack.c.h.b16 %v8407
        %v8461 = vunpack.c.l.b16 %v8408
        %v8462 = vunpack.c.h.b16 %v8408
        %v8463 = vpack.c.b16 %v8433, %v8431
        %v8464 = vpack.c.b16 %v8434, %v8432
        %v8465 = vpack.c.b16 %v8437, %v8435
        %v8466 = vpack.c.b16 %v8438, %v8436
        %v8467 = vpack.c.b16 %v8441, %v8439
        %v8468 = vpack.c.b16 %v8442, %v8440
        %v8469 = vpack.c.b16 %v8445, %v8443
        %v8470 = vpack.c.b16 %v8446, %v8444
        %v8471 = vpack.c.b16 %v8449, %v8447
        %v8472 = vpack.c.b16 %v8450, %v8448
        %v8473 = vpack.c.b16 %v8453, %v8451
        %v8474 = vpack.c.b16 %v8454, %v8452
        %v8475 = vpack.c.b16 %v8457, %v8455
        %v8476 = vpack.c.b16 %v8458, %v8456
        %v8477 = vpack.c.b16 %v8461, %v8459
        %v8478 = vpack.c.b16 %v8462, %v8460
        %8495 = vmatpush.bf16.msra.mxu0 %v8477
        %8496 = vmatpush.bf16.msra.mxu0 %v8475
        %8497 = vmatpush.bf16.msra.mxu0 %v8473
        %8498 = vmatpush.bf16.msra.mxu0 %v8471
        %8499 = vmatpush.bf16.msra.mxu0 %v8469
        %8500 = vmatpush.bf16.msra.mxu0 %v8467
        %8501 = vmatpush.bf16.msra.mxu0 %v8465
        %8502 = vmatpush.bf16.msra.mxu0 %v8463
        %8503 = vmatmul.bf16.gmra.mxu0 %v8392
        %v8504 = vpop.f32.mrf.mxu0
        %v8505 = vadd.f32 %v8411, %v8504
        %v8506 = vpop.f32.mrf.mxu0
        %v8507 = vadd.f32 %v8411, %v8506
        %8508 = vdwg.mxu0
        %8509 = vmatpush.bf16.msra.mxu0 %v8478
        %8510 = vmatpush.bf16.msra.mxu0 %v8476
        %8511 = vmatpush.bf16.msra.mxu0 %v8474
        %8512 = vmatpush.bf16.msra.mxu0 %v8472
        %8513 = vmatpush.bf16.msra.mxu0 %v8470
        %8514 = vmatpush.bf16.msra.mxu0 %v8468
        %8515 = vmatpush.bf16.msra.mxu0 %v8466
        %8516 = vmatpush.bf16.msra.mxu0 %v8464
        %8517 = vmatmul.bf16.gmra.mxu0 %v8392
        %v8518 = vpop.f32.mrf.mxu0
        %v8519 = vadd.f32 %v8412, %v8518
        %v8520 = vpop.f32.mrf.mxu0
        %v8521 = vadd.f32 %v8412, %v8520
        %8522 = vdwg.mxu0
        %8523 = vst [vmem:[%s1998] sm:$0xff] %v8505
        %8524 = vst [vmem:[%s1998 + $0x8] sm:$0xff] %v8519
        %8525 = vst [vmem:[%s1998 + $0x10] sm:$0xff] %v8507
        %8526 = vst [vmem:[%s1998 + $0x18] sm:$0xff] %v8521
        %s8527 = smul.u32 2, %s134
        %p8528 = scmp.lt.s32.totalorder %s8527, 3
        %s8529 = scalar_select %p8528, %s8527, 3
        %s8530 = smul.addr %s8529, 2
        %s8531 = smul.addr %s8530, 8
        %s8532 = scalar_lea.vmem %s111, %s8531
        // Predicated region
        $region329: #{forward.1} parent=239 // pred_check
          %p8533 = pneg %p1312
        $region330: #{forward.1} parent=239 // pred_check_branch
          %8535 = sbr.rel (%p8533) target = $region332
        $region331: #{forward.1} parent=239 // pred_region
          %s8536 = smul.u32 2, %s134
        $region332: #{forward.1} parent=239 // pred_fallthru
          _
      $region240: #{forward.1} parent=5 // pred_fallthru
        _
      %p8537 = scmp.le.s32.totalorder 2, %s129
      // Predicated region
      $region333: #{forward.1} parent=5 // pred_check
        %p8538 = pneg %p8537
      $region334: #{forward.1} parent=5 // pred_check_branch
        %8540 = sbr.rel (%p8538) target = $region336
      $region335: #{forward.1} parent=5 // pred_region
        %s8541 = ssub.s32 %s129, 2
        // Predicated region
        $region337: #{forward.1} parent=335 // pred_check
          %p8542 = pneg %p1318
        $region338: #{forward.1} parent=335 // pred_check_branch
          %8544 = sbr.rel (%p8542) target = $region340
        $region339: #{forward.1} parent=335 // pred_region
          %s8545 = smul.u32 2, %s135
          %p8546 = scmp.lt.s32.totalorder %s8545, 3
          %s8547 = scalar_select %p8546, %s8545, 3
          %s8548 = smul.addr %s8547, 2
          %s8549 = smul.addr %s8548, 8
          %s8550 = scalar_lea.vmem %s111, %s8549
        $region340: #{forward.1} parent=335 // pred_fallthru
          _
      $region336: #{forward.1} parent=5 // pred_fallthru
        _
    $region6: #{forward.1} parent=1 // loop_footer
      %s133 = sadd.s32 1, %s129
    $region7: #{forward.1} parent=1 // loop_footer_branch
      %128 = sbr.rel target = $region3
    $region8: #{forward.1} parent=1 // loop_exit
      _
    %8551 = vsyncpa [#allocation7], 1
    %s8552 = scalar_lea.sflag [#allocation7], 1
    %8553 = vsyncpa %s8552, 1
    %8554 = vsyncpa [#allocation9], 1
    %8555 = vsyncpa [#allocation12], 1
    %8556 = vsyncpa [#allocation15], 1
    %8557 = vsyncpa [#allocation18], 1
    %8558 = vsyncpa [#allocation21], 1
    %8559 = vsyncpa [#allocation24], 1
    %8560 = vsyncpa [#allocation27], 1
    %8561 = vsyncpa [#allocation30], 1
    %8562 = vsyncpa [#allocation33], 1
    %8563 = vsyncpa [#allocation36], 1
    %8564 = vsyncpa [#allocation39], 1

</llo_original>
